<compile_context>
chip_gen: v7x
topology: tpu7x:2x2x1
jax: 0.10.0
libtpu: 0.0.40
codegen_flags: <defaults>
</compile_context>

<pallas_src>
import functools

import jax
import jax.numpy as jnp
from jax.experimental import pallas as pl
from jax.experimental.pallas import tpu as pltpu


BN_EPS = 1e-5


def _vmem_limit_bytes():
    """Scoped-VMEM budget per generation (conservative on 64 MiB parts)."""
    try:
        kind = jax.devices()[0].device_kind.lower()
    except Exception:  # pragma: no cover - defensive
        kind = ""
    if "v5" in kind or "v6" in kind:      # 128 MiB VMEM parts
        return 96 * 1024 * 1024
    return 48 * 1024 * 1024               # v7x-class (64 MiB) / unknown


# ----------------------------- Pallas kernels ------------------------------ #
def _conv_stats_kernel(*refs, tile_m, halo, wpad, fuse_input_act):
    """3x3 conv as 9 row-shifted MXU matmuls + per-tile masked BN statistics.

    The VMEM scratch `win_ref` holds rows [i*tile_m, i*tile_m + tile_m + halo)
    of the flat input buffer (main block + small halo block); output row r of
    the tile reads window rows r + dy*wpad + dx (dy, dx in 0..2).

    fuse_input_act=True additionally applies the *previous* layer's BatchNorm
    scale/shift, ReLU and interior zero-mask to the loaded window rows, so the
    intermediate activation never round-trips HBM.
    """
    if fuse_input_act:
        (ss_ref, mina_ref, minb_ref, xa_ref, xb_ref, mout_ref, w_ref,
         y_ref, st_ref, win_ref) = refs
    else:
        xa_ref, xb_ref, mout_ref, w_ref, y_ref, st_ref, win_ref = refs

    if fuse_input_act:
        scale, shift = ss_ref[0:1, :], ss_ref[1:2, :]
        a_main = jnp.maximum(xa_ref[...].astype(jnp.float32) * scale + shift, 0.0)
        a_halo = jnp.maximum(xb_ref[...].astype(jnp.float32) * scale + shift, 0.0)
        win_ref[0:tile_m, :] = (a_main * mina_ref[...]).astype(win_ref.dtype)
        win_ref[tile_m:tile_m + halo, :] = (a_halo * minb_ref[...]).astype(win_ref.dtype)
    else:
        # First layer: the input buffer is already zero padded, no activation.
        win_ref[0:tile_m, :] = xa_ref[...]
        win_ref[tile_m:tile_m + halo, :] = xb_ref[...]

    cout = y_ref.shape[1]
    acc = jnp.zeros((tile_m, cout), jnp.float32)
    for k in range(9):                       # static unroll: 9 shifted matmuls
        off = (k // 3) * wpad + (k % 3)
        acc = acc + jnp.dot(win_ref[off:off + tile_m, :], w_ref[k],
                            preferred_element_type=jnp.float32)
    y_ref[...] = acc.astype(y_ref.dtype)

    # Per-tile BatchNorm partial statistics over interior output rows.
    # Single-pass (sum, sum_sq) in f32.  TODO(synk): centered per-tile partials
    # / Welford merging for very large N*H*W.
    ym = acc * mout_ref[...]
    tile_stats = jnp.concatenate(
        [jnp.sum(ym, axis=0, keepdims=True),
         jnp.sum(ym * acc, axis=0, keepdims=True)], axis=0)   # (2, cout) f32
    st_ref[...] = tile_stats[None]


def _bn_relu_kernel(y_ref, ss_ref, o_ref):
    """Final layer only: y*scale + shift -> ReLU (interior is sliced outside)."""
    o_ref[...] = jnp.maximum(
        y_ref[...].astype(jnp.float32) * ss_ref[0:1, :] + ss_ref[1:2, :], 0.0)


# ------------------------------- layer glue --------------------------------- #
def _conv_pass(x_in, mask_out, wk, *, act, tile_m, halo, wpad, vmem_limit):
    """One 3x3 conv pass over the flat padded layout.

    x_in     : (rows_in, Cin)  flat input buffer (lead L_in rows of zeros/junk)
    mask_out : (rows_y, 1)     1.0 where the *output* row is an interior pixel
    wk       : (9, Cin, Cout)  conv taps, k = dy*3 + dx
    act      : None for the first layer (x_in already zero padded); otherwise
               (ss, mask_in) to fuse the previous layer's BN + ReLU + zero-pad
               into the window load.
    Returns (raw conv output y of shape (rows_y, Cout), summed [sum, sum_sq]
    statistics of shape (2, Cout)).  Output row p holds the conv at flat index
    p - (L_in - lead), i.e. the lead shrinks by wpad+1 per layer.
    """
    rows_y = mask_out.shape[0]
    num_tiles = rows_y // tile_m
    cin = x_in.shape[1]
    cout = wk.shape[2]
    dtype = x_in.dtype
    isz = jnp.dtype(dtype).itemsize
    hblk = tile_m // halo

    kernel = functools.partial(_conv_stats_kernel, tile_m=tile_m, halo=halo,
                               wpad=wpad, fuse_input_act=act is not None)

    inputs, in_specs = [], []
    if act is not None:
        ss, mask_in = act
        inputs += [ss, mask_in, mask_in]
        in_specs += [
            pl.BlockSpec((2, cin), lambda i: (0, 0)),                  # scale/shift
            pl.BlockSpec((tile_m, 1), lambda i: (i, 0)),               # input mask
            pl.BlockSpec((halo, 1), lambda i: ((i + 1) * hblk, 0)),    # mask halo
        ]
    inputs += [x_in, x_in, mask_out, wk]
    in_specs += [
        pl.BlockSpec((tile_m, cin), lambda i: (i, 0)),                 # main rows
        pl.BlockSpec((halo, cin), lambda i: ((i + 1) * hblk, 0)),      # small halo
        pl.BlockSpec((tile_m, 1), lambda i: (i, 0)),                   # stats mask
        # TODO(synk): single-buffer this grid-invariant block at large C.
        pl.BlockSpec((9, cin, cout), lambda i: (0, 0, 0)),
    ]

    bytes_accessed = int(
        (rows_y + num_tiles * halo) * cin * isz        # x main + halo streams
        + rows_y * cout * isz                          # raw conv output
        + 9 * cin * cout * isz                         # weights
        + (2 * rows_y + num_tiles * halo) * 4          # masks
        + num_tiles * 2 * cout * 4 + 2 * cin * 4)      # stats out, scale/shift

    y, stats = pl.pallas_call(
        kernel,
        out_shape=(jax.ShapeDtypeStruct((rows_y, cout), dtype),
                   jax.ShapeDtypeStruct((num_tiles, 2, cout), jnp.float32)),
        grid=(num_tiles,),
        in_specs=in_specs,
        out_specs=(pl.BlockSpec((tile_m, cout), lambda i: (i, 0)),
                   pl.BlockSpec((1, 2, cout), lambda i: (i, 0, 0))),
        scratch_shapes=[pltpu.VMEM((tile_m + halo, cin), dtype)],
        compiler_params=pltpu.CompilerParams(
            dimension_semantics=("parallel",),
            vmem_limit_bytes=vmem_limit),
        cost_estimate=pl.CostEstimate(
            flops=2 * rows_y * 9 * cin * cout,
            transcendentals=0,
            bytes_accessed=bytes_accessed),
    )(*inputs)
    return y, jnp.sum(stats, axis=0)


def _bn_relu(y, ss, *, tile_m, vmem_limit):
    rows, cout = y.shape
    num_tiles = rows // tile_m
    isz = jnp.dtype(y.dtype).itemsize
    return pl.pallas_call(
        _bn_relu_kernel,
        out_shape=jax.ShapeDtypeStruct((rows, cout), jnp.float32),
        grid=(num_tiles,),
        in_specs=[pl.BlockSpec((tile_m, cout), lambda i: (i, 0)),
                  pl.BlockSpec((2, cout), lambda i: (0, 0))],
        out_specs=pl.BlockSpec((tile_m, cout), lambda i: (i, 0)),
        compiler_params=pltpu.CompilerParams(
            dimension_semantics=("parallel",),
            vmem_limit_bytes=vmem_limit),
        cost_estimate=pl.CostEstimate(
            flops=3 * rows * cout, transcendentals=0,
            bytes_accessed=rows * cout * (isz + 4) + 8 * cout),
    )(y, ss)


def _bn_scale_shift(stats, gamma, beta, count):
    """Fold train-mode BN statistics + affine params into (2, C) scale/shift."""
    mean = stats[0] / count
    var = jnp.maximum(stats[1] / count - mean * mean, 0.0)
    scale = gamma * jax.lax.rsqrt(var + BN_EPS)
    shift = beta - mean * scale
    return jnp.stack([scale, shift], axis=0).astype(jnp.float32)


@functools.partial(jax.jit, static_argnames=("block_m", "compute_dtype"))
def double_conv2d(x_nchw, params, *, block_m=1024, compute_dtype=jnp.float32):
    """Forward pass of DoubleConv2d.  Input/output are NCHW like PyTorch."""
    n, cin, h, w = x_nchw.shape
    cmid = params["w1"].shape[0]
    cout = params["w2"].shape[0]
    hpad, wpad = h + 2, w + 2
    mp = n * hpad * wpad
    lead = wpad + 1                               # max |row offset| of a 3x3 tap
    halo = -(-2 * lead // 8) * 8                  # multiple of 8, >= 2*lead
    tile_m = max(halo, (block_m // halo) * halo)  # multiple of halo (and of 8)
    assert halo >= 2 * lead and halo % 8 == 0 and tile_m % halo == 0
    num_tiles = -(-mp // tile_m)
    rows_out = num_tiles * tile_m                 # final-layer rows (lead 0)
    rows_mid = rows_out + tile_m                  # y1 rows          (lead = lead)
    rows_x = rows_mid + tile_m                    # padded-x rows    (lead = 2*lead)
    count = float(n * h * w)
    vmem_limit = _vmem_limit_bytes()

    # NCHW -> zero-padded, channels-last flat layout: flat index
    # f = (img*hpad + hp)*wpad + wp is stored at row f + 2*lead of xbuf.
    x_nhwc = jnp.transpose(x_nchw, (0, 2, 3, 1)).astype(compute_dtype)
    x_flat = jnp.pad(x_nhwc, ((0, 0), (1, 1), (1, 1), (0, 0))).reshape(mp, cin)
    xbuf = jnp.pad(x_flat, ((2 * lead, rows_x - mp - 2 * lead), (0, 0)))

    # Interior-pixel masks: m1[p] masks rows of the y1 layout (flat = p - lead),
    # m2[p] masks rows of the final layout (flat = p).
    def interior(rows, shift):
        f = jnp.arange(rows) - shift
        hp = (f // wpad) % hpad
        wp = f % wpad
        ok = ((f >= 0) & (f < mp) & (hp >= 1) & (hp <= h)
              & (wp >= 1) & (wp <= w))
        return ok.astype(jnp.float32)[:, None]

    m1 = interior(rows_mid, lead)
    m2 = interior(rows_out, 0)

    # PyTorch weight (Cout, Cin, kh, kw) -> (9, Cin, Cout), k = dy*3 + dx.
    wk1 = jnp.transpose(params["w1"], (2, 3, 1, 0)).reshape(9, cin, cmid)
    wk2 = jnp.transpose(params["w2"], (2, 3, 1, 0)).reshape(9, cmid, cout)
    wk1 = wk1.astype(compute_dtype)
    wk2 = wk2.astype(compute_dtype)

    # Layer 1: conv (zero padding comes pre-filled in xbuf) + masked stats.
    y1, st1 = _conv_pass(xbuf, m1, wk1, act=None, tile_m=tile_m, halo=halo,
                         wpad=wpad, vmem_limit=vmem_limit)
    ss1 = _bn_scale_shift(st1, params["g1"], params["beta1"], count)

    # Layer 2: BN1 + ReLU + zero-pad fused into the window load, then conv.
    y2, st2 = _conv_pass(y1, m2, wk2, act=(ss1, m1), tile_m=tile_m, halo=halo,
                         wpad=wpad, vmem_limit=vmem_limit)
    ss2 = _bn_scale_shift(st2, params["g2"], params["beta2"], count)

    # Final BN + ReLU; the interior crop below discards ring / overhang rows.
    act2 = _bn_relu(y2, ss2, tile_m=tile_m, vmem_limit=vmem_limit)

    out = act2[:mp].reshape(n, hpad, wpad, cout)[:, 1:h + 1, 1:w + 1, :]
    return jnp.transpose(out, (0, 3, 1, 2))       # NHWC -> NCHW


# --------------------------- pure-JAX reference ----------------------------- #
def _ref_layer(x_nhwc, w_pt, b, gamma, beta):
    wt = jnp.transpose(w_pt, (2, 3, 1, 0))        # HWIO
    y = jax.lax.conv_general_dilated(
        x_nhwc, wt, window_strides=(1, 1), padding="SAME",
        dimension_numbers=("NHWC", "HWIO", "NHWC")) + b
    mean = jnp.mean(y, axis=(0, 1, 2), keepdims=True)
    var = jnp.mean(jnp.square(y - mean), axis=(0, 1, 2), keepdims=True)
    return jnp.maximum((y - mean) * jax.lax.rsqrt(var + BN_EPS) * gamma + beta,
                       0.0)


def double_conv2d_ref(x_nchw, params):
    x = jnp.transpose(x_nchw, (0, 2, 3, 1))
    x = _ref_layer(x, params["w1"], params["b1"], params["g1"], params["beta1"])
    x = _ref_layer(x, params["w2"], params["b2"], params["g2"], params["beta2"])
    return jnp.transpose(x, (0, 3, 1, 2))


# ----------------------------------- main ----------------------------------- #
if __name__ == "__main__":
    N, CIN, COUT, H, W = 2, 4, 8, 16, 16

    key = jax.random.PRNGKey(0)
    kx, kw1, kb1, kw2, kb2 = jax.random.split(key, 5)

    x = jax.random.normal(kx, (N, CIN, H, W), jnp.float32)

    params = {
        # nn.Conv2d(in_channels, out_channels, 3, padding=1) params.
        "w1": jax.random.normal(kw1, (COUT, CIN, 3, 3), jnp.float32) * 0.1,
        "b1": jax.random.normal(kb1, (COUT,), jnp.float32) * 0.1,
        # nn.BatchNorm2d default init: gamma=1, beta=0.
        "g1": jnp.ones((COUT,), jnp.float32),
        "beta1": jnp.zeros((COUT,), jnp.float32),
        "w2": jax.random.normal(kw2, (COUT, COUT, 3, 3), jnp.float32) * 0.1,
        "b2": jax.random.normal(kb2, (COUT,), jnp.float32) * 0.1,
        "g2": jnp.ones((COUT,), jnp.float32),
        "beta2": jnp.zeros((COUT,), jnp.float32),
    }

    ref = jax.block_until_ready(double_conv2d_ref(x, params))

    # Exact (f32) path with a small block_m so multiple grid tiles, halo
    # fetches and per-tile stats blocks are exercised.
    out = jax.block_until_ready(
        double_conv2d(x, params, block_m=256, compute_dtype=jnp.float32))
    assert out.shape == (N, COUT, H, W), out.shape
    err32 = float(jnp.max(jnp.abs(out - ref)))
    assert err32 < 1e-3, f"f32 mismatch vs reference: {err32}"

    # bf16 MXU path (f32 accumulation / statistics): bf16 rounding of inputs,
    # weights and the intermediate activation -> looser tolerance.
    out16 = jax.block_until_ready(
        double_conv2d(x, params, block_m=256, compute_dtype=jnp.bfloat16))
    err16 = float(jnp.max(jnp.abs(out16 - ref)))
    assert err16 < 1e-1, f"bf16 mismatch vs reference: {err16}"

    print("KERNEL_OK")
</pallas_src>

<mosaic_0001>
module attributes {stable_mosaic.version = 11 : i64} {
  func.func @_conv_stats_kernel(%arg0: i32, %arg1: memref<240x4xf32, #tpu.memory_space<vmem>>, %arg2: memref<40x4xf32, #tpu.memory_space<vmem>>, %arg3: memref<240x1xf32, #tpu.memory_space<vmem>>, %arg4: memref<9x4x8xf32, #tpu.memory_space<vmem>>, %arg5: memref<240x8xf32, #tpu.memory_space<vmem>>, %arg6: memref<1x2x8xf32, #tpu.memory_space<vmem>>, %arg7: memref<280x4xf32, #tpu.memory_space<vmem>>) attributes {dimension_semantics = [#tpu.dimension_semantics<parallel>], iteration_bounds = array<i64: 4>, scalar_prefetch = 0 : i64, scratch_operands = 1 : i64, tpu.core_type = #tpu.core_type<tc>, window_params = [{transform_indices = @transform_0, window_bounds = array<i64: 240, 4>}, {transform_indices = @transform_1, window_bounds = array<i64: 40, 4>}, {transform_indices = @transform_2, window_bounds = array<i64: 240, 1>}, {pipeline_mode = #tpu.pipeline_mode<synchronous>, transform_indices = @transform_3, window_bounds = array<i64: 9, 4, 8>}, {transform_indices = @transform_4, window_bounds = array<i64: 240, 8>}, {transform_indices = @transform_5, window_bounds = array<i64: 1, 2, 8>}]} {
    %c0 = arith.constant 0 : index
    %c0_0 = arith.constant 0 : index
    %0 = vector.load %arg1[%c0, %c0_0] : memref<240x4xf32, #tpu.memory_space<vmem>>, vector<240x4xf32>
    %c0_1 = arith.constant 0 : index
    %c0_2 = arith.constant 0 : index
    %1 = vector.load %arg7[%c0_1, %c0_2] : memref<280x4xf32, #tpu.memory_space<vmem>>, vector<240x4xf32>
    tpu.vector_store %arg7[%c0_1, %c0_2], %0 {strides = array<i32>} : memref<280x4xf32, #tpu.memory_space<vmem>>, vector<240x4xf32>,
    %c0_3 = arith.constant 0 : index
    %c0_4 = arith.constant 0 : index
    %2 = vector.load %arg2[%c0_3, %c0_4] : memref<40x4xf32, #tpu.memory_space<vmem>>, vector<40x4xf32>
    %c240 = arith.constant 240 : index
    %c0_5 = arith.constant 0 : index
    %3 = vector.load %arg7[%c240, %c0_5] : memref<280x4xf32, #tpu.memory_space<vmem>>, vector<40x4xf32>
    tpu.vector_store %arg7[%c240, %c0_5], %2 {strides = array<i32>} : memref<280x4xf32, #tpu.memory_space<vmem>>, vector<40x4xf32>,
    %cst = arith.constant 0.000000e+00 : f32
    %4 = vector.broadcast %cst : f32 to vector<240x8xf32>
    %c0_6 = arith.constant 0 : index
    %c0_7 = arith.constant 0 : index
    %5 = vector.load %arg7[%c0_6, %c0_7] : memref<280x4xf32, #tpu.memory_space<vmem>>, vector<240x4xf32>
    %c0_8 = arith.constant 0 : index
    %c0_9 = arith.constant 0 : index
    %c0_10 = arith.constant 0 : index
    %6 = vector.load %arg4[%c0_8, %c0_9, %c0_10] : memref<9x4x8xf32, #tpu.memory_space<vmem>>, vector<1x4x8xf32>
    %7 = vector.shape_cast %6 : vector<1x4x8xf32> to vector<4x8xf32>
    %cst_11 = arith.constant dense<0.000000e+00> : vector<240x8xf32>
    %8 = tpu.matmul %5, %7, %cst_11 {dimension_numbers = #tpu.dot_dimension_numbers<[1], [0], [0], [1], [0, 0, 1, 1], [], []>} : vector<240x4xf32>, vector<4x8xf32>, vector<240x8xf32> -> vector<240x8xf32>
    %9 = arith.addf %4, %8 : vector<240x8xf32>
    %c1 = arith.constant 1 : index
    %c0_12 = arith.constant 0 : index
    %10 = vector.load %arg7[%c1, %c0_12] : memref<280x4xf32, #tpu.memory_space<vmem>>, vector<240x4xf32>
    %c1_13 = arith.constant 1 : index
    %c0_14 = arith.constant 0 : index
    %c0_15 = arith.constant 0 : index
    %11 = vector.load %arg4[%c1_13, %c0_14, %c0_15] : memref<9x4x8xf32, #tpu.memory_space<vmem>>, vector<1x4x8xf32>
    %12 = vector.shape_cast %11 : vector<1x4x8xf32> to vector<4x8xf32>
    %cst_16 = arith.constant dense<0.000000e+00> : vector<240x8xf32>
    %13 = tpu.matmul %10, %12, %cst_16 {dimension_numbers = #tpu.dot_dimension_numbers<[1], [0], [0], [1], [0, 0, 1, 1], [], []>} : vector<240x4xf32>, vector<4x8xf32>, vector<240x8xf32> -> vector<240x8xf32>
    %14 = arith.addf %9, %13 : vector<240x8xf32>
    %c2 = arith.constant 2 : index
    %c0_17 = arith.constant 0 : index
    %15 = vector.load %arg7[%c2, %c0_17] : memref<280x4xf32, #tpu.memory_space<vmem>>, vector<240x4xf32>
    %c2_18 = arith.constant 2 : index
    %c0_19 = arith.constant 0 : index
    %c0_20 = arith.constant 0 : index
    %16 = vector.load %arg4[%c2_18, %c0_19, %c0_20] : memref<9x4x8xf32, #tpu.memory_space<vmem>>, vector<1x4x8xf32>
    %17 = vector.shape_cast %16 : vector<1x4x8xf32> to vector<4x8xf32>
    %cst_21 = arith.constant dense<0.000000e+00> : vector<240x8xf32>
    %18 = tpu.matmul %15, %17, %cst_21 {dimension_numbers = #tpu.dot_dimension_numbers<[1], [0], [0], [1], [0, 0, 1, 1], [], []>} : vector<240x4xf32>, vector<4x8xf32>, vector<240x8xf32> -> vector<240x8xf32>
    %19 = arith.addf %14, %18 : vector<240x8xf32>
    %c18 = arith.constant 18 : index
    %c0_22 = arith.constant 0 : index
    %20 = vector.load %arg7[%c18, %c0_22] : memref<280x4xf32, #tpu.memory_space<vmem>>, vector<240x4xf32>
    %c3 = arith.constant 3 : index
    %c0_23 = arith.constant 0 : index
    %c0_24 = arith.constant 0 : index
    %21 = vector.load %arg4[%c3, %c0_23, %c0_24] : memref<9x4x8xf32, #tpu.memory_space<vmem>>, vector<1x4x8xf32>
    %22 = vector.shape_cast %21 : vector<1x4x8xf32> to vector<4x8xf32>
    %cst_25 = arith.constant dense<0.000000e+00> : vector<240x8xf32>
    %23 = tpu.matmul %20, %22, %cst_25 {dimension_numbers = #tpu.dot_dimension_numbers<[1], [0], [0], [1], [0, 0, 1, 1], [], []>} : vector<240x4xf32>, vector<4x8xf32>, vector<240x8xf32> -> vector<240x8xf32>
    %24 = arith.addf %19, %23 : vector<240x8xf32>
    %c19 = arith.constant 19 : index
    %c0_26 = arith.constant 0 : index
    %25 = vector.load %arg7[%c19, %c0_26] : memref<280x4xf32, #tpu.memory_space<vmem>>, vector<240x4xf32>
    %c4 = arith.constant 4 : index
    %c0_27 = arith.constant 0 : index
    %c0_28 = arith.constant 0 : index
    %26 = vector.load %arg4[%c4, %c0_27, %c0_28] : memref<9x4x8xf32, #tpu.memory_space<vmem>>, vector<1x4x8xf32>
    %27 = vector.shape_cast %26 : vector<1x4x8xf32> to vector<4x8xf32>
    %cst_29 = arith.constant dense<0.000000e+00> : vector<240x8xf32>
    %28 = tpu.matmul %25, %27, %cst_29 {dimension_numbers = #tpu.dot_dimension_numbers<[1], [0], [0], [1], [0, 0, 1, 1], [], []>} : vector<240x4xf32>, vector<4x8xf32>, vector<240x8xf32> -> vector<240x8xf32>
    %29 = arith.addf %24, %28 : vector<240x8xf32>
    %c20 = arith.constant 20 : index
    %c0_30 = arith.constant 0 : index
    %30 = vector.load %arg7[%c20, %c0_30] : memref<280x4xf32, #tpu.memory_space<vmem>>, vector<240x4xf32>
    %c5 = arith.constant 5 : index
    %c0_31 = arith.constant 0 : index
    %c0_32 = arith.constant 0 : index
    %31 = vector.load %arg4[%c5, %c0_31, %c0_32] : memref<9x4x8xf32, #tpu.memory_space<vmem>>, vector<1x4x8xf32>
    %32 = vector.shape_cast %31 : vector<1x4x8xf32> to vector<4x8xf32>
    %cst_33 = arith.constant dense<0.000000e+00> : vector<240x8xf32>
    %33 = tpu.matmul %30, %32, %cst_33 {dimension_numbers = #tpu.dot_dimension_numbers<[1], [0], [0], [1], [0, 0, 1, 1], [], []>} : vector<240x4xf32>, vector<4x8xf32>, vector<240x8xf32> -> vector<240x8xf32>
    %34 = arith.addf %29, %33 : vector<240x8xf32>
    %c36 = arith.constant 36 : index
    %c0_34 = arith.constant 0 : index
    %35 = vector.load %arg7[%c36, %c0_34] : memref<280x4xf32, #tpu.memory_space<vmem>>, vector<240x4xf32>
    %c6 = arith.constant 6 : index
    %c0_35 = arith.constant 0 : index
    %c0_36 = arith.constant 0 : index
    %36 = vector.load %arg4[%c6, %c0_35, %c0_36] : memref<9x4x8xf32, #tpu.memory_space<vmem>>, vector<1x4x8xf32>
    %37 = vector.shape_cast %36 : vector<1x4x8xf32> to vector<4x8xf32>
    %cst_37 = arith.constant dense<0.000000e+00> : vector<240x8xf32>
    %38 = tpu.matmul %35, %37, %cst_37 {dimension_numbers = #tpu.dot_dimension_numbers<[1], [0], [0], [1], [0, 0, 1, 1], [], []>} : vector<240x4xf32>, vector<4x8xf32>, vector<240x8xf32> -> vector<240x8xf32>
    %39 = arith.addf %34, %38 : vector<240x8xf32>
    %c37 = arith.constant 37 : index
    %c0_38 = arith.constant 0 : index
    %40 = vector.load %arg7[%c37, %c0_38] : memref<280x4xf32, #tpu.memory_space<vmem>>, vector<240x4xf32>
    %c7 = arith.constant 7 : index
    %c0_39 = arith.constant 0 : index
    %c0_40 = arith.constant 0 : index
    %41 = vector.load %arg4[%c7, %c0_39, %c0_40] : memref<9x4x8xf32, #tpu.memory_space<vmem>>, vector<1x4x8xf32>
    %42 = vector.shape_cast %41 : vector<1x4x8xf32> to vector<4x8xf32>
    %cst_41 = arith.constant dense<0.000000e+00> : vector<240x8xf32>
    %43 = tpu.matmul %40, %42, %cst_41 {dimension_numbers = #tpu.dot_dimension_numbers<[1], [0], [0], [1], [0, 0, 1, 1], [], []>} : vector<240x4xf32>, vector<4x8xf32>, vector<240x8xf32> -> vector<240x8xf32>
    %44 = arith.addf %39, %43 : vector<240x8xf32>
    %c38 = arith.constant 38 : index
    %c0_42 = arith.constant 0 : index
    %45 = vector.load %arg7[%c38, %c0_42] : memref<280x4xf32, #tpu.memory_space<vmem>>, vector<240x4xf32>
    %c8 = arith.constant 8 : index
    %c0_43 = arith.constant 0 : index
    %c0_44 = arith.constant 0 : index
    %46 = vector.load %arg4[%c8, %c0_43, %c0_44] : memref<9x4x8xf32, #tpu.memory_space<vmem>>, vector<1x4x8xf32>
    %47 = vector.shape_cast %46 : vector<1x4x8xf32> to vector<4x8xf32>
    %cst_45 = arith.constant dense<0.000000e+00> : vector<240x8xf32>
    %48 = tpu.matmul %45, %47, %cst_45 {dimension_numbers = #tpu.dot_dimension_numbers<[1], [0], [0], [1], [0, 0, 1, 1], [], []>} : vector<240x4xf32>, vector<4x8xf32>, vector<240x8xf32> -> vector<240x8xf32>
    %49 = arith.addf %44, %48 : vector<240x8xf32>
    %c0_46 = arith.constant 0 : index
    %c0_47 = arith.constant 0 : index
    %50 = vector.load %arg5[%c0_46, %c0_47] : memref<240x8xf32, #tpu.memory_space<vmem>>, vector<240x8xf32>
    tpu.vector_store %arg5[%c0_46, %c0_47], %49 {strides = array<i32>} : memref<240x8xf32, #tpu.memory_space<vmem>>, vector<240x8xf32>,
    %c0_48 = arith.constant 0 : index
    %c0_49 = arith.constant 0 : index
    %51 = vector.load %arg3[%c0_48, %c0_49] : memref<240x1xf32, #tpu.memory_space<vmem>>, vector<240x1xf32>
    %52 = vector.broadcast %51 : vector<240x1xf32> to vector<240x8xf32>
    %53 = arith.mulf %49, %52 : vector<240x8xf32>
    %cst_50 = arith.constant dense<0.000000e+00> : vector<8xf32>
    %54 = vector.multi_reduction <add>, %53, %cst_50 [0] : vector<240x8xf32> to vector<8xf32>
    %55 = vector.shape_cast %54 : vector<8xf32> to vector<1x8xf32>
    %56 = arith.mulf %53, %49 : vector<240x8xf32>
    %cst_51 = arith.constant dense<0.000000e+00> : vector<8xf32>
    %57 = vector.multi_reduction <add>, %56, %cst_51 [0] : vector<240x8xf32> to vector<8xf32>
    %58 = vector.shape_cast %57 : vector<8xf32> to vector<1x8xf32>
    %59 = tpu.concatenate %55, %58 in 0 : vector<1x8xf32>, vector<1x8xf32> -> vector<2x8xf32>
    %60 = vector.shape_cast %59 : vector<2x8xf32> to vector<1x2x8xf32>
    %c0_52 = arith.constant 0 : index
    %c0_53 = arith.constant 0 : index
    %c0_54 = arith.constant 0 : index
    %61 = vector.load %arg6[%c0_52, %c0_53, %c0_54] : memref<1x2x8xf32, #tpu.memory_space<vmem>>, vector<1x2x8xf32>
    tpu.vector_store %arg6[%c0_52, %c0_53, %c0_54], %60 {strides = array<i32>} : memref<1x2x8xf32, #tpu.memory_space<vmem>>, vector<1x2x8xf32>,
    return
  }
  func.func @transform_0(%arg0: i32) -> (i32, i32) {
    %c0_i32 = arith.constant 0 : i32
    %c0_i32_0 = arith.constant 0 : i32
    return %arg0, %c0_i32 : i32, i32
  }
  func.func @transform_1(%arg0: i32) -> (i32, i32) {
    %c1_i32 = arith.constant 1 : i32
    %0 = arith.addi %arg0, %c1_i32 : i32
    %c6_i32 = arith.constant 6 : i32
    %1 = arith.muli %0, %c6_i32 : i32
    %c0_i32 = arith.constant 0 : i32
    %c0_i32_0 = arith.constant 0 : i32
    return %1, %c0_i32 : i32, i32
  }
  func.func @transform_2(%arg0: i32) -> (i32, i32) {
    %c0_i32 = arith.constant 0 : i32
    %c0_i32_0 = arith.constant 0 : i32
    return %arg0, %c0_i32 : i32, i32
  }
  func.func @transform_3(%arg0: i32) -> (i32, i32, i32) {
    %c0_i32 = arith.constant 0 : i32
    %c0_i32_0 = arith.constant 0 : i32
    %c0_i32_1 = arith.constant 0 : i32
    %c0_i32_2 = arith.constant 0 : i32
    return %c0_i32, %c0_i32_0, %c0_i32_1 : i32, i32, i32
  }
  func.func @transform_4(%arg0: i32) -> (i32, i32) {
    %c0_i32 = arith.constant 0 : i32
    %c0_i32_0 = arith.constant 0 : i32
    return %arg0, %c0_i32 : i32, i32
  }
  func.func @transform_5(%arg0: i32) -> (i32, i32, i32) {
    %c0_i32 = arith.constant 0 : i32
    %c0_i32_0 = arith.constant 0 : i32
    %c0_i32_1 = arith.constant 0 : i32
    return %arg0, %c0_i32, %c0_i32_0 : i32, i32, i32
  }
}

module attributes {stable_mosaic.version = 11 : i64} {
  func.func @_conv_stats_kernel(%arg0: i32, %arg1: memref<2x8xf32, #tpu.memory_space<vmem>>, %arg2: memref<240x1xf32, #tpu.memory_space<vmem>>, %arg3: memref<40x1xf32, #tpu.memory_space<vmem>>, %arg4: memref<240x8xf32, #tpu.memory_space<vmem>>, %arg5: memref<40x8xf32, #tpu.memory_space<vmem>>, %arg6: memref<240x1xf32, #tpu.memory_space<vmem>>, %arg7: memref<9x8x8xf32, #tpu.memory_space<vmem>>, %arg8: memref<240x8xf32, #tpu.memory_space<vmem>>, %arg9: memref<1x2x8xf32, #tpu.memory_space<vmem>>, %arg10: memref<280x8xf32, #tpu.memory_space<vmem>>) attributes {dimension_semantics = [#tpu.dimension_semantics<parallel>], iteration_bounds = array<i64: 3>, scalar_prefetch = 0 : i64, scratch_operands = 1 : i64, tpu.core_type = #tpu.core_type<tc>, window_params = [{pipeline_mode = #tpu.pipeline_mode<synchronous>, transform_indices = @transform_0, window_bounds = array<i64: 2, 8>}, {transform_indices = @transform_1, window_bounds = array<i64: 240, 1>}, {transform_indices = @transform_2, window_bounds = array<i64: 40, 1>}, {transform_indices = @transform_3, window_bounds = array<i64: 240, 8>}, {transform_indices = @transform_4, window_bounds = array<i64: 40, 8>}, {transform_indices = @transform_5, window_bounds = array<i64: 240, 1>}, {pipeline_mode = #tpu.pipeline_mode<synchronous>, transform_indices = @transform_6, window_bounds = array<i64: 9, 8, 8>}, {transform_indices = @transform_7, window_bounds = array<i64: 240, 8>}, {transform_indices = @transform_8, window_bounds = array<i64: 1, 2, 8>}]} {
    %c0 = arith.constant 0 : index
    %c0_0 = arith.constant 0 : index
    %0 = vector.load %arg1[%c0, %c0_0] : memref<2x8xf32, #tpu.memory_space<vmem>>, vector<1x8xf32>
    %c1 = arith.constant 1 : index
    %c0_1 = arith.constant 0 : index
    %1 = vector.load %arg1[%c1, %c0_1] : memref<2x8xf32, #tpu.memory_space<vmem>>, vector<1x8xf32>
    %c0_2 = arith.constant 0 : index
    %c0_3 = arith.constant 0 : index
    %2 = vector.load %arg4[%c0_2, %c0_3] : memref<240x8xf32, #tpu.memory_space<vmem>>, vector<240x8xf32>
    %3 = vector.broadcast %0 : vector<1x8xf32> to vector<240x8xf32>
    %4 = arith.mulf %2, %3 : vector<240x8xf32>
    %5 = vector.broadcast %1 : vector<1x8xf32> to vector<240x8xf32>
    %6 = arith.addf %4, %5 : vector<240x8xf32>
    %cst = arith.constant 0.000000e+00 : f32
    %7 = vector.broadcast %cst : f32 to vector<240x8xf32>
    %8 = arith.maximumf %6, %7 : vector<240x8xf32>
    %c0_4 = arith.constant 0 : index
    %c0_5 = arith.constant 0 : index
    %9 = vector.load %arg5[%c0_4, %c0_5] : memref<40x8xf32, #tpu.memory_space<vmem>>, vector<40x8xf32>
    %10 = vector.broadcast %0 : vector<1x8xf32> to vector<40x8xf32>
    %11 = arith.mulf %9, %10 : vector<40x8xf32>
    %12 = vector.broadcast %1 : vector<1x8xf32> to vector<40x8xf32>
    %13 = arith.addf %11, %12 : vector<40x8xf32>
    %cst_6 = arith.constant 0.000000e+00 : f32
    %14 = vector.broadcast %cst_6 : f32 to vector<40x8xf32>
    %15 = arith.maximumf %13, %14 : vector<40x8xf32>
    %c0_7 = arith.constant 0 : index
    %c0_8 = arith.constant 0 : index
    %16 = vector.load %arg2[%c0_7, %c0_8] : memref<240x1xf32, #tpu.memory_space<vmem>>, vector<240x1xf32>
    %17 = vector.broadcast %16 : vector<240x1xf32> to vector<240x8xf32>
    %18 = arith.mulf %8, %17 : vector<240x8xf32>
    %c0_9 = arith.constant 0 : index
    %c0_10 = arith.constant 0 : index
    %19 = vector.load %arg10[%c0_9, %c0_10] : memref<280x8xf32, #tpu.memory_space<vmem>>, vector<240x8xf32>
    tpu.vector_store %arg10[%c0_9, %c0_10], %18 {strides = array<i32>} : memref<280x8xf32, #tpu.memory_space<vmem>>, vector<240x8xf32>,
    %c0_11 = arith.constant 0 : index
    %c0_12 = arith.constant 0 : index
    %20 = vector.load %arg3[%c0_11, %c0_12] : memref<40x1xf32, #tpu.memory_space<vmem>>, vector<40x1xf32>
    %21 = vector.broadcast %20 : vector<40x1xf32> to vector<40x8xf32>
    %22 = arith.mulf %15, %21 : vector<40x8xf32>
    %c240 = arith.constant 240 : index
    %c0_13 = arith.constant 0 : index
    %23 = vector.load %arg10[%c240, %c0_13] : memref<280x8xf32, #tpu.memory_space<vmem>>, vector<40x8xf32>
    tpu.vector_store %arg10[%c240, %c0_13], %22 {strides = array<i32>} : memref<280x8xf32, #tpu.memory_space<vmem>>, vector<40x8xf32>,
    %cst_14 = arith.constant 0.000000e+00 : f32
    %24 = vector.broadcast %cst_14 : f32 to vector<240x8xf32>
    %c0_15 = arith.constant 0 : index
    %c0_16 = arith.constant 0 : index
    %25 = vector.load %arg10[%c0_15, %c0_16] : memref<280x8xf32, #tpu.memory_space<vmem>>, vector<240x8xf32>
    %c0_17 = arith.constant 0 : index
    %c0_18 = arith.constant 0 : index
    %c0_19 = arith.constant 0 : index
    %26 = vector.load %arg7[%c0_17, %c0_18, %c0_19] : memref<9x8x8xf32, #tpu.memory_space<vmem>>, vector<1x8x8xf32>
    %27 = vector.shape_cast %26 : vector<1x8x8xf32> to vector<8x8xf32>
    %cst_20 = arith.constant dense<0.000000e+00> : vector<240x8xf32>
    %28 = tpu.matmul %25, %27, %cst_20 {dimension_numbers = #tpu.dot_dimension_numbers<[1], [0], [0], [1], [0, 0, 1, 1], [], []>} : vector<240x8xf32>, vector<8x8xf32>, vector<240x8xf32> -> vector<240x8xf32>
    %29 = arith.addf %24, %28 : vector<240x8xf32>
    %c1_21 = arith.constant 1 : index
    %c0_22 = arith.constant 0 : index
    %30 = vector.load %arg10[%c1_21, %c0_22] : memref<280x8xf32, #tpu.memory_space<vmem>>, vector<240x8xf32>
    %c1_23 = arith.constant 1 : index
    %c0_24 = arith.constant 0 : index
    %c0_25 = arith.constant 0 : index
    %31 = vector.load %arg7[%c1_23, %c0_24, %c0_25] : memref<9x8x8xf32, #tpu.memory_space<vmem>>, vector<1x8x8xf32>
    %32 = vector.shape_cast %31 : vector<1x8x8xf32> to vector<8x8xf32>
    %cst_26 = arith.constant dense<0.000000e+00> : vector<240x8xf32>
    %33 = tpu.matmul %30, %32, %cst_26 {dimension_numbers = #tpu.dot_dimension_numbers<[1], [0], [0], [1], [0, 0, 1, 1], [], []>} : vector<240x8xf32>, vector<8x8xf32>, vector<240x8xf32> -> vector<240x8xf32>
    %34 = arith.addf %29, %33 : vector<240x8xf32>
    %c2 = arith.constant 2 : index
    %c0_27 = arith.constant 0 : index
    %35 = vector.load %arg10[%c2, %c0_27] : memref<280x8xf32, #tpu.memory_space<vmem>>, vector<240x8xf32>
    %c2_28 = arith.constant 2 : index
    %c0_29 = arith.constant 0 : index
    %c0_30 = arith.constant 0 : index
    %36 = vector.load %arg7[%c2_28, %c0_29, %c0_30] : memref<9x8x8xf32, #tpu.memory_space<vmem>>, vector<1x8x8xf32>
    %37 = vector.shape_cast %36 : vector<1x8x8xf32> to vector<8x8xf32>
    %cst_31 = arith.constant dense<0.000000e+00> : vector<240x8xf32>
    %38 = tpu.matmul %35, %37, %cst_31 {dimension_numbers = #tpu.dot_dimension_numbers<[1], [0], [0], [1], [0, 0, 1, 1], [], []>} : vector<240x8xf32>, vector<8x8xf32>, vector<240x8xf32> -> vector<240x8xf32>
    %39 = arith.addf %34, %38 : vector<240x8xf32>
    %c18 = arith.constant 18 : index
    %c0_32 = arith.constant 0 : index
    %40 = vector.load %arg10[%c18, %c0_32] : memref<280x8xf32, #tpu.memory_space<vmem>>, vector<240x8xf32>
    %c3 = arith.constant 3 : index
    %c0_33 = arith.constant 0 : index
    %c0_34 = arith.constant 0 : index
    %41 = vector.load %arg7[%c3, %c0_33, %c0_34] : memref<9x8x8xf32, #tpu.memory_space<vmem>>, vector<1x8x8xf32>
    %42 = vector.shape_cast %41 : vector<1x8x8xf32> to vector<8x8xf32>
    %cst_35 = arith.constant dense<0.000000e+00> : vector<240x8xf32>
    %43 = tpu.matmul %40, %42, %cst_35 {dimension_numbers = #tpu.dot_dimension_numbers<[1], [0], [0], [1], [0, 0, 1, 1], [], []>} : vector<240x8xf32>, vector<8x8xf32>, vector<240x8xf32> -> vector<240x8xf32>
    %44 = arith.addf %39, %43 : vector<240x8xf32>
    %c19 = arith.constant 19 : index
    %c0_36 = arith.constant 0 : index
    %45 = vector.load %arg10[%c19, %c0_36] : memref<280x8xf32, #tpu.memory_space<vmem>>, vector<240x8xf32>
    %c4 = arith.constant 4 : index
    %c0_37 = arith.constant 0 : index
    %c0_38 = arith.constant 0 : index
    %46 = vector.load %arg7[%c4, %c0_37, %c0_38] : memref<9x8x8xf32, #tpu.memory_space<vmem>>, vector<1x8x8xf32>
    %47 = vector.shape_cast %46 : vector<1x8x8xf32> to vector<8x8xf32>
    %cst_39 = arith.constant dense<0.000000e+00> : vector<240x8xf32>
    %48 = tpu.matmul %45, %47, %cst_39 {dimension_numbers = #tpu.dot_dimension_numbers<[1], [0], [0], [1], [0, 0, 1, 1], [], []>} : vector<240x8xf32>, vector<8x8xf32>, vector<240x8xf32> -> vector<240x8xf32>
    %49 = arith.addf %44, %48 : vector<240x8xf32>
    %c20 = arith.constant 20 : index
    %c0_40 = arith.constant 0 : index
    %50 = vector.load %arg10[%c20, %c0_40] : memref<280x8xf32, #tpu.memory_space<vmem>>, vector<240x8xf32>
    %c5 = arith.constant 5 : index
    %c0_41 = arith.constant 0 : index
    %c0_42 = arith.constant 0 : index
    %51 = vector.load %arg7[%c5, %c0_41, %c0_42] : memref<9x8x8xf32, #tpu.memory_space<vmem>>, vector<1x8x8xf32>
    %52 = vector.shape_cast %51 : vector<1x8x8xf32> to vector<8x8xf32>
    %cst_43 = arith.constant dense<0.000000e+00> : vector<240x8xf32>
    %53 = tpu.matmul %50, %52, %cst_43 {dimension_numbers = #tpu.dot_dimension_numbers<[1], [0], [0], [1], [0, 0, 1, 1], [], []>} : vector<240x8xf32>, vector<8x8xf32>, vector<240x8xf32> -> vector<240x8xf32>
    %54 = arith.addf %49, %53 : vector<240x8xf32>
    %c36 = arith.constant 36 : index
    %c0_44 = arith.constant 0 : index
    %55 = vector.load %arg10[%c36, %c0_44] : memref<280x8xf32, #tpu.memory_space<vmem>>, vector<240x8xf32>
    %c6 = arith.constant 6 : index
    %c0_45 = arith.constant 0 : index
    %c0_46 = arith.constant 0 : index
    %56 = vector.load %arg7[%c6, %c0_45, %c0_46] : memref<9x8x8xf32, #tpu.memory_space<vmem>>, vector<1x8x8xf32>
    %57 = vector.shape_cast %56 : vector<1x8x8xf32> to vector<8x8xf32>
    %cst_47 = arith.constant dense<0.000000e+00> : vector<240x8xf32>
    %58 = tpu.matmul %55, %57, %cst_47 {dimension_numbers = #tpu.dot_dimension_numbers<[1], [0], [0], [1], [0, 0, 1, 1], [], []>} : vector<240x8xf32>, vector<8x8xf32>, vector<240x8xf32> -> vector<240x8xf32>
    %59 = arith.addf %54, %58 : vector<240x8xf32>
    %c37 = arith.constant 37 : index
    %c0_48 = arith.constant 0 : index
    %60 = vector.load %arg10[%c37, %c0_48] : memref<280x8xf32, #tpu.memory_space<vmem>>, vector<240x8xf32>
    %c7 = arith.constant 7 : index
    %c0_49 = arith.constant 0 : index
    %c0_50 = arith.constant 0 : index
    %61 = vector.load %arg7[%c7, %c0_49, %c0_50] : memref<9x8x8xf32, #tpu.memory_space<vmem>>, vector<1x8x8xf32>
    %62 = vector.shape_cast %61 : vector<1x8x8xf32> to vector<8x8xf32>
    %cst_51 = arith.constant dense<0.000000e+00> : vector<240x8xf32>
    %63 = tpu.matmul %60, %62, %cst_51 {dimension_numbers = #tpu.dot_dimension_numbers<[1], [0], [0], [1], [0, 0, 1, 1], [], []>} : vector<240x8xf32>, vector<8x8xf32>, vector<240x8xf32> -> vector<240x8xf32>
    %64 = arith.addf %59, %63 : vector<240x8xf32>
    %c38 = arith.constant 38 : index
    %c0_52 = arith.constant 0 : index
    %65 = vector.load %arg10[%c38, %c0_52] : memref<280x8xf32, #tpu.memory_space<vmem>>, vector<240x8xf32>
    %c8 = arith.constant 8 : index
    %c0_53 = arith.constant 0 : index
    %c0_54 = arith.constant 0 : index
    %66 = vector.load %arg7[%c8, %c0_53, %c0_54] : memref<9x8x8xf32, #tpu.memory_space<vmem>>, vector<1x8x8xf32>
    %67 = vector.shape_cast %66 : vector<1x8x8xf32> to vector<8x8xf32>
    %cst_55 = arith.constant dense<0.000000e+00> : vector<240x8xf32>
    %68 = tpu.matmul %65, %67, %cst_55 {dimension_numbers = #tpu.dot_dimension_numbers<[1], [0], [0], [1], [0, 0, 1, 1], [], []>} : vector<240x8xf32>, vector<8x8xf32>, vector<240x8xf32> -> vector<240x8xf32>
    %69 = arith.addf %64, %68 : vector<240x8xf32>
    %c0_56 = arith.constant 0 : index
    %c0_57 = arith.constant 0 : index
    %70 = vector.load %arg8[%c0_56, %c0_57] : memref<240x8xf32, #tpu.memory_space<vmem>>, vector<240x8xf32>
    tpu.vector_store %arg8[%c0_56, %c0_57], %69 {strides = array<i32>} : memref<240x8xf32, #tpu.memory_space<vmem>>, vector<240x8xf32>,
    %c0_58 = arith.constant 0 : index
    %c0_59 = arith.constant 0 : index
    %71 = vector.load %arg6[%c0_58, %c0_59] : memref<240x1xf32, #tpu.memory_space<vmem>>, vector<240x1xf32>
    %72 = vector.broadcast %71 : vector<240x1xf32> to vector<240x8xf32>
    %73 = arith.mulf %69, %72 : vector<240x8xf32>
    %cst_60 = arith.constant dense<0.000000e+00> : vector<8xf32>
    %74 = vector.multi_reduction <add>, %73, %cst_60 [0] : vector<240x8xf32> to vector<8xf32>
    %75 = vector.shape_cast %74 : vector<8xf32> to vector<1x8xf32>
    %76 = arith.mulf %73, %69 : vector<240x8xf32>
    %cst_61 = arith.constant dense<0.000000e+00> : vector<8xf32>
    %77 = vector.multi_reduction <add>, %76, %cst_61 [0] : vector<240x8xf32> to vector<8xf32>
    %78 = vector.shape_cast %77 : vector<8xf32> to vector<1x8xf32>
    %79 = tpu.concatenate %75, %78 in 0 : vector<1x8xf32>, vector<1x8xf32> -> vector<2x8xf32>
    %80 = vector.shape_cast %79 : vector<2x8xf32> to vector<1x2x8xf32>
    %c0_62 = arith.constant 0 : index
    %c0_63 = arith.constant 0 : index
    %c0_64 = arith.constant 0 : index
    %81 = vector.load %arg9[%c0_62, %c0_63, %c0_64] : memref<1x2x8xf32, #tpu.memory_space<vmem>>, vector<1x2x8xf32>
    tpu.vector_store %arg9[%c0_62, %c0_63, %c0_64], %80 {strides = array<i32>} : memref<1x2x8xf32, #tpu.memory_space<vmem>>, vector<1x2x8xf32>,
    return
  }
  func.func @transform_0(%arg0: i32) -> (i32, i32) {
    %c0_i32 = arith.constant 0 : i32
    %c0_i32_0 = arith.constant 0 : i32
    %c0_i32_1 = arith.constant 0 : i32
    return %c0_i32, %c0_i32_0 : i32, i32
  }
  func.func @transform_1(%arg0: i32) -> (i32, i32) {
    %c0_i32 = arith.constant 0 : i32
    %c0_i32_0 = arith.constant 0 : i32
    return %arg0, %c0_i32 : i32, i32
  }
  func.func @transform_2(%arg0: i32) -> (i32, i32) {
    %c1_i32 = arith.constant 1 : i32
    %0 = arith.addi %arg0, %c1_i32 : i32
    %c6_i32 = arith.constant 6 : i32
    %1 = arith.muli %0, %c6_i32 : i32
    %c0_i32 = arith.constant 0 : i32
    %c0_i32_0 = arith.constant 0 : i32
    return %1, %c0_i32 : i32, i32
  }
  func.func @transform_3(%arg0: i32) -> (i32, i32) {
    %c0_i32 = arith.constant 0 : i32
    %c0_i32_0 = arith.constant 0 : i32
    return %arg0, %c0_i32 : i32, i32
  }
  func.func @transform_4(%arg0: i32) -> (i32, i32) {
    %c1_i32 = arith.constant 1 : i32
    %0 = arith.addi %arg0, %c1_i32 : i32
    %c6_i32 = arith.constant 6 : i32
    %1 = arith.muli %0, %c6_i32 : i32
    %c0_i32 = arith.constant 0 : i32
    %c0_i32_0 = arith.constant 0 : i32
    return %1, %c0_i32 : i32, i32
  }
  func.func @transform_5(%arg0: i32) -> (i32, i32) {
    %c0_i32 = arith.constant 0 : i32
    %c0_i32_0 = arith.constant 0 : i32
    return %arg0, %c0_i32 : i32, i32
  }
  func.func @transform_6(%arg0: i32) -> (i32, i32, i32) {
    %c0_i32 = arith.constant 0 : i32
    %c0_i32_0 = arith.constant 0 : i32
    %c0_i32_1 = arith.constant 0 : i32
    %c0_i32_2 = arith.constant 0 : i32
    return %c0_i32, %c0_i32_0, %c0_i32_1 : i32, i32, i32
  }
  func.func @transform_7(%arg0: i32) -> (i32, i32) {
    %c0_i32 = arith.constant 0 : i32
    %c0_i32_0 = arith.constant 0 : i32
    return %arg0, %c0_i32 : i32, i32
  }
  func.func @transform_8(%arg0: i32) -> (i32, i32, i32) {
    %c0_i32 = arith.constant 0 : i32
    %c0_i32_0 = arith.constant 0 : i32
    %c0_i32_1 = arith.constant 0 : i32
    return %arg0, %c0_i32, %c0_i32_0 : i32, i32, i32
  }
}

module attributes {stable_mosaic.version = 11 : i64} {
  func.func @_bn_relu_kernel(%arg0: i32, %arg1: memref<240x8xf32, #tpu.memory_space<vmem>>, %arg2: memref<2x8xf32, #tpu.memory_space<vmem>>, %arg3: memref<240x8xf32, #tpu.memory_space<vmem>>) attributes {dimension_semantics = [#tpu.dimension_semantics<parallel>], iteration_bounds = array<i64: 3>, scalar_prefetch = 0 : i64, scratch_operands = 0 : i64, tpu.core_type = #tpu.core_type<tc>, window_params = [{transform_indices = @transform_0, window_bounds = array<i64: 240, 8>}, {pipeline_mode = #tpu.pipeline_mode<synchronous>, transform_indices = @transform_1, window_bounds = array<i64: 2, 8>}, {transform_indices = @transform_2, window_bounds = array<i64: 240, 8>}]} {
    %c0 = arith.constant 0 : index
    %c0_0 = arith.constant 0 : index
    %0 = vector.load %arg1[%c0, %c0_0] : memref<240x8xf32, #tpu.memory_space<vmem>>, vector<240x8xf32>
    %c0_1 = arith.constant 0 : index
    %c0_2 = arith.constant 0 : index
    %1 = vector.load %arg2[%c0_1, %c0_2] : memref<2x8xf32, #tpu.memory_space<vmem>>, vector<1x8xf32>
    %2 = vector.broadcast %1 : vector<1x8xf32> to vector<240x8xf32>
    %3 = arith.mulf %0, %2 : vector<240x8xf32>
    %c1 = arith.constant 1 : index
    %c0_3 = arith.constant 0 : index
    %4 = vector.load %arg2[%c1, %c0_3] : memref<2x8xf32, #tpu.memory_space<vmem>>, vector<1x8xf32>
    %5 = vector.broadcast %4 : vector<1x8xf32> to vector<240x8xf32>
    %6 = arith.addf %3, %5 : vector<240x8xf32>
    %cst = arith.constant 0.000000e+00 : f32
    %7 = vector.broadcast %cst : f32 to vector<240x8xf32>
    %8 = arith.maximumf %6, %7 : vector<240x8xf32>
    %c0_4 = arith.constant 0 : index
    %c0_5 = arith.constant 0 : index
    %9 = vector.load %arg3[%c0_4, %c0_5] : memref<240x8xf32, #tpu.memory_space<vmem>>, vector<240x8xf32>
    tpu.vector_store %arg3[%c0_4, %c0_5], %8 {strides = array<i32>} : memref<240x8xf32, #tpu.memory_space<vmem>>, vector<240x8xf32>,
    return
  }
  func.func @transform_0(%arg0: i32) -> (i32, i32) {
    %c0_i32 = arith.constant 0 : i32
    %c0_i32_0 = arith.constant 0 : i32
    return %arg0, %c0_i32 : i32, i32
  }
  func.func @transform_1(%arg0: i32) -> (i32, i32) {
    %c0_i32 = arith.constant 0 : i32
    %c0_i32_0 = arith.constant 0 : i32
    %c0_i32_1 = arith.constant 0 : i32
    return %c0_i32, %c0_i32_0 : i32, i32
  }
  func.func @transform_2(%arg0: i32) -> (i32, i32) {
    %c0_i32 = arith.constant 0 : i32
    %c0_i32_0 = arith.constant 0 : i32
    return %arg0, %c0_i32 : i32, i32
  }
}

</mosaic_0001>

<llo_original>
// kernel: double_conv2d.3
$region0: #{double_conv2d.3}
  #allocation0 [shape = 'u32[]', space=smem, size = 0x4, offset = 0x4, fixed_abs, tag = 'smem constant byte address 0x4 - core index']
  #allocation1 [shape = 'u32[144,128]{1,0:T(1,128)}', space=vmem, size = 0x12000, scoped, tag = 'internal scratch']
  #allocation2 [shape = 'f32[280,4]{1,0:T(8,128)}', space=vmem, size = 0x23000, scoped, tag = 'scratch operand']
  %s0 = inlined_call_operand.vmem [shape: f32[1200,4], index: 0, kind: input, shape index: {}, may-alias: {0,1}]
  %s1 = inlined_call_operand.vmem [shape: f32[1200,4], index: 1, kind: input, shape index: {}, may-alias: {0,1}]
  %s2 = inlined_call_operand.vmem [shape: f32[960,1], index: 2, kind: input, shape index: {}]
  %s3 = inlined_call_operand.vmem [shape: f32[9,4,8], index: 3, kind: input, shape index: {}]
  %s4 = inlined_call_operand.vmem [shape: f32[960,8], index: 4, kind: output, shape index: {0}]
  %s5 = inlined_call_operand.vmem [shape: f32[4,2,8], index: 5, kind: output, shape index: {1}]
  %6 = xla_tuple %s4, %s5
  %s7 = sld [smem:[#allocation0]]
  $region57: #{double_conv2d.3} parent=0
    _
  %s9 = ssub.s32 1, %s7
  %s10 = scalar_select 0, %s9, %s7
  loop: start=0, step=1, limit=6
  $region2: #{double_conv2d.3} parent=0 // loop_pre_header
    _
  $region3: #{double_conv2d.3} parent=0 // loop_header
    %s12 = sphi 0, %s16
    %p13 = scmp.ge.s32.totalorder %s12, 6
    %s22 = sphi 0, %s24
    %s25 = sphi 0, %s22
    %s26 = sphi 0, %s25
    %s42 = sphi 0, %s26
    %s52 = sphi 0, %s54
    %s55 = sphi 0, %s52
    %s56 = sphi 0, %s55
    %s72 = sphi 0, %s56
    %s78 = sphi 0, %s80
    %s81 = sphi 0, %s78
    %s82 = sphi 0, %s81
    %s98 = sphi 0, %s82
    %s102 = sphi 0, %s102
    %s104 = sphi 0, %s102
    %s105 = sphi 0, %s104
    %s119 = sphi 0, %s105
    %s125 = sphi 0, %s127
    %s128 = sphi 0, %s125
    %s129 = sphi 0, %s128
    %s145 = sphi 0, %s129
    %s151 = sphi 0, %s153
    %s154 = sphi 0, %s151
    %s155 = sphi 0, %s154
    %s171 = sphi 0, %s155
  $region4: #{double_conv2d.3} parent=0 // loop_header_branch
    %15 = sbr.rel (%p13) target = $region8
  $region5: #{double_conv2d.3} parent=0 // loop_body
    %s17 = ssub.s32 %s12, 1
    %s18 = ssub.s32 %s12, 2
    %s19 = sadd.s32 %s12, 1
    %s20 = ssub.s32 %s12, %s19
    %p21 = scmp.eq.s32.totalorder %s20, 0
    %s23 = sadd.s32 %s22, 1
    %s24 = scalar_select %p21, %s22, %s23
    %p27 = pneg %p21
    %p28 = scmp.eq.s32.totalorder %s12, 3
    %p29 = por %p27, %p28
    %p30 = scmp.ne.s32.totalorder %s22, %s25
    %p31 = scmp.eq.s32.totalorder %s12, 0
    %p32 = por %p30, %p31
    %p33 = scmp.ne.s32.totalorder %s22, %s25
    %p34 = scmp.eq.s32.totalorder %s17, 3
    %p35 = por %p33, %p34
    %p36 = scmp.ne.s32.totalorder %s25, %s26
    %p37 = scmp.eq.s32.totalorder %s17, 0
    %p38 = por %p36, %p37
    %p39 = scmp.ne.s32.totalorder %s25, %s26
    %p40 = scmp.eq.s32.totalorder %s18, 3
    %p41 = por %p39, %p40
    %p43 = scmp.ne.s32.totalorder %s26, %s42
    %p44 = scmp.eq.s32.totalorder %s18, 0
    %p45 = por %p43, %p44
    %s46 = sadd.s32 %s12, 1
    %s47 = smul.u32 %s46, 6
    %s48 = sadd.s32 %s19, 1
    %s49 = smul.u32 %s48, 6
    %s50 = ssub.s32 %s47, %s49
    %p51 = scmp.eq.s32.totalorder %s50, 0
    %s53 = sadd.s32 %s52, 1
    %s54 = scalar_select %p51, %s52, %s53
    %p57 = pneg %p51
    %p58 = scmp.eq.s32.totalorder %s12, 3
    %p59 = por %p57, %p58
    %p60 = scmp.ne.s32.totalorder %s52, %s55
    %p61 = scmp.eq.s32.totalorder %s12, 0
    %p62 = por %p60, %p61
    %p63 = scmp.ne.s32.totalorder %s52, %s55
    %p64 = scmp.eq.s32.totalorder %s17, 3
    %p65 = por %p63, %p64
    %p66 = scmp.ne.s32.totalorder %s55, %s56
    %p67 = scmp.eq.s32.totalorder %s17, 0
    %p68 = por %p66, %p67
    %p69 = scmp.ne.s32.totalorder %s55, %s56
    %p70 = scmp.eq.s32.totalorder %s18, 3
    %p71 = por %p69, %p70
    %p73 = scmp.ne.s32.totalorder %s56, %s72
    %p74 = scmp.eq.s32.totalorder %s18, 0
    %p75 = por %p73, %p74
    %s76 = ssub.s32 %s12, %s19
    %p77 = scmp.eq.s32.totalorder %s76, 0
    %s79 = sadd.s32 %s78, 1
    %s80 = scalar_select %p77, %s78, %s79
    %p83 = pneg %p77
    %p84 = scmp.eq.s32.totalorder %s12, 3
    %p85 = por %p83, %p84
    %p86 = scmp.ne.s32.totalorder %s78, %s81
    %p87 = scmp.eq.s32.totalorder %s12, 0
    %p88 = por %p86, %p87
    %p89 = scmp.ne.s32.totalorder %s78, %s81
    %p90 = scmp.eq.s32.totalorder %s17, 3
    %p91 = por %p89, %p90
    %p92 = scmp.ne.s32.totalorder %s81, %s82
    %p93 = scmp.eq.s32.totalorder %s17, 0
    %p94 = por %p92, %p93
    %p95 = scmp.ne.s32.totalorder %s81, %s82
    %p96 = scmp.eq.s32.totalorder %s18, 3
    %p97 = por %p95, %p96
    %p99 = scmp.ne.s32.totalorder %s82, %s98
    %p100 = scmp.eq.s32.totalorder %s18, 0
    %p101 = por %p99, %p100
    %s103 = sadd.s32 %s102, 1
    %p106 = scmp.eq.s32.totalorder %s12, 3
    %p107 = scmp.ne.s32.totalorder %s102, %s104
    %p108 = scmp.eq.s32.totalorder %s12, 0
    %p109 = por %p107, %p108
    %p110 = scmp.ne.s32.totalorder %s102, %s104
    %p111 = scmp.eq.s32.totalorder %s17, 3
    %p112 = por %p110, %p111
    %p113 = scmp.ne.s32.totalorder %s104, %s105
    %p114 = scmp.eq.s32.totalorder %s17, 0
    %p115 = por %p113, %p114
    %p116 = scmp.ne.s32.totalorder %s104, %s105
    %p117 = scmp.eq.s32.totalorder %s18, 3
    %p118 = por %p116, %p117
    %p120 = scmp.ne.s32.totalorder %s105, %s119
    %p121 = scmp.eq.s32.totalorder %s18, 0
    %p122 = por %p120, %p121
    %s123 = ssub.s32 %s12, %s19
    %p124 = scmp.eq.s32.totalorder %s123, 0
    %s126 = sadd.s32 %s125, 1
    %s127 = scalar_select %p124, %s125, %s126
    %p130 = pneg %p124
    %p131 = scmp.eq.s32.totalorder %s12, 3
    %p132 = por %p130, %p131
    %p133 = scmp.ne.s32.totalorder %s125, %s128
    %p134 = scmp.eq.s32.totalorder %s12, 0
    %p135 = por %p133, %p134
    %p136 = scmp.ne.s32.totalorder %s125, %s128
    %p137 = scmp.eq.s32.totalorder %s17, 3
    %p138 = por %p136, %p137
    %p139 = scmp.ne.s32.totalorder %s128, %s129
    %p140 = scmp.eq.s32.totalorder %s17, 0
    %p141 = por %p139, %p140
    %p142 = scmp.ne.s32.totalorder %s128, %s129
    %p143 = scmp.eq.s32.totalorder %s18, 3
    %p144 = por %p142, %p143
    %p146 = scmp.ne.s32.totalorder %s129, %s145
    %p147 = scmp.eq.s32.totalorder %s18, 0
    %p148 = por %p146, %p147
    %s149 = ssub.s32 %s12, %s19
    %p150 = scmp.eq.s32.totalorder %s149, 0
    %s152 = sadd.s32 %s151, 1
    %s153 = scalar_select %p150, %s151, %s152
    %p156 = pneg %p150
    %p157 = scmp.eq.s32.totalorder %s12, 3
    %p158 = por %p156, %p157
    %p159 = scmp.ne.s32.totalorder %s151, %s154
    %p160 = scmp.eq.s32.totalorder %s12, 0
    %p161 = por %p159, %p160
    %p162 = scmp.ne.s32.totalorder %s151, %s154
    %p163 = scmp.eq.s32.totalorder %s17, 3
    %p164 = por %p162, %p163
    %p165 = scmp.ne.s32.totalorder %s154, %s155
    %p166 = scmp.eq.s32.totalorder %s17, 0
    %p167 = por %p165, %p166
    %p168 = scmp.ne.s32.totalorder %s154, %s155
    %p169 = scmp.eq.s32.totalorder %s18, 3
    %p170 = por %p168, %p169
    %p172 = scmp.ne.s32.totalorder %s155, %s171
    %p173 = scmp.eq.s32.totalorder %s18, 0
    %p174 = por %p172, %p173
    %p175 = scmp.le.s32.totalorder 1, %s12
    %p176 = scmp.lt.s32.totalorder %s12, 5
    %p177 = pnand %p175, %p176
    %p178 = pneg %p177
    // Predicated region
    $region9: #{double_conv2d.3} parent=5 // pred_check
      _
    $region10: #{double_conv2d.3} parent=5 // pred_check_branch
      %180 = sbr.rel (%p177) target = $region12
    $region11: #{double_conv2d.3} parent=5 // pred_region
      %s181 = ssub.s32 %s12, 1
      // Predicated region
      $region13: #{double_conv2d.3} parent=11 // pred_check
        %p182 = pneg %p115
      $region14: #{double_conv2d.3} parent=11 // pred_check_branch
        %184 = sbr.rel (%p182) target = $region16
      $region15: #{double_conv2d.3} parent=11 // pred_region
        _
      $region16: #{double_conv2d.3} parent=11 // pred_fallthru
        _
    $region12: #{double_conv2d.3} parent=5 // pred_fallthru
      _
    %p185 = scmp.lt.s32.totalorder %s12, 4
    // Predicated region
    $region17: #{double_conv2d.3} parent=5 // pred_check
      %p186 = pneg %p185
    $region18: #{double_conv2d.3} parent=5 // pred_check_branch
      %188 = sbr.rel (%p186) target = $region20
    $region19: #{double_conv2d.3} parent=5 // pred_region
      // Predicated region
      $region21: #{double_conv2d.3} parent=19 // pred_check
        %p189 = pneg %p32
      $region22: #{double_conv2d.3} parent=19 // pred_check_branch
        %191 = sbr.rel (%p189) target = $region24
      $region23: #{double_conv2d.3} parent=19 // pred_region
        %s192 = smul.u32 30, %s12
        %p193 = scmp.lt.s32.totalorder %s192, 149
        %s194 = scalar_select %p193, %s192, 149
        %s195 = smul.addr %s194, 8
        %s196 = scalar_lea.vmem %s0, %s195
        %s197 = smul.u32 30, %s12
      $region24: #{double_conv2d.3} parent=19 // pred_fallthru
        _
      // Predicated region
      $region25: #{double_conv2d.3} parent=19 // pred_check
        %p198 = pneg %p62
      $region26: #{double_conv2d.3} parent=19 // pred_check_branch
        %200 = sbr.rel (%p198) target = $region28
      $region27: #{double_conv2d.3} parent=19 // pred_region
        %s201 = sadd.s32 %s12, 1
        %s202 = smul.u32 %s201, 6
        %s203 = smul.u32 5, %s202
        %p204 = scmp.lt.s32.totalorder %s203, 149
        %s205 = scalar_select %p204, %s203, 149
        %s206 = smul.addr %s205, 8
        %s207 = scalar_lea.vmem %s1, %s206
        %s208 = sadd.s32 %s12, 1
        %s209 = smul.u32 %s208, 6
        %s210 = smul.u32 5, %s209
      $region28: #{double_conv2d.3} parent=19 // pred_fallthru
        _
      // Predicated region
      $region29: #{double_conv2d.3} parent=19 // pred_check
        %p211 = pneg %p88
      $region30: #{double_conv2d.3} parent=19 // pred_check_branch
        %213 = sbr.rel (%p211) target = $region32
      $region31: #{double_conv2d.3} parent=19 // pred_region
        %s214 = smul.u32 30, %s12
        %p215 = scmp.lt.s32.totalorder %s214, 119
        %s216 = scalar_select %p215, %s214, 119
        %s217 = smul.addr %s216, 8
        %s218 = scalar_lea.vmem %s2, %s217
        %s219 = smul.u32 30, %s12
      $region32: #{double_conv2d.3} parent=19 // pred_fallthru
        _
    $region20: #{double_conv2d.3} parent=5 // pred_fallthru
      _
    %p220 = scmp.le.s32.totalorder 1, %s12
    %p221 = scmp.lt.s32.totalorder %s12, 5
    %p222 = pnand %p220, %p221
    %p223 = pneg %p222
    // Predicated region
    $region33: #{double_conv2d.3} parent=5 // pred_check
      _
    $region34: #{double_conv2d.3} parent=5 // pred_check_branch
      %225 = sbr.rel (%p222) target = $region36
    $region35: #{double_conv2d.3} parent=5 // pred_region
      %s226 = ssub.s32 %s12, 1
      %s227 = smul.u32 30, %s17
      %p228 = scmp.lt.s32.totalorder %s227, 149
      %s229 = scalar_select %p228, %s227, 149
      %s230 = smul.addr %s229, 8
      %s231 = scalar_lea.vmem %s0, %s230
      %p232 = pneg %p38
      %p233 = pneg %p35
      %s234 = sadd.s32 %s17, 1
      %s235 = smul.u32 %s234, 6
      %s236 = smul.u32 5, %s235
      %p237 = scmp.lt.s32.totalorder %s236, 149
      %s238 = scalar_select %p237, %s236, 149
      %s239 = smul.addr %s238, 8
      %s240 = scalar_lea.vmem %s1, %s239
      %p241 = pneg %p68
      %p242 = pneg %p65
      %s243 = smul.u32 30, %s17
      %p244 = scmp.lt.s32.totalorder %s243, 119
      %s245 = scalar_select %p244, %s243, 119
      %s246 = smul.addr %s245, 8
      %s247 = scalar_lea.vmem %s2, %s246
      %p248 = pneg %p94
      %p249 = pneg %p91
      %p250 = pneg %p115
      %p251 = pneg %p112
      %p252 = pneg %p141
      %p253 = pneg %p138
      %s254 = smul.u32 30, %s17
      %p255 = scmp.lt.s32.totalorder %s254, 119
      %s256 = scalar_select %p255, %s254, 119
      %s257 = smul.addr %s256, 8
      %s258 = scalar_lea.vmem %s4, %s257
      %p259 = pneg %p167
      %p260 = pneg %p164
      %p261 = scmp.lt.s32.totalorder %s17, 3
      %s262 = scalar_select %p261, %s17, 3
      %s263 = smul.addr %s262, 2
      %s264 = scalar_lea.vmem %s5, %s263
      %s265 = smul.u32 30, %s17
      %p266 = scmp.lt.s32.totalorder %s265, 149
      %s267 = scalar_select %p266, %s265, 149
      %s268 = smul.addr %s267, 8
      %s269 = scalar_lea.vmem %s0, %s268
      %s270 = smul.u32 30, %s17
      %s271 = sadd.s32 %s17, 1
      %s272 = smul.u32 %s271, 6
      %s273 = smul.u32 5, %s272
      %p274 = scmp.lt.s32.totalorder %s273, 149
      %s275 = scalar_select %p274, %s273, 149
      %s276 = smul.addr %s275, 8
      %s277 = scalar_lea.vmem %s1, %s276
      %s278 = sadd.s32 %s17, 1
      %s279 = smul.u32 %s278, 6
      %s280 = smul.u32 5, %s279
      %s281 = smul.u32 30, %s17
      %p282 = scmp.lt.s32.totalorder %s281, 119
      %s283 = scalar_select %p282, %s281, 119
      %s284 = smul.addr %s283, 8
      %s285 = scalar_lea.vmem %s2, %s284
      %s286 = smul.u32 30, %s17
      %s287 = smul.u32 30, %s17
      %p288 = scmp.lt.s32.totalorder %s287, 119
      %s289 = scalar_select %p288, %s287, 119
      %s290 = smul.addr %s289, 8
      %s291 = scalar_lea.vmem %s4, %s290
      %s292 = smul.u32 30, %s17
      %p293 = scmp.lt.s32.totalorder %s17, 3
      %s294 = scalar_select %p293, %s17, 3
      %s295 = smul.addr %s294, 2
      %s296 = scalar_lea.vmem %s5, %s295
      %v297 = vld [vmem:[%s269] sm:$0xff]
      %v298 = vld [vmem:[%s269 + $0x8] sm:$0xff]
      %v299 = vld [vmem:[%s269 + $0x10] sm:$0xff]
      %v300 = vld [vmem:[%s269 + $0x18] sm:$0xff]
      %v301 = vld [vmem:[%s269 + $0x20] sm:$0xff]
      %v302 = vld [vmem:[%s269 + $0x28] sm:$0xff]
      %v303 = vld [vmem:[%s269 + $0x30] sm:$0xff]
      %v304 = vld [vmem:[%s269 + $0x38] sm:$0xff]
      %v305 = vld [vmem:[%s269 + $0x40] sm:$0xff]
      %v306 = vld [vmem:[%s269 + $0x48] sm:$0xff]
      %v307 = vld [vmem:[%s269 + $0x50] sm:$0xff]
      %v308 = vld [vmem:[%s269 + $0x58] sm:$0xff]
      %v309 = vld [vmem:[%s269 + $0x60] sm:$0xff]
      %v310 = vld [vmem:[%s269 + $0x68] sm:$0xff]
      %v311 = vld [vmem:[%s269 + $0x70] sm:$0xff]
      %v312 = vld [vmem:[%s269 + $0x78] sm:$0xff]
      %v313 = vld [vmem:[%s269 + $0x80] sm:$0xff]
      %v314 = vld [vmem:[%s269 + $0x88] sm:$0xff]
      %v315 = vld [vmem:[%s269 + $0x90] sm:$0xff]
      %v316 = vld [vmem:[%s269 + $0x98] sm:$0xff]
      %v317 = vld [vmem:[%s269 + $0xa0] sm:$0xff]
      %v318 = vld [vmem:[%s269 + $0xa8] sm:$0xff]
      %v319 = vld [vmem:[%s269 + $0xb0] sm:$0xff]
      %v320 = vld [vmem:[%s269 + $0xb8] sm:$0xff]
      %v321 = vld [vmem:[%s269 + $0xc0] sm:$0xff]
      %v322 = vld [vmem:[%s269 + $0xc8] sm:$0xff]
      %v323 = vld [vmem:[%s269 + $0xd0] sm:$0xff]
      %v324 = vld [vmem:[%s269 + $0xd8] sm:$0xff]
      %v325 = vld [vmem:[%s269 + $0xe0] sm:$0xff]
      %v326 = vld [vmem:[%s269 + $0xe8] sm:$0xff]
      %vm327 = vcmask 31744
      %328 = vst.msk [vmem:[#allocation2] sm:$0xff] %vm327, %v297
      %329 = vst.msk [vmem:[#allocation2 + $0x8] sm:$0xff] %vm327, %v298
      %330 = vst.msk [vmem:[#allocation2 + $0x10] sm:$0xff] %vm327, %v299
      %331 = vst.msk [vmem:[#allocation2 + $0x18] sm:$0xff] %vm327, %v300
      %332 = vst.msk [vmem:[#allocation2 + $0x20] sm:$0xff] %vm327, %v301
      %333 = vst.msk [vmem:[#allocation2 + $0x28] sm:$0xff] %vm327, %v302
      %334 = vst.msk [vmem:[#allocation2 + $0x30] sm:$0xff] %vm327, %v303
      %335 = vst.msk [vmem:[#allocation2 + $0x38] sm:$0xff] %vm327, %v304
      %336 = vst.msk [vmem:[#allocation2 + $0x40] sm:$0xff] %vm327, %v305
      %337 = vst.msk [vmem:[#allocation2 + $0x48] sm:$0xff] %vm327, %v306
      %338 = vst.msk [vmem:[#allocation2 + $0x50] sm:$0xff] %vm327, %v307
      %339 = vst.msk [vmem:[#allocation2 + $0x58] sm:$0xff] %vm327, %v308
      %340 = vst.msk [vmem:[#allocation2 + $0x60] sm:$0xff] %vm327, %v309
      %341 = vst.msk [vmem:[#allocation2 + $0x68] sm:$0xff] %vm327, %v310
      %342 = vst.msk [vmem:[#allocation2 + $0x70] sm:$0xff] %vm327, %v311
      %343 = vst.msk [vmem:[#allocation2 + $0x78] sm:$0xff] %vm327, %v312
      %344 = vst.msk [vmem:[#allocation2 + $0x80] sm:$0xff] %vm327, %v313
      %345 = vst.msk [vmem:[#allocation2 + $0x88] sm:$0xff] %vm327, %v314
      %346 = vst.msk [vmem:[#allocation2 + $0x90] sm:$0xff] %vm327, %v315
      %347 = vst.msk [vmem:[#allocation2 + $0x98] sm:$0xff] %vm327, %v316
      %348 = vst.msk [vmem:[#allocation2 + $0xa0] sm:$0xff] %vm327, %v317
      %349 = vst.msk [vmem:[#allocation2 + $0xa8] sm:$0xff] %vm327, %v318
      %350 = vst.msk [vmem:[#allocation2 + $0xb0] sm:$0xff] %vm327, %v319
      %351 = vst.msk [vmem:[#allocation2 + $0xb8] sm:$0xff] %vm327, %v320
      %352 = vst.msk [vmem:[#allocation2 + $0xc0] sm:$0xff] %vm327, %v321
      %353 = vst.msk [vmem:[#allocation2 + $0xc8] sm:$0xff] %vm327, %v322
      %354 = vst.msk [vmem:[#allocation2 + $0xd0] sm:$0xff] %vm327, %v323
      %355 = vst.msk [vmem:[#allocation2 + $0xd8] sm:$0xff] %vm327, %v324
      %356 = vst.msk [vmem:[#allocation2 + $0xe0] sm:$0xff] %vm327, %v325
      %357 = vst.msk [vmem:[#allocation2 + $0xe8] sm:$0xff] %vm327, %v326
      %v358 = vld [vmem:[%s277] sm:$0xff]
      %v359 = vld [vmem:[%s277 + $0x8] sm:$0xff]
      %v360 = vld [vmem:[%s277 + $0x10] sm:$0xff]
      %v361 = vld [vmem:[%s277 + $0x18] sm:$0xff]
      %v362 = vld [vmem:[%s277 + $0x20] sm:$0xff]
      %363 = vst.msk [vmem:[#allocation2 + $0xf0] sm:$0xff] %vm327, %v358
      %364 = vst.msk [vmem:[#allocation2 + $0xf8] sm:$0xff] %vm327, %v359
      %365 = vst.msk [vmem:[#allocation2 + $0x100] sm:$0xff] %vm327, %v360
      %366 = vst.msk [vmem:[#allocation2 + $0x108] sm:$0xff] %vm327, %v361
      %367 = vst.msk [vmem:[#allocation2 + $0x110] sm:$0xff] %vm327, %v362
      %v368 = vld [vmem:[#allocation2] sm:$0xff]
      %v369 = vld [vmem:[#allocation2 + $0x8] sm:$0xff]
      %v370 = vld [vmem:[#allocation2 + $0x10] sm:$0xff]
      %v371 = vld [vmem:[#allocation2 + $0x18] sm:$0xff]
      %v372 = vld [vmem:[#allocation2 + $0x20] sm:$0xff]
      %v373 = vld [vmem:[#allocation2 + $0x28] sm:$0xff]
      %v374 = vld [vmem:[#allocation2 + $0x30] sm:$0xff]
      %v375 = vld [vmem:[#allocation2 + $0x38] sm:$0xff]
      %v376 = vld [vmem:[#allocation2 + $0x40] sm:$0xff]
      %v377 = vld [vmem:[#allocation2 + $0x48] sm:$0xff]
      %v378 = vld [vmem:[#allocation2 + $0x50] sm:$0xff]
      %v379 = vld [vmem:[#allocation2 + $0x58] sm:$0xff]
      %v380 = vld [vmem:[#allocation2 + $0x60] sm:$0xff]
      %v381 = vld [vmem:[#allocation2 + $0x68] sm:$0xff]
      %v382 = vld [vmem:[#allocation2 + $0x70] sm:$0xff]
      %v383 = vld [vmem:[#allocation2 + $0x78] sm:$0xff]
      %v384 = vld [vmem:[#allocation2 + $0x80] sm:$0xff]
      %v385 = vld [vmem:[#allocation2 + $0x88] sm:$0xff]
      %v386 = vld [vmem:[#allocation2 + $0x90] sm:$0xff]
      %v387 = vld [vmem:[#allocation2 + $0x98] sm:$0xff]
      %v388 = vld [vmem:[#allocation2 + $0xa0] sm:$0xff]
      %v389 = vld [vmem:[#allocation2 + $0xa8] sm:$0xff]
      %v390 = vld [vmem:[#allocation2 + $0xb0] sm:$0xff]
      %v391 = vld [vmem:[#allocation2 + $0xb8] sm:$0xff]
      %v392 = vld [vmem:[#allocation2 + $0xc0] sm:$0xff]
      %v393 = vld [vmem:[#allocation2 + $0xc8] sm:$0xff]
      %v394 = vld [vmem:[#allocation2 + $0xd0] sm:$0xff]
      %v395 = vld [vmem:[#allocation2 + $0xd8] sm:$0xff]
      %v396 = vld [vmem:[#allocation2 + $0xe0] sm:$0xff]
      %v397 = vld [vmem:[#allocation2 + $0xe8] sm:$0xff]
      %v398 = vld [vmem:[%s3] sm:$0xf]
      %v399 = vld [vmem:[#allocation2 + $0x1] sm:$0xff]
      %v400 = vld [vmem:[#allocation2 + $0x9] sm:$0xff]
      %v401 = vld [vmem:[#allocation2 + $0x11] sm:$0xff]
      %v402 = vld [vmem:[#allocation2 + $0x19] sm:$0xff]
      %v403 = vld [vmem:[#allocation2 + $0x21] sm:$0xff]
      %v404 = vld [vmem:[#allocation2 + $0x29] sm:$0xff]
      %v405 = vld [vmem:[#allocation2 + $0x31] sm:$0xff]
      %v406 = vld [vmem:[#allocation2 + $0x39] sm:$0xff]
      %v407 = vld [vmem:[#allocation2 + $0x41] sm:$0xff]
      %v408 = vld [vmem:[#allocation2 + $0x49] sm:$0xff]
      %v409 = vld [vmem:[#allocation2 + $0x51] sm:$0xff]
      %v410 = vld [vmem:[#allocation2 + $0x59] sm:$0xff]
      %v411 = vld [vmem:[#allocation2 + $0x61] sm:$0xff]
      %v412 = vld [vmem:[#allocation2 + $0x69] sm:$0xff]
      %v413 = vld [vmem:[#allocation2 + $0x71] sm:$0xff]
      %v414 = vld [vmem:[#allocation2 + $0x79] sm:$0xff]
      %v415 = vld [vmem:[#allocation2 + $0x81] sm:$0xff]
      %v416 = vld [vmem:[#allocation2 + $0x89] sm:$0xff]
      %v417 = vld [vmem:[#allocation2 + $0x91] sm:$0xff]
      %v418 = vld [vmem:[#allocation2 + $0x99] sm:$0xff]
      %v419 = vld [vmem:[#allocation2 + $0xa1] sm:$0xff]
      %v420 = vld [vmem:[#allocation2 + $0xa9] sm:$0xff]
      %v421 = vld [vmem:[#allocation2 + $0xb1] sm:$0xff]
      %v422 = vld [vmem:[#allocation2 + $0xb9] sm:$0xff]
      %v423 = vld [vmem:[#allocation2 + $0xc1] sm:$0xff]
      %v424 = vld [vmem:[#allocation2 + $0xc9] sm:$0xff]
      %v425 = vld [vmem:[#allocation2 + $0xd1] sm:$0xff]
      %v426 = vld [vmem:[#allocation2 + $0xd9] sm:$0xff]
      %v427 = vld [vmem:[#allocation2 + $0xe1] sm:$0xff]
      %v428 = vld [vmem:[#allocation2 + $0xe9] sm:$0xff]
      %s429 = scalar_lea.vmem %s3, 4
      %v430 = vld [vmem:[%s429] sm:$0xf]
      %v432 = vsel %vm327, %v399, 0
      %v435 = vsel %vm327, %v400, 0
      %v438 = vsel %vm327, %v401, 0
      %v441 = vsel %vm327, %v402, 0
      %v444 = vsel %vm327, %v403, 0
      %v447 = vsel %vm327, %v404, 0
      %v450 = vsel %vm327, %v405, 0
      %v453 = vsel %vm327, %v406, 0
      %v456 = vsel %vm327, %v407, 0
      %v459 = vsel %vm327, %v408, 0
      %v462 = vsel %vm327, %v409, 0
      %v465 = vsel %vm327, %v410, 0
      %v468 = vsel %vm327, %v411, 0
      %v471 = vsel %vm327, %v412, 0
      %v474 = vsel %vm327, %v413, 0
      %v477 = vsel %vm327, %v414, 0
      %v480 = vsel %vm327, %v415, 0
      %v483 = vsel %vm327, %v416, 0
      %v486 = vsel %vm327, %v417, 0
      %v489 = vsel %vm327, %v418, 0
      %v492 = vsel %vm327, %v419, 0
      %v495 = vsel %vm327, %v420, 0
      %v498 = vsel %vm327, %v421, 0
      %v501 = vsel %vm327, %v422, 0
      %v504 = vsel %vm327, %v423, 0
      %v507 = vsel %vm327, %v424, 0
      %v510 = vsel %vm327, %v425, 0
      %v513 = vsel %vm327, %v426, 0
      %v516 = vsel %vm327, %v427, 0
      %v519 = vsel %vm327, %v428, 0
      %vm521 = vcmask 1043456
      %v523 = vsel %vm521, %v430, 0
      %525 = vmatprep.subr.mxu0 0.0
      %526 = vmatpush1.msra.mxu0 %v523
      %527 = vmatprep.subr.mxu0 0.0
      %528 = vmatpush1.msra.mxu0 0.0
      %529 = vmatprep.subr.mxu0 0.0
      %530 = vmatpush1.msra.mxu0 0.0
      %531 = vmatprep.subr.mxu0 0.0
      %532 = vmatpush1.msra.mxu0 0.0
      %533 = vmatprep.subr.mxu0 0.0
      %534 = vmatpush1.msra.mxu0 0.0
      %535 = vmatprep.subr.mxu0 0.0
      %536 = vmatpush1.msra.mxu0 0.0
      %537 = vmatprep.subr.mxu0 0.0
      %538 = vmatpush1.msra.mxu0 0.0
      %539 = vmatprep.subr.mxu0 0.0
      %540 = vmatpush1.msra.mxu0 0.0
      %541 = vmatprep.subr.mxu0 0.0
      %542 = vmatpush1.msra.mxu0 0.0
      %543 = vmatprep.subr.mxu0 0.0
      %544 = vmatpush1.msra.mxu0 0.0
      %545 = vmatprep.subr.mxu0 0.0
      %546 = vmatpush1.msra.mxu0 0.0
      %547 = vmatprep.subr.mxu0 0.0
      %548 = vmatpush1.msra.mxu0 0.0
      %549 = vmatprep.subr.mxu0 0.0
      %550 = vmatpush1.msra.mxu0 0.0
      %551 = vmatprep.subr.mxu0 0.0
      %552 = vmatpush1.msra.mxu0 0.0
      %553 = vmatprep.subr.mxu0 0.0
      %554 = vmatpush1.msra.mxu0 0.0
      %555 = vmatprep.subr.mxu0 0.0
      %556 = vmatpush1.msra.mxu0 0.0
      %557 = vmatprep.subr.mxu0 0.0
      %558 = vmatpush1.msra.mxu0 0.0
      %559 = vmatprep.subr.mxu0 0.0
      %560 = vmatpush1.msra.mxu0 0.0
      %561 = vmatprep.subr.mxu0 0.0
      %562 = vmatpush1.msra.mxu0 0.0
      %563 = vmatprep.subr.mxu0 0.0
      %564 = vmatpush1.msra.mxu0 0.0
      %565 = vmatprep.subr.mxu0 0.0
      %566 = vmatpush1.msra.mxu0 0.0
      %567 = vmatprep.subr.mxu0 0.0
      %568 = vmatpush1.msra.mxu0 0.0
      %569 = vmatprep.subr.mxu0 0.0
      %570 = vmatpush1.msra.mxu0 0.0
      %571 = vmatprep.subr.mxu0 0.0
      %572 = vmatpush1.msra.mxu0 0.0
      %573 = vmatprep.subr.mxu0 0.0
      %574 = vmatpush1.msra.mxu0 0.0
      %575 = vmatprep.subr.mxu0 0.0
      %576 = vmatpush1.msra.mxu0 0.0
      %577 = vmatprep.subr.mxu0 0.0
      %578 = vmatpush1.msra.mxu0 0.0
      %579 = vmatprep.subr.mxu0 0.0
      %580 = vmatpush1.msra.mxu0 0.0
      %581 = vmatprep.subr.mxu0 0.0
      %582 = vmatpush1.msra.mxu0 0.0
      %583 = vmatprep.subr.mxu0 0.0
      %584 = vmatpush1.msra.mxu0 0.0
      %585 = vmatprep.subr.mxu0 0.0
      %586 = vmatpush1.msra.mxu0 0.0
      %587 = vmatprep.subr.mxu0 0.0
      %588 = vmatpush1.msra.mxu0 0.0
      %589 = vmatprep.mubr.f32.mxu0 0.0
      %590 = vmatmul.mubr.f32.gmra.mrb[0].mxu0 %v432
      %v591 = vpop.f32.mrb[0].mxu0
      %v592 = vadd.f32 0.0, %v591
      %v593 = vpop.f32.mrb[0].mxu0
      %594 = vmatprep.mubr.f32.mxu0 0.0
      %595 = vmatmul.mubr.f32.gmra.mrb[0].mxu0 %v435
      %v596 = vpop.f32.mrb[0].mxu0
      %v597 = vadd.f32 0.0, %v596
      %v598 = vpop.f32.mrb[0].mxu0
      %599 = vmatprep.mubr.f32.mxu0 0.0
      %600 = vmatmul.mubr.f32.gmra.mrb[0].mxu0 %v438
      %v601 = vpop.f32.mrb[0].mxu0
      %v602 = vadd.f32 0.0, %v601
      %v603 = vpop.f32.mrb[0].mxu0
      %604 = vmatprep.mubr.f32.mxu0 0.0
      %605 = vmatmul.mubr.f32.gmra.mrb[0].mxu0 %v441
      %v606 = vpop.f32.mrb[0].mxu0
      %v607 = vadd.f32 0.0, %v606
      %v608 = vpop.f32.mrb[0].mxu0
      %609 = vmatprep.mubr.f32.mxu0 0.0
      %610 = vmatmul.mubr.f32.gmra.mrb[0].mxu0 %v444
      %v611 = vpop.f32.mrb[0].mxu0
      %v612 = vadd.f32 0.0, %v611
      %v613 = vpop.f32.mrb[0].mxu0
      %614 = vmatprep.mubr.f32.mxu0 0.0
      %615 = vmatmul.mubr.f32.gmra.mrb[0].mxu0 %v447
      %v616 = vpop.f32.mrb[0].mxu0
      %v617 = vadd.f32 0.0, %v616
      %v618 = vpop.f32.mrb[0].mxu0
      %619 = vmatprep.mubr.f32.mxu0 0.0
      %620 = vmatmul.mubr.f32.gmra.mrb[0].mxu0 %v450
      %v621 = vpop.f32.mrb[0].mxu0
      %v622 = vadd.f32 0.0, %v621
      %v623 = vpop.f32.mrb[0].mxu0
      %624 = vmatprep.mubr.f32.mxu0 0.0
      %625 = vmatmul.mubr.f32.gmra.mrb[0].mxu0 %v453
      %v626 = vpop.f32.mrb[0].mxu0
      %v627 = vadd.f32 0.0, %v626
      %v628 = vpop.f32.mrb[0].mxu0
      %629 = vmatprep.mubr.f32.mxu0 0.0
      %630 = vmatmul.mubr.f32.gmra.mrb[0].mxu0 %v456
      %v631 = vpop.f32.mrb[0].mxu0
      %v632 = vadd.f32 0.0, %v631
      %v633 = vpop.f32.mrb[0].mxu0
      %634 = vmatprep.mubr.f32.mxu0 0.0
      %635 = vmatmul.mubr.f32.gmra.mrb[0].mxu0 %v459
      %v636 = vpop.f32.mrb[0].mxu0
      %v637 = vadd.f32 0.0, %v636
      %v638 = vpop.f32.mrb[0].mxu0
      %639 = vmatprep.mubr.f32.mxu0 0.0
      %640 = vmatmul.mubr.f32.gmra.mrb[0].mxu0 %v462
      %v641 = vpop.f32.mrb[0].mxu0
      %v642 = vadd.f32 0.0, %v641
      %v643 = vpop.f32.mrb[0].mxu0
      %644 = vmatprep.mubr.f32.mxu0 0.0
      %645 = vmatmul.mubr.f32.gmra.mrb[0].mxu0 %v465
      %v646 = vpop.f32.mrb[0].mxu0
      %v647 = vadd.f32 0.0, %v646
      %v648 = vpop.f32.mrb[0].mxu0
      %649 = vmatprep.mubr.f32.mxu0 0.0
      %650 = vmatmul.mubr.f32.gmra.mrb[0].mxu0 %v468
      %v651 = vpop.f32.mrb[0].mxu0
      %v652 = vadd.f32 0.0, %v651
      %v653 = vpop.f32.mrb[0].mxu0
      %654 = vmatprep.mubr.f32.mxu0 0.0
      %655 = vmatmul.mubr.f32.gmra.mrb[0].mxu0 %v471
      %v656 = vpop.f32.mrb[0].mxu0
      %v657 = vadd.f32 0.0, %v656
      %v658 = vpop.f32.mrb[0].mxu0
      %659 = vmatprep.mubr.f32.mxu0 0.0
      %660 = vmatmul.mubr.f32.gmra.mrb[0].mxu0 %v474
      %v661 = vpop.f32.mrb[0].mxu0
      %v662 = vadd.f32 0.0, %v661
      %v663 = vpop.f32.mrb[0].mxu0
      %664 = vmatprep.mubr.f32.mxu0 0.0
      %665 = vmatmul.mubr.f32.gmra.mrb[0].mxu0 %v477
      %v666 = vpop.f32.mrb[0].mxu0
      %v667 = vadd.f32 0.0, %v666
      %v668 = vpop.f32.mrb[0].mxu0
      %669 = vmatprep.mubr.f32.mxu0 0.0
      %670 = vmatmul.mubr.f32.gmra.mrb[0].mxu0 %v480
      %v671 = vpop.f32.mrb[0].mxu0
      %v672 = vadd.f32 0.0, %v671
      %v673 = vpop.f32.mrb[0].mxu0
      %674 = vmatprep.mubr.f32.mxu0 0.0
      %675 = vmatmul.mubr.f32.gmra.mrb[0].mxu0 %v483
      %v676 = vpop.f32.mrb[0].mxu0
      %v677 = vadd.f32 0.0, %v676
      %v678 = vpop.f32.mrb[0].mxu0
      %679 = vmatprep.mubr.f32.mxu0 0.0
      %680 = vmatmul.mubr.f32.gmra.mrb[0].mxu0 %v486
      %v681 = vpop.f32.mrb[0].mxu0
      %v682 = vadd.f32 0.0, %v681
      %v683 = vpop.f32.mrb[0].mxu0
      %684 = vmatprep.mubr.f32.mxu0 0.0
      %685 = vmatmul.mubr.f32.gmra.mrb[0].mxu0 %v489
      %v686 = vpop.f32.mrb[0].mxu0
      %v687 = vadd.f32 0.0, %v686
      %v688 = vpop.f32.mrb[0].mxu0
      %689 = vmatprep.mubr.f32.mxu0 0.0
      %690 = vmatmul.mubr.f32.gmra.mrb[0].mxu0 %v492
      %v691 = vpop.f32.mrb[0].mxu0
      %v692 = vadd.f32 0.0, %v691
      %v693 = vpop.f32.mrb[0].mxu0
      %694 = vmatprep.mubr.f32.mxu0 0.0
      %695 = vmatmul.mubr.f32.gmra.mrb[0].mxu0 %v495
      %v696 = vpop.f32.mrb[0].mxu0
      %v697 = vadd.f32 0.0, %v696
      %v698 = vpop.f32.mrb[0].mxu0
      %699 = vmatprep.mubr.f32.mxu0 0.0
      %700 = vmatmul.mubr.f32.gmra.mrb[0].mxu0 %v498
      %v701 = vpop.f32.mrb[0].mxu0
      %v702 = vadd.f32 0.0, %v701
      %v703 = vpop.f32.mrb[0].mxu0
      %704 = vmatprep.mubr.f32.mxu0 0.0
      %705 = vmatmul.mubr.f32.gmra.mrb[0].mxu0 %v501
      %v706 = vpop.f32.mrb[0].mxu0
      %v707 = vadd.f32 0.0, %v706
      %v708 = vpop.f32.mrb[0].mxu0
      %709 = vmatprep.mubr.f32.mxu0 0.0
      %710 = vmatmul.mubr.f32.gmra.mrb[0].mxu0 %v504
      %v711 = vpop.f32.mrb[0].mxu0
      %v712 = vadd.f32 0.0, %v711
      %v713 = vpop.f32.mrb[0].mxu0
      %714 = vmatprep.mubr.f32.mxu0 0.0
      %715 = vmatmul.mubr.f32.gmra.mrb[0].mxu0 %v507
      %v716 = vpop.f32.mrb[0].mxu0
      %v717 = vadd.f32 0.0, %v716
      %v718 = vpop.f32.mrb[0].mxu0
      %719 = vmatprep.mubr.f32.mxu0 0.0
      %720 = vmatmul.mubr.f32.gmra.mrb[0].mxu0 %v510
      %v721 = vpop.f32.mrb[0].mxu0
      %v722 = vadd.f32 0.0, %v721
      %v723 = vpop.f32.mrb[0].mxu0
      %724 = vmatprep.mubr.f32.mxu0 0.0
      %725 = vmatmul.mubr.f32.gmra.mrb[0].mxu0 %v513
      %v726 = vpop.f32.mrb[0].mxu0
      %v727 = vadd.f32 0.0, %v726
      %v728 = vpop.f32.mrb[0].mxu0
      %729 = vmatprep.mubr.f32.mxu0 0.0
      %730 = vmatmul.mubr.f32.gmra.mrb[0].mxu0 %v516
      %v731 = vpop.f32.mrb[0].mxu0
      %v732 = vadd.f32 0.0, %v731
      %v733 = vpop.f32.mrb[0].mxu0
      %734 = vmatprep.mubr.f32.mxu0 0.0
      %735 = vmatmul.mubr.f32.gmra.mrb[0].mxu0 %v519
      %v736 = vpop.f32.mrb[0].mxu0
      %v737 = vadd.f32 0.0, %v736
      %v738 = vpop.f32.mrb[0].mxu0
      %739 = vdwg.mxu0
      %v741 = vsel %vm327, %v368, 0
      %v744 = vsel %vm327, %v369, 0
      %v747 = vsel %vm327, %v370, 0
      %v750 = vsel %vm327, %v371, 0
      %v753 = vsel %vm327, %v372, 0
      %v756 = vsel %vm327, %v373, 0
      %v759 = vsel %vm327, %v374, 0
      %v762 = vsel %vm327, %v375, 0
      %v765 = vsel %vm327, %v376, 0
      %v768 = vsel %vm327, %v377, 0
      %v771 = vsel %vm327, %v378, 0
      %v774 = vsel %vm327, %v379, 0
      %v777 = vsel %vm327, %v380, 0
      %v780 = vsel %vm327, %v381, 0
      %v783 = vsel %vm327, %v382, 0
      %v786 = vsel %vm327, %v383, 0
      %v789 = vsel %vm327, %v384, 0
      %v792 = vsel %vm327, %v385, 0
      %v795 = vsel %vm327, %v386, 0
      %v798 = vsel %vm327, %v387, 0
      %v801 = vsel %vm327, %v388, 0
      %v804 = vsel %vm327, %v389, 0
      %v807 = vsel %vm327, %v390, 0
      %v810 = vsel %vm327, %v391, 0
      %v813 = vsel %vm327, %v392, 0
      %v816 = vsel %vm327, %v393, 0
      %v819 = vsel %vm327, %v394, 0
      %v822 = vsel %vm327, %v395, 0
      %v825 = vsel %vm327, %v396, 0
      %v828 = vsel %vm327, %v397, 0
      %v831 = vsel %vm521, %v398, 0
      %833 = vmatprep.subr.mxu0 0.0
      %834 = vmatpush1.msra.mxu0 %v831
      %835 = vmatprep.subr.mxu0 0.0
      %836 = vmatpush1.msra.mxu0 0.0
      %837 = vmatprep.subr.mxu0 0.0
      %838 = vmatpush1.msra.mxu0 0.0
      %839 = vmatprep.subr.mxu0 0.0
      %840 = vmatpush1.msra.mxu0 0.0
      %841 = vmatprep.subr.mxu0 0.0
      %842 = vmatpush1.msra.mxu0 0.0
      %843 = vmatprep.subr.mxu0 0.0
      %844 = vmatpush1.msra.mxu0 0.0
      %845 = vmatprep.subr.mxu0 0.0
      %846 = vmatpush1.msra.mxu0 0.0
      %847 = vmatprep.subr.mxu0 0.0
      %848 = vmatpush1.msra.mxu0 0.0
      %849 = vmatprep.subr.mxu0 0.0
      %850 = vmatpush1.msra.mxu0 0.0
      %851 = vmatprep.subr.mxu0 0.0
      %852 = vmatpush1.msra.mxu0 0.0
      %853 = vmatprep.subr.mxu0 0.0
      %854 = vmatpush1.msra.mxu0 0.0
      %855 = vmatprep.subr.mxu0 0.0
      %856 = vmatpush1.msra.mxu0 0.0
      %857 = vmatprep.subr.mxu0 0.0
      %858 = vmatpush1.msra.mxu0 0.0
      %859 = vmatprep.subr.mxu0 0.0
      %860 = vmatpush1.msra.mxu0 0.0
      %861 = vmatprep.subr.mxu0 0.0
      %862 = vmatpush1.msra.mxu0 0.0
      %863 = vmatprep.subr.mxu0 0.0
      %864 = vmatpush1.msra.mxu0 0.0
      %865 = vmatprep.subr.mxu0 0.0
      %866 = vmatpush1.msra.mxu0 0.0
      %867 = vmatprep.subr.mxu0 0.0
      %868 = vmatpush1.msra.mxu0 0.0
      %869 = vmatprep.subr.mxu0 0.0
      %870 = vmatpush1.msra.mxu0 0.0
      %871 = vmatprep.subr.mxu0 0.0
      %872 = vmatpush1.msra.mxu0 0.0
      %873 = vmatprep.subr.mxu0 0.0
      %874 = vmatpush1.msra.mxu0 0.0
      %875 = vmatprep.subr.mxu0 0.0
      %876 = vmatpush1.msra.mxu0 0.0
      %877 = vmatprep.subr.mxu0 0.0
      %878 = vmatpush1.msra.mxu0 0.0
      %879 = vmatprep.subr.mxu0 0.0
      %880 = vmatpush1.msra.mxu0 0.0
      %881 = vmatprep.subr.mxu0 0.0
      %882 = vmatpush1.msra.mxu0 0.0
      %883 = vmatprep.subr.mxu0 0.0
      %884 = vmatpush1.msra.mxu0 0.0
      %885 = vmatprep.subr.mxu0 0.0
      %886 = vmatpush1.msra.mxu0 0.0
      %887 = vmatprep.subr.mxu0 0.0
      %888 = vmatpush1.msra.mxu0 0.0
      %889 = vmatprep.subr.mxu0 0.0
      %890 = vmatpush1.msra.mxu0 0.0
      %891 = vmatprep.subr.mxu0 0.0
      %892 = vmatpush1.msra.mxu0 0.0
      %893 = vmatprep.subr.mxu0 0.0
      %894 = vmatpush1.msra.mxu0 0.0
      %895 = vmatprep.subr.mxu0 0.0
      %896 = vmatpush1.msra.mxu0 0.0
      %897 = vmatprep.mubr.f32.mxu0 0.0
      %898 = vmatmul.mubr.f32.gmra.mrb[0].mxu0 %v741
      %v899 = vpop.f32.mrb[0].mxu0
      %v900 = vadd.f32 %v592, %v899
      %v901 = vpop.f32.mrb[0].mxu0
      %902 = vmatprep.mubr.f32.mxu0 0.0
      %903 = vmatmul.mubr.f32.gmra.mrb[0].mxu0 %v744
      %v904 = vpop.f32.mrb[0].mxu0
      %v905 = vadd.f32 %v597, %v904
      %v906 = vpop.f32.mrb[0].mxu0
      %907 = vmatprep.mubr.f32.mxu0 0.0
      %908 = vmatmul.mubr.f32.gmra.mrb[0].mxu0 %v747
      %v909 = vpop.f32.mrb[0].mxu0
      %v910 = vadd.f32 %v602, %v909
      %v911 = vpop.f32.mrb[0].mxu0
      %912 = vmatprep.mubr.f32.mxu0 0.0
      %913 = vmatmul.mubr.f32.gmra.mrb[0].mxu0 %v750
      %v914 = vpop.f32.mrb[0].mxu0
      %v915 = vadd.f32 %v607, %v914
      %v916 = vpop.f32.mrb[0].mxu0
      %917 = vmatprep.mubr.f32.mxu0 0.0
      %918 = vmatmul.mubr.f32.gmra.mrb[0].mxu0 %v753
      %v919 = vpop.f32.mrb[0].mxu0
      %v920 = vadd.f32 %v612, %v919
      %v921 = vpop.f32.mrb[0].mxu0
      %922 = vmatprep.mubr.f32.mxu0 0.0
      %923 = vmatmul.mubr.f32.gmra.mrb[0].mxu0 %v756
      %v924 = vpop.f32.mrb[0].mxu0
      %v925 = vadd.f32 %v617, %v924
      %v926 = vpop.f32.mrb[0].mxu0
      %927 = vmatprep.mubr.f32.mxu0 0.0
      %928 = vmatmul.mubr.f32.gmra.mrb[0].mxu0 %v759
      %v929 = vpop.f32.mrb[0].mxu0
      %v930 = vadd.f32 %v622, %v929
      %v931 = vpop.f32.mrb[0].mxu0
      %932 = vmatprep.mubr.f32.mxu0 0.0
      %933 = vmatmul.mubr.f32.gmra.mrb[0].mxu0 %v762
      %v934 = vpop.f32.mrb[0].mxu0
      %v935 = vadd.f32 %v627, %v934
      %v936 = vpop.f32.mrb[0].mxu0
      %937 = vmatprep.mubr.f32.mxu0 0.0
      %938 = vmatmul.mubr.f32.gmra.mrb[0].mxu0 %v765
      %v939 = vpop.f32.mrb[0].mxu0
      %v940 = vadd.f32 %v632, %v939
      %v941 = vpop.f32.mrb[0].mxu0
      %942 = vmatprep.mubr.f32.mxu0 0.0
      %943 = vmatmul.mubr.f32.gmra.mrb[0].mxu0 %v768
      %v944 = vpop.f32.mrb[0].mxu0
      %v945 = vadd.f32 %v637, %v944
      %v946 = vpop.f32.mrb[0].mxu0
      %947 = vmatprep.mubr.f32.mxu0 0.0
      %948 = vmatmul.mubr.f32.gmra.mrb[0].mxu0 %v771
      %v949 = vpop.f32.mrb[0].mxu0
      %v950 = vadd.f32 %v642, %v949
      %v951 = vpop.f32.mrb[0].mxu0
      %952 = vmatprep.mubr.f32.mxu0 0.0
      %953 = vmatmul.mubr.f32.gmra.mrb[0].mxu0 %v774
      %v954 = vpop.f32.mrb[0].mxu0
      %v955 = vadd.f32 %v647, %v954
      %v956 = vpop.f32.mrb[0].mxu0
      %957 = vmatprep.mubr.f32.mxu0 0.0
      %958 = vmatmul.mubr.f32.gmra.mrb[0].mxu0 %v777
      %v959 = vpop.f32.mrb[0].mxu0
      %v960 = vadd.f32 %v652, %v959
      %v961 = vpop.f32.mrb[0].mxu0
      %962 = vmatprep.mubr.f32.mxu0 0.0
      %963 = vmatmul.mubr.f32.gmra.mrb[0].mxu0 %v780
      %v964 = vpop.f32.mrb[0].mxu0
      %v965 = vadd.f32 %v657, %v964
      %v966 = vpop.f32.mrb[0].mxu0
      %967 = vmatprep.mubr.f32.mxu0 0.0
      %968 = vmatmul.mubr.f32.gmra.mrb[0].mxu0 %v783
      %v969 = vpop.f32.mrb[0].mxu0
      %v970 = vadd.f32 %v662, %v969
      %v971 = vpop.f32.mrb[0].mxu0
      %972 = vmatprep.mubr.f32.mxu0 0.0
      %973 = vmatmul.mubr.f32.gmra.mrb[0].mxu0 %v786
      %v974 = vpop.f32.mrb[0].mxu0
      %v975 = vadd.f32 %v667, %v974
      %v976 = vpop.f32.mrb[0].mxu0
      %977 = vmatprep.mubr.f32.mxu0 0.0
      %978 = vmatmul.mubr.f32.gmra.mrb[0].mxu0 %v789
      %v979 = vpop.f32.mrb[0].mxu0
      %v980 = vadd.f32 %v672, %v979
      %v981 = vpop.f32.mrb[0].mxu0
      %982 = vmatprep.mubr.f32.mxu0 0.0
      %983 = vmatmul.mubr.f32.gmra.mrb[0].mxu0 %v792
      %v984 = vpop.f32.mrb[0].mxu0
      %v985 = vadd.f32 %v677, %v984
      %v986 = vpop.f32.mrb[0].mxu0
      %987 = vmatprep.mubr.f32.mxu0 0.0
      %988 = vmatmul.mubr.f32.gmra.mrb[0].mxu0 %v795
      %v989 = vpop.f32.mrb[0].mxu0
      %v990 = vadd.f32 %v682, %v989
      %v991 = vpop.f32.mrb[0].mxu0
      %992 = vmatprep.mubr.f32.mxu0 0.0
      %993 = vmatmul.mubr.f32.gmra.mrb[0].mxu0 %v798
      %v994 = vpop.f32.mrb[0].mxu0
      %v995 = vadd.f32 %v687, %v994
      %v996 = vpop.f32.mrb[0].mxu0
      %997 = vmatprep.mubr.f32.mxu0 0.0
      %998 = vmatmul.mubr.f32.gmra.mrb[0].mxu0 %v801
      %v999 = vpop.f32.mrb[0].mxu0
      %v1000 = vadd.f32 %v692, %v999
      %v1001 = vpop.f32.mrb[0].mxu0
      %1002 = vmatprep.mubr.f32.mxu0 0.0
      %1003 = vmatmul.mubr.f32.gmra.mrb[0].mxu0 %v804
      %v1004 = vpop.f32.mrb[0].mxu0
      %v1005 = vadd.f32 %v697, %v1004
      %v1006 = vpop.f32.mrb[0].mxu0
      %1007 = vmatprep.mubr.f32.mxu0 0.0
      %1008 = vmatmul.mubr.f32.gmra.mrb[0].mxu0 %v807
      %v1009 = vpop.f32.mrb[0].mxu0
      %v1010 = vadd.f32 %v702, %v1009
      %v1011 = vpop.f32.mrb[0].mxu0
      %1012 = vmatprep.mubr.f32.mxu0 0.0
      %1013 = vmatmul.mubr.f32.gmra.mrb[0].mxu0 %v810
      %v1014 = vpop.f32.mrb[0].mxu0
      %v1015 = vadd.f32 %v707, %v1014
      %v1016 = vpop.f32.mrb[0].mxu0
      %1017 = vmatprep.mubr.f32.mxu0 0.0
      %1018 = vmatmul.mubr.f32.gmra.mrb[0].mxu0 %v813
      %v1019 = vpop.f32.mrb[0].mxu0
      %v1020 = vadd.f32 %v712, %v1019
      %v1021 = vpop.f32.mrb[0].mxu0
      %1022 = vmatprep.mubr.f32.mxu0 0.0
      %1023 = vmatmul.mubr.f32.gmra.mrb[0].mxu0 %v816
      %v1024 = vpop.f32.mrb[0].mxu0
      %v1025 = vadd.f32 %v717, %v1024
      %v1026 = vpop.f32.mrb[0].mxu0
      %1027 = vmatprep.mubr.f32.mxu0 0.0
      %1028 = vmatmul.mubr.f32.gmra.mrb[0].mxu0 %v819
      %v1029 = vpop.f32.mrb[0].mxu0
      %v1030 = vadd.f32 %v722, %v1029
      %v1031 = vpop.f32.mrb[0].mxu0
      %1032 = vmatprep.mubr.f32.mxu0 0.0
      %1033 = vmatmul.mubr.f32.gmra.mrb[0].mxu0 %v822
      %v1034 = vpop.f32.mrb[0].mxu0
      %v1035 = vadd.f32 %v727, %v1034
      %v1036 = vpop.f32.mrb[0].mxu0
      %1037 = vmatprep.mubr.f32.mxu0 0.0
      %1038 = vmatmul.mubr.f32.gmra.mrb[0].mxu0 %v825
      %v1039 = vpop.f32.mrb[0].mxu0
      %v1040 = vadd.f32 %v732, %v1039
      %v1041 = vpop.f32.mrb[0].mxu0
      %1042 = vmatprep.mubr.f32.mxu0 0.0
      %1043 = vmatmul.mubr.f32.gmra.mrb[0].mxu0 %v828
      %v1044 = vpop.f32.mrb[0].mxu0
      %v1045 = vadd.f32 %v737, %v1044
      %v1046 = vpop.f32.mrb[0].mxu0
      %1047 = vdwg.mxu0
      %v1048 = vld [vmem:[#allocation2 + $0x2] sm:$0xff]
      %v1049 = vld [vmem:[#allocation2 + $0xa] sm:$0xff]
      %v1050 = vld [vmem:[#allocation2 + $0x12] sm:$0xff]
      %v1051 = vld [vmem:[#allocation2 + $0x1a] sm:$0xff]
      %v1052 = vld [vmem:[#allocation2 + $0x22] sm:$0xff]
      %v1053 = vld [vmem:[#allocation2 + $0x2a] sm:$0xff]
      %v1054 = vld [vmem:[#allocation2 + $0x32] sm:$0xff]
      %v1055 = vld [vmem:[#allocation2 + $0x3a] sm:$0xff]
      %v1056 = vld [vmem:[#allocation2 + $0x42] sm:$0xff]
      %v1057 = vld [vmem:[#allocation2 + $0x4a] sm:$0xff]
      %v1058 = vld [vmem:[#allocation2 + $0x52] sm:$0xff]
      %v1059 = vld [vmem:[#allocation2 + $0x5a] sm:$0xff]
      %v1060 = vld [vmem:[#allocation2 + $0x62] sm:$0xff]
      %v1061 = vld [vmem:[#allocation2 + $0x6a] sm:$0xff]
      %v1062 = vld [vmem:[#allocation2 + $0x72] sm:$0xff]
      %v1063 = vld [vmem:[#allocation2 + $0x7a] sm:$0xff]
      %v1064 = vld [vmem:[#allocation2 + $0x82] sm:$0xff]
      %v1065 = vld [vmem:[#allocation2 + $0x8a] sm:$0xff]
      %v1066 = vld [vmem:[#allocation2 + $0x92] sm:$0xff]
      %v1067 = vld [vmem:[#allocation2 + $0x9a] sm:$0xff]
      %v1068 = vld [vmem:[#allocation2 + $0xa2] sm:$0xff]
      %v1069 = vld [vmem:[#allocation2 + $0xaa] sm:$0xff]
      %v1070 = vld [vmem:[#allocation2 + $0xb2] sm:$0xff]
      %v1071 = vld [vmem:[#allocation2 + $0xba] sm:$0xff]
      %v1072 = vld [vmem:[#allocation2 + $0xc2] sm:$0xff]
      %v1073 = vld [vmem:[#allocation2 + $0xca] sm:$0xff]
      %v1074 = vld [vmem:[#allocation2 + $0xd2] sm:$0xff]
      %v1075 = vld [vmem:[#allocation2 + $0xda] sm:$0xff]
      %v1076 = vld [vmem:[#allocation2 + $0xe2] sm:$0xff]
      %v1077 = vld [vmem:[#allocation2 + $0xea] sm:$0xff]
      %s1078 = scalar_lea.vmem %s3, 8
      %v1079 = vld [vmem:[%s1078] sm:$0xf]
      %v1081 = vsel %vm327, %v1048, 0
      %v1084 = vsel %vm327, %v1049, 0
      %v1087 = vsel %vm327, %v1050, 0
      %v1090 = vsel %vm327, %v1051, 0
      %v1093 = vsel %vm327, %v1052, 0
      %v1096 = vsel %vm327, %v1053, 0
      %v1099 = vsel %vm327, %v1054, 0
      %v1102 = vsel %vm327, %v1055, 0
      %v1105 = vsel %vm327, %v1056, 0
      %v1108 = vsel %vm327, %v1057, 0
      %v1111 = vsel %vm327, %v1058, 0
      %v1114 = vsel %vm327, %v1059, 0
      %v1117 = vsel %vm327, %v1060, 0
      %v1120 = vsel %vm327, %v1061, 0
      %v1123 = vsel %vm327, %v1062, 0
      %v1126 = vsel %vm327, %v1063, 0
      %v1129 = vsel %vm327, %v1064, 0
      %v1132 = vsel %vm327, %v1065, 0
      %v1135 = vsel %vm327, %v1066, 0
      %v1138 = vsel %vm327, %v1067, 0
      %v1141 = vsel %vm327, %v1068, 0
      %v1144 = vsel %vm327, %v1069, 0
      %v1147 = vsel %vm327, %v1070, 0
      %v1150 = vsel %vm327, %v1071, 0
      %v1153 = vsel %vm327, %v1072, 0
      %v1156 = vsel %vm327, %v1073, 0
      %v1159 = vsel %vm327, %v1074, 0
      %v1162 = vsel %vm327, %v1075, 0
      %v1165 = vsel %vm327, %v1076, 0
      %v1168 = vsel %vm327, %v1077, 0
      %v1171 = vsel %vm521, %v1079, 0
      %1173 = vmatprep.subr.mxu0 0.0
      %1174 = vmatpush1.msra.mxu0 %v1171
      %1175 = vmatprep.subr.mxu0 0.0
      %1176 = vmatpush1.msra.mxu0 0.0
      %1177 = vmatprep.subr.mxu0 0.0
      %1178 = vmatpush1.msra.mxu0 0.0
      %1179 = vmatprep.subr.mxu0 0.0
      %1180 = vmatpush1.msra.mxu0 0.0
      %1181 = vmatprep.subr.mxu0 0.0
      %1182 = vmatpush1.msra.mxu0 0.0
      %1183 = vmatprep.subr.mxu0 0.0
      %1184 = vmatpush1.msra.mxu0 0.0
      %1185 = vmatprep.subr.mxu0 0.0
      %1186 = vmatpush1.msra.mxu0 0.0
      %1187 = vmatprep.subr.mxu0 0.0
      %1188 = vmatpush1.msra.mxu0 0.0
      %1189 = vmatprep.subr.mxu0 0.0
      %1190 = vmatpush1.msra.mxu0 0.0
      %1191 = vmatprep.subr.mxu0 0.0
      %1192 = vmatpush1.msra.mxu0 0.0
      %1193 = vmatprep.subr.mxu0 0.0
      %1194 = vmatpush1.msra.mxu0 0.0
      %1195 = vmatprep.subr.mxu0 0.0
      %1196 = vmatpush1.msra.mxu0 0.0
      %1197 = vmatprep.subr.mxu0 0.0
      %1198 = vmatpush1.msra.mxu0 0.0
      %1199 = vmatprep.subr.mxu0 0.0
      %1200 = vmatpush1.msra.mxu0 0.0
      %1201 = vmatprep.subr.mxu0 0.0
      %1202 = vmatpush1.msra.mxu0 0.0
      %1203 = vmatprep.subr.mxu0 0.0
      %1204 = vmatpush1.msra.mxu0 0.0
      %1205 = vmatprep.subr.mxu0 0.0
      %1206 = vmatpush1.msra.mxu0 0.0
      %1207 = vmatprep.subr.mxu0 0.0
      %1208 = vmatpush1.msra.mxu0 0.0
      %1209 = vmatprep.subr.mxu0 0.0
      %1210 = vmatpush1.msra.mxu0 0.0
      %1211 = vmatprep.subr.mxu0 0.0
      %1212 = vmatpush1.msra.mxu0 0.0
      %1213 = vmatprep.subr.mxu0 0.0
      %1214 = vmatpush1.msra.mxu0 0.0
      %1215 = vmatprep.subr.mxu0 0.0
      %1216 = vmatpush1.msra.mxu0 0.0
      %1217 = vmatprep.subr.mxu0 0.0
      %1218 = vmatpush1.msra.mxu0 0.0
      %1219 = vmatprep.subr.mxu0 0.0
      %1220 = vmatpush1.msra.mxu0 0.0
      %1221 = vmatprep.subr.mxu0 0.0
      %1222 = vmatpush1.msra.mxu0 0.0
      %1223 = vmatprep.subr.mxu0 0.0
      %1224 = vmatpush1.msra.mxu0 0.0
      %1225 = vmatprep.subr.mxu0 0.0
      %1226 = vmatpush1.msra.mxu0 0.0
      %1227 = vmatprep.subr.mxu0 0.0
      %1228 = vmatpush1.msra.mxu0 0.0
      %1229 = vmatprep.subr.mxu0 0.0
      %1230 = vmatpush1.msra.mxu0 0.0
      %1231 = vmatprep.subr.mxu0 0.0
      %1232 = vmatpush1.msra.mxu0 0.0
      %1233 = vmatprep.subr.mxu0 0.0
      %1234 = vmatpush1.msra.mxu0 0.0
      %1235 = vmatprep.subr.mxu0 0.0
      %1236 = vmatpush1.msra.mxu0 0.0
      %1237 = vmatprep.mubr.f32.mxu0 0.0
      %1238 = vmatmul.mubr.f32.gmra.mrb[0].mxu0 %v1081
      %v1239 = vpop.f32.mrb[0].mxu0
      %v1240 = vadd.f32 0.0, %v1239
      %v1241 = vpop.f32.mrb[0].mxu0
      %1242 = vmatprep.mubr.f32.mxu0 0.0
      %1243 = vmatmul.mubr.f32.gmra.mrb[0].mxu0 %v1084
      %v1244 = vpop.f32.mrb[0].mxu0
      %v1245 = vadd.f32 0.0, %v1244
      %v1246 = vpop.f32.mrb[0].mxu0
      %1247 = vmatprep.mubr.f32.mxu0 0.0
      %1248 = vmatmul.mubr.f32.gmra.mrb[0].mxu0 %v1087
      %v1249 = vpop.f32.mrb[0].mxu0
      %v1250 = vadd.f32 0.0, %v1249
      %v1251 = vpop.f32.mrb[0].mxu0
      %1252 = vmatprep.mubr.f32.mxu0 0.0
      %1253 = vmatmul.mubr.f32.gmra.mrb[0].mxu0 %v1090
      %v1254 = vpop.f32.mrb[0].mxu0
      %v1255 = vadd.f32 0.0, %v1254
      %v1256 = vpop.f32.mrb[0].mxu0
      %1257 = vmatprep.mubr.f32.mxu0 0.0
      %1258 = vmatmul.mubr.f32.gmra.mrb[0].mxu0 %v1093
      %v1259 = vpop.f32.mrb[0].mxu0
      %v1260 = vadd.f32 0.0, %v1259
      %v1261 = vpop.f32.mrb[0].mxu0
      %1262 = vmatprep.mubr.f32.mxu0 0.0
      %1263 = vmatmul.mubr.f32.gmra.mrb[0].mxu0 %v1096
      %v1264 = vpop.f32.mrb[0].mxu0
      %v1265 = vadd.f32 0.0, %v1264
      %v1266 = vpop.f32.mrb[0].mxu0
      %1267 = vmatprep.mubr.f32.mxu0 0.0
      %1268 = vmatmul.mubr.f32.gmra.mrb[0].mxu0 %v1099
      %v1269 = vpop.f32.mrb[0].mxu0
      %v1270 = vadd.f32 0.0, %v1269
      %v1271 = vpop.f32.mrb[0].mxu0
      %1272 = vmatprep.mubr.f32.mxu0 0.0
      %1273 = vmatmul.mubr.f32.gmra.mrb[0].mxu0 %v1102
      %v1274 = vpop.f32.mrb[0].mxu0
      %v1275 = vadd.f32 0.0, %v1274
      %v1276 = vpop.f32.mrb[0].mxu0
      %1277 = vmatprep.mubr.f32.mxu0 0.0
      %1278 = vmatmul.mubr.f32.gmra.mrb[0].mxu0 %v1105
      %v1279 = vpop.f32.mrb[0].mxu0
      %v1280 = vadd.f32 0.0, %v1279
      %v1281 = vpop.f32.mrb[0].mxu0
      %1282 = vmatprep.mubr.f32.mxu0 0.0
      %1283 = vmatmul.mubr.f32.gmra.mrb[0].mxu0 %v1108
      %v1284 = vpop.f32.mrb[0].mxu0
      %v1285 = vadd.f32 0.0, %v1284
      %v1286 = vpop.f32.mrb[0].mxu0
      %1287 = vmatprep.mubr.f32.mxu0 0.0
      %1288 = vmatmul.mubr.f32.gmra.mrb[0].mxu0 %v1111
      %v1289 = vpop.f32.mrb[0].mxu0
      %v1290 = vadd.f32 0.0, %v1289
      %v1291 = vpop.f32.mrb[0].mxu0
      %1292 = vmatprep.mubr.f32.mxu0 0.0
      %1293 = vmatmul.mubr.f32.gmra.mrb[0].mxu0 %v1114
      %v1294 = vpop.f32.mrb[0].mxu0
      %v1295 = vadd.f32 0.0, %v1294
      %v1296 = vpop.f32.mrb[0].mxu0
      %1297 = vmatprep.mubr.f32.mxu0 0.0
      %1298 = vmatmul.mubr.f32.gmra.mrb[0].mxu0 %v1117
      %v1299 = vpop.f32.mrb[0].mxu0
      %v1300 = vadd.f32 0.0, %v1299
      %v1301 = vpop.f32.mrb[0].mxu0
      %1302 = vmatprep.mubr.f32.mxu0 0.0
      %1303 = vmatmul.mubr.f32.gmra.mrb[0].mxu0 %v1120
      %v1304 = vpop.f32.mrb[0].mxu0
      %v1305 = vadd.f32 0.0, %v1304
      %v1306 = vpop.f32.mrb[0].mxu0
      %1307 = vmatprep.mubr.f32.mxu0 0.0
      %1308 = vmatmul.mubr.f32.gmra.mrb[0].mxu0 %v1123
      %v1309 = vpop.f32.mrb[0].mxu0
      %v1310 = vadd.f32 0.0, %v1309
      %v1311 = vpop.f32.mrb[0].mxu0
      %1312 = vmatprep.mubr.f32.mxu0 0.0
      %1313 = vmatmul.mubr.f32.gmra.mrb[0].mxu0 %v1126
      %v1314 = vpop.f32.mrb[0].mxu0
      %v1315 = vadd.f32 0.0, %v1314
      %v1316 = vpop.f32.mrb[0].mxu0
      %1317 = vmatprep.mubr.f32.mxu0 0.0
      %1318 = vmatmul.mubr.f32.gmra.mrb[0].mxu0 %v1129
      %v1319 = vpop.f32.mrb[0].mxu0
      %v1320 = vadd.f32 0.0, %v1319
      %v1321 = vpop.f32.mrb[0].mxu0
      %1322 = vmatprep.mubr.f32.mxu0 0.0
      %1323 = vmatmul.mubr.f32.gmra.mrb[0].mxu0 %v1132
      %v1324 = vpop.f32.mrb[0].mxu0
      %v1325 = vadd.f32 0.0, %v1324
      %v1326 = vpop.f32.mrb[0].mxu0
      %1327 = vmatprep.mubr.f32.mxu0 0.0
      %1328 = vmatmul.mubr.f32.gmra.mrb[0].mxu0 %v1135
      %v1329 = vpop.f32.mrb[0].mxu0
      %v1330 = vadd.f32 0.0, %v1329
      %v1331 = vpop.f32.mrb[0].mxu0
      %1332 = vmatprep.mubr.f32.mxu0 0.0
      %1333 = vmatmul.mubr.f32.gmra.mrb[0].mxu0 %v1138
      %v1334 = vpop.f32.mrb[0].mxu0
      %v1335 = vadd.f32 0.0, %v1334
      %v1336 = vpop.f32.mrb[0].mxu0
      %1337 = vmatprep.mubr.f32.mxu0 0.0
      %1338 = vmatmul.mubr.f32.gmra.mrb[0].mxu0 %v1141
      %v1339 = vpop.f32.mrb[0].mxu0
      %v1340 = vadd.f32 0.0, %v1339
      %v1341 = vpop.f32.mrb[0].mxu0
      %1342 = vmatprep.mubr.f32.mxu0 0.0
      %1343 = vmatmul.mubr.f32.gmra.mrb[0].mxu0 %v1144
      %v1344 = vpop.f32.mrb[0].mxu0
      %v1345 = vadd.f32 0.0, %v1344
      %v1346 = vpop.f32.mrb[0].mxu0
      %1347 = vmatprep.mubr.f32.mxu0 0.0
      %1348 = vmatmul.mubr.f32.gmra.mrb[0].mxu0 %v1147
      %v1349 = vpop.f32.mrb[0].mxu0
      %v1350 = vadd.f32 0.0, %v1349
      %v1351 = vpop.f32.mrb[0].mxu0
      %1352 = vmatprep.mubr.f32.mxu0 0.0
      %1353 = vmatmul.mubr.f32.gmra.mrb[0].mxu0 %v1150
      %v1354 = vpop.f32.mrb[0].mxu0
      %v1355 = vadd.f32 0.0, %v1354
      %v1356 = vpop.f32.mrb[0].mxu0
      %1357 = vmatprep.mubr.f32.mxu0 0.0
      %1358 = vmatmul.mubr.f32.gmra.mrb[0].mxu0 %v1153
      %v1359 = vpop.f32.mrb[0].mxu0
      %v1360 = vadd.f32 0.0, %v1359
      %v1361 = vpop.f32.mrb[0].mxu0
      %1362 = vmatprep.mubr.f32.mxu0 0.0
      %1363 = vmatmul.mubr.f32.gmra.mrb[0].mxu0 %v1156
      %v1364 = vpop.f32.mrb[0].mxu0
      %v1365 = vadd.f32 0.0, %v1364
      %v1366 = vpop.f32.mrb[0].mxu0
      %1367 = vmatprep.mubr.f32.mxu0 0.0
      %1368 = vmatmul.mubr.f32.gmra.mrb[0].mxu0 %v1159
      %v1369 = vpop.f32.mrb[0].mxu0
      %v1370 = vadd.f32 0.0, %v1369
      %v1371 = vpop.f32.mrb[0].mxu0
      %1372 = vmatprep.mubr.f32.mxu0 0.0
      %1373 = vmatmul.mubr.f32.gmra.mrb[0].mxu0 %v1162
      %v1374 = vpop.f32.mrb[0].mxu0
      %v1375 = vadd.f32 0.0, %v1374
      %v1376 = vpop.f32.mrb[0].mxu0
      %1377 = vmatprep.mubr.f32.mxu0 0.0
      %1378 = vmatmul.mubr.f32.gmra.mrb[0].mxu0 %v1165
      %v1379 = vpop.f32.mrb[0].mxu0
      %v1380 = vadd.f32 0.0, %v1379
      %v1381 = vpop.f32.mrb[0].mxu0
      %1382 = vmatprep.mubr.f32.mxu0 0.0
      %1383 = vmatmul.mubr.f32.gmra.mrb[0].mxu0 %v1168
      %v1384 = vpop.f32.mrb[0].mxu0
      %v1385 = vadd.f32 0.0, %v1384
      %v1386 = vpop.f32.mrb[0].mxu0
      %1387 = vdwg.mxu0
      %v1388 = vadd.f32 %v900, %v1240
      %v1389 = vadd.f32 %v905, %v1245
      %v1390 = vadd.f32 %v910, %v1250
      %v1391 = vadd.f32 %v915, %v1255
      %v1392 = vadd.f32 %v920, %v1260
      %v1393 = vadd.f32 %v925, %v1265
      %v1394 = vadd.f32 %v930, %v1270
      %v1395 = vadd.f32 %v935, %v1275
      %v1396 = vadd.f32 %v940, %v1280
      %v1397 = vadd.f32 %v945, %v1285
      %v1398 = vadd.f32 %v950, %v1290
      %v1399 = vadd.f32 %v955, %v1295
      %v1400 = vadd.f32 %v960, %v1300
      %v1401 = vadd.f32 %v965, %v1305
      %v1402 = vadd.f32 %v970, %v1310
      %v1403 = vadd.f32 %v975, %v1315
      %v1404 = vadd.f32 %v980, %v1320
      %v1405 = vadd.f32 %v985, %v1325
      %v1406 = vadd.f32 %v990, %v1330
      %v1407 = vadd.f32 %v995, %v1335
      %v1408 = vadd.f32 %v1000, %v1340
      %v1409 = vadd.f32 %v1005, %v1345
      %v1410 = vadd.f32 %v1010, %v1350
      %v1411 = vadd.f32 %v1015, %v1355
      %v1412 = vadd.f32 %v1020, %v1360
      %v1413 = vadd.f32 %v1025, %v1365
      %v1414 = vadd.f32 %v1030, %v1370
      %v1415 = vadd.f32 %v1035, %v1375
      %v1416 = vadd.f32 %v1040, %v1380
      %v1417 = vadd.f32 %v1045, %v1385
      %v1418 = vld [vmem:[#allocation2 + $0x12] sm:$0xff]
      %v1419 = vld [vmem:[#allocation2 + $0x1a] sm:$0xff]
      %v1420 = vld [vmem:[#allocation2 + $0x22] sm:$0xff]
      %v1421 = vld [vmem:[#allocation2 + $0x2a] sm:$0xff]
      %v1422 = vld [vmem:[#allocation2 + $0x32] sm:$0xff]
      %v1423 = vld [vmem:[#allocation2 + $0x3a] sm:$0xff]
      %v1424 = vld [vmem:[#allocation2 + $0x42] sm:$0xff]
      %v1425 = vld [vmem:[#allocation2 + $0x4a] sm:$0xff]
      %v1426 = vld [vmem:[#allocation2 + $0x52] sm:$0xff]
      %v1427 = vld [vmem:[#allocation2 + $0x5a] sm:$0xff]
      %v1428 = vld [vmem:[#allocation2 + $0x62] sm:$0xff]
      %v1429 = vld [vmem:[#allocation2 + $0x6a] sm:$0xff]
      %v1430 = vld [vmem:[#allocation2 + $0x72] sm:$0xff]
      %v1431 = vld [vmem:[#allocation2 + $0x7a] sm:$0xff]
      %v1432 = vld [vmem:[#allocation2 + $0x82] sm:$0xff]
      %v1433 = vld [vmem:[#allocation2 + $0x8a] sm:$0xff]
      %v1434 = vld [vmem:[#allocation2 + $0x92] sm:$0xff]
      %v1435 = vld [vmem:[#allocation2 + $0x9a] sm:$0xff]
      %v1436 = vld [vmem:[#allocation2 + $0xa2] sm:$0xff]
      %v1437 = vld [vmem:[#allocation2 + $0xaa] sm:$0xff]
      %v1438 = vld [vmem:[#allocation2 + $0xb2] sm:$0xff]
      %v1439 = vld [vmem:[#allocation2 + $0xba] sm:$0xff]
      %v1440 = vld [vmem:[#allocation2 + $0xc2] sm:$0xff]
      %v1441 = vld [vmem:[#allocation2 + $0xca] sm:$0xff]
      %v1442 = vld [vmem:[#allocation2 + $0xd2] sm:$0xff]
      %v1443 = vld [vmem:[#allocation2 + $0xda] sm:$0xff]
      %v1444 = vld [vmem:[#allocation2 + $0xe2] sm:$0xff]
      %v1445 = vld [vmem:[#allocation2 + $0xea] sm:$0xff]
      %v1446 = vld [vmem:[#allocation2 + $0xf2] sm:$0xff]
      %v1447 = vld [vmem:[#allocation2 + $0xfa] sm:$0xff]
      %s1448 = scalar_lea.vmem %s3, 12
      %v1449 = vld [vmem:[%s1448] sm:$0xf]
      %v1451 = vsel %vm327, %v1418, 0
      %v1454 = vsel %vm327, %v1419, 0
      %v1457 = vsel %vm327, %v1420, 0
      %v1460 = vsel %vm327, %v1421, 0
      %v1463 = vsel %vm327, %v1422, 0
      %v1466 = vsel %vm327, %v1423, 0
      %v1469 = vsel %vm327, %v1424, 0
      %v1472 = vsel %vm327, %v1425, 0
      %v1475 = vsel %vm327, %v1426, 0
      %v1478 = vsel %vm327, %v1427, 0
      %v1481 = vsel %vm327, %v1428, 0
      %v1484 = vsel %vm327, %v1429, 0
      %v1487 = vsel %vm327, %v1430, 0
      %v1490 = vsel %vm327, %v1431, 0
      %v1493 = vsel %vm327, %v1432, 0
      %v1496 = vsel %vm327, %v1433, 0
      %v1499 = vsel %vm327, %v1434, 0
      %v1502 = vsel %vm327, %v1435, 0
      %v1505 = vsel %vm327, %v1436, 0
      %v1508 = vsel %vm327, %v1437, 0
      %v1511 = vsel %vm327, %v1438, 0
      %v1514 = vsel %vm327, %v1439, 0
      %v1517 = vsel %vm327, %v1440, 0
      %v1520 = vsel %vm327, %v1441, 0
      %v1523 = vsel %vm327, %v1442, 0
      %v1526 = vsel %vm327, %v1443, 0
      %v1529 = vsel %vm327, %v1444, 0
      %v1532 = vsel %vm327, %v1445, 0
      %v1535 = vsel %vm327, %v1446, 0
      %v1538 = vsel %vm327, %v1447, 0
      %v1541 = vsel %vm521, %v1449, 0
      %1543 = vmatprep.subr.mxu0 0.0
      %1544 = vmatpush1.msra.mxu0 %v1541
      %1545 = vmatprep.subr.mxu0 0.0
      %1546 = vmatpush1.msra.mxu0 0.0
      %1547 = vmatprep.subr.mxu0 0.0
      %1548 = vmatpush1.msra.mxu0 0.0
      %1549 = vmatprep.subr.mxu0 0.0
      %1550 = vmatpush1.msra.mxu0 0.0
      %1551 = vmatprep.subr.mxu0 0.0
      %1552 = vmatpush1.msra.mxu0 0.0
      %1553 = vmatprep.subr.mxu0 0.0
      %1554 = vmatpush1.msra.mxu0 0.0
      %1555 = vmatprep.subr.mxu0 0.0
      %1556 = vmatpush1.msra.mxu0 0.0
      %1557 = vmatprep.subr.mxu0 0.0
      %1558 = vmatpush1.msra.mxu0 0.0
      %1559 = vmatprep.subr.mxu0 0.0
      %1560 = vmatpush1.msra.mxu0 0.0
      %1561 = vmatprep.subr.mxu0 0.0
      %1562 = vmatpush1.msra.mxu0 0.0
      %1563 = vmatprep.subr.mxu0 0.0
      %1564 = vmatpush1.msra.mxu0 0.0
      %1565 = vmatprep.subr.mxu0 0.0
      %1566 = vmatpush1.msra.mxu0 0.0
      %1567 = vmatprep.subr.mxu0 0.0
      %1568 = vmatpush1.msra.mxu0 0.0
      %1569 = vmatprep.subr.mxu0 0.0
      %1570 = vmatpush1.msra.mxu0 0.0
      %1571 = vmatprep.subr.mxu0 0.0
      %1572 = vmatpush1.msra.mxu0 0.0
      %1573 = vmatprep.subr.mxu0 0.0
      %1574 = vmatpush1.msra.mxu0 0.0
      %1575 = vmatprep.subr.mxu0 0.0
      %1576 = vmatpush1.msra.mxu0 0.0
      %1577 = vmatprep.subr.mxu0 0.0
      %1578 = vmatpush1.msra.mxu0 0.0
      %1579 = vmatprep.subr.mxu0 0.0
      %1580 = vmatpush1.msra.mxu0 0.0
      %1581 = vmatprep.subr.mxu0 0.0
      %1582 = vmatpush1.msra.mxu0 0.0
      %1583 = vmatprep.subr.mxu0 0.0
      %1584 = vmatpush1.msra.mxu0 0.0
      %1585 = vmatprep.subr.mxu0 0.0
      %1586 = vmatpush1.msra.mxu0 0.0
      %1587 = vmatprep.subr.mxu0 0.0
      %1588 = vmatpush1.msra.mxu0 0.0
      %1589 = vmatprep.subr.mxu0 0.0
      %1590 = vmatpush1.msra.mxu0 0.0
      %1591 = vmatprep.subr.mxu0 0.0
      %1592 = vmatpush1.msra.mxu0 0.0
      %1593 = vmatprep.subr.mxu0 0.0
      %1594 = vmatpush1.msra.mxu0 0.0
      %1595 = vmatprep.subr.mxu0 0.0
      %1596 = vmatpush1.msra.mxu0 0.0
      %1597 = vmatprep.subr.mxu0 0.0
      %1598 = vmatpush1.msra.mxu0 0.0
      %1599 = vmatprep.subr.mxu0 0.0
      %1600 = vmatpush1.msra.mxu0 0.0
      %1601 = vmatprep.subr.mxu0 0.0
      %1602 = vmatpush1.msra.mxu0 0.0
      %1603 = vmatprep.subr.mxu0 0.0
      %1604 = vmatpush1.msra.mxu0 0.0
      %1605 = vmatprep.subr.mxu0 0.0
      %1606 = vmatpush1.msra.mxu0 0.0
      %1607 = vmatprep.mubr.f32.mxu0 0.0
      %1608 = vmatmul.mubr.f32.gmra.mrb[0].mxu0 %v1451
      %v1609 = vpop.f32.mrb[0].mxu0
      %v1610 = vadd.f32 0.0, %v1609
      %v1611 = vpop.f32.mrb[0].mxu0
      %1612 = vmatprep.mubr.f32.mxu0 0.0
      %1613 = vmatmul.mubr.f32.gmra.mrb[0].mxu0 %v1454
      %v1614 = vpop.f32.mrb[0].mxu0
      %v1615 = vadd.f32 0.0, %v1614
      %v1616 = vpop.f32.mrb[0].mxu0
      %1617 = vmatprep.mubr.f32.mxu0 0.0
      %1618 = vmatmul.mubr.f32.gmra.mrb[0].mxu0 %v1457
      %v1619 = vpop.f32.mrb[0].mxu0
      %v1620 = vadd.f32 0.0, %v1619
      %v1621 = vpop.f32.mrb[0].mxu0
      %1622 = vmatprep.mubr.f32.mxu0 0.0
      %1623 = vmatmul.mubr.f32.gmra.mrb[0].mxu0 %v1460
      %v1624 = vpop.f32.mrb[0].mxu0
      %v1625 = vadd.f32 0.0, %v1624
      %v1626 = vpop.f32.mrb[0].mxu0
      %1627 = vmatprep.mubr.f32.mxu0 0.0
      %1628 = vmatmul.mubr.f32.gmra.mrb[0].mxu0 %v1463
      %v1629 = vpop.f32.mrb[0].mxu0
      %v1630 = vadd.f32 0.0, %v1629
      %v1631 = vpop.f32.mrb[0].mxu0
      %1632 = vmatprep.mubr.f32.mxu0 0.0
      %1633 = vmatmul.mubr.f32.gmra.mrb[0].mxu0 %v1466
      %v1634 = vpop.f32.mrb[0].mxu0
      %v1635 = vadd.f32 0.0, %v1634
      %v1636 = vpop.f32.mrb[0].mxu0
      %1637 = vmatprep.mubr.f32.mxu0 0.0
      %1638 = vmatmul.mubr.f32.gmra.mrb[0].mxu0 %v1469
      %v1639 = vpop.f32.mrb[0].mxu0
      %v1640 = vadd.f32 0.0, %v1639
      %v1641 = vpop.f32.mrb[0].mxu0
      %1642 = vmatprep.mubr.f32.mxu0 0.0
      %1643 = vmatmul.mubr.f32.gmra.mrb[0].mxu0 %v1472
      %v1644 = vpop.f32.mrb[0].mxu0
      %v1645 = vadd.f32 0.0, %v1644
      %v1646 = vpop.f32.mrb[0].mxu0
      %1647 = vmatprep.mubr.f32.mxu0 0.0
      %1648 = vmatmul.mubr.f32.gmra.mrb[0].mxu0 %v1475
      %v1649 = vpop.f32.mrb[0].mxu0
      %v1650 = vadd.f32 0.0, %v1649
      %v1651 = vpop.f32.mrb[0].mxu0
      %1652 = vmatprep.mubr.f32.mxu0 0.0
      %1653 = vmatmul.mubr.f32.gmra.mrb[0].mxu0 %v1478
      %v1654 = vpop.f32.mrb[0].mxu0
      %v1655 = vadd.f32 0.0, %v1654
      %v1656 = vpop.f32.mrb[0].mxu0
      %1657 = vmatprep.mubr.f32.mxu0 0.0
      %1658 = vmatmul.mubr.f32.gmra.mrb[0].mxu0 %v1481
      %v1659 = vpop.f32.mrb[0].mxu0
      %v1660 = vadd.f32 0.0, %v1659
      %v1661 = vpop.f32.mrb[0].mxu0
      %1662 = vmatprep.mubr.f32.mxu0 0.0
      %1663 = vmatmul.mubr.f32.gmra.mrb[0].mxu0 %v1484
      %v1664 = vpop.f32.mrb[0].mxu0
      %v1665 = vadd.f32 0.0, %v1664
      %v1666 = vpop.f32.mrb[0].mxu0
      %1667 = vmatprep.mubr.f32.mxu0 0.0
      %1668 = vmatmul.mubr.f32.gmra.mrb[0].mxu0 %v1487
      %v1669 = vpop.f32.mrb[0].mxu0
      %v1670 = vadd.f32 0.0, %v1669
      %v1671 = vpop.f32.mrb[0].mxu0
      %1672 = vmatprep.mubr.f32.mxu0 0.0
      %1673 = vmatmul.mubr.f32.gmra.mrb[0].mxu0 %v1490
      %v1674 = vpop.f32.mrb[0].mxu0
      %v1675 = vadd.f32 0.0, %v1674
      %v1676 = vpop.f32.mrb[0].mxu0
      %1677 = vmatprep.mubr.f32.mxu0 0.0
      %1678 = vmatmul.mubr.f32.gmra.mrb[0].mxu0 %v1493
      %v1679 = vpop.f32.mrb[0].mxu0
      %v1680 = vadd.f32 0.0, %v1679
      %v1681 = vpop.f32.mrb[0].mxu0
      %1682 = vmatprep.mubr.f32.mxu0 0.0
      %1683 = vmatmul.mubr.f32.gmra.mrb[0].mxu0 %v1496
      %v1684 = vpop.f32.mrb[0].mxu0
      %v1685 = vadd.f32 0.0, %v1684
      %v1686 = vpop.f32.mrb[0].mxu0
      %1687 = vmatprep.mubr.f32.mxu0 0.0
      %1688 = vmatmul.mubr.f32.gmra.mrb[0].mxu0 %v1499
      %v1689 = vpop.f32.mrb[0].mxu0
      %v1690 = vadd.f32 0.0, %v1689
      %v1691 = vpop.f32.mrb[0].mxu0
      %1692 = vmatprep.mubr.f32.mxu0 0.0
      %1693 = vmatmul.mubr.f32.gmra.mrb[0].mxu0 %v1502
      %v1694 = vpop.f32.mrb[0].mxu0
      %v1695 = vadd.f32 0.0, %v1694
      %v1696 = vpop.f32.mrb[0].mxu0
      %1697 = vmatprep.mubr.f32.mxu0 0.0
      %1698 = vmatmul.mubr.f32.gmra.mrb[0].mxu0 %v1505
      %v1699 = vpop.f32.mrb[0].mxu0
      %v1700 = vadd.f32 0.0, %v1699
      %v1701 = vpop.f32.mrb[0].mxu0
      %1702 = vmatprep.mubr.f32.mxu0 0.0
      %1703 = vmatmul.mubr.f32.gmra.mrb[0].mxu0 %v1508
      %v1704 = vpop.f32.mrb[0].mxu0
      %v1705 = vadd.f32 0.0, %v1704
      %v1706 = vpop.f32.mrb[0].mxu0
      %1707 = vmatprep.mubr.f32.mxu0 0.0
      %1708 = vmatmul.mubr.f32.gmra.mrb[0].mxu0 %v1511
      %v1709 = vpop.f32.mrb[0].mxu0
      %v1710 = vadd.f32 0.0, %v1709
      %v1711 = vpop.f32.mrb[0].mxu0
      %1712 = vmatprep.mubr.f32.mxu0 0.0
      %1713 = vmatmul.mubr.f32.gmra.mrb[0].mxu0 %v1514
      %v1714 = vpop.f32.mrb[0].mxu0
      %v1715 = vadd.f32 0.0, %v1714
      %v1716 = vpop.f32.mrb[0].mxu0
      %1717 = vmatprep.mubr.f32.mxu0 0.0
      %1718 = vmatmul.mubr.f32.gmra.mrb[0].mxu0 %v1517
      %v1719 = vpop.f32.mrb[0].mxu0
      %v1720 = vadd.f32 0.0, %v1719
      %v1721 = vpop.f32.mrb[0].mxu0
      %1722 = vmatprep.mubr.f32.mxu0 0.0
      %1723 = vmatmul.mubr.f32.gmra.mrb[0].mxu0 %v1520
      %v1724 = vpop.f32.mrb[0].mxu0
      %v1725 = vadd.f32 0.0, %v1724
      %v1726 = vpop.f32.mrb[0].mxu0
      %1727 = vmatprep.mubr.f32.mxu0 0.0
      %1728 = vmatmul.mubr.f32.gmra.mrb[0].mxu0 %v1523
      %v1729 = vpop.f32.mrb[0].mxu0
      %v1730 = vadd.f32 0.0, %v1729
      %v1731 = vpop.f32.mrb[0].mxu0
      %1732 = vmatprep.mubr.f32.mxu0 0.0
      %1733 = vmatmul.mubr.f32.gmra.mrb[0].mxu0 %v1526
      %v1734 = vpop.f32.mrb[0].mxu0
      %v1735 = vadd.f32 0.0, %v1734
      %v1736 = vpop.f32.mrb[0].mxu0
      %1737 = vmatprep.mubr.f32.mxu0 0.0
      %1738 = vmatmul.mubr.f32.gmra.mrb[0].mxu0 %v1529
      %v1739 = vpop.f32.mrb[0].mxu0
      %v1740 = vadd.f32 0.0, %v1739
      %v1741 = vpop.f32.mrb[0].mxu0
      %1742 = vmatprep.mubr.f32.mxu0 0.0
      %1743 = vmatmul.mubr.f32.gmra.mrb[0].mxu0 %v1532
      %v1744 = vpop.f32.mrb[0].mxu0
      %v1745 = vadd.f32 0.0, %v1744
      %v1746 = vpop.f32.mrb[0].mxu0
      %1747 = vmatprep.mubr.f32.mxu0 0.0
      %1748 = vmatmul.mubr.f32.gmra.mrb[0].mxu0 %v1535
      %v1749 = vpop.f32.mrb[0].mxu0
      %v1750 = vadd.f32 0.0, %v1749
      %v1751 = vpop.f32.mrb[0].mxu0
      %1752 = vmatprep.mubr.f32.mxu0 0.0
      %1753 = vmatmul.mubr.f32.gmra.mrb[0].mxu0 %v1538
      %v1754 = vpop.f32.mrb[0].mxu0
      %v1755 = vadd.f32 0.0, %v1754
      %v1756 = vpop.f32.mrb[0].mxu0
      %1757 = vdwg.mxu0
      %v1758 = vadd.f32 %v1388, %v1610
      %v1759 = vadd.f32 %v1389, %v1615
      %v1760 = vadd.f32 %v1390, %v1620
      %v1761 = vadd.f32 %v1391, %v1625
      %v1762 = vadd.f32 %v1392, %v1630
      %v1763 = vadd.f32 %v1393, %v1635
      %v1764 = vadd.f32 %v1394, %v1640
      %v1765 = vadd.f32 %v1395, %v1645
      %v1766 = vadd.f32 %v1396, %v1650
      %v1767 = vadd.f32 %v1397, %v1655
      %v1768 = vadd.f32 %v1398, %v1660
      %v1769 = vadd.f32 %v1399, %v1665
      %v1770 = vadd.f32 %v1400, %v1670
      %v1771 = vadd.f32 %v1401, %v1675
      %v1772 = vadd.f32 %v1402, %v1680
      %v1773 = vadd.f32 %v1403, %v1685
      %v1774 = vadd.f32 %v1404, %v1690
      %v1775 = vadd.f32 %v1405, %v1695
      %v1776 = vadd.f32 %v1406, %v1700
      %v1777 = vadd.f32 %v1407, %v1705
      %v1778 = vadd.f32 %v1408, %v1710
      %v1779 = vadd.f32 %v1409, %v1715
      %v1780 = vadd.f32 %v1410, %v1720
      %v1781 = vadd.f32 %v1411, %v1725
      %v1782 = vadd.f32 %v1412, %v1730
      %v1783 = vadd.f32 %v1413, %v1735
      %v1784 = vadd.f32 %v1414, %v1740
      %v1785 = vadd.f32 %v1415, %v1745
      %v1786 = vadd.f32 %v1416, %v1750
      %v1787 = vadd.f32 %v1417, %v1755
      %v1788 = vld [vmem:[#allocation2 + $0x13] sm:$0xff]
      %v1789 = vld [vmem:[#allocation2 + $0x1b] sm:$0xff]
      %v1790 = vld [vmem:[#allocation2 + $0x23] sm:$0xff]
      %v1791 = vld [vmem:[#allocation2 + $0x2b] sm:$0xff]
      %v1792 = vld [vmem:[#allocation2 + $0x33] sm:$0xff]
      %v1793 = vld [vmem:[#allocation2 + $0x3b] sm:$0xff]
      %v1794 = vld [vmem:[#allocation2 + $0x43] sm:$0xff]
      %v1795 = vld [vmem:[#allocation2 + $0x4b] sm:$0xff]
      %v1796 = vld [vmem:[#allocation2 + $0x53] sm:$0xff]
      %v1797 = vld [vmem:[#allocation2 + $0x5b] sm:$0xff]
      %v1798 = vld [vmem:[#allocation2 + $0x63] sm:$0xff]
      %v1799 = vld [vmem:[#allocation2 + $0x6b] sm:$0xff]
      %v1800 = vld [vmem:[#allocation2 + $0x73] sm:$0xff]
      %v1801 = vld [vmem:[#allocation2 + $0x7b] sm:$0xff]
      %v1802 = vld [vmem:[#allocation2 + $0x83] sm:$0xff]
      %v1803 = vld [vmem:[#allocation2 + $0x8b] sm:$0xff]
      %v1804 = vld [vmem:[#allocation2 + $0x93] sm:$0xff]
      %v1805 = vld [vmem:[#allocation2 + $0x9b] sm:$0xff]
      %v1806 = vld [vmem:[#allocation2 + $0xa3] sm:$0xff]
      %v1807 = vld [vmem:[#allocation2 + $0xab] sm:$0xff]
      %v1808 = vld [vmem:[#allocation2 + $0xb3] sm:$0xff]
      %v1809 = vld [vmem:[#allocation2 + $0xbb] sm:$0xff]
      %v1810 = vld [vmem:[#allocation2 + $0xc3] sm:$0xff]
      %v1811 = vld [vmem:[#allocation2 + $0xcb] sm:$0xff]
      %v1812 = vld [vmem:[#allocation2 + $0xd3] sm:$0xff]
      %v1813 = vld [vmem:[#allocation2 + $0xdb] sm:$0xff]
      %v1814 = vld [vmem:[#allocation2 + $0xe3] sm:$0xff]
      %v1815 = vld [vmem:[#allocation2 + $0xeb] sm:$0xff]
      %v1816 = vld [vmem:[#allocation2 + $0xf3] sm:$0xff]
      %v1817 = vld [vmem:[#allocation2 + $0xfb] sm:$0xff]
      %s1818 = scalar_lea.vmem %s3, 16
      %v1819 = vld [vmem:[%s1818] sm:$0xf]
      %v1821 = vsel %vm327, %v1788, 0
      %v1824 = vsel %vm327, %v1789, 0
      %v1827 = vsel %vm327, %v1790, 0
      %v1830 = vsel %vm327, %v1791, 0
      %v1833 = vsel %vm327, %v1792, 0
      %v1836 = vsel %vm327, %v1793, 0
      %v1839 = vsel %vm327, %v1794, 0
      %v1842 = vsel %vm327, %v1795, 0
      %v1845 = vsel %vm327, %v1796, 0
      %v1848 = vsel %vm327, %v1797, 0
      %v1851 = vsel %vm327, %v1798, 0
      %v1854 = vsel %vm327, %v1799, 0
      %v1857 = vsel %vm327, %v1800, 0
      %v1860 = vsel %vm327, %v1801, 0
      %v1863 = vsel %vm327, %v1802, 0
      %v1866 = vsel %vm327, %v1803, 0
      %v1869 = vsel %vm327, %v1804, 0
      %v1872 = vsel %vm327, %v1805, 0
      %v1875 = vsel %vm327, %v1806, 0
      %v1878 = vsel %vm327, %v1807, 0
      %v1881 = vsel %vm327, %v1808, 0
      %v1884 = vsel %vm327, %v1809, 0
      %v1887 = vsel %vm327, %v1810, 0
      %v1890 = vsel %vm327, %v1811, 0
      %v1893 = vsel %vm327, %v1812, 0
      %v1896 = vsel %vm327, %v1813, 0
      %v1899 = vsel %vm327, %v1814, 0
      %v1902 = vsel %vm327, %v1815, 0
      %v1905 = vsel %vm327, %v1816, 0
      %v1908 = vsel %vm327, %v1817, 0
      %v1911 = vsel %vm521, %v1819, 0
      %1913 = vmatprep.subr.mxu0 0.0
      %1914 = vmatpush1.msra.mxu0 %v1911
      %1915 = vmatprep.subr.mxu0 0.0
      %1916 = vmatpush1.msra.mxu0 0.0
      %1917 = vmatprep.subr.mxu0 0.0
      %1918 = vmatpush1.msra.mxu0 0.0
      %1919 = vmatprep.subr.mxu0 0.0
      %1920 = vmatpush1.msra.mxu0 0.0
      %1921 = vmatprep.subr.mxu0 0.0
      %1922 = vmatpush1.msra.mxu0 0.0
      %1923 = vmatprep.subr.mxu0 0.0
      %1924 = vmatpush1.msra.mxu0 0.0
      %1925 = vmatprep.subr.mxu0 0.0
      %1926 = vmatpush1.msra.mxu0 0.0
      %1927 = vmatprep.subr.mxu0 0.0
      %1928 = vmatpush1.msra.mxu0 0.0
      %1929 = vmatprep.subr.mxu0 0.0
      %1930 = vmatpush1.msra.mxu0 0.0
      %1931 = vmatprep.subr.mxu0 0.0
      %1932 = vmatpush1.msra.mxu0 0.0
      %1933 = vmatprep.subr.mxu0 0.0
      %1934 = vmatpush1.msra.mxu0 0.0
      %1935 = vmatprep.subr.mxu0 0.0
      %1936 = vmatpush1.msra.mxu0 0.0
      %1937 = vmatprep.subr.mxu0 0.0
      %1938 = vmatpush1.msra.mxu0 0.0
      %1939 = vmatprep.subr.mxu0 0.0
      %1940 = vmatpush1.msra.mxu0 0.0
      %1941 = vmatprep.subr.mxu0 0.0
      %1942 = vmatpush1.msra.mxu0 0.0
      %1943 = vmatprep.subr.mxu0 0.0
      %1944 = vmatpush1.msra.mxu0 0.0
      %1945 = vmatprep.subr.mxu0 0.0
      %1946 = vmatpush1.msra.mxu0 0.0
      %1947 = vmatprep.subr.mxu0 0.0
      %1948 = vmatpush1.msra.mxu0 0.0
      %1949 = vmatprep.subr.mxu0 0.0
      %1950 = vmatpush1.msra.mxu0 0.0
      %1951 = vmatprep.subr.mxu0 0.0
      %1952 = vmatpush1.msra.mxu0 0.0
      %1953 = vmatprep.subr.mxu0 0.0
      %1954 = vmatpush1.msra.mxu0 0.0
      %1955 = vmatprep.subr.mxu0 0.0
      %1956 = vmatpush1.msra.mxu0 0.0
      %1957 = vmatprep.subr.mxu0 0.0
      %1958 = vmatpush1.msra.mxu0 0.0
      %1959 = vmatprep.subr.mxu0 0.0
      %1960 = vmatpush1.msra.mxu0 0.0
      %1961 = vmatprep.subr.mxu0 0.0
      %1962 = vmatpush1.msra.mxu0 0.0
      %1963 = vmatprep.subr.mxu0 0.0
      %1964 = vmatpush1.msra.mxu0 0.0
      %1965 = vmatprep.subr.mxu0 0.0
      %1966 = vmatpush1.msra.mxu0 0.0
      %1967 = vmatprep.subr.mxu0 0.0
      %1968 = vmatpush1.msra.mxu0 0.0
      %1969 = vmatprep.subr.mxu0 0.0
      %1970 = vmatpush1.msra.mxu0 0.0
      %1971 = vmatprep.subr.mxu0 0.0
      %1972 = vmatpush1.msra.mxu0 0.0
      %1973 = vmatprep.subr.mxu0 0.0
      %1974 = vmatpush1.msra.mxu0 0.0
      %1975 = vmatprep.subr.mxu0 0.0
      %1976 = vmatpush1.msra.mxu0 0.0
      %1977 = vmatprep.mubr.f32.mxu0 0.0
      %1978 = vmatmul.mubr.f32.gmra.mrb[0].mxu0 %v1821
      %v1979 = vpop.f32.mrb[0].mxu0
      %v1980 = vadd.f32 0.0, %v1979
      %v1981 = vpop.f32.mrb[0].mxu0
      %1982 = vmatprep.mubr.f32.mxu0 0.0
      %1983 = vmatmul.mubr.f32.gmra.mrb[0].mxu0 %v1824
      %v1984 = vpop.f32.mrb[0].mxu0
      %v1985 = vadd.f32 0.0, %v1984
      %v1986 = vpop.f32.mrb[0].mxu0
      %1987 = vmatprep.mubr.f32.mxu0 0.0
      %1988 = vmatmul.mubr.f32.gmra.mrb[0].mxu0 %v1827
      %v1989 = vpop.f32.mrb[0].mxu0
      %v1990 = vadd.f32 0.0, %v1989
      %v1991 = vpop.f32.mrb[0].mxu0
      %1992 = vmatprep.mubr.f32.mxu0 0.0
      %1993 = vmatmul.mubr.f32.gmra.mrb[0].mxu0 %v1830
      %v1994 = vpop.f32.mrb[0].mxu0
      %v1995 = vadd.f32 0.0, %v1994
      %v1996 = vpop.f32.mrb[0].mxu0
      %1997 = vmatprep.mubr.f32.mxu0 0.0
      %1998 = vmatmul.mubr.f32.gmra.mrb[0].mxu0 %v1833
      %v1999 = vpop.f32.mrb[0].mxu0
      %v2000 = vadd.f32 0.0, %v1999
      %v2001 = vpop.f32.mrb[0].mxu0
      %2002 = vmatprep.mubr.f32.mxu0 0.0
      %2003 = vmatmul.mubr.f32.gmra.mrb[0].mxu0 %v1836
      %v2004 = vpop.f32.mrb[0].mxu0
      %v2005 = vadd.f32 0.0, %v2004
      %v2006 = vpop.f32.mrb[0].mxu0
      %2007 = vmatprep.mubr.f32.mxu0 0.0
      %2008 = vmatmul.mubr.f32.gmra.mrb[0].mxu0 %v1839
      %v2009 = vpop.f32.mrb[0].mxu0
      %v2010 = vadd.f32 0.0, %v2009
      %v2011 = vpop.f32.mrb[0].mxu0
      %2012 = vmatprep.mubr.f32.mxu0 0.0
      %2013 = vmatmul.mubr.f32.gmra.mrb[0].mxu0 %v1842
      %v2014 = vpop.f32.mrb[0].mxu0
      %v2015 = vadd.f32 0.0, %v2014
      %v2016 = vpop.f32.mrb[0].mxu0
      %2017 = vmatprep.mubr.f32.mxu0 0.0
      %2018 = vmatmul.mubr.f32.gmra.mrb[0].mxu0 %v1845
      %v2019 = vpop.f32.mrb[0].mxu0
      %v2020 = vadd.f32 0.0, %v2019
      %v2021 = vpop.f32.mrb[0].mxu0
      %2022 = vmatprep.mubr.f32.mxu0 0.0
      %2023 = vmatmul.mubr.f32.gmra.mrb[0].mxu0 %v1848
      %v2024 = vpop.f32.mrb[0].mxu0
      %v2025 = vadd.f32 0.0, %v2024
      %v2026 = vpop.f32.mrb[0].mxu0
      %2027 = vmatprep.mubr.f32.mxu0 0.0
      %2028 = vmatmul.mubr.f32.gmra.mrb[0].mxu0 %v1851
      %v2029 = vpop.f32.mrb[0].mxu0
      %v2030 = vadd.f32 0.0, %v2029
      %v2031 = vpop.f32.mrb[0].mxu0
      %2032 = vmatprep.mubr.f32.mxu0 0.0
      %2033 = vmatmul.mubr.f32.gmra.mrb[0].mxu0 %v1854
      %v2034 = vpop.f32.mrb[0].mxu0
      %v2035 = vadd.f32 0.0, %v2034
      %v2036 = vpop.f32.mrb[0].mxu0
      %2037 = vmatprep.mubr.f32.mxu0 0.0
      %2038 = vmatmul.mubr.f32.gmra.mrb[0].mxu0 %v1857
      %v2039 = vpop.f32.mrb[0].mxu0
      %v2040 = vadd.f32 0.0, %v2039
      %v2041 = vpop.f32.mrb[0].mxu0
      %2042 = vmatprep.mubr.f32.mxu0 0.0
      %2043 = vmatmul.mubr.f32.gmra.mrb[0].mxu0 %v1860
      %v2044 = vpop.f32.mrb[0].mxu0
      %v2045 = vadd.f32 0.0, %v2044
      %v2046 = vpop.f32.mrb[0].mxu0
      %2047 = vmatprep.mubr.f32.mxu0 0.0
      %2048 = vmatmul.mubr.f32.gmra.mrb[0].mxu0 %v1863
      %v2049 = vpop.f32.mrb[0].mxu0
      %v2050 = vadd.f32 0.0, %v2049
      %v2051 = vpop.f32.mrb[0].mxu0
      %2052 = vmatprep.mubr.f32.mxu0 0.0
      %2053 = vmatmul.mubr.f32.gmra.mrb[0].mxu0 %v1866
      %v2054 = vpop.f32.mrb[0].mxu0
      %v2055 = vadd.f32 0.0, %v2054
      %v2056 = vpop.f32.mrb[0].mxu0
      %2057 = vmatprep.mubr.f32.mxu0 0.0
      %2058 = vmatmul.mubr.f32.gmra.mrb[0].mxu0 %v1869
      %v2059 = vpop.f32.mrb[0].mxu0
      %v2060 = vadd.f32 0.0, %v2059
      %v2061 = vpop.f32.mrb[0].mxu0
      %2062 = vmatprep.mubr.f32.mxu0 0.0
      %2063 = vmatmul.mubr.f32.gmra.mrb[0].mxu0 %v1872
      %v2064 = vpop.f32.mrb[0].mxu0
      %v2065 = vadd.f32 0.0, %v2064
      %v2066 = vpop.f32.mrb[0].mxu0
      %2067 = vmatprep.mubr.f32.mxu0 0.0
      %2068 = vmatmul.mubr.f32.gmra.mrb[0].mxu0 %v1875
      %v2069 = vpop.f32.mrb[0].mxu0
      %v2070 = vadd.f32 0.0, %v2069
      %v2071 = vpop.f32.mrb[0].mxu0
      %2072 = vmatprep.mubr.f32.mxu0 0.0
      %2073 = vmatmul.mubr.f32.gmra.mrb[0].mxu0 %v1878
      %v2074 = vpop.f32.mrb[0].mxu0
      %v2075 = vadd.f32 0.0, %v2074
      %v2076 = vpop.f32.mrb[0].mxu0
      %2077 = vmatprep.mubr.f32.mxu0 0.0
      %2078 = vmatmul.mubr.f32.gmra.mrb[0].mxu0 %v1881
      %v2079 = vpop.f32.mrb[0].mxu0
      %v2080 = vadd.f32 0.0, %v2079
      %v2081 = vpop.f32.mrb[0].mxu0
      %2082 = vmatprep.mubr.f32.mxu0 0.0
      %2083 = vmatmul.mubr.f32.gmra.mrb[0].mxu0 %v1884
      %v2084 = vpop.f32.mrb[0].mxu0
      %v2085 = vadd.f32 0.0, %v2084
      %v2086 = vpop.f32.mrb[0].mxu0
      %2087 = vmatprep.mubr.f32.mxu0 0.0
      %2088 = vmatmul.mubr.f32.gmra.mrb[0].mxu0 %v1887
      %v2089 = vpop.f32.mrb[0].mxu0
      %v2090 = vadd.f32 0.0, %v2089
      %v2091 = vpop.f32.mrb[0].mxu0
      %2092 = vmatprep.mubr.f32.mxu0 0.0
      %2093 = vmatmul.mubr.f32.gmra.mrb[0].mxu0 %v1890
      %v2094 = vpop.f32.mrb[0].mxu0
      %v2095 = vadd.f32 0.0, %v2094
      %v2096 = vpop.f32.mrb[0].mxu0
      %2097 = vmatprep.mubr.f32.mxu0 0.0
      %2098 = vmatmul.mubr.f32.gmra.mrb[0].mxu0 %v1893
      %v2099 = vpop.f32.mrb[0].mxu0
      %v2100 = vadd.f32 0.0, %v2099
      %v2101 = vpop.f32.mrb[0].mxu0
      %2102 = vmatprep.mubr.f32.mxu0 0.0
      %2103 = vmatmul.mubr.f32.gmra.mrb[0].mxu0 %v1896
      %v2104 = vpop.f32.mrb[0].mxu0
      %v2105 = vadd.f32 0.0, %v2104
      %v2106 = vpop.f32.mrb[0].mxu0
      %2107 = vmatprep.mubr.f32.mxu0 0.0
      %2108 = vmatmul.mubr.f32.gmra.mrb[0].mxu0 %v1899
      %v2109 = vpop.f32.mrb[0].mxu0
      %v2110 = vadd.f32 0.0, %v2109
      %v2111 = vpop.f32.mrb[0].mxu0
      %2112 = vmatprep.mubr.f32.mxu0 0.0
      %2113 = vmatmul.mubr.f32.gmra.mrb[0].mxu0 %v1902
      %v2114 = vpop.f32.mrb[0].mxu0
      %v2115 = vadd.f32 0.0, %v2114
      %v2116 = vpop.f32.mrb[0].mxu0
      %2117 = vmatprep.mubr.f32.mxu0 0.0
      %2118 = vmatmul.mubr.f32.gmra.mrb[0].mxu0 %v1905
      %v2119 = vpop.f32.mrb[0].mxu0
      %v2120 = vadd.f32 0.0, %v2119
      %v2121 = vpop.f32.mrb[0].mxu0
      %2122 = vmatprep.mubr.f32.mxu0 0.0
      %2123 = vmatmul.mubr.f32.gmra.mrb[0].mxu0 %v1908
      %v2124 = vpop.f32.mrb[0].mxu0
      %v2125 = vadd.f32 0.0, %v2124
      %v2126 = vpop.f32.mrb[0].mxu0
      %2127 = vdwg.mxu0
      %v2128 = vadd.f32 %v1758, %v1980
      %v2129 = vadd.f32 %v1759, %v1985
      %v2130 = vadd.f32 %v1760, %v1990
      %v2131 = vadd.f32 %v1761, %v1995
      %v2132 = vadd.f32 %v1762, %v2000
      %v2133 = vadd.f32 %v1763, %v2005
      %v2134 = vadd.f32 %v1764, %v2010
      %v2135 = vadd.f32 %v1765, %v2015
      %v2136 = vadd.f32 %v1766, %v2020
      %v2137 = vadd.f32 %v1767, %v2025
      %v2138 = vadd.f32 %v1768, %v2030
      %v2139 = vadd.f32 %v1769, %v2035
      %v2140 = vadd.f32 %v1770, %v2040
      %v2141 = vadd.f32 %v1771, %v2045
      %v2142 = vadd.f32 %v1772, %v2050
      %v2143 = vadd.f32 %v1773, %v2055
      %v2144 = vadd.f32 %v1774, %v2060
      %v2145 = vadd.f32 %v1775, %v2065
      %v2146 = vadd.f32 %v1776, %v2070
      %v2147 = vadd.f32 %v1777, %v2075
      %v2148 = vadd.f32 %v1778, %v2080
      %v2149 = vadd.f32 %v1779, %v2085
      %v2150 = vadd.f32 %v1780, %v2090
      %v2151 = vadd.f32 %v1781, %v2095
      %v2152 = vadd.f32 %v1782, %v2100
      %v2153 = vadd.f32 %v1783, %v2105
      %v2154 = vadd.f32 %v1784, %v2110
      %v2155 = vadd.f32 %v1785, %v2115
      %v2156 = vadd.f32 %v1786, %v2120
      %v2157 = vadd.f32 %v1787, %v2125
      %v2158 = vld [vmem:[#allocation2 + $0x14] sm:$0xff]
      %v2159 = vld [vmem:[#allocation2 + $0x1c] sm:$0xff]
      %v2160 = vld [vmem:[#allocation2 + $0x24] sm:$0xff]
      %v2161 = vld [vmem:[#allocation2 + $0x2c] sm:$0xff]
      %v2162 = vld [vmem:[#allocation2 + $0x34] sm:$0xff]
      %v2163 = vld [vmem:[#allocation2 + $0x3c] sm:$0xff]
      %v2164 = vld [vmem:[#allocation2 + $0x44] sm:$0xff]
      %v2165 = vld [vmem:[#allocation2 + $0x4c] sm:$0xff]
      %v2166 = vld [vmem:[#allocation2 + $0x54] sm:$0xff]
      %v2167 = vld [vmem:[#allocation2 + $0x5c] sm:$0xff]
      %v2168 = vld [vmem:[#allocation2 + $0x64] sm:$0xff]
      %v2169 = vld [vmem:[#allocation2 + $0x6c] sm:$0xff]
      %v2170 = vld [vmem:[#allocation2 + $0x74] sm:$0xff]
      %v2171 = vld [vmem:[#allocation2 + $0x7c] sm:$0xff]
      %v2172 = vld [vmem:[#allocation2 + $0x84] sm:$0xff]
      %v2173 = vld [vmem:[#allocation2 + $0x8c] sm:$0xff]
      %v2174 = vld [vmem:[#allocation2 + $0x94] sm:$0xff]
      %v2175 = vld [vmem:[#allocation2 + $0x9c] sm:$0xff]
      %v2176 = vld [vmem:[#allocation2 + $0xa4] sm:$0xff]
      %v2177 = vld [vmem:[#allocation2 + $0xac] sm:$0xff]
      %v2178 = vld [vmem:[#allocation2 + $0xb4] sm:$0xff]
      %v2179 = vld [vmem:[#allocation2 + $0xbc] sm:$0xff]
      %v2180 = vld [vmem:[#allocation2 + $0xc4] sm:$0xff]
      %v2181 = vld [vmem:[#allocation2 + $0xcc] sm:$0xff]
      %v2182 = vld [vmem:[#allocation2 + $0xd4] sm:$0xff]
      %v2183 = vld [vmem:[#allocation2 + $0xdc] sm:$0xff]
      %v2184 = vld [vmem:[#allocation2 + $0xe4] sm:$0xff]
      %v2185 = vld [vmem:[#allocation2 + $0xec] sm:$0xff]
      %v2186 = vld [vmem:[#allocation2 + $0xf4] sm:$0xff]
      %v2187 = vld [vmem:[#allocation2 + $0xfc] sm:$0xff]
      %s2188 = scalar_lea.vmem %s3, 20
      %v2189 = vld [vmem:[%s2188] sm:$0xf]
      %v2191 = vsel %vm327, %v2158, 0
      %v2194 = vsel %vm327, %v2159, 0
      %v2197 = vsel %vm327, %v2160, 0
      %v2200 = vsel %vm327, %v2161, 0
      %v2203 = vsel %vm327, %v2162, 0
      %v2206 = vsel %vm327, %v2163, 0
      %v2209 = vsel %vm327, %v2164, 0
      %v2212 = vsel %vm327, %v2165, 0
      %v2215 = vsel %vm327, %v2166, 0
      %v2218 = vsel %vm327, %v2167, 0
      %v2221 = vsel %vm327, %v2168, 0
      %v2224 = vsel %vm327, %v2169, 0
      %v2227 = vsel %vm327, %v2170, 0
      %v2230 = vsel %vm327, %v2171, 0
      %v2233 = vsel %vm327, %v2172, 0
      %v2236 = vsel %vm327, %v2173, 0
      %v2239 = vsel %vm327, %v2174, 0
      %v2242 = vsel %vm327, %v2175, 0
      %v2245 = vsel %vm327, %v2176, 0
      %v2248 = vsel %vm327, %v2177, 0
      %v2251 = vsel %vm327, %v2178, 0
      %v2254 = vsel %vm327, %v2179, 0
      %v2257 = vsel %vm327, %v2180, 0
      %v2260 = vsel %vm327, %v2181, 0
      %v2263 = vsel %vm327, %v2182, 0
      %v2266 = vsel %vm327, %v2183, 0
      %v2269 = vsel %vm327, %v2184, 0
      %v2272 = vsel %vm327, %v2185, 0
      %v2275 = vsel %vm327, %v2186, 0
      %v2278 = vsel %vm327, %v2187, 0
      %v2281 = vsel %vm521, %v2189, 0
      %2283 = vmatprep.subr.mxu0 0.0
      %2284 = vmatpush1.msra.mxu0 %v2281
      %2285 = vmatprep.subr.mxu0 0.0
      %2286 = vmatpush1.msra.mxu0 0.0
      %2287 = vmatprep.subr.mxu0 0.0
      %2288 = vmatpush1.msra.mxu0 0.0
      %2289 = vmatprep.subr.mxu0 0.0
      %2290 = vmatpush1.msra.mxu0 0.0
      %2291 = vmatprep.subr.mxu0 0.0
      %2292 = vmatpush1.msra.mxu0 0.0
      %2293 = vmatprep.subr.mxu0 0.0
      %2294 = vmatpush1.msra.mxu0 0.0
      %2295 = vmatprep.subr.mxu0 0.0
      %2296 = vmatpush1.msra.mxu0 0.0
      %2297 = vmatprep.subr.mxu0 0.0
      %2298 = vmatpush1.msra.mxu0 0.0
      %2299 = vmatprep.subr.mxu0 0.0
      %2300 = vmatpush1.msra.mxu0 0.0
      %2301 = vmatprep.subr.mxu0 0.0
      %2302 = vmatpush1.msra.mxu0 0.0
      %2303 = vmatprep.subr.mxu0 0.0
      %2304 = vmatpush1.msra.mxu0 0.0
      %2305 = vmatprep.subr.mxu0 0.0
      %2306 = vmatpush1.msra.mxu0 0.0
      %2307 = vmatprep.subr.mxu0 0.0
      %2308 = vmatpush1.msra.mxu0 0.0
      %2309 = vmatprep.subr.mxu0 0.0
      %2310 = vmatpush1.msra.mxu0 0.0
      %2311 = vmatprep.subr.mxu0 0.0
      %2312 = vmatpush1.msra.mxu0 0.0
      %2313 = vmatprep.subr.mxu0 0.0
      %2314 = vmatpush1.msra.mxu0 0.0
      %2315 = vmatprep.subr.mxu0 0.0
      %2316 = vmatpush1.msra.mxu0 0.0
      %2317 = vmatprep.subr.mxu0 0.0
      %2318 = vmatpush1.msra.mxu0 0.0
      %2319 = vmatprep.subr.mxu0 0.0
      %2320 = vmatpush1.msra.mxu0 0.0
      %2321 = vmatprep.subr.mxu0 0.0
      %2322 = vmatpush1.msra.mxu0 0.0
      %2323 = vmatprep.subr.mxu0 0.0
      %2324 = vmatpush1.msra.mxu0 0.0
      %2325 = vmatprep.subr.mxu0 0.0
      %2326 = vmatpush1.msra.mxu0 0.0
      %2327 = vmatprep.subr.mxu0 0.0
      %2328 = vmatpush1.msra.mxu0 0.0
      %2329 = vmatprep.subr.mxu0 0.0
      %2330 = vmatpush1.msra.mxu0 0.0
      %2331 = vmatprep.subr.mxu0 0.0
      %2332 = vmatpush1.msra.mxu0 0.0
      %2333 = vmatprep.subr.mxu0 0.0
      %2334 = vmatpush1.msra.mxu0 0.0
      %2335 = vmatprep.subr.mxu0 0.0
      %2336 = vmatpush1.msra.mxu0 0.0
      %2337 = vmatprep.subr.mxu0 0.0
      %2338 = vmatpush1.msra.mxu0 0.0
      %2339 = vmatprep.subr.mxu0 0.0
      %2340 = vmatpush1.msra.mxu0 0.0
      %2341 = vmatprep.subr.mxu0 0.0
      %2342 = vmatpush1.msra.mxu0 0.0
      %2343 = vmatprep.subr.mxu0 0.0
      %2344 = vmatpush1.msra.mxu0 0.0
      %2345 = vmatprep.subr.mxu0 0.0
      %2346 = vmatpush1.msra.mxu0 0.0
      %2347 = vmatprep.mubr.f32.mxu0 0.0
      %2348 = vmatmul.mubr.f32.gmra.mrb[0].mxu0 %v2191
      %v2349 = vpop.f32.mrb[0].mxu0
      %v2350 = vadd.f32 0.0, %v2349
      %v2351 = vpop.f32.mrb[0].mxu0
      %2352 = vmatprep.mubr.f32.mxu0 0.0
      %2353 = vmatmul.mubr.f32.gmra.mrb[0].mxu0 %v2194
      %v2354 = vpop.f32.mrb[0].mxu0
      %v2355 = vadd.f32 0.0, %v2354
      %v2356 = vpop.f32.mrb[0].mxu0
      %2357 = vmatprep.mubr.f32.mxu0 0.0
      %2358 = vmatmul.mubr.f32.gmra.mrb[0].mxu0 %v2197
      %v2359 = vpop.f32.mrb[0].mxu0
      %v2360 = vadd.f32 0.0, %v2359
      %v2361 = vpop.f32.mrb[0].mxu0
      %2362 = vmatprep.mubr.f32.mxu0 0.0
      %2363 = vmatmul.mubr.f32.gmra.mrb[0].mxu0 %v2200
      %v2364 = vpop.f32.mrb[0].mxu0
      %v2365 = vadd.f32 0.0, %v2364
      %v2366 = vpop.f32.mrb[0].mxu0
      %2367 = vmatprep.mubr.f32.mxu0 0.0
      %2368 = vmatmul.mubr.f32.gmra.mrb[0].mxu0 %v2203
      %v2369 = vpop.f32.mrb[0].mxu0
      %v2370 = vadd.f32 0.0, %v2369
      %v2371 = vpop.f32.mrb[0].mxu0
      %2372 = vmatprep.mubr.f32.mxu0 0.0
      %2373 = vmatmul.mubr.f32.gmra.mrb[0].mxu0 %v2206
      %v2374 = vpop.f32.mrb[0].mxu0
      %v2375 = vadd.f32 0.0, %v2374
      %v2376 = vpop.f32.mrb[0].mxu0
      %2377 = vmatprep.mubr.f32.mxu0 0.0
      %2378 = vmatmul.mubr.f32.gmra.mrb[0].mxu0 %v2209
      %v2379 = vpop.f32.mrb[0].mxu0
      %v2380 = vadd.f32 0.0, %v2379
      %v2381 = vpop.f32.mrb[0].mxu0
      %2382 = vmatprep.mubr.f32.mxu0 0.0
      %2383 = vmatmul.mubr.f32.gmra.mrb[0].mxu0 %v2212
      %v2384 = vpop.f32.mrb[0].mxu0
      %v2385 = vadd.f32 0.0, %v2384
      %v2386 = vpop.f32.mrb[0].mxu0
      %2387 = vmatprep.mubr.f32.mxu0 0.0
      %2388 = vmatmul.mubr.f32.gmra.mrb[0].mxu0 %v2215
      %v2389 = vpop.f32.mrb[0].mxu0
      %v2390 = vadd.f32 0.0, %v2389
      %v2391 = vpop.f32.mrb[0].mxu0
      %2392 = vmatprep.mubr.f32.mxu0 0.0
      %2393 = vmatmul.mubr.f32.gmra.mrb[0].mxu0 %v2218
      %v2394 = vpop.f32.mrb[0].mxu0
      %v2395 = vadd.f32 0.0, %v2394
      %v2396 = vpop.f32.mrb[0].mxu0
      %2397 = vmatprep.mubr.f32.mxu0 0.0
      %2398 = vmatmul.mubr.f32.gmra.mrb[0].mxu0 %v2221
      %v2399 = vpop.f32.mrb[0].mxu0
      %v2400 = vadd.f32 0.0, %v2399
      %v2401 = vpop.f32.mrb[0].mxu0
      %2402 = vmatprep.mubr.f32.mxu0 0.0
      %2403 = vmatmul.mubr.f32.gmra.mrb[0].mxu0 %v2224
      %v2404 = vpop.f32.mrb[0].mxu0
      %v2405 = vadd.f32 0.0, %v2404
      %v2406 = vpop.f32.mrb[0].mxu0
      %2407 = vmatprep.mubr.f32.mxu0 0.0
      %2408 = vmatmul.mubr.f32.gmra.mrb[0].mxu0 %v2227
      %v2409 = vpop.f32.mrb[0].mxu0
      %v2410 = vadd.f32 0.0, %v2409
      %v2411 = vpop.f32.mrb[0].mxu0
      %2412 = vmatprep.mubr.f32.mxu0 0.0
      %2413 = vmatmul.mubr.f32.gmra.mrb[0].mxu0 %v2230
      %v2414 = vpop.f32.mrb[0].mxu0
      %v2415 = vadd.f32 0.0, %v2414
      %v2416 = vpop.f32.mrb[0].mxu0
      %2417 = vmatprep.mubr.f32.mxu0 0.0
      %2418 = vmatmul.mubr.f32.gmra.mrb[0].mxu0 %v2233
      %v2419 = vpop.f32.mrb[0].mxu0
      %v2420 = vadd.f32 0.0, %v2419
      %v2421 = vpop.f32.mrb[0].mxu0
      %2422 = vmatprep.mubr.f32.mxu0 0.0
      %2423 = vmatmul.mubr.f32.gmra.mrb[0].mxu0 %v2236
      %v2424 = vpop.f32.mrb[0].mxu0
      %v2425 = vadd.f32 0.0, %v2424
      %v2426 = vpop.f32.mrb[0].mxu0
      %2427 = vmatprep.mubr.f32.mxu0 0.0
      %2428 = vmatmul.mubr.f32.gmra.mrb[0].mxu0 %v2239
      %v2429 = vpop.f32.mrb[0].mxu0
      %v2430 = vadd.f32 0.0, %v2429
      %v2431 = vpop.f32.mrb[0].mxu0
      %2432 = vmatprep.mubr.f32.mxu0 0.0
      %2433 = vmatmul.mubr.f32.gmra.mrb[0].mxu0 %v2242
      %v2434 = vpop.f32.mrb[0].mxu0
      %v2435 = vadd.f32 0.0, %v2434
      %v2436 = vpop.f32.mrb[0].mxu0
      %2437 = vmatprep.mubr.f32.mxu0 0.0
      %2438 = vmatmul.mubr.f32.gmra.mrb[0].mxu0 %v2245
      %v2439 = vpop.f32.mrb[0].mxu0
      %v2440 = vadd.f32 0.0, %v2439
      %v2441 = vpop.f32.mrb[0].mxu0
      %2442 = vmatprep.mubr.f32.mxu0 0.0
      %2443 = vmatmul.mubr.f32.gmra.mrb[0].mxu0 %v2248
      %v2444 = vpop.f32.mrb[0].mxu0
      %v2445 = vadd.f32 0.0, %v2444
      %v2446 = vpop.f32.mrb[0].mxu0
      %2447 = vmatprep.mubr.f32.mxu0 0.0
      %2448 = vmatmul.mubr.f32.gmra.mrb[0].mxu0 %v2251
      %v2449 = vpop.f32.mrb[0].mxu0
      %v2450 = vadd.f32 0.0, %v2449
      %v2451 = vpop.f32.mrb[0].mxu0
      %2452 = vmatprep.mubr.f32.mxu0 0.0
      %2453 = vmatmul.mubr.f32.gmra.mrb[0].mxu0 %v2254
      %v2454 = vpop.f32.mrb[0].mxu0
      %v2455 = vadd.f32 0.0, %v2454
      %v2456 = vpop.f32.mrb[0].mxu0
      %2457 = vmatprep.mubr.f32.mxu0 0.0
      %2458 = vmatmul.mubr.f32.gmra.mrb[0].mxu0 %v2257
      %v2459 = vpop.f32.mrb[0].mxu0
      %v2460 = vadd.f32 0.0, %v2459
      %v2461 = vpop.f32.mrb[0].mxu0
      %2462 = vmatprep.mubr.f32.mxu0 0.0
      %2463 = vmatmul.mubr.f32.gmra.mrb[0].mxu0 %v2260
      %v2464 = vpop.f32.mrb[0].mxu0
      %v2465 = vadd.f32 0.0, %v2464
      %v2466 = vpop.f32.mrb[0].mxu0
      %2467 = vmatprep.mubr.f32.mxu0 0.0
      %2468 = vmatmul.mubr.f32.gmra.mrb[0].mxu0 %v2263
      %v2469 = vpop.f32.mrb[0].mxu0
      %v2470 = vadd.f32 0.0, %v2469
      %v2471 = vpop.f32.mrb[0].mxu0
      %2472 = vmatprep.mubr.f32.mxu0 0.0
      %2473 = vmatmul.mubr.f32.gmra.mrb[0].mxu0 %v2266
      %v2474 = vpop.f32.mrb[0].mxu0
      %v2475 = vadd.f32 0.0, %v2474
      %v2476 = vpop.f32.mrb[0].mxu0
      %2477 = vmatprep.mubr.f32.mxu0 0.0
      %2478 = vmatmul.mubr.f32.gmra.mrb[0].mxu0 %v2269
      %v2479 = vpop.f32.mrb[0].mxu0
      %v2480 = vadd.f32 0.0, %v2479
      %v2481 = vpop.f32.mrb[0].mxu0
      %2482 = vmatprep.mubr.f32.mxu0 0.0
      %2483 = vmatmul.mubr.f32.gmra.mrb[0].mxu0 %v2272
      %v2484 = vpop.f32.mrb[0].mxu0
      %v2485 = vadd.f32 0.0, %v2484
      %v2486 = vpop.f32.mrb[0].mxu0
      %2487 = vmatprep.mubr.f32.mxu0 0.0
      %2488 = vmatmul.mubr.f32.gmra.mrb[0].mxu0 %v2275
      %v2489 = vpop.f32.mrb[0].mxu0
      %v2490 = vadd.f32 0.0, %v2489
      %v2491 = vpop.f32.mrb[0].mxu0
      %2492 = vmatprep.mubr.f32.mxu0 0.0
      %2493 = vmatmul.mubr.f32.gmra.mrb[0].mxu0 %v2278
      %v2494 = vpop.f32.mrb[0].mxu0
      %v2495 = vadd.f32 0.0, %v2494
      %v2496 = vpop.f32.mrb[0].mxu0
      %2497 = vdwg.mxu0
      %v2498 = vadd.f32 %v2128, %v2350
      %v2499 = vadd.f32 %v2129, %v2355
      %v2500 = vadd.f32 %v2130, %v2360
      %v2501 = vadd.f32 %v2131, %v2365
      %v2502 = vadd.f32 %v2132, %v2370
      %v2503 = vadd.f32 %v2133, %v2375
      %v2504 = vadd.f32 %v2134, %v2380
      %v2505 = vadd.f32 %v2135, %v2385
      %v2506 = vadd.f32 %v2136, %v2390
      %v2507 = vadd.f32 %v2137, %v2395
      %v2508 = vadd.f32 %v2138, %v2400
      %v2509 = vadd.f32 %v2139, %v2405
      %v2510 = vadd.f32 %v2140, %v2410
      %v2511 = vadd.f32 %v2141, %v2415
      %v2512 = vadd.f32 %v2142, %v2420
      %v2513 = vadd.f32 %v2143, %v2425
      %v2514 = vadd.f32 %v2144, %v2430
      %v2515 = vadd.f32 %v2145, %v2435
      %v2516 = vadd.f32 %v2146, %v2440
      %v2517 = vadd.f32 %v2147, %v2445
      %v2518 = vadd.f32 %v2148, %v2450
      %v2519 = vadd.f32 %v2149, %v2455
      %v2520 = vadd.f32 %v2150, %v2460
      %v2521 = vadd.f32 %v2151, %v2465
      %v2522 = vadd.f32 %v2152, %v2470
      %v2523 = vadd.f32 %v2153, %v2475
      %v2524 = vadd.f32 %v2154, %v2480
      %v2525 = vadd.f32 %v2155, %v2485
      %v2526 = vadd.f32 %v2156, %v2490
      %v2527 = vadd.f32 %v2157, %v2495
      %v2528 = vld [vmem:[#allocation2 + $0x24] sm:$0xff]
      %v2529 = vld [vmem:[#allocation2 + $0x2c] sm:$0xff]
      %v2530 = vld [vmem:[#allocation2 + $0x34] sm:$0xff]
      %v2531 = vld [vmem:[#allocation2 + $0x3c] sm:$0xff]
      %v2532 = vld [vmem:[#allocation2 + $0x44] sm:$0xff]
      %v2533 = vld [vmem:[#allocation2 + $0x4c] sm:$0xff]
      %v2534 = vld [vmem:[#allocation2 + $0x54] sm:$0xff]
      %v2535 = vld [vmem:[#allocation2 + $0x5c] sm:$0xff]
      %v2536 = vld [vmem:[#allocation2 + $0x64] sm:$0xff]
      %v2537 = vld [vmem:[#allocation2 + $0x6c] sm:$0xff]
      %v2538 = vld [vmem:[#allocation2 + $0x74] sm:$0xff]
      %v2539 = vld [vmem:[#allocation2 + $0x7c] sm:$0xff]
      %v2540 = vld [vmem:[#allocation2 + $0x84] sm:$0xff]
      %v2541 = vld [vmem:[#allocation2 + $0x8c] sm:$0xff]
      %v2542 = vld [vmem:[#allocation2 + $0x94] sm:$0xff]
      %v2543 = vld [vmem:[#allocation2 + $0x9c] sm:$0xff]
      %v2544 = vld [vmem:[#allocation2 + $0xa4] sm:$0xff]
      %v2545 = vld [vmem:[#allocation2 + $0xac] sm:$0xff]
      %v2546 = vld [vmem:[#allocation2 + $0xb4] sm:$0xff]
      %v2547 = vld [vmem:[#allocation2 + $0xbc] sm:$0xff]
      %v2548 = vld [vmem:[#allocation2 + $0xc4] sm:$0xff]
      %v2549 = vld [vmem:[#allocation2 + $0xcc] sm:$0xff]
      %v2550 = vld [vmem:[#allocation2 + $0xd4] sm:$0xff]
      %v2551 = vld [vmem:[#allocation2 + $0xdc] sm:$0xff]
      %v2552 = vld [vmem:[#allocation2 + $0xe4] sm:$0xff]
      %v2553 = vld [vmem:[#allocation2 + $0xec] sm:$0xff]
      %v2554 = vld [vmem:[#allocation2 + $0xf4] sm:$0xff]
      %v2555 = vld [vmem:[#allocation2 + $0xfc] sm:$0xff]
      %v2556 = vld [vmem:[#allocation2 + $0x104] sm:$0xff]
      %v2557 = vld [vmem:[#allocation2 + $0x10c] sm:$0xff]
      %s2558 = scalar_lea.vmem %s3, 24
      %v2559 = vld [vmem:[%s2558] sm:$0xf]
      %v2561 = vsel %vm327, %v2528, 0
      %v2564 = vsel %vm327, %v2529, 0
      %v2567 = vsel %vm327, %v2530, 0
      %v2570 = vsel %vm327, %v2531, 0
      %v2573 = vsel %vm327, %v2532, 0
      %v2576 = vsel %vm327, %v2533, 0
      %v2579 = vsel %vm327, %v2534, 0
      %v2582 = vsel %vm327, %v2535, 0
      %v2585 = vsel %vm327, %v2536, 0
      %v2588 = vsel %vm327, %v2537, 0
      %v2591 = vsel %vm327, %v2538, 0
      %v2594 = vsel %vm327, %v2539, 0
      %v2597 = vsel %vm327, %v2540, 0
      %v2600 = vsel %vm327, %v2541, 0
      %v2603 = vsel %vm327, %v2542, 0
      %v2606 = vsel %vm327, %v2543, 0
      %v2609 = vsel %vm327, %v2544, 0
      %v2612 = vsel %vm327, %v2545, 0
      %v2615 = vsel %vm327, %v2546, 0
      %v2618 = vsel %vm327, %v2547, 0
      %v2621 = vsel %vm327, %v2548, 0
      %v2624 = vsel %vm327, %v2549, 0
      %v2627 = vsel %vm327, %v2550, 0
      %v2630 = vsel %vm327, %v2551, 0
      %v2633 = vsel %vm327, %v2552, 0
      %v2636 = vsel %vm327, %v2553, 0
      %v2639 = vsel %vm327, %v2554, 0
      %v2642 = vsel %vm327, %v2555, 0
      %v2645 = vsel %vm327, %v2556, 0
      %v2648 = vsel %vm327, %v2557, 0
      %v2651 = vsel %vm521, %v2559, 0
      %2653 = vmatprep.subr.mxu0 0.0
      %2654 = vmatpush1.msra.mxu0 %v2651
      %2655 = vmatprep.subr.mxu0 0.0
      %2656 = vmatpush1.msra.mxu0 0.0
      %2657 = vmatprep.subr.mxu0 0.0
      %2658 = vmatpush1.msra.mxu0 0.0
      %2659 = vmatprep.subr.mxu0 0.0
      %2660 = vmatpush1.msra.mxu0 0.0
      %2661 = vmatprep.subr.mxu0 0.0
      %2662 = vmatpush1.msra.mxu0 0.0
      %2663 = vmatprep.subr.mxu0 0.0
      %2664 = vmatpush1.msra.mxu0 0.0
      %2665 = vmatprep.subr.mxu0 0.0
      %2666 = vmatpush1.msra.mxu0 0.0
      %2667 = vmatprep.subr.mxu0 0.0
      %2668 = vmatpush1.msra.mxu0 0.0
      %2669 = vmatprep.subr.mxu0 0.0
      %2670 = vmatpush1.msra.mxu0 0.0
      %2671 = vmatprep.subr.mxu0 0.0
      %2672 = vmatpush1.msra.mxu0 0.0
      %2673 = vmatprep.subr.mxu0 0.0
      %2674 = vmatpush1.msra.mxu0 0.0
      %2675 = vmatprep.subr.mxu0 0.0
      %2676 = vmatpush1.msra.mxu0 0.0
      %2677 = vmatprep.subr.mxu0 0.0
      %2678 = vmatpush1.msra.mxu0 0.0
      %2679 = vmatprep.subr.mxu0 0.0
      %2680 = vmatpush1.msra.mxu0 0.0
      %2681 = vmatprep.subr.mxu0 0.0
      %2682 = vmatpush1.msra.mxu0 0.0
      %2683 = vmatprep.subr.mxu0 0.0
      %2684 = vmatpush1.msra.mxu0 0.0
      %2685 = vmatprep.subr.mxu0 0.0
      %2686 = vmatpush1.msra.mxu0 0.0
      %2687 = vmatprep.subr.mxu0 0.0
      %2688 = vmatpush1.msra.mxu0 0.0
      %2689 = vmatprep.subr.mxu0 0.0
      %2690 = vmatpush1.msra.mxu0 0.0
      %2691 = vmatprep.subr.mxu0 0.0
      %2692 = vmatpush1.msra.mxu0 0.0
      %2693 = vmatprep.subr.mxu0 0.0
      %2694 = vmatpush1.msra.mxu0 0.0
      %2695 = vmatprep.subr.mxu0 0.0
      %2696 = vmatpush1.msra.mxu0 0.0
      %2697 = vmatprep.subr.mxu0 0.0
      %2698 = vmatpush1.msra.mxu0 0.0
      %2699 = vmatprep.subr.mxu0 0.0
      %2700 = vmatpush1.msra.mxu0 0.0
      %2701 = vmatprep.subr.mxu0 0.0
      %2702 = vmatpush1.msra.mxu0 0.0
      %2703 = vmatprep.subr.mxu0 0.0
      %2704 = vmatpush1.msra.mxu0 0.0
      %2705 = vmatprep.subr.mxu0 0.0
      %2706 = vmatpush1.msra.mxu0 0.0
      %2707 = vmatprep.subr.mxu0 0.0
      %2708 = vmatpush1.msra.mxu0 0.0
      %2709 = vmatprep.subr.mxu0 0.0
      %2710 = vmatpush1.msra.mxu0 0.0
      %2711 = vmatprep.subr.mxu0 0.0
      %2712 = vmatpush1.msra.mxu0 0.0
      %2713 = vmatprep.subr.mxu0 0.0
      %2714 = vmatpush1.msra.mxu0 0.0
      %2715 = vmatprep.subr.mxu0 0.0
      %2716 = vmatpush1.msra.mxu0 0.0
      %2717 = vmatprep.mubr.f32.mxu0 0.0
      %2718 = vmatmul.mubr.f32.gmra.mrb[0].mxu0 %v2561
      %v2719 = vpop.f32.mrb[0].mxu0
      %v2720 = vadd.f32 0.0, %v2719
      %v2721 = vpop.f32.mrb[0].mxu0
      %2722 = vmatprep.mubr.f32.mxu0 0.0
      %2723 = vmatmul.mubr.f32.gmra.mrb[0].mxu0 %v2564
      %v2724 = vpop.f32.mrb[0].mxu0
      %v2725 = vadd.f32 0.0, %v2724
      %v2726 = vpop.f32.mrb[0].mxu0
      %2727 = vmatprep.mubr.f32.mxu0 0.0
      %2728 = vmatmul.mubr.f32.gmra.mrb[0].mxu0 %v2567
      %v2729 = vpop.f32.mrb[0].mxu0
      %v2730 = vadd.f32 0.0, %v2729
      %v2731 = vpop.f32.mrb[0].mxu0
      %2732 = vmatprep.mubr.f32.mxu0 0.0
      %2733 = vmatmul.mubr.f32.gmra.mrb[0].mxu0 %v2570
      %v2734 = vpop.f32.mrb[0].mxu0
      %v2735 = vadd.f32 0.0, %v2734
      %v2736 = vpop.f32.mrb[0].mxu0
      %2737 = vmatprep.mubr.f32.mxu0 0.0
      %2738 = vmatmul.mubr.f32.gmra.mrb[0].mxu0 %v2573
      %v2739 = vpop.f32.mrb[0].mxu0
      %v2740 = vadd.f32 0.0, %v2739
      %v2741 = vpop.f32.mrb[0].mxu0
      %2742 = vmatprep.mubr.f32.mxu0 0.0
      %2743 = vmatmul.mubr.f32.gmra.mrb[0].mxu0 %v2576
      %v2744 = vpop.f32.mrb[0].mxu0
      %v2745 = vadd.f32 0.0, %v2744
      %v2746 = vpop.f32.mrb[0].mxu0
      %2747 = vmatprep.mubr.f32.mxu0 0.0
      %2748 = vmatmul.mubr.f32.gmra.mrb[0].mxu0 %v2579
      %v2749 = vpop.f32.mrb[0].mxu0
      %v2750 = vadd.f32 0.0, %v2749
      %v2751 = vpop.f32.mrb[0].mxu0
      %2752 = vmatprep.mubr.f32.mxu0 0.0
      %2753 = vmatmul.mubr.f32.gmra.mrb[0].mxu0 %v2582
      %v2754 = vpop.f32.mrb[0].mxu0
      %v2755 = vadd.f32 0.0, %v2754
      %v2756 = vpop.f32.mrb[0].mxu0
      %2757 = vmatprep.mubr.f32.mxu0 0.0
      %2758 = vmatmul.mubr.f32.gmra.mrb[0].mxu0 %v2585
      %v2759 = vpop.f32.mrb[0].mxu0
      %v2760 = vadd.f32 0.0, %v2759
      %v2761 = vpop.f32.mrb[0].mxu0
      %2762 = vmatprep.mubr.f32.mxu0 0.0
      %2763 = vmatmul.mubr.f32.gmra.mrb[0].mxu0 %v2588
      %v2764 = vpop.f32.mrb[0].mxu0
      %v2765 = vadd.f32 0.0, %v2764
      %v2766 = vpop.f32.mrb[0].mxu0
      %2767 = vmatprep.mubr.f32.mxu0 0.0
      %2768 = vmatmul.mubr.f32.gmra.mrb[0].mxu0 %v2591
      %v2769 = vpop.f32.mrb[0].mxu0
      %v2770 = vadd.f32 0.0, %v2769
      %v2771 = vpop.f32.mrb[0].mxu0
      %2772 = vmatprep.mubr.f32.mxu0 0.0
      %2773 = vmatmul.mubr.f32.gmra.mrb[0].mxu0 %v2594
      %v2774 = vpop.f32.mrb[0].mxu0
      %v2775 = vadd.f32 0.0, %v2774
      %v2776 = vpop.f32.mrb[0].mxu0
      %2777 = vmatprep.mubr.f32.mxu0 0.0
      %2778 = vmatmul.mubr.f32.gmra.mrb[0].mxu0 %v2597
      %v2779 = vpop.f32.mrb[0].mxu0
      %v2780 = vadd.f32 0.0, %v2779
      %v2781 = vpop.f32.mrb[0].mxu0
      %2782 = vmatprep.mubr.f32.mxu0 0.0
      %2783 = vmatmul.mubr.f32.gmra.mrb[0].mxu0 %v2600
      %v2784 = vpop.f32.mrb[0].mxu0
      %v2785 = vadd.f32 0.0, %v2784
      %v2786 = vpop.f32.mrb[0].mxu0
      %2787 = vmatprep.mubr.f32.mxu0 0.0
      %2788 = vmatmul.mubr.f32.gmra.mrb[0].mxu0 %v2603
      %v2789 = vpop.f32.mrb[0].mxu0
      %v2790 = vadd.f32 0.0, %v2789
      %v2791 = vpop.f32.mrb[0].mxu0
      %2792 = vmatprep.mubr.f32.mxu0 0.0
      %2793 = vmatmul.mubr.f32.gmra.mrb[0].mxu0 %v2606
      %v2794 = vpop.f32.mrb[0].mxu0
      %v2795 = vadd.f32 0.0, %v2794
      %v2796 = vpop.f32.mrb[0].mxu0
      %2797 = vmatprep.mubr.f32.mxu0 0.0
      %2798 = vmatmul.mubr.f32.gmra.mrb[0].mxu0 %v2609
      %v2799 = vpop.f32.mrb[0].mxu0
      %v2800 = vadd.f32 0.0, %v2799
      %v2801 = vpop.f32.mrb[0].mxu0
      %2802 = vmatprep.mubr.f32.mxu0 0.0
      %2803 = vmatmul.mubr.f32.gmra.mrb[0].mxu0 %v2612
      %v2804 = vpop.f32.mrb[0].mxu0
      %v2805 = vadd.f32 0.0, %v2804
      %v2806 = vpop.f32.mrb[0].mxu0
      %2807 = vmatprep.mubr.f32.mxu0 0.0
      %2808 = vmatmul.mubr.f32.gmra.mrb[0].mxu0 %v2615
      %v2809 = vpop.f32.mrb[0].mxu0
      %v2810 = vadd.f32 0.0, %v2809
      %v2811 = vpop.f32.mrb[0].mxu0
      %2812 = vmatprep.mubr.f32.mxu0 0.0
      %2813 = vmatmul.mubr.f32.gmra.mrb[0].mxu0 %v2618
      %v2814 = vpop.f32.mrb[0].mxu0
      %v2815 = vadd.f32 0.0, %v2814
      %v2816 = vpop.f32.mrb[0].mxu0
      %2817 = vmatprep.mubr.f32.mxu0 0.0
      %2818 = vmatmul.mubr.f32.gmra.mrb[0].mxu0 %v2621
      %v2819 = vpop.f32.mrb[0].mxu0
      %v2820 = vadd.f32 0.0, %v2819
      %v2821 = vpop.f32.mrb[0].mxu0
      %2822 = vmatprep.mubr.f32.mxu0 0.0
      %2823 = vmatmul.mubr.f32.gmra.mrb[0].mxu0 %v2624
      %v2824 = vpop.f32.mrb[0].mxu0
      %v2825 = vadd.f32 0.0, %v2824
      %v2826 = vpop.f32.mrb[0].mxu0
      %2827 = vmatprep.mubr.f32.mxu0 0.0
      %2828 = vmatmul.mubr.f32.gmra.mrb[0].mxu0 %v2627
      %v2829 = vpop.f32.mrb[0].mxu0
      %v2830 = vadd.f32 0.0, %v2829
      %v2831 = vpop.f32.mrb[0].mxu0
      %2832 = vmatprep.mubr.f32.mxu0 0.0
      %2833 = vmatmul.mubr.f32.gmra.mrb[0].mxu0 %v2630
      %v2834 = vpop.f32.mrb[0].mxu0
      %v2835 = vadd.f32 0.0, %v2834
      %v2836 = vpop.f32.mrb[0].mxu0
      %2837 = vmatprep.mubr.f32.mxu0 0.0
      %2838 = vmatmul.mubr.f32.gmra.mrb[0].mxu0 %v2633
      %v2839 = vpop.f32.mrb[0].mxu0
      %v2840 = vadd.f32 0.0, %v2839
      %v2841 = vpop.f32.mrb[0].mxu0
      %2842 = vmatprep.mubr.f32.mxu0 0.0
      %2843 = vmatmul.mubr.f32.gmra.mrb[0].mxu0 %v2636
      %v2844 = vpop.f32.mrb[0].mxu0
      %v2845 = vadd.f32 0.0, %v2844
      %v2846 = vpop.f32.mrb[0].mxu0
      %2847 = vmatprep.mubr.f32.mxu0 0.0
      %2848 = vmatmul.mubr.f32.gmra.mrb[0].mxu0 %v2639
      %v2849 = vpop.f32.mrb[0].mxu0
      %v2850 = vadd.f32 0.0, %v2849
      %v2851 = vpop.f32.mrb[0].mxu0
      %2852 = vmatprep.mubr.f32.mxu0 0.0
      %2853 = vmatmul.mubr.f32.gmra.mrb[0].mxu0 %v2642
      %v2854 = vpop.f32.mrb[0].mxu0
      %v2855 = vadd.f32 0.0, %v2854
      %v2856 = vpop.f32.mrb[0].mxu0
      %2857 = vmatprep.mubr.f32.mxu0 0.0
      %2858 = vmatmul.mubr.f32.gmra.mrb[0].mxu0 %v2645
      %v2859 = vpop.f32.mrb[0].mxu0
      %v2860 = vadd.f32 0.0, %v2859
      %v2861 = vpop.f32.mrb[0].mxu0
      %2862 = vmatprep.mubr.f32.mxu0 0.0
      %2863 = vmatmul.mubr.f32.gmra.mrb[0].mxu0 %v2648
      %v2864 = vpop.f32.mrb[0].mxu0
      %v2865 = vadd.f32 0.0, %v2864
      %v2866 = vpop.f32.mrb[0].mxu0
      %2867 = vdwg.mxu0
      %v2868 = vadd.f32 %v2498, %v2720
      %v2869 = vadd.f32 %v2499, %v2725
      %v2870 = vadd.f32 %v2500, %v2730
      %v2871 = vadd.f32 %v2501, %v2735
      %v2872 = vadd.f32 %v2502, %v2740
      %v2873 = vadd.f32 %v2503, %v2745
      %v2874 = vadd.f32 %v2504, %v2750
      %v2875 = vadd.f32 %v2505, %v2755
      %v2876 = vadd.f32 %v2506, %v2760
      %v2877 = vadd.f32 %v2507, %v2765
      %v2878 = vadd.f32 %v2508, %v2770
      %v2879 = vadd.f32 %v2509, %v2775
      %v2880 = vadd.f32 %v2510, %v2780
      %v2881 = vadd.f32 %v2511, %v2785
      %v2882 = vadd.f32 %v2512, %v2790
      %v2883 = vadd.f32 %v2513, %v2795
      %v2884 = vadd.f32 %v2514, %v2800
      %v2885 = vadd.f32 %v2515, %v2805
      %v2886 = vadd.f32 %v2516, %v2810
      %v2887 = vadd.f32 %v2517, %v2815
      %v2888 = vadd.f32 %v2518, %v2820
      %v2889 = vadd.f32 %v2519, %v2825
      %v2890 = vadd.f32 %v2520, %v2830
      %v2891 = vadd.f32 %v2521, %v2835
      %v2892 = vadd.f32 %v2522, %v2840
      %v2893 = vadd.f32 %v2523, %v2845
      %v2894 = vadd.f32 %v2524, %v2850
      %v2895 = vadd.f32 %v2525, %v2855
      %v2896 = vadd.f32 %v2526, %v2860
      %v2897 = vadd.f32 %v2527, %v2865
      %v2898 = vld [vmem:[#allocation2 + $0x25] sm:$0xff]
      %v2899 = vld [vmem:[#allocation2 + $0x2d] sm:$0xff]
      %v2900 = vld [vmem:[#allocation2 + $0x35] sm:$0xff]
      %v2901 = vld [vmem:[#allocation2 + $0x3d] sm:$0xff]
      %v2902 = vld [vmem:[#allocation2 + $0x45] sm:$0xff]
      %v2903 = vld [vmem:[#allocation2 + $0x4d] sm:$0xff]
      %v2904 = vld [vmem:[#allocation2 + $0x55] sm:$0xff]
      %v2905 = vld [vmem:[#allocation2 + $0x5d] sm:$0xff]
      %v2906 = vld [vmem:[#allocation2 + $0x65] sm:$0xff]
      %v2907 = vld [vmem:[#allocation2 + $0x6d] sm:$0xff]
      %v2908 = vld [vmem:[#allocation2 + $0x75] sm:$0xff]
      %v2909 = vld [vmem:[#allocation2 + $0x7d] sm:$0xff]
      %v2910 = vld [vmem:[#allocation2 + $0x85] sm:$0xff]
      %v2911 = vld [vmem:[#allocation2 + $0x8d] sm:$0xff]
      %v2912 = vld [vmem:[#allocation2 + $0x95] sm:$0xff]
      %v2913 = vld [vmem:[#allocation2 + $0x9d] sm:$0xff]
      %v2914 = vld [vmem:[#allocation2 + $0xa5] sm:$0xff]
      %v2915 = vld [vmem:[#allocation2 + $0xad] sm:$0xff]
      %v2916 = vld [vmem:[#allocation2 + $0xb5] sm:$0xff]
      %v2917 = vld [vmem:[#allocation2 + $0xbd] sm:$0xff]
      %v2918 = vld [vmem:[#allocation2 + $0xc5] sm:$0xff]
      %v2919 = vld [vmem:[#allocation2 + $0xcd] sm:$0xff]
      %v2920 = vld [vmem:[#allocation2 + $0xd5] sm:$0xff]
      %v2921 = vld [vmem:[#allocation2 + $0xdd] sm:$0xff]
      %v2922 = vld [vmem:[#allocation2 + $0xe5] sm:$0xff]
      %v2923 = vld [vmem:[#allocation2 + $0xed] sm:$0xff]
      %v2924 = vld [vmem:[#allocation2 + $0xf5] sm:$0xff]
      %v2925 = vld [vmem:[#allocation2 + $0xfd] sm:$0xff]
      %v2926 = vld [vmem:[#allocation2 + $0x105] sm:$0xff]
      %v2927 = vld [vmem:[#allocation2 + $0x10d] sm:$0xff]
      %s2928 = scalar_lea.vmem %s3, 28
      %v2929 = vld [vmem:[%s2928] sm:$0xf]
      %v2931 = vsel %vm327, %v2898, 0
      %v2934 = vsel %vm327, %v2899, 0
      %v2937 = vsel %vm327, %v2900, 0
      %v2940 = vsel %vm327, %v2901, 0
      %v2943 = vsel %vm327, %v2902, 0
      %v2946 = vsel %vm327, %v2903, 0
      %v2949 = vsel %vm327, %v2904, 0
      %v2952 = vsel %vm327, %v2905, 0
      %v2955 = vsel %vm327, %v2906, 0
      %v2958 = vsel %vm327, %v2907, 0
      %v2961 = vsel %vm327, %v2908, 0
      %v2964 = vsel %vm327, %v2909, 0
      %v2967 = vsel %vm327, %v2910, 0
      %v2970 = vsel %vm327, %v2911, 0
      %v2973 = vsel %vm327, %v2912, 0
      %v2976 = vsel %vm327, %v2913, 0
      %v2979 = vsel %vm327, %v2914, 0
      %v2982 = vsel %vm327, %v2915, 0
      %v2985 = vsel %vm327, %v2916, 0
      %v2988 = vsel %vm327, %v2917, 0
      %v2991 = vsel %vm327, %v2918, 0
      %v2994 = vsel %vm327, %v2919, 0
      %v2997 = vsel %vm327, %v2920, 0
      %v3000 = vsel %vm327, %v2921, 0
      %v3003 = vsel %vm327, %v2922, 0
      %v3006 = vsel %vm327, %v2923, 0
      %v3009 = vsel %vm327, %v2924, 0
      %v3012 = vsel %vm327, %v2925, 0
      %v3015 = vsel %vm327, %v2926, 0
      %v3018 = vsel %vm327, %v2927, 0
      %v3021 = vsel %vm521, %v2929, 0
      %3023 = vmatprep.subr.mxu0 0.0
      %3024 = vmatpush1.msra.mxu0 %v3021
      %3025 = vmatprep.subr.mxu0 0.0
      %3026 = vmatpush1.msra.mxu0 0.0
      %3027 = vmatprep.subr.mxu0 0.0
      %3028 = vmatpush1.msra.mxu0 0.0
      %3029 = vmatprep.subr.mxu0 0.0
      %3030 = vmatpush1.msra.mxu0 0.0
      %3031 = vmatprep.subr.mxu0 0.0
      %3032 = vmatpush1.msra.mxu0 0.0
      %3033 = vmatprep.subr.mxu0 0.0
      %3034 = vmatpush1.msra.mxu0 0.0
      %3035 = vmatprep.subr.mxu0 0.0
      %3036 = vmatpush1.msra.mxu0 0.0
      %3037 = vmatprep.subr.mxu0 0.0
      %3038 = vmatpush1.msra.mxu0 0.0
      %3039 = vmatprep.subr.mxu0 0.0
      %3040 = vmatpush1.msra.mxu0 0.0
      %3041 = vmatprep.subr.mxu0 0.0
      %3042 = vmatpush1.msra.mxu0 0.0
      %3043 = vmatprep.subr.mxu0 0.0
      %3044 = vmatpush1.msra.mxu0 0.0
      %3045 = vmatprep.subr.mxu0 0.0
      %3046 = vmatpush1.msra.mxu0 0.0
      %3047 = vmatprep.subr.mxu0 0.0
      %3048 = vmatpush1.msra.mxu0 0.0
      %3049 = vmatprep.subr.mxu0 0.0
      %3050 = vmatpush1.msra.mxu0 0.0
      %3051 = vmatprep.subr.mxu0 0.0
      %3052 = vmatpush1.msra.mxu0 0.0
      %3053 = vmatprep.subr.mxu0 0.0
      %3054 = vmatpush1.msra.mxu0 0.0
      %3055 = vmatprep.subr.mxu0 0.0
      %3056 = vmatpush1.msra.mxu0 0.0
      %3057 = vmatprep.subr.mxu0 0.0
      %3058 = vmatpush1.msra.mxu0 0.0
      %3059 = vmatprep.subr.mxu0 0.0
      %3060 = vmatpush1.msra.mxu0 0.0
      %3061 = vmatprep.subr.mxu0 0.0
      %3062 = vmatpush1.msra.mxu0 0.0
      %3063 = vmatprep.subr.mxu0 0.0
      %3064 = vmatpush1.msra.mxu0 0.0
      %3065 = vmatprep.subr.mxu0 0.0
      %3066 = vmatpush1.msra.mxu0 0.0
      %3067 = vmatprep.subr.mxu0 0.0
      %3068 = vmatpush1.msra.mxu0 0.0
      %3069 = vmatprep.subr.mxu0 0.0
      %3070 = vmatpush1.msra.mxu0 0.0
      %3071 = vmatprep.subr.mxu0 0.0
      %3072 = vmatpush1.msra.mxu0 0.0
      %3073 = vmatprep.subr.mxu0 0.0
      %3074 = vmatpush1.msra.mxu0 0.0
      %3075 = vmatprep.subr.mxu0 0.0
      %3076 = vmatpush1.msra.mxu0 0.0
      %3077 = vmatprep.subr.mxu0 0.0
      %3078 = vmatpush1.msra.mxu0 0.0
      %3079 = vmatprep.subr.mxu0 0.0
      %3080 = vmatpush1.msra.mxu0 0.0
      %3081 = vmatprep.subr.mxu0 0.0
      %3082 = vmatpush1.msra.mxu0 0.0
      %3083 = vmatprep.subr.mxu0 0.0
      %3084 = vmatpush1.msra.mxu0 0.0
      %3085 = vmatprep.subr.mxu0 0.0
      %3086 = vmatpush1.msra.mxu0 0.0
      %3087 = vmatprep.mubr.f32.mxu0 0.0
      %3088 = vmatmul.mubr.f32.gmra.mrb[0].mxu0 %v2931
      %v3089 = vpop.f32.mrb[0].mxu0
      %v3090 = vadd.f32 0.0, %v3089
      %v3091 = vpop.f32.mrb[0].mxu0
      %3092 = vmatprep.mubr.f32.mxu0 0.0
      %3093 = vmatmul.mubr.f32.gmra.mrb[0].mxu0 %v2934
      %v3094 = vpop.f32.mrb[0].mxu0
      %v3095 = vadd.f32 0.0, %v3094
      %v3096 = vpop.f32.mrb[0].mxu0
      %3097 = vmatprep.mubr.f32.mxu0 0.0
      %3098 = vmatmul.mubr.f32.gmra.mrb[0].mxu0 %v2937
      %v3099 = vpop.f32.mrb[0].mxu0
      %v3100 = vadd.f32 0.0, %v3099
      %v3101 = vpop.f32.mrb[0].mxu0
      %3102 = vmatprep.mubr.f32.mxu0 0.0
      %3103 = vmatmul.mubr.f32.gmra.mrb[0].mxu0 %v2940
      %v3104 = vpop.f32.mrb[0].mxu0
      %v3105 = vadd.f32 0.0, %v3104
      %v3106 = vpop.f32.mrb[0].mxu0
      %3107 = vmatprep.mubr.f32.mxu0 0.0
      %3108 = vmatmul.mubr.f32.gmra.mrb[0].mxu0 %v2943
      %v3109 = vpop.f32.mrb[0].mxu0
      %v3110 = vadd.f32 0.0, %v3109
      %v3111 = vpop.f32.mrb[0].mxu0
      %3112 = vmatprep.mubr.f32.mxu0 0.0
      %3113 = vmatmul.mubr.f32.gmra.mrb[0].mxu0 %v2946
      %v3114 = vpop.f32.mrb[0].mxu0
      %v3115 = vadd.f32 0.0, %v3114
      %v3116 = vpop.f32.mrb[0].mxu0
      %3117 = vmatprep.mubr.f32.mxu0 0.0
      %3118 = vmatmul.mubr.f32.gmra.mrb[0].mxu0 %v2949
      %v3119 = vpop.f32.mrb[0].mxu0
      %v3120 = vadd.f32 0.0, %v3119
      %v3121 = vpop.f32.mrb[0].mxu0
      %3122 = vmatprep.mubr.f32.mxu0 0.0
      %3123 = vmatmul.mubr.f32.gmra.mrb[0].mxu0 %v2952
      %v3124 = vpop.f32.mrb[0].mxu0
      %v3125 = vadd.f32 0.0, %v3124
      %v3126 = vpop.f32.mrb[0].mxu0
      %3127 = vmatprep.mubr.f32.mxu0 0.0
      %3128 = vmatmul.mubr.f32.gmra.mrb[0].mxu0 %v2955
      %v3129 = vpop.f32.mrb[0].mxu0
      %v3130 = vadd.f32 0.0, %v3129
      %v3131 = vpop.f32.mrb[0].mxu0
      %3132 = vmatprep.mubr.f32.mxu0 0.0
      %3133 = vmatmul.mubr.f32.gmra.mrb[0].mxu0 %v2958
      %v3134 = vpop.f32.mrb[0].mxu0
      %v3135 = vadd.f32 0.0, %v3134
      %v3136 = vpop.f32.mrb[0].mxu0
      %3137 = vmatprep.mubr.f32.mxu0 0.0
      %3138 = vmatmul.mubr.f32.gmra.mrb[0].mxu0 %v2961
      %v3139 = vpop.f32.mrb[0].mxu0
      %v3140 = vadd.f32 0.0, %v3139
      %v3141 = vpop.f32.mrb[0].mxu0
      %3142 = vmatprep.mubr.f32.mxu0 0.0
      %3143 = vmatmul.mubr.f32.gmra.mrb[0].mxu0 %v2964
      %v3144 = vpop.f32.mrb[0].mxu0
      %v3145 = vadd.f32 0.0, %v3144
      %v3146 = vpop.f32.mrb[0].mxu0
      %3147 = vmatprep.mubr.f32.mxu0 0.0
      %3148 = vmatmul.mubr.f32.gmra.mrb[0].mxu0 %v2967
      %v3149 = vpop.f32.mrb[0].mxu0
      %v3150 = vadd.f32 0.0, %v3149
      %v3151 = vpop.f32.mrb[0].mxu0
      %3152 = vmatprep.mubr.f32.mxu0 0.0
      %3153 = vmatmul.mubr.f32.gmra.mrb[0].mxu0 %v2970
      %v3154 = vpop.f32.mrb[0].mxu0
      %v3155 = vadd.f32 0.0, %v3154
      %v3156 = vpop.f32.mrb[0].mxu0
      %3157 = vmatprep.mubr.f32.mxu0 0.0
      %3158 = vmatmul.mubr.f32.gmra.mrb[0].mxu0 %v2973
      %v3159 = vpop.f32.mrb[0].mxu0
      %v3160 = vadd.f32 0.0, %v3159
      %v3161 = vpop.f32.mrb[0].mxu0
      %3162 = vmatprep.mubr.f32.mxu0 0.0
      %3163 = vmatmul.mubr.f32.gmra.mrb[0].mxu0 %v2976
      %v3164 = vpop.f32.mrb[0].mxu0
      %v3165 = vadd.f32 0.0, %v3164
      %v3166 = vpop.f32.mrb[0].mxu0
      %3167 = vmatprep.mubr.f32.mxu0 0.0
      %3168 = vmatmul.mubr.f32.gmra.mrb[0].mxu0 %v2979
      %v3169 = vpop.f32.mrb[0].mxu0
      %v3170 = vadd.f32 0.0, %v3169
      %v3171 = vpop.f32.mrb[0].mxu0
      %3172 = vmatprep.mubr.f32.mxu0 0.0
      %3173 = vmatmul.mubr.f32.gmra.mrb[0].mxu0 %v2982
      %v3174 = vpop.f32.mrb[0].mxu0
      %v3175 = vadd.f32 0.0, %v3174
      %v3176 = vpop.f32.mrb[0].mxu0
      %3177 = vmatprep.mubr.f32.mxu0 0.0
      %3178 = vmatmul.mubr.f32.gmra.mrb[0].mxu0 %v2985
      %v3179 = vpop.f32.mrb[0].mxu0
      %v3180 = vadd.f32 0.0, %v3179
      %v3181 = vpop.f32.mrb[0].mxu0
      %3182 = vmatprep.mubr.f32.mxu0 0.0
      %3183 = vmatmul.mubr.f32.gmra.mrb[0].mxu0 %v2988
      %v3184 = vpop.f32.mrb[0].mxu0
      %v3185 = vadd.f32 0.0, %v3184
      %v3186 = vpop.f32.mrb[0].mxu0
      %3187 = vmatprep.mubr.f32.mxu0 0.0
      %3188 = vmatmul.mubr.f32.gmra.mrb[0].mxu0 %v2991
      %v3189 = vpop.f32.mrb[0].mxu0
      %v3190 = vadd.f32 0.0, %v3189
      %v3191 = vpop.f32.mrb[0].mxu0
      %3192 = vmatprep.mubr.f32.mxu0 0.0
      %3193 = vmatmul.mubr.f32.gmra.mrb[0].mxu0 %v2994
      %v3194 = vpop.f32.mrb[0].mxu0
      %v3195 = vadd.f32 0.0, %v3194
      %v3196 = vpop.f32.mrb[0].mxu0
      %3197 = vmatprep.mubr.f32.mxu0 0.0
      %3198 = vmatmul.mubr.f32.gmra.mrb[0].mxu0 %v2997
      %v3199 = vpop.f32.mrb[0].mxu0
      %v3200 = vadd.f32 0.0, %v3199
      %v3201 = vpop.f32.mrb[0].mxu0
      %3202 = vmatprep.mubr.f32.mxu0 0.0
      %3203 = vmatmul.mubr.f32.gmra.mrb[0].mxu0 %v3000
      %v3204 = vpop.f32.mrb[0].mxu0
      %v3205 = vadd.f32 0.0, %v3204
      %v3206 = vpop.f32.mrb[0].mxu0
      %3207 = vmatprep.mubr.f32.mxu0 0.0
      %3208 = vmatmul.mubr.f32.gmra.mrb[0].mxu0 %v3003
      %v3209 = vpop.f32.mrb[0].mxu0
      %v3210 = vadd.f32 0.0, %v3209
      %v3211 = vpop.f32.mrb[0].mxu0
      %3212 = vmatprep.mubr.f32.mxu0 0.0
      %3213 = vmatmul.mubr.f32.gmra.mrb[0].mxu0 %v3006
      %v3214 = vpop.f32.mrb[0].mxu0
      %v3215 = vadd.f32 0.0, %v3214
      %v3216 = vpop.f32.mrb[0].mxu0
      %3217 = vmatprep.mubr.f32.mxu0 0.0
      %3218 = vmatmul.mubr.f32.gmra.mrb[0].mxu0 %v3009
      %v3219 = vpop.f32.mrb[0].mxu0
      %v3220 = vadd.f32 0.0, %v3219
      %v3221 = vpop.f32.mrb[0].mxu0
      %3222 = vmatprep.mubr.f32.mxu0 0.0
      %3223 = vmatmul.mubr.f32.gmra.mrb[0].mxu0 %v3012
      %v3224 = vpop.f32.mrb[0].mxu0
      %v3225 = vadd.f32 0.0, %v3224
      %v3226 = vpop.f32.mrb[0].mxu0
      %3227 = vmatprep.mubr.f32.mxu0 0.0
      %3228 = vmatmul.mubr.f32.gmra.mrb[0].mxu0 %v3015
      %v3229 = vpop.f32.mrb[0].mxu0
      %v3230 = vadd.f32 0.0, %v3229
      %v3231 = vpop.f32.mrb[0].mxu0
      %3232 = vmatprep.mubr.f32.mxu0 0.0
      %3233 = vmatmul.mubr.f32.gmra.mrb[0].mxu0 %v3018
      %v3234 = vpop.f32.mrb[0].mxu0
      %v3235 = vadd.f32 0.0, %v3234
      %v3236 = vpop.f32.mrb[0].mxu0
      %3237 = vdwg.mxu0
      %v3238 = vadd.f32 %v2868, %v3090
      %v3239 = vadd.f32 %v2869, %v3095
      %v3240 = vadd.f32 %v2870, %v3100
      %v3241 = vadd.f32 %v2871, %v3105
      %v3242 = vadd.f32 %v2872, %v3110
      %v3243 = vadd.f32 %v2873, %v3115
      %v3244 = vadd.f32 %v2874, %v3120
      %v3245 = vadd.f32 %v2875, %v3125
      %v3246 = vadd.f32 %v2876, %v3130
      %v3247 = vadd.f32 %v2877, %v3135
      %v3248 = vadd.f32 %v2878, %v3140
      %v3249 = vadd.f32 %v2879, %v3145
      %v3250 = vadd.f32 %v2880, %v3150
      %v3251 = vadd.f32 %v2881, %v3155
      %v3252 = vadd.f32 %v2882, %v3160
      %v3253 = vadd.f32 %v2883, %v3165
      %v3254 = vadd.f32 %v2884, %v3170
      %v3255 = vadd.f32 %v2885, %v3175
      %v3256 = vadd.f32 %v2886, %v3180
      %v3257 = vadd.f32 %v2887, %v3185
      %v3258 = vadd.f32 %v2888, %v3190
      %v3259 = vadd.f32 %v2889, %v3195
      %v3260 = vadd.f32 %v2890, %v3200
      %v3261 = vadd.f32 %v2891, %v3205
      %v3262 = vadd.f32 %v2892, %v3210
      %v3263 = vadd.f32 %v2893, %v3215
      %v3264 = vadd.f32 %v2894, %v3220
      %v3265 = vadd.f32 %v2895, %v3225
      %v3266 = vadd.f32 %v2896, %v3230
      %v3267 = vadd.f32 %v2897, %v3235
      %v3268 = vld [vmem:[#allocation2 + $0x26] sm:$0xff]
      %v3269 = vld [vmem:[#allocation2 + $0x2e] sm:$0xff]
      %v3270 = vld [vmem:[#allocation2 + $0x36] sm:$0xff]
      %v3271 = vld [vmem:[#allocation2 + $0x3e] sm:$0xff]
      %v3272 = vld [vmem:[#allocation2 + $0x46] sm:$0xff]
      %v3273 = vld [vmem:[#allocation2 + $0x4e] sm:$0xff]
      %v3274 = vld [vmem:[#allocation2 + $0x56] sm:$0xff]
      %v3275 = vld [vmem:[#allocation2 + $0x5e] sm:$0xff]
      %v3276 = vld [vmem:[#allocation2 + $0x66] sm:$0xff]
      %v3277 = vld [vmem:[#allocation2 + $0x6e] sm:$0xff]
      %v3278 = vld [vmem:[#allocation2 + $0x76] sm:$0xff]
      %v3279 = vld [vmem:[#allocation2 + $0x7e] sm:$0xff]
      %v3280 = vld [vmem:[#allocation2 + $0x86] sm:$0xff]
      %v3281 = vld [vmem:[#allocation2 + $0x8e] sm:$0xff]
      %v3282 = vld [vmem:[#allocation2 + $0x96] sm:$0xff]
      %v3283 = vld [vmem:[#allocation2 + $0x9e] sm:$0xff]
      %v3284 = vld [vmem:[#allocation2 + $0xa6] sm:$0xff]
      %v3285 = vld [vmem:[#allocation2 + $0xae] sm:$0xff]
      %v3286 = vld [vmem:[#allocation2 + $0xb6] sm:$0xff]
      %v3287 = vld [vmem:[#allocation2 + $0xbe] sm:$0xff]
      %v3288 = vld [vmem:[#allocation2 + $0xc6] sm:$0xff]
      %v3289 = vld [vmem:[#allocation2 + $0xce] sm:$0xff]
      %v3290 = vld [vmem:[#allocation2 + $0xd6] sm:$0xff]
      %v3291 = vld [vmem:[#allocation2 + $0xde] sm:$0xff]
      %v3292 = vld [vmem:[#allocation2 + $0xe6] sm:$0xff]
      %v3293 = vld [vmem:[#allocation2 + $0xee] sm:$0xff]
      %v3294 = vld [vmem:[#allocation2 + $0xf6] sm:$0xff]
      %v3295 = vld [vmem:[#allocation2 + $0xfe] sm:$0xff]
      %v3296 = vld [vmem:[#allocation2 + $0x106] sm:$0xff]
      %v3297 = vld [vmem:[#allocation2 + $0x10e] sm:$0xff]
      %s3298 = scalar_lea.vmem %s3, 32
      %v3299 = vld [vmem:[%s3298] sm:$0xf]
      %v3301 = vsel %vm327, %v3268, 0
      %v3304 = vsel %vm327, %v3269, 0
      %v3307 = vsel %vm327, %v3270, 0
      %v3310 = vsel %vm327, %v3271, 0
      %v3313 = vsel %vm327, %v3272, 0
      %v3316 = vsel %vm327, %v3273, 0
      %v3319 = vsel %vm327, %v3274, 0
      %v3322 = vsel %vm327, %v3275, 0
      %v3325 = vsel %vm327, %v3276, 0
      %v3328 = vsel %vm327, %v3277, 0
      %v3331 = vsel %vm327, %v3278, 0
      %v3334 = vsel %vm327, %v3279, 0
      %v3337 = vsel %vm327, %v3280, 0
      %v3340 = vsel %vm327, %v3281, 0
      %v3343 = vsel %vm327, %v3282, 0
      %v3346 = vsel %vm327, %v3283, 0
      %v3349 = vsel %vm327, %v3284, 0
      %v3352 = vsel %vm327, %v3285, 0
      %v3355 = vsel %vm327, %v3286, 0
      %v3358 = vsel %vm327, %v3287, 0
      %v3361 = vsel %vm327, %v3288, 0
      %v3364 = vsel %vm327, %v3289, 0
      %v3367 = vsel %vm327, %v3290, 0
      %v3370 = vsel %vm327, %v3291, 0
      %v3373 = vsel %vm327, %v3292, 0
      %v3376 = vsel %vm327, %v3293, 0
      %v3379 = vsel %vm327, %v3294, 0
      %v3382 = vsel %vm327, %v3295, 0
      %v3385 = vsel %vm327, %v3296, 0
      %v3388 = vsel %vm327, %v3297, 0
      %v3391 = vsel %vm521, %v3299, 0
      %3393 = vmatprep.subr.mxu0 0.0
      %3394 = vmatpush1.msra.mxu0 %v3391
      %3395 = vmatprep.subr.mxu0 0.0
      %3396 = vmatpush1.msra.mxu0 0.0
      %3397 = vmatprep.subr.mxu0 0.0
      %3398 = vmatpush1.msra.mxu0 0.0
      %3399 = vmatprep.subr.mxu0 0.0
      %3400 = vmatpush1.msra.mxu0 0.0
      %3401 = vmatprep.subr.mxu0 0.0
      %3402 = vmatpush1.msra.mxu0 0.0
      %3403 = vmatprep.subr.mxu0 0.0
      %3404 = vmatpush1.msra.mxu0 0.0
      %3405 = vmatprep.subr.mxu0 0.0
      %3406 = vmatpush1.msra.mxu0 0.0
      %3407 = vmatprep.subr.mxu0 0.0
      %3408 = vmatpush1.msra.mxu0 0.0
      %3409 = vmatprep.subr.mxu0 0.0
      %3410 = vmatpush1.msra.mxu0 0.0
      %3411 = vmatprep.subr.mxu0 0.0
      %3412 = vmatpush1.msra.mxu0 0.0
      %3413 = vmatprep.subr.mxu0 0.0
      %3414 = vmatpush1.msra.mxu0 0.0
      %3415 = vmatprep.subr.mxu0 0.0
      %3416 = vmatpush1.msra.mxu0 0.0
      %3417 = vmatprep.subr.mxu0 0.0
      %3418 = vmatpush1.msra.mxu0 0.0
      %3419 = vmatprep.subr.mxu0 0.0
      %3420 = vmatpush1.msra.mxu0 0.0
      %3421 = vmatprep.subr.mxu0 0.0
      %3422 = vmatpush1.msra.mxu0 0.0
      %3423 = vmatprep.subr.mxu0 0.0
      %3424 = vmatpush1.msra.mxu0 0.0
      %3425 = vmatprep.subr.mxu0 0.0
      %3426 = vmatpush1.msra.mxu0 0.0
      %3427 = vmatprep.subr.mxu0 0.0
      %3428 = vmatpush1.msra.mxu0 0.0
      %3429 = vmatprep.subr.mxu0 0.0
      %3430 = vmatpush1.msra.mxu0 0.0
      %3431 = vmatprep.subr.mxu0 0.0
      %3432 = vmatpush1.msra.mxu0 0.0
      %3433 = vmatprep.subr.mxu0 0.0
      %3434 = vmatpush1.msra.mxu0 0.0
      %3435 = vmatprep.subr.mxu0 0.0
      %3436 = vmatpush1.msra.mxu0 0.0
      %3437 = vmatprep.subr.mxu0 0.0
      %3438 = vmatpush1.msra.mxu0 0.0
      %3439 = vmatprep.subr.mxu0 0.0
      %3440 = vmatpush1.msra.mxu0 0.0
      %3441 = vmatprep.subr.mxu0 0.0
      %3442 = vmatpush1.msra.mxu0 0.0
      %3443 = vmatprep.subr.mxu0 0.0
      %3444 = vmatpush1.msra.mxu0 0.0
      %3445 = vmatprep.subr.mxu0 0.0
      %3446 = vmatpush1.msra.mxu0 0.0
      %3447 = vmatprep.subr.mxu0 0.0
      %3448 = vmatpush1.msra.mxu0 0.0
      %3449 = vmatprep.subr.mxu0 0.0
      %3450 = vmatpush1.msra.mxu0 0.0
      %3451 = vmatprep.subr.mxu0 0.0
      %3452 = vmatpush1.msra.mxu0 0.0
      %3453 = vmatprep.subr.mxu0 0.0
      %3454 = vmatpush1.msra.mxu0 0.0
      %3455 = vmatprep.subr.mxu0 0.0
      %3456 = vmatpush1.msra.mxu0 0.0
      %3457 = vmatprep.mubr.f32.mxu0 0.0
      %3458 = vmatmul.mubr.f32.gmra.mrb[0].mxu0 %v3301
      %v3459 = vpop.f32.mrb[0].mxu0
      %v3460 = vadd.f32 0.0, %v3459
      %v3461 = vpop.f32.mrb[0].mxu0
      %3462 = vmatprep.mubr.f32.mxu0 0.0
      %3463 = vmatmul.mubr.f32.gmra.mrb[0].mxu0 %v3304
      %v3464 = vpop.f32.mrb[0].mxu0
      %v3465 = vadd.f32 0.0, %v3464
      %v3466 = vpop.f32.mrb[0].mxu0
      %3467 = vmatprep.mubr.f32.mxu0 0.0
      %3468 = vmatmul.mubr.f32.gmra.mrb[0].mxu0 %v3307
      %v3469 = vpop.f32.mrb[0].mxu0
      %v3470 = vadd.f32 0.0, %v3469
      %v3471 = vpop.f32.mrb[0].mxu0
      %3472 = vmatprep.mubr.f32.mxu0 0.0
      %3473 = vmatmul.mubr.f32.gmra.mrb[0].mxu0 %v3310
      %v3474 = vpop.f32.mrb[0].mxu0
      %v3475 = vadd.f32 0.0, %v3474
      %v3476 = vpop.f32.mrb[0].mxu0
      %3477 = vmatprep.mubr.f32.mxu0 0.0
      %3478 = vmatmul.mubr.f32.gmra.mrb[0].mxu0 %v3313
      %v3479 = vpop.f32.mrb[0].mxu0
      %v3480 = vadd.f32 0.0, %v3479
      %v3481 = vpop.f32.mrb[0].mxu0
      %3482 = vmatprep.mubr.f32.mxu0 0.0
      %3483 = vmatmul.mubr.f32.gmra.mrb[0].mxu0 %v3316
      %v3484 = vpop.f32.mrb[0].mxu0
      %v3485 = vadd.f32 0.0, %v3484
      %v3486 = vpop.f32.mrb[0].mxu0
      %3487 = vmatprep.mubr.f32.mxu0 0.0
      %3488 = vmatmul.mubr.f32.gmra.mrb[0].mxu0 %v3319
      %v3489 = vpop.f32.mrb[0].mxu0
      %v3490 = vadd.f32 0.0, %v3489
      %v3491 = vpop.f32.mrb[0].mxu0
      %3492 = vmatprep.mubr.f32.mxu0 0.0
      %3493 = vmatmul.mubr.f32.gmra.mrb[0].mxu0 %v3322
      %v3494 = vpop.f32.mrb[0].mxu0
      %v3495 = vadd.f32 0.0, %v3494
      %v3496 = vpop.f32.mrb[0].mxu0
      %3497 = vmatprep.mubr.f32.mxu0 0.0
      %3498 = vmatmul.mubr.f32.gmra.mrb[0].mxu0 %v3325
      %v3499 = vpop.f32.mrb[0].mxu0
      %v3500 = vadd.f32 0.0, %v3499
      %v3501 = vpop.f32.mrb[0].mxu0
      %3502 = vmatprep.mubr.f32.mxu0 0.0
      %3503 = vmatmul.mubr.f32.gmra.mrb[0].mxu0 %v3328
      %v3504 = vpop.f32.mrb[0].mxu0
      %v3505 = vadd.f32 0.0, %v3504
      %v3506 = vpop.f32.mrb[0].mxu0
      %3507 = vmatprep.mubr.f32.mxu0 0.0
      %3508 = vmatmul.mubr.f32.gmra.mrb[0].mxu0 %v3331
      %v3509 = vpop.f32.mrb[0].mxu0
      %v3510 = vadd.f32 0.0, %v3509
      %v3511 = vpop.f32.mrb[0].mxu0
      %3512 = vmatprep.mubr.f32.mxu0 0.0
      %3513 = vmatmul.mubr.f32.gmra.mrb[0].mxu0 %v3334
      %v3514 = vpop.f32.mrb[0].mxu0
      %v3515 = vadd.f32 0.0, %v3514
      %v3516 = vpop.f32.mrb[0].mxu0
      %3517 = vmatprep.mubr.f32.mxu0 0.0
      %3518 = vmatmul.mubr.f32.gmra.mrb[0].mxu0 %v3337
      %v3519 = vpop.f32.mrb[0].mxu0
      %v3520 = vadd.f32 0.0, %v3519
      %v3521 = vpop.f32.mrb[0].mxu0
      %3522 = vmatprep.mubr.f32.mxu0 0.0
      %3523 = vmatmul.mubr.f32.gmra.mrb[0].mxu0 %v3340
      %v3524 = vpop.f32.mrb[0].mxu0
      %v3525 = vadd.f32 0.0, %v3524
      %v3526 = vpop.f32.mrb[0].mxu0
      %3527 = vmatprep.mubr.f32.mxu0 0.0
      %3528 = vmatmul.mubr.f32.gmra.mrb[0].mxu0 %v3343
      %v3529 = vpop.f32.mrb[0].mxu0
      %v3530 = vadd.f32 0.0, %v3529
      %v3531 = vpop.f32.mrb[0].mxu0
      %3532 = vmatprep.mubr.f32.mxu0 0.0
      %3533 = vmatmul.mubr.f32.gmra.mrb[0].mxu0 %v3346
      %v3534 = vpop.f32.mrb[0].mxu0
      %v3535 = vadd.f32 0.0, %v3534
      %v3536 = vpop.f32.mrb[0].mxu0
      %3537 = vmatprep.mubr.f32.mxu0 0.0
      %3538 = vmatmul.mubr.f32.gmra.mrb[0].mxu0 %v3349
      %v3539 = vpop.f32.mrb[0].mxu0
      %v3540 = vadd.f32 0.0, %v3539
      %v3541 = vpop.f32.mrb[0].mxu0
      %3542 = vmatprep.mubr.f32.mxu0 0.0
      %3543 = vmatmul.mubr.f32.gmra.mrb[0].mxu0 %v3352
      %v3544 = vpop.f32.mrb[0].mxu0
      %v3545 = vadd.f32 0.0, %v3544
      %v3546 = vpop.f32.mrb[0].mxu0
      %3547 = vmatprep.mubr.f32.mxu0 0.0
      %3548 = vmatmul.mubr.f32.gmra.mrb[0].mxu0 %v3355
      %v3549 = vpop.f32.mrb[0].mxu0
      %v3550 = vadd.f32 0.0, %v3549
      %v3551 = vpop.f32.mrb[0].mxu0
      %3552 = vmatprep.mubr.f32.mxu0 0.0
      %3553 = vmatmul.mubr.f32.gmra.mrb[0].mxu0 %v3358
      %v3554 = vpop.f32.mrb[0].mxu0
      %v3555 = vadd.f32 0.0, %v3554
      %v3556 = vpop.f32.mrb[0].mxu0
      %3557 = vmatprep.mubr.f32.mxu0 0.0
      %3558 = vmatmul.mubr.f32.gmra.mrb[0].mxu0 %v3361
      %v3559 = vpop.f32.mrb[0].mxu0
      %v3560 = vadd.f32 0.0, %v3559
      %v3561 = vpop.f32.mrb[0].mxu0
      %3562 = vmatprep.mubr.f32.mxu0 0.0
      %3563 = vmatmul.mubr.f32.gmra.mrb[0].mxu0 %v3364
      %v3564 = vpop.f32.mrb[0].mxu0
      %v3565 = vadd.f32 0.0, %v3564
      %v3566 = vpop.f32.mrb[0].mxu0
      %3567 = vmatprep.mubr.f32.mxu0 0.0
      %3568 = vmatmul.mubr.f32.gmra.mrb[0].mxu0 %v3367
      %v3569 = vpop.f32.mrb[0].mxu0
      %v3570 = vadd.f32 0.0, %v3569
      %v3571 = vpop.f32.mrb[0].mxu0
      %3572 = vmatprep.mubr.f32.mxu0 0.0
      %3573 = vmatmul.mubr.f32.gmra.mrb[0].mxu0 %v3370
      %v3574 = vpop.f32.mrb[0].mxu0
      %v3575 = vadd.f32 0.0, %v3574
      %v3576 = vpop.f32.mrb[0].mxu0
      %3577 = vmatprep.mubr.f32.mxu0 0.0
      %3578 = vmatmul.mubr.f32.gmra.mrb[0].mxu0 %v3373
      %v3579 = vpop.f32.mrb[0].mxu0
      %v3580 = vadd.f32 0.0, %v3579
      %v3581 = vpop.f32.mrb[0].mxu0
      %3582 = vmatprep.mubr.f32.mxu0 0.0
      %3583 = vmatmul.mubr.f32.gmra.mrb[0].mxu0 %v3376
      %v3584 = vpop.f32.mrb[0].mxu0
      %v3585 = vadd.f32 0.0, %v3584
      %v3586 = vpop.f32.mrb[0].mxu0
      %3587 = vmatprep.mubr.f32.mxu0 0.0
      %3588 = vmatmul.mubr.f32.gmra.mrb[0].mxu0 %v3379
      %v3589 = vpop.f32.mrb[0].mxu0
      %v3590 = vadd.f32 0.0, %v3589
      %v3591 = vpop.f32.mrb[0].mxu0
      %3592 = vmatprep.mubr.f32.mxu0 0.0
      %3593 = vmatmul.mubr.f32.gmra.mrb[0].mxu0 %v3382
      %v3594 = vpop.f32.mrb[0].mxu0
      %v3595 = vadd.f32 0.0, %v3594
      %v3596 = vpop.f32.mrb[0].mxu0
      %3597 = vmatprep.mubr.f32.mxu0 0.0
      %3598 = vmatmul.mubr.f32.gmra.mrb[0].mxu0 %v3385
      %v3599 = vpop.f32.mrb[0].mxu0
      %v3600 = vadd.f32 0.0, %v3599
      %v3601 = vpop.f32.mrb[0].mxu0
      %3602 = vmatprep.mubr.f32.mxu0 0.0
      %3603 = vmatmul.mubr.f32.gmra.mrb[0].mxu0 %v3388
      %v3604 = vpop.f32.mrb[0].mxu0
      %v3605 = vadd.f32 0.0, %v3604
      %v3606 = vpop.f32.mrb[0].mxu0
      %3607 = vdwg.mxu0
      %v3608 = vadd.f32 %v3238, %v3460
      %v3609 = vadd.f32 %v3239, %v3465
      %v3610 = vadd.f32 %v3240, %v3470
      %v3611 = vadd.f32 %v3241, %v3475
      %v3612 = vadd.f32 %v3242, %v3480
      %v3613 = vadd.f32 %v3243, %v3485
      %v3614 = vadd.f32 %v3244, %v3490
      %v3615 = vadd.f32 %v3245, %v3495
      %v3616 = vadd.f32 %v3246, %v3500
      %v3617 = vadd.f32 %v3247, %v3505
      %v3618 = vadd.f32 %v3248, %v3510
      %v3619 = vadd.f32 %v3249, %v3515
      %v3620 = vadd.f32 %v3250, %v3520
      %v3621 = vadd.f32 %v3251, %v3525
      %v3622 = vadd.f32 %v3252, %v3530
      %v3623 = vadd.f32 %v3253, %v3535
      %v3624 = vadd.f32 %v3254, %v3540
      %v3625 = vadd.f32 %v3255, %v3545
      %v3626 = vadd.f32 %v3256, %v3550
      %v3627 = vadd.f32 %v3257, %v3555
      %v3628 = vadd.f32 %v3258, %v3560
      %v3629 = vadd.f32 %v3259, %v3565
      %v3630 = vadd.f32 %v3260, %v3570
      %v3631 = vadd.f32 %v3261, %v3575
      %v3632 = vadd.f32 %v3262, %v3580
      %v3633 = vadd.f32 %v3263, %v3585
      %v3634 = vadd.f32 %v3264, %v3590
      %v3635 = vadd.f32 %v3265, %v3595
      %v3636 = vadd.f32 %v3266, %v3600
      %v3637 = vadd.f32 %v3267, %v3605
      %vm3638 = vcmask 64512
      %3639 = vst.msk [vmem:[%s291] sm:$0xff] %vm3638, %v3608
      %3640 = vst.msk [vmem:[%s291 + $0x8] sm:$0xff] %vm3638, %v3609
      %3641 = vst.msk [vmem:[%s291 + $0x10] sm:$0xff] %vm3638, %v3610
      %3642 = vst.msk [vmem:[%s291 + $0x18] sm:$0xff] %vm3638, %v3611
      %3643 = vst.msk [vmem:[%s291 + $0x20] sm:$0xff] %vm3638, %v3612
      %3644 = vst.msk [vmem:[%s291 + $0x28] sm:$0xff] %vm3638, %v3613
      %3645 = vst.msk [vmem:[%s291 + $0x30] sm:$0xff] %vm3638, %v3614
      %3646 = vst.msk [vmem:[%s291 + $0x38] sm:$0xff] %vm3638, %v3615
      %3647 = vst.msk [vmem:[%s291 + $0x40] sm:$0xff] %vm3638, %v3616
      %3648 = vst.msk [vmem:[%s291 + $0x48] sm:$0xff] %vm3638, %v3617
      %3649 = vst.msk [vmem:[%s291 + $0x50] sm:$0xff] %vm3638, %v3618
      %3650 = vst.msk [vmem:[%s291 + $0x58] sm:$0xff] %vm3638, %v3619
      %3651 = vst.msk [vmem:[%s291 + $0x60] sm:$0xff] %vm3638, %v3620
      %3652 = vst.msk [vmem:[%s291 + $0x68] sm:$0xff] %vm3638, %v3621
      %3653 = vst.msk [vmem:[%s291 + $0x70] sm:$0xff] %vm3638, %v3622
      %3654 = vst.msk [vmem:[%s291 + $0x78] sm:$0xff] %vm3638, %v3623
      %3655 = vst.msk [vmem:[%s291 + $0x80] sm:$0xff] %vm3638, %v3624
      %3656 = vst.msk [vmem:[%s291 + $0x88] sm:$0xff] %vm3638, %v3625
      %3657 = vst.msk [vmem:[%s291 + $0x90] sm:$0xff] %vm3638, %v3626
      %3658 = vst.msk [vmem:[%s291 + $0x98] sm:$0xff] %vm3638, %v3627
      %3659 = vst.msk [vmem:[%s291 + $0xa0] sm:$0xff] %vm3638, %v3628
      %3660 = vst.msk [vmem:[%s291 + $0xa8] sm:$0xff] %vm3638, %v3629
      %3661 = vst.msk [vmem:[%s291 + $0xb0] sm:$0xff] %vm3638, %v3630
      %3662 = vst.msk [vmem:[%s291 + $0xb8] sm:$0xff] %vm3638, %v3631
      %3663 = vst.msk [vmem:[%s291 + $0xc0] sm:$0xff] %vm3638, %v3632
      %3664 = vst.msk [vmem:[%s291 + $0xc8] sm:$0xff] %vm3638, %v3633
      %3665 = vst.msk [vmem:[%s291 + $0xd0] sm:$0xff] %vm3638, %v3634
      %3666 = vst.msk [vmem:[%s291 + $0xd8] sm:$0xff] %vm3638, %v3635
      %3667 = vst.msk [vmem:[%s291 + $0xe0] sm:$0xff] %vm3638, %v3636
      %3668 = vst.msk [vmem:[%s291 + $0xe8] sm:$0xff] %vm3638, %v3637
      %v3669 = vld [vmem:[%s285] sm:$0xff]
      %v3670 = vld [vmem:[%s285 + $0x8] sm:$0xff]
      %v3671 = vld [vmem:[%s285 + $0x10] sm:$0xff]
      %v3672 = vld [vmem:[%s285 + $0x18] sm:$0xff]
      %v3673 = vld [vmem:[%s285 + $0x20] sm:$0xff]
      %v3674 = vld [vmem:[%s285 + $0x28] sm:$0xff]
      %v3675 = vld [vmem:[%s285 + $0x30] sm:$0xff]
      %v3676 = vld [vmem:[%s285 + $0x38] sm:$0xff]
      %v3677 = vld [vmem:[%s285 + $0x40] sm:$0xff]
      %v3678 = vld [vmem:[%s285 + $0x48] sm:$0xff]
      %v3679 = vld [vmem:[%s285 + $0x50] sm:$0xff]
      %v3680 = vld [vmem:[%s285 + $0x58] sm:$0xff]
      %v3681 = vld [vmem:[%s285 + $0x60] sm:$0xff]
      %v3682 = vld [vmem:[%s285 + $0x68] sm:$0xff]
      %v3683 = vld [vmem:[%s285 + $0x70] sm:$0xff]
      %v3684 = vld [vmem:[%s285 + $0x78] sm:$0xff]
      %v3685 = vld [vmem:[%s285 + $0x80] sm:$0xff]
      %v3686 = vld [vmem:[%s285 + $0x88] sm:$0xff]
      %v3687 = vld [vmem:[%s285 + $0x90] sm:$0xff]
      %v3688 = vld [vmem:[%s285 + $0x98] sm:$0xff]
      %v3689 = vld [vmem:[%s285 + $0xa0] sm:$0xff]
      %v3690 = vld [vmem:[%s285 + $0xa8] sm:$0xff]
      %v3691 = vld [vmem:[%s285 + $0xb0] sm:$0xff]
      %v3692 = vld [vmem:[%s285 + $0xb8] sm:$0xff]
      %v3693 = vld [vmem:[%s285 + $0xc0] sm:$0xff]
      %v3694 = vld [vmem:[%s285 + $0xc8] sm:$0xff]
      %v3695 = vld [vmem:[%s285 + $0xd0] sm:$0xff]
      %v3696 = vld [vmem:[%s285 + $0xd8] sm:$0xff]
      %v3697 = vld [vmem:[%s285 + $0xe0] sm:$0xff]
      %v3698 = vld [vmem:[%s285 + $0xe8] sm:$0xff]
      %3700 = vset.pattern.permute.xlu0 0
      %3701 = vperm.xlu0 %3700, %v3669
      %v3702 = vpop.permute.xlu0 %3701
      %3705 = vset.pattern.permute.xlu0 0
      %3706 = vperm.xlu0 %3705, %v3670
      %v3707 = vpop.permute.xlu0 %3706
      %3710 = vset.pattern.permute.xlu0 0
      %3711 = vperm.xlu0 %3710, %v3671
      %v3712 = vpop.permute.xlu0 %3711
      %3715 = vset.pattern.permute.xlu0 0
      %3716 = vperm.xlu0 %3715, %v3672
      %v3717 = vpop.permute.xlu0 %3716
      %3720 = vset.pattern.permute.xlu0 0
      %3721 = vperm.xlu0 %3720, %v3673
      %v3722 = vpop.permute.xlu0 %3721
      %3725 = vset.pattern.permute.xlu0 0
      %3726 = vperm.xlu0 %3725, %v3674
      %v3727 = vpop.permute.xlu0 %3726
      %3730 = vset.pattern.permute.xlu0 0
      %3731 = vperm.xlu0 %3730, %v3675
      %v3732 = vpop.permute.xlu0 %3731
      %3735 = vset.pattern.permute.xlu0 0
      %3736 = vperm.xlu0 %3735, %v3676
      %v3737 = vpop.permute.xlu0 %3736
      %3740 = vset.pattern.permute.xlu0 0
      %3741 = vperm.xlu0 %3740, %v3677
      %v3742 = vpop.permute.xlu0 %3741
      %3745 = vset.pattern.permute.xlu0 0
      %3746 = vperm.xlu0 %3745, %v3678
      %v3747 = vpop.permute.xlu0 %3746
      %3750 = vset.pattern.permute.xlu0 0
      %3751 = vperm.xlu0 %3750, %v3679
      %v3752 = vpop.permute.xlu0 %3751
      %3755 = vset.pattern.permute.xlu0 0
      %3756 = vperm.xlu0 %3755, %v3680
      %v3757 = vpop.permute.xlu0 %3756
      %3760 = vset.pattern.permute.xlu0 0
      %3761 = vperm.xlu0 %3760, %v3681
      %v3762 = vpop.permute.xlu0 %3761
      %3765 = vset.pattern.permute.xlu0 0
      %3766 = vperm.xlu0 %3765, %v3682
      %v3767 = vpop.permute.xlu0 %3766
      %3770 = vset.pattern.permute.xlu0 0
      %3771 = vperm.xlu0 %3770, %v3683
      %v3772 = vpop.permute.xlu0 %3771
      %3775 = vset.pattern.permute.xlu0 0
      %3776 = vperm.xlu0 %3775, %v3684
      %v3777 = vpop.permute.xlu0 %3776
      %3780 = vset.pattern.permute.xlu0 0
      %3781 = vperm.xlu0 %3780, %v3685
      %v3782 = vpop.permute.xlu0 %3781
      %3785 = vset.pattern.permute.xlu0 0
      %3786 = vperm.xlu0 %3785, %v3686
      %v3787 = vpop.permute.xlu0 %3786
      %3790 = vset.pattern.permute.xlu0 0
      %3791 = vperm.xlu0 %3790, %v3687
      %v3792 = vpop.permute.xlu0 %3791
      %3795 = vset.pattern.permute.xlu0 0
      %3796 = vperm.xlu0 %3795, %v3688
      %v3797 = vpop.permute.xlu0 %3796
      %3800 = vset.pattern.permute.xlu0 0
      %3801 = vperm.xlu0 %3800, %v3689
      %v3802 = vpop.permute.xlu0 %3801
      %3805 = vset.pattern.permute.xlu0 0
      %3806 = vperm.xlu0 %3805, %v3690
      %v3807 = vpop.permute.xlu0 %3806
      %3810 = vset.pattern.permute.xlu0 0
      %3811 = vperm.xlu0 %3810, %v3691
      %v3812 = vpop.permute.xlu0 %3811
      %3815 = vset.pattern.permute.xlu0 0
      %3816 = vperm.xlu0 %3815, %v3692
      %v3817 = vpop.permute.xlu0 %3816
      %3820 = vset.pattern.permute.xlu0 0
      %3821 = vperm.xlu0 %3820, %v3693
      %v3822 = vpop.permute.xlu0 %3821
      %3825 = vset.pattern.permute.xlu0 0
      %3826 = vperm.xlu0 %3825, %v3694
      %v3827 = vpop.permute.xlu0 %3826
      %3830 = vset.pattern.permute.xlu0 0
      %3831 = vperm.xlu0 %3830, %v3695
      %v3832 = vpop.permute.xlu0 %3831
      %3835 = vset.pattern.permute.xlu0 0
      %3836 = vperm.xlu0 %3835, %v3696
      %v3837 = vpop.permute.xlu0 %3836
      %3840 = vset.pattern.permute.xlu0 0
      %3841 = vperm.xlu0 %3840, %v3697
      %v3842 = vpop.permute.xlu0 %3841
      %3845 = vset.pattern.permute.xlu0 0
      %3846 = vperm.xlu0 %3845, %v3698
      %v3847 = vpop.permute.xlu0 %3846
      %v3849 = vmul.f32 %v3608, %v3702
      %v3850 = vmul.f32 %v3609, %v3707
      %v3851 = vmul.f32 %v3610, %v3712
      %v3852 = vmul.f32 %v3611, %v3717
      %v3853 = vmul.f32 %v3612, %v3722
      %v3854 = vmul.f32 %v3613, %v3727
      %v3855 = vmul.f32 %v3614, %v3732
      %v3856 = vmul.f32 %v3615, %v3737
      %v3857 = vmul.f32 %v3616, %v3742
      %v3858 = vmul.f32 %v3617, %v3747
      %v3859 = vmul.f32 %v3618, %v3752
      %v3860 = vmul.f32 %v3619, %v3757
      %v3861 = vmul.f32 %v3620, %v3762
      %v3862 = vmul.f32 %v3621, %v3767
      %v3863 = vmul.f32 %v3622, %v3772
      %v3864 = vmul.f32 %v3623, %v3777
      %v3865 = vmul.f32 %v3624, %v3782
      %v3866 = vmul.f32 %v3625, %v3787
      %v3867 = vmul.f32 %v3626, %v3792
      %v3868 = vmul.f32 %v3627, %v3797
      %v3869 = vmul.f32 %v3628, %v3802
      %v3870 = vmul.f32 %v3629, %v3807
      %v3871 = vmul.f32 %v3630, %v3812
      %v3872 = vmul.f32 %v3631, %v3817
      %v3873 = vmul.f32 %v3632, %v3822
      %v3874 = vmul.f32 %v3633, %v3827
      %v3875 = vmul.f32 %v3634, %v3832
      %v3876 = vmul.f32 %v3635, %v3837
      %v3877 = vmul.f32 %v3636, %v3842
      %v3878 = vmul.f32 %v3637, %v3847
      %v3879 = vsel %vm3638, %v3849, 0.0
      %v3880 = vsel %vm3638, %v3850, 0.0
      %v3881 = vadd.f32 %v3879, %v3880
      %v3882 = vsel %vm3638, %v3851, 0.0
      %v3883 = vadd.f32 %v3881, %v3882
      %v3884 = vsel %vm3638, %v3852, 0.0
      %v3885 = vadd.f32 %v3883, %v3884
      %v3886 = vsel %vm3638, %v3853, 0.0
      %v3887 = vadd.f32 %v3885, %v3886
      %v3888 = vsel %vm3638, %v3854, 0.0
      %v3889 = vadd.f32 %v3887, %v3888
      %v3890 = vsel %vm3638, %v3855, 0.0
      %v3891 = vadd.f32 %v3889, %v3890
      %v3892 = vsel %vm3638, %v3856, 0.0
      %v3893 = vadd.f32 %v3891, %v3892
      %v3894 = vsel %vm3638, %v3857, 0.0
      %v3895 = vadd.f32 %v3893, %v3894
      %v3896 = vsel %vm3638, %v3858, 0.0
      %v3897 = vadd.f32 %v3895, %v3896
      %v3898 = vsel %vm3638, %v3859, 0.0
      %v3899 = vadd.f32 %v3897, %v3898
      %v3900 = vsel %vm3638, %v3860, 0.0
      %v3901 = vadd.f32 %v3899, %v3900
      %v3902 = vsel %vm3638, %v3861, 0.0
      %v3903 = vadd.f32 %v3901, %v3902
      %v3904 = vsel %vm3638, %v3862, 0.0
      %v3905 = vadd.f32 %v3903, %v3904
      %v3906 = vsel %vm3638, %v3863, 0.0
      %v3907 = vadd.f32 %v3905, %v3906
      %v3908 = vsel %vm3638, %v3864, 0.0
      %v3909 = vadd.f32 %v3907, %v3908
      %v3910 = vsel %vm3638, %v3865, 0.0
      %v3911 = vadd.f32 %v3909, %v3910
      %v3912 = vsel %vm3638, %v3866, 0.0
      %v3913 = vadd.f32 %v3911, %v3912
      %v3914 = vsel %vm3638, %v3867, 0.0
      %v3915 = vadd.f32 %v3913, %v3914
      %v3916 = vsel %vm3638, %v3868, 0.0
      %v3917 = vadd.f32 %v3915, %v3916
      %v3918 = vsel %vm3638, %v3869, 0.0
      %v3919 = vadd.f32 %v3917, %v3918
      %v3920 = vsel %vm3638, %v3870, 0.0
      %v3921 = vadd.f32 %v3919, %v3920
      %v3922 = vsel %vm3638, %v3871, 0.0
      %v3923 = vadd.f32 %v3921, %v3922
      %v3924 = vsel %vm3638, %v3872, 0.0
      %v3925 = vadd.f32 %v3923, %v3924
      %v3926 = vsel %vm3638, %v3873, 0.0
      %v3927 = vadd.f32 %v3925, %v3926
      %v3928 = vsel %vm3638, %v3874, 0.0
      %v3929 = vadd.f32 %v3927, %v3928
      %v3930 = vsel %vm3638, %v3875, 0.0
      %v3931 = vadd.f32 %v3929, %v3930
      %v3932 = vsel %vm3638, %v3876, 0.0
      %v3933 = vadd.f32 %v3931, %v3932
      %v3934 = vsel %vm3638, %v3877, 0.0
      %v3935 = vadd.f32 %v3933, %v3934
      %v3936 = vsel %vm3638, %v3878, 0.0
      %v3937 = vadd.f32 %v3935, %v3936
      %v3938 = vrot.slane %v3937, 4
      %v3939 = vadd.f32 %v3937, %v3938
      %v3940 = vrot.slane %v3939, 2
      %v3941 = vadd.f32 %v3939, %v3940
      %v3942 = vrot.slane %v3941, 1
      %v3943 = vadd.f32 %v3941, %v3942
      %v3944 = vmul.f32 %v3849, %v3608
      %v3945 = vmul.f32 %v3850, %v3609
      %v3946 = vmul.f32 %v3851, %v3610
      %v3947 = vmul.f32 %v3852, %v3611
      %v3948 = vmul.f32 %v3853, %v3612
      %v3949 = vmul.f32 %v3854, %v3613
      %v3950 = vmul.f32 %v3855, %v3614
      %v3951 = vmul.f32 %v3856, %v3615
      %v3952 = vmul.f32 %v3857, %v3616
      %v3953 = vmul.f32 %v3858, %v3617
      %v3954 = vmul.f32 %v3859, %v3618
      %v3955 = vmul.f32 %v3860, %v3619
      %v3956 = vmul.f32 %v3861, %v3620
      %v3957 = vmul.f32 %v3862, %v3621
      %v3958 = vmul.f32 %v3863, %v3622
      %v3959 = vmul.f32 %v3864, %v3623
      %v3960 = vmul.f32 %v3865, %v3624
      %v3961 = vmul.f32 %v3866, %v3625
      %v3962 = vmul.f32 %v3867, %v3626
      %v3963 = vmul.f32 %v3868, %v3627
      %v3964 = vmul.f32 %v3869, %v3628
      %v3965 = vmul.f32 %v3870, %v3629
      %v3966 = vmul.f32 %v3871, %v3630
      %v3967 = vmul.f32 %v3872, %v3631
      %v3968 = vmul.f32 %v3873, %v3632
      %v3969 = vmul.f32 %v3874, %v3633
      %v3970 = vmul.f32 %v3875, %v3634
      %v3971 = vmul.f32 %v3876, %v3635
      %v3972 = vmul.f32 %v3877, %v3636
      %v3973 = vmul.f32 %v3878, %v3637
      %v3974 = vsel %vm3638, %v3944, 0.0
      %v3975 = vsel %vm3638, %v3945, 0.0
      %v3976 = vadd.f32 %v3974, %v3975
      %v3977 = vsel %vm3638, %v3946, 0.0
      %v3978 = vadd.f32 %v3976, %v3977
      %v3979 = vsel %vm3638, %v3947, 0.0
      %v3980 = vadd.f32 %v3978, %v3979
      %v3981 = vsel %vm3638, %v3948, 0.0
      %v3982 = vadd.f32 %v3980, %v3981
      %v3983 = vsel %vm3638, %v3949, 0.0
      %v3984 = vadd.f32 %v3982, %v3983
      %v3985 = vsel %vm3638, %v3950, 0.0
      %v3986 = vadd.f32 %v3984, %v3985
      %v3987 = vsel %vm3638, %v3951, 0.0
      %v3988 = vadd.f32 %v3986, %v3987
      %v3989 = vsel %vm3638, %v3952, 0.0
      %v3990 = vadd.f32 %v3988, %v3989
      %v3991 = vsel %vm3638, %v3953, 0.0
      %v3992 = vadd.f32 %v3990, %v3991
      %v3993 = vsel %vm3638, %v3954, 0.0
      %v3994 = vadd.f32 %v3992, %v3993
      %v3995 = vsel %vm3638, %v3955, 0.0
      %v3996 = vadd.f32 %v3994, %v3995
      %v3997 = vsel %vm3638, %v3956, 0.0
      %v3998 = vadd.f32 %v3996, %v3997
      %v3999 = vsel %vm3638, %v3957, 0.0
      %v4000 = vadd.f32 %v3998, %v3999
      %v4001 = vsel %vm3638, %v3958, 0.0
      %v4002 = vadd.f32 %v4000, %v4001
      %v4003 = vsel %vm3638, %v3959, 0.0
      %v4004 = vadd.f32 %v4002, %v4003
      %v4005 = vsel %vm3638, %v3960, 0.0
      %v4006 = vadd.f32 %v4004, %v4005
      %v4007 = vsel %vm3638, %v3961, 0.0
      %v4008 = vadd.f32 %v4006, %v4007
      %v4009 = vsel %vm3638, %v3962, 0.0
      %v4010 = vadd.f32 %v4008, %v4009
      %v4011 = vsel %vm3638, %v3963, 0.0
      %v4012 = vadd.f32 %v4010, %v4011
      %v4013 = vsel %vm3638, %v3964, 0.0
      %v4014 = vadd.f32 %v4012, %v4013
      %v4015 = vsel %vm3638, %v3965, 0.0
      %v4016 = vadd.f32 %v4014, %v4015
      %v4017 = vsel %vm3638, %v3966, 0.0
      %v4018 = vadd.f32 %v4016, %v4017
      %v4019 = vsel %vm3638, %v3967, 0.0
      %v4020 = vadd.f32 %v4018, %v4019
      %v4021 = vsel %vm3638, %v3968, 0.0
      %v4022 = vadd.f32 %v4020, %v4021
      %v4023 = vsel %vm3638, %v3969, 0.0
      %v4024 = vadd.f32 %v4022, %v4023
      %v4025 = vsel %vm3638, %v3970, 0.0
      %v4026 = vadd.f32 %v4024, %v4025
      %v4027 = vsel %vm3638, %v3971, 0.0
      %v4028 = vadd.f32 %v4026, %v4027
      %v4029 = vsel %vm3638, %v3972, 0.0
      %v4030 = vadd.f32 %v4028, %v4029
      %v4031 = vsel %vm3638, %v3973, 0.0
      %v4032 = vadd.f32 %v4030, %v4031
      %v4033 = vrot.slane %v4032, 4
      %v4034 = vadd.f32 %v4032, %v4033
      %v4035 = vrot.slane %v4034, 2
      %v4036 = vadd.f32 %v4034, %v4035
      %v4037 = vrot.slane %v4036, 1
      %v4038 = vadd.f32 %v4036, %v4037
      %vm4039 = vcmask 1040384
      %v4040 = vsel %vm4039, %v3943, %v4038
      %vm4041 = vcmask 58368
      %4042 = vst.msk [vmem:[%s296] sm:$0x3] %vm4041, %v4040
      %s4043 = smul.u32 30, %s17
      %p4044 = scmp.lt.s32.totalorder %s4043, 119
      %s4045 = scalar_select %p4044, %s4043, 119
      %s4046 = smul.addr %s4045, 8
      %s4047 = scalar_lea.vmem %s4, %s4046
      %p4048 = scmp.lt.s32.totalorder %s17, 3
      %s4049 = scalar_select %p4048, %s17, 3
      %s4050 = smul.addr %s4049, 2
      %s4051 = scalar_lea.vmem %s5, %s4050
      // Predicated region
      $region37: #{double_conv2d.3} parent=35 // pred_check
        %p4052 = pneg %p138
      $region38: #{double_conv2d.3} parent=35 // pred_check_branch
        %4054 = sbr.rel (%p4052) target = $region40
      $region39: #{double_conv2d.3} parent=35 // pred_region
        %s4055 = smul.u32 30, %s17
      $region40: #{double_conv2d.3} parent=35 // pred_fallthru
        _
      // Predicated region
      $region41: #{double_conv2d.3} parent=35 // pred_check
        %p4056 = pneg %p164
      $region42: #{double_conv2d.3} parent=35 // pred_check_branch
        %4058 = sbr.rel (%p4056) target = $region44
      $region43: #{double_conv2d.3} parent=35 // pred_region
        _
      $region44: #{double_conv2d.3} parent=35 // pred_fallthru
        _
    $region36: #{double_conv2d.3} parent=5 // pred_fallthru
      _
    %p4059 = scmp.le.s32.totalorder 2, %s12
    // Predicated region
    $region45: #{double_conv2d.3} parent=5 // pred_check
      %p4060 = pneg %p4059
    $region46: #{double_conv2d.3} parent=5 // pred_check_branch
      %4062 = sbr.rel (%p4060) target = $region48
    $region47: #{double_conv2d.3} parent=5 // pred_region
      %s4063 = ssub.s32 %s12, 2
      // Predicated region
      $region49: #{double_conv2d.3} parent=47 // pred_check
        %p4064 = pneg %p144
      $region50: #{double_conv2d.3} parent=47 // pred_check_branch
        %4066 = sbr.rel (%p4064) target = $region52
      $region51: #{double_conv2d.3} parent=47 // pred_region
        %s4067 = smul.u32 30, %s18
        %p4068 = scmp.lt.s32.totalorder %s4067, 119
        %s4069 = scalar_select %p4068, %s4067, 119
        %s4070 = smul.addr %s4069, 8
        %s4071 = scalar_lea.vmem %s4, %s4070
      $region52: #{double_conv2d.3} parent=47 // pred_fallthru
        _
      // Predicated region
      $region53: #{double_conv2d.3} parent=47 // pred_check
        %p4072 = pneg %p170
      $region54: #{double_conv2d.3} parent=47 // pred_check_branch
        %4074 = sbr.rel (%p4072) target = $region56
      $region55: #{double_conv2d.3} parent=47 // pred_region
        %p4075 = scmp.lt.s32.totalorder %s18, 3
        %s4076 = scalar_select %p4075, %s18, 3
        %s4077 = smul.addr %s4076, 2
        %s4078 = scalar_lea.vmem %s5, %s4077
      $region56: #{double_conv2d.3} parent=47 // pred_fallthru
        _
    $region48: #{double_conv2d.3} parent=5 // pred_fallthru
      _
  $region6: #{double_conv2d.3} parent=0 // loop_footer
    %s16 = sadd.s32 1, %s12
  $region7: #{double_conv2d.3} parent=0 // loop_footer_branch
    %11 = sbr.rel target = $region3
  $region8: #{double_conv2d.3} parent=0 // loop_exit
    _

// kernel: double_conv2d.5
$region0: #{double_conv2d.5}
  #allocation0 [shape = 'u32[]', space=smem, size = 0x4, offset = 0x4, fixed_abs, tag = 'smem constant byte address 0x4 - core index']
  #allocation1 [shape = 'u32[144,128]{1,0:T(1,128)}', space=vmem, size = 0x12000, scoped, tag = 'internal scratch']
  %s0 = inlined_call_operand.vmem [shape: f32[720,8], index: 0, kind: input, shape index: {}]
  %s1 = inlined_call_operand.vmem [shape: f32[2,8], index: 1, kind: input, shape index: {}]
  %s2 = inlined_call_operand.vmem [shape: f32[720,8], index: 2, kind: output, shape index: {}]
  %s3 = sld [smem:[#allocation0]]
  $region41: #{double_conv2d.5} parent=0
    _
  %s5 = ssub.s32 1, %s3
  %s6 = scalar_select 0, %s5, %s3
  loop: start=0, step=1, limit=5
  $region2: #{double_conv2d.5} parent=0 // loop_pre_header
    _
  $region3: #{double_conv2d.5} parent=0 // loop_header
    %s8 = sphi 0, %s12
    %p9 = scmp.ge.s32.totalorder %s8, 5
    %s18 = sphi 0, %s20
    %s21 = sphi 0, %s18
    %s22 = sphi 0, %s21
    %s38 = sphi 0, %s22
    %s42 = sphi 0, %s42
    %s44 = sphi 0, %s42
    %s45 = sphi 0, %s44
    %s59 = sphi 0, %s45
    %s65 = sphi 0, %s67
    %s68 = sphi 0, %s65
    %s69 = sphi 0, %s68
    %s85 = sphi 0, %s69
  $region4: #{double_conv2d.5} parent=0 // loop_header_branch
    %11 = sbr.rel (%p9) target = $region8
  $region5: #{double_conv2d.5} parent=0 // loop_body
    %s13 = ssub.s32 %s8, 1
    %s14 = ssub.s32 %s8, 2
    %s15 = sadd.s32 %s8, 1
    %s16 = ssub.s32 %s8, %s15
    %p17 = scmp.eq.s32.totalorder %s16, 0
    %s19 = sadd.s32 %s18, 1
    %s20 = scalar_select %p17, %s18, %s19
    %p23 = pneg %p17
    %p24 = scmp.eq.s32.totalorder %s8, 2
    %p25 = por %p23, %p24
    %p26 = scmp.ne.s32.totalorder %s18, %s21
    %p27 = scmp.eq.s32.totalorder %s8, 0
    %p28 = por %p26, %p27
    %p29 = scmp.ne.s32.totalorder %s18, %s21
    %p30 = scmp.eq.s32.totalorder %s13, 2
    %p31 = por %p29, %p30
    %p32 = scmp.ne.s32.totalorder %s21, %s22
    %p33 = scmp.eq.s32.totalorder %s13, 0
    %p34 = por %p32, %p33
    %p35 = scmp.ne.s32.totalorder %s21, %s22
    %p36 = scmp.eq.s32.totalorder %s14, 2
    %p37 = por %p35, %p36
    %p39 = scmp.ne.s32.totalorder %s22, %s38
    %p40 = scmp.eq.s32.totalorder %s14, 0
    %p41 = por %p39, %p40
    %s43 = sadd.s32 %s42, 1
    %p46 = scmp.eq.s32.totalorder %s8, 2
    %p47 = scmp.ne.s32.totalorder %s42, %s44
    %p48 = scmp.eq.s32.totalorder %s8, 0
    %p49 = por %p47, %p48
    %p50 = scmp.ne.s32.totalorder %s42, %s44
    %p51 = scmp.eq.s32.totalorder %s13, 2
    %p52 = por %p50, %p51
    %p53 = scmp.ne.s32.totalorder %s44, %s45
    %p54 = scmp.eq.s32.totalorder %s13, 0
    %p55 = por %p53, %p54
    %p56 = scmp.ne.s32.totalorder %s44, %s45
    %p57 = scmp.eq.s32.totalorder %s14, 2
    %p58 = por %p56, %p57
    %p60 = scmp.ne.s32.totalorder %s45, %s59
    %p61 = scmp.eq.s32.totalorder %s14, 0
    %p62 = por %p60, %p61
    %s63 = ssub.s32 %s8, %s15
    %p64 = scmp.eq.s32.totalorder %s63, 0
    %s66 = sadd.s32 %s65, 1
    %s67 = scalar_select %p64, %s65, %s66
    %p70 = pneg %p64
    %p71 = scmp.eq.s32.totalorder %s8, 2
    %p72 = por %p70, %p71
    %p73 = scmp.ne.s32.totalorder %s65, %s68
    %p74 = scmp.eq.s32.totalorder %s8, 0
    %p75 = por %p73, %p74
    %p76 = scmp.ne.s32.totalorder %s65, %s68
    %p77 = scmp.eq.s32.totalorder %s13, 2
    %p78 = por %p76, %p77
    %p79 = scmp.ne.s32.totalorder %s68, %s69
    %p80 = scmp.eq.s32.totalorder %s13, 0
    %p81 = por %p79, %p80
    %p82 = scmp.ne.s32.totalorder %s68, %s69
    %p83 = scmp.eq.s32.totalorder %s14, 2
    %p84 = por %p82, %p83
    %p86 = scmp.ne.s32.totalorder %s69, %s85
    %p87 = scmp.eq.s32.totalorder %s14, 0
    %p88 = por %p86, %p87
    %p89 = scmp.le.s32.totalorder 1, %s8
    %p90 = scmp.lt.s32.totalorder %s8, 4
    %p91 = pnand %p89, %p90
    %p92 = pneg %p91
    // Predicated region
    $region9: #{double_conv2d.5} parent=5 // pred_check
      _
    $region10: #{double_conv2d.5} parent=5 // pred_check_branch
      %94 = sbr.rel (%p91) target = $region12
    $region11: #{double_conv2d.5} parent=5 // pred_region
      %s95 = ssub.s32 %s8, 1
      // Predicated region
      $region13: #{double_conv2d.5} parent=11 // pred_check
        %p96 = pneg %p55
      $region14: #{double_conv2d.5} parent=11 // pred_check_branch
        %98 = sbr.rel (%p96) target = $region16
      $region15: #{double_conv2d.5} parent=11 // pred_region
        _
      $region16: #{double_conv2d.5} parent=11 // pred_fallthru
        _
    $region12: #{double_conv2d.5} parent=5 // pred_fallthru
      _
    %p99 = scmp.lt.s32.totalorder %s8, 3
    // Predicated region
    $region17: #{double_conv2d.5} parent=5 // pred_check
      %p100 = pneg %p99
    $region18: #{double_conv2d.5} parent=5 // pred_check_branch
      %102 = sbr.rel (%p100) target = $region20
    $region19: #{double_conv2d.5} parent=5 // pred_region
      // Predicated region
      $region21: #{double_conv2d.5} parent=19 // pred_check
        %p103 = pneg %p28
      $region22: #{double_conv2d.5} parent=19 // pred_check_branch
        %105 = sbr.rel (%p103) target = $region24
      $region23: #{double_conv2d.5} parent=19 // pred_region
        %s106 = smul.u32 30, %s8
        %p107 = scmp.lt.s32.totalorder %s106, 89
        %s108 = scalar_select %p107, %s106, 89
        %s109 = smul.addr %s108, 8
        %s110 = scalar_lea.vmem %s0, %s109
        %s111 = smul.u32 30, %s8
      $region24: #{double_conv2d.5} parent=19 // pred_fallthru
        _
    $region20: #{double_conv2d.5} parent=5 // pred_fallthru
      _
    %p112 = scmp.le.s32.totalorder 1, %s8
    %p113 = scmp.lt.s32.totalorder %s8, 4
    %p114 = pnand %p112, %p113
    %p115 = pneg %p114
    // Predicated region
    $region25: #{double_conv2d.5} parent=5 // pred_check
      _
    $region26: #{double_conv2d.5} parent=5 // pred_check_branch
      %117 = sbr.rel (%p114) target = $region28
    $region27: #{double_conv2d.5} parent=5 // pred_region
      %s118 = ssub.s32 %s8, 1
      %s119 = smul.u32 30, %s13
      %p120 = scmp.lt.s32.totalorder %s119, 89
      %s121 = scalar_select %p120, %s119, 89
      %s122 = smul.addr %s121, 8
      %s123 = scalar_lea.vmem %s0, %s122
      %p124 = pneg %p34
      %p125 = pneg %p31
      %p126 = pneg %p55
      %p127 = pneg %p52
      %p128 = pneg %p81
      %p129 = pneg %p78
      %s130 = smul.u32 30, %s13
      %p131 = scmp.lt.s32.totalorder %s130, 89
      %s132 = scalar_select %p131, %s130, 89
      %s133 = smul.addr %s132, 8
      %s134 = scalar_lea.vmem %s2, %s133
      %s135 = smul.u32 30, %s13
      %p136 = scmp.lt.s32.totalorder %s135, 89
      %s137 = scalar_select %p136, %s135, 89
      %s138 = smul.addr %s137, 8
      %s139 = scalar_lea.vmem %s0, %s138
      %s140 = smul.u32 30, %s13
      %s141 = smul.u32 30, %s13
      %p142 = scmp.lt.s32.totalorder %s141, 89
      %s143 = scalar_select %p142, %s141, 89
      %s144 = smul.addr %s143, 8
      %s145 = scalar_lea.vmem %s2, %s144
      %s146 = smul.u32 30, %s13
      %v147 = vld [vmem:[%s139] sm:$0xff]
      %v148 = vld [vmem:[%s139 + $0x8] sm:$0xff]
      %v149 = vld [vmem:[%s139 + $0x10] sm:$0xff]
      %v150 = vld [vmem:[%s139 + $0x18] sm:$0xff]
      %v151 = vld [vmem:[%s139 + $0x20] sm:$0xff]
      %v152 = vld [vmem:[%s139 + $0x28] sm:$0xff]
      %v153 = vld [vmem:[%s139 + $0x30] sm:$0xff]
      %v154 = vld [vmem:[%s139 + $0x38] sm:$0xff]
      %v155 = vld [vmem:[%s139 + $0x40] sm:$0xff]
      %v156 = vld [vmem:[%s139 + $0x48] sm:$0xff]
      %v157 = vld [vmem:[%s139 + $0x50] sm:$0xff]
      %v158 = vld [vmem:[%s139 + $0x58] sm:$0xff]
      %v159 = vld [vmem:[%s139 + $0x60] sm:$0xff]
      %v160 = vld [vmem:[%s139 + $0x68] sm:$0xff]
      %v161 = vld [vmem:[%s139 + $0x70] sm:$0xff]
      %v162 = vld [vmem:[%s139 + $0x78] sm:$0xff]
      %v163 = vld [vmem:[%s139 + $0x80] sm:$0xff]
      %v164 = vld [vmem:[%s139 + $0x88] sm:$0xff]
      %v165 = vld [vmem:[%s139 + $0x90] sm:$0xff]
      %v166 = vld [vmem:[%s139 + $0x98] sm:$0xff]
      %v167 = vld [vmem:[%s139 + $0xa0] sm:$0xff]
      %v168 = vld [vmem:[%s139 + $0xa8] sm:$0xff]
      %v169 = vld [vmem:[%s139 + $0xb0] sm:$0xff]
      %v170 = vld [vmem:[%s139 + $0xb8] sm:$0xff]
      %v171 = vld [vmem:[%s139 + $0xc0] sm:$0xff]
      %v172 = vld [vmem:[%s139 + $0xc8] sm:$0xff]
      %v173 = vld [vmem:[%s139 + $0xd0] sm:$0xff]
      %v174 = vld [vmem:[%s139 + $0xd8] sm:$0xff]
      %v175 = vld [vmem:[%s139 + $0xe0] sm:$0xff]
      %v176 = vld [vmem:[%s139 + $0xe8] sm:$0xff]
      %v177 = vld [vmem:[%s1] sm:$0x1]
      %v178 = vlaneseq
      %v179 = vshrl.u32 %v178, 7
      %v180 = vsub.s32 0, %v179
      %v181 = vrot.slane %v177, %v180
      %v182 = vmul.f32 %v147, %v181
      %v183 = vmul.f32 %v148, %v181
      %v184 = vmul.f32 %v149, %v181
      %v185 = vmul.f32 %v150, %v181
      %v186 = vmul.f32 %v151, %v181
      %v187 = vmul.f32 %v152, %v181
      %v188 = vmul.f32 %v153, %v181
      %v189 = vmul.f32 %v154, %v181
      %v190 = vmul.f32 %v155, %v181
      %v191 = vmul.f32 %v156, %v181
      %v192 = vmul.f32 %v157, %v181
      %v193 = vmul.f32 %v158, %v181
      %v194 = vmul.f32 %v159, %v181
      %v195 = vmul.f32 %v160, %v181
      %v196 = vmul.f32 %v161, %v181
      %v197 = vmul.f32 %v162, %v181
      %v198 = vmul.f32 %v163, %v181
      %v199 = vmul.f32 %v164, %v181
      %v200 = vmul.f32 %v165, %v181
      %v201 = vmul.f32 %v166, %v181
      %v202 = vmul.f32 %v167, %v181
      %v203 = vmul.f32 %v168, %v181
      %v204 = vmul.f32 %v169, %v181
      %v205 = vmul.f32 %v170, %v181
      %v206 = vmul.f32 %v171, %v181
      %v207 = vmul.f32 %v172, %v181
      %v208 = vmul.f32 %v173, %v181
      %v209 = vmul.f32 %v174, %v181
      %v210 = vmul.f32 %v175, %v181
      %v211 = vmul.f32 %v176, %v181
      %v212 = vld [vmem:[%s1 + $0x1] sm:$0x1]
      %v213 = vlaneseq
      %v214 = vshrl.u32 %v213, 7
      %v215 = vsub.s32 0, %v214
      %v216 = vrot.slane %v212, %v215
      %v217 = vadd.f32 %v182, %v216
      %v218 = vadd.f32 %v183, %v216
      %v219 = vadd.f32 %v184, %v216
      %v220 = vadd.f32 %v185, %v216
      %v221 = vadd.f32 %v186, %v216
      %v222 = vadd.f32 %v187, %v216
      %v223 = vadd.f32 %v188, %v216
      %v224 = vadd.f32 %v189, %v216
      %v225 = vadd.f32 %v190, %v216
      %v226 = vadd.f32 %v191, %v216
      %v227 = vadd.f32 %v192, %v216
      %v228 = vadd.f32 %v193, %v216
      %v229 = vadd.f32 %v194, %v216
      %v230 = vadd.f32 %v195, %v216
      %v231 = vadd.f32 %v196, %v216
      %v232 = vadd.f32 %v197, %v216
      %v233 = vadd.f32 %v198, %v216
      %v234 = vadd.f32 %v199, %v216
      %v235 = vadd.f32 %v200, %v216
      %v236 = vadd.f32 %v201, %v216
      %v237 = vadd.f32 %v202, %v216
      %v238 = vadd.f32 %v203, %v216
      %v239 = vadd.f32 %v204, %v216
      %v240 = vadd.f32 %v205, %v216
      %v241 = vadd.f32 %v206, %v216
      %v242 = vadd.f32 %v207, %v216
      %v243 = vadd.f32 %v208, %v216
      %v244 = vadd.f32 %v209, %v216
      %v245 = vadd.f32 %v210, %v216
      %v246 = vadd.f32 %v211, %v216
      %v247 = vmax.f32 %v217, 0.0
      %v248 = vmax.f32 %v218, 0.0
      %v249 = vmax.f32 %v219, 0.0
      %v250 = vmax.f32 %v220, 0.0
      %v251 = vmax.f32 %v221, 0.0
      %v252 = vmax.f32 %v222, 0.0
      %v253 = vmax.f32 %v223, 0.0
      %v254 = vmax.f32 %v224, 0.0
      %v255 = vmax.f32 %v225, 0.0
      %v256 = vmax.f32 %v226, 0.0
      %v257 = vmax.f32 %v227, 0.0
      %v258 = vmax.f32 %v228, 0.0
      %v259 = vmax.f32 %v229, 0.0
      %v260 = vmax.f32 %v230, 0.0
      %v261 = vmax.f32 %v231, 0.0
      %v262 = vmax.f32 %v232, 0.0
      %v263 = vmax.f32 %v233, 0.0
      %v264 = vmax.f32 %v234, 0.0
      %v265 = vmax.f32 %v235, 0.0
      %v266 = vmax.f32 %v236, 0.0
      %v267 = vmax.f32 %v237, 0.0
      %v268 = vmax.f32 %v238, 0.0
      %v269 = vmax.f32 %v239, 0.0
      %v270 = vmax.f32 %v240, 0.0
      %v271 = vmax.f32 %v241, 0.0
      %v272 = vmax.f32 %v242, 0.0
      %v273 = vmax.f32 %v243, 0.0
      %v274 = vmax.f32 %v244, 0.0
      %v275 = vmax.f32 %v245, 0.0
      %v276 = vmax.f32 %v246, 0.0
      %vm277 = vcmask 64512
      %278 = vst.msk [vmem:[%s145] sm:$0xff] %vm277, %v247
      %279 = vst.msk [vmem:[%s145 + $0x8] sm:$0xff] %vm277, %v248
      %280 = vst.msk [vmem:[%s145 + $0x10] sm:$0xff] %vm277, %v249
      %281 = vst.msk [vmem:[%s145 + $0x18] sm:$0xff] %vm277, %v250
      %282 = vst.msk [vmem:[%s145 + $0x20] sm:$0xff] %vm277, %v251
      %283 = vst.msk [vmem:[%s145 + $0x28] sm:$0xff] %vm277, %v252
      %284 = vst.msk [vmem:[%s145 + $0x30] sm:$0xff] %vm277, %v253
      %285 = vst.msk [vmem:[%s145 + $0x38] sm:$0xff] %vm277, %v254
      %286 = vst.msk [vmem:[%s145 + $0x40] sm:$0xff] %vm277, %v255
      %287 = vst.msk [vmem:[%s145 + $0x48] sm:$0xff] %vm277, %v256
      %288 = vst.msk [vmem:[%s145 + $0x50] sm:$0xff] %vm277, %v257
      %289 = vst.msk [vmem:[%s145 + $0x58] sm:$0xff] %vm277, %v258
      %290 = vst.msk [vmem:[%s145 + $0x60] sm:$0xff] %vm277, %v259
      %291 = vst.msk [vmem:[%s145 + $0x68] sm:$0xff] %vm277, %v260
      %292 = vst.msk [vmem:[%s145 + $0x70] sm:$0xff] %vm277, %v261
      %293 = vst.msk [vmem:[%s145 + $0x78] sm:$0xff] %vm277, %v262
      %294 = vst.msk [vmem:[%s145 + $0x80] sm:$0xff] %vm277, %v263
      %295 = vst.msk [vmem:[%s145 + $0x88] sm:$0xff] %vm277, %v264
      %296 = vst.msk [vmem:[%s145 + $0x90] sm:$0xff] %vm277, %v265
      %297 = vst.msk [vmem:[%s145 + $0x98] sm:$0xff] %vm277, %v266
      %298 = vst.msk [vmem:[%s145 + $0xa0] sm:$0xff] %vm277, %v267
      %299 = vst.msk [vmem:[%s145 + $0xa8] sm:$0xff] %vm277, %v268
      %300 = vst.msk [vmem:[%s145 + $0xb0] sm:$0xff] %vm277, %v269
      %301 = vst.msk [vmem:[%s145 + $0xb8] sm:$0xff] %vm277, %v270
      %302 = vst.msk [vmem:[%s145 + $0xc0] sm:$0xff] %vm277, %v271
      %303 = vst.msk [vmem:[%s145 + $0xc8] sm:$0xff] %vm277, %v272
      %304 = vst.msk [vmem:[%s145 + $0xd0] sm:$0xff] %vm277, %v273
      %305 = vst.msk [vmem:[%s145 + $0xd8] sm:$0xff] %vm277, %v274
      %306 = vst.msk [vmem:[%s145 + $0xe0] sm:$0xff] %vm277, %v275
      %307 = vst.msk [vmem:[%s145 + $0xe8] sm:$0xff] %vm277, %v276
      %s308 = smul.u32 30, %s13
      %p309 = scmp.lt.s32.totalorder %s308, 89
      %s310 = scalar_select %p309, %s308, 89
      %s311 = smul.addr %s310, 8
      %s312 = scalar_lea.vmem %s2, %s311
      // Predicated region
      $region29: #{double_conv2d.5} parent=27 // pred_check
        %p313 = pneg %p78
      $region30: #{double_conv2d.5} parent=27 // pred_check_branch
        %315 = sbr.rel (%p313) target = $region32
      $region31: #{double_conv2d.5} parent=27 // pred_region
        %s316 = smul.u32 30, %s13
      $region32: #{double_conv2d.5} parent=27 // pred_fallthru
        _
    $region28: #{double_conv2d.5} parent=5 // pred_fallthru
      _
    %p317 = scmp.le.s32.totalorder 2, %s8
    // Predicated region
    $region33: #{double_conv2d.5} parent=5 // pred_check
      %p318 = pneg %p317
    $region34: #{double_conv2d.5} parent=5 // pred_check_branch
      %320 = sbr.rel (%p318) target = $region36
    $region35: #{double_conv2d.5} parent=5 // pred_region
      %s321 = ssub.s32 %s8, 2
      // Predicated region
      $region37: #{double_conv2d.5} parent=35 // pred_check
        %p322 = pneg %p84
      $region38: #{double_conv2d.5} parent=35 // pred_check_branch
        %324 = sbr.rel (%p322) target = $region40
      $region39: #{double_conv2d.5} parent=35 // pred_region
        %s325 = smul.u32 30, %s14
        %p326 = scmp.lt.s32.totalorder %s325, 89
        %s327 = scalar_select %p326, %s325, 89
        %s328 = smul.addr %s327, 8
        %s329 = scalar_lea.vmem %s2, %s328
      $region40: #{double_conv2d.5} parent=35 // pred_fallthru
        _
    $region36: #{double_conv2d.5} parent=5 // pred_fallthru
      _
  $region6: #{double_conv2d.5} parent=0 // loop_footer
    %s12 = sadd.s32 1, %s8
  $region7: #{double_conv2d.5} parent=0 // loop_footer_branch
    %7 = sbr.rel target = $region3
  $region8: #{double_conv2d.5} parent=0 // loop_exit
    _

// kernel: double_conv2d.4
$region0: #{double_conv2d.4}
  #allocation0 [shape = 'u32[]', space=smem, size = 0x4, offset = 0x4, fixed_abs, tag = 'smem constant byte address 0x4 - core index']
  #allocation1 [shape = 'u32[144,128]{1,0:T(1,128)}', space=vmem, size = 0x12000, scoped, tag = 'internal scratch']
  #allocation2 [shape = 'f32[280,8]{1,0:T(8,128)}', space=vmem, size = 0x23000, scoped, tag = 'scratch operand']
  %s0 = inlined_call_operand.vmem [shape: f32[2,8], index: 0, kind: input, shape index: {}]
  %s1 = inlined_call_operand.vmem [shape: f32[960,1], index: 1, kind: input, shape index: {}, may-alias: {1,2}]
  %s2 = inlined_call_operand.vmem [shape: f32[960,1], index: 2, kind: input, shape index: {}, may-alias: {1,2}]
  %s3 = inlined_call_operand.vmem [shape: f32[960,8], index: 3, kind: input, shape index: {}, may-alias: {3,4}]
  %s4 = inlined_call_operand.vmem [shape: f32[960,8], index: 4, kind: input, shape index: {}, may-alias: {3,4}]
  %s5 = inlined_call_operand.vmem [shape: f32[720,1], index: 5, kind: input, shape index: {}]
  %s6 = inlined_call_operand.vmem [shape: f32[9,8,8], index: 6, kind: input, shape index: {}]
  %s7 = inlined_call_operand.vmem [shape: f32[720,8], index: 7, kind: output, shape index: {0}]
  %s8 = inlined_call_operand.vmem [shape: f32[3,2,8], index: 8, kind: output, shape index: {1}]
  %9 = xla_tuple %s7, %s8
  %s10 = sld [smem:[#allocation0]]
  $region69: #{double_conv2d.4} parent=0
    _
  %s12 = ssub.s32 1, %s10
  %s13 = scalar_select 0, %s12, %s10
  loop: start=0, step=1, limit=5
  $region2: #{double_conv2d.4} parent=0 // loop_pre_header
    _
  $region3: #{double_conv2d.4} parent=0 // loop_header
    %s15 = sphi 0, %s19
    %p16 = scmp.ge.s32.totalorder %s15, 5
    %s23 = sphi 0, %s23
    %s25 = sphi 0, %s23
    %s26 = sphi 0, %s25
    %s40 = sphi 0, %s26
    %s46 = sphi 0, %s48
    %s49 = sphi 0, %s46
    %s50 = sphi 0, %s49
    %s66 = sphi 0, %s50
    %s76 = sphi 0, %s78
    %s79 = sphi 0, %s76
    %s80 = sphi 0, %s79
    %s96 = sphi 0, %s80
    %s102 = sphi 0, %s104
    %s105 = sphi 0, %s102
    %s106 = sphi 0, %s105
    %s122 = sphi 0, %s106
    %s132 = sphi 0, %s134
    %s135 = sphi 0, %s132
    %s136 = sphi 0, %s135
    %s152 = sphi 0, %s136
    %s158 = sphi 0, %s160
    %s161 = sphi 0, %s158
    %s162 = sphi 0, %s161
    %s178 = sphi 0, %s162
    %s182 = sphi 0, %s182
    %s184 = sphi 0, %s182
    %s185 = sphi 0, %s184
    %s199 = sphi 0, %s185
    %s205 = sphi 0, %s207
    %s208 = sphi 0, %s205
    %s209 = sphi 0, %s208
    %s225 = sphi 0, %s209
    %s231 = sphi 0, %s233
    %s234 = sphi 0, %s231
    %s235 = sphi 0, %s234
    %s251 = sphi 0, %s235
  $region4: #{double_conv2d.4} parent=0 // loop_header_branch
    %18 = sbr.rel (%p16) target = $region8
  $region5: #{double_conv2d.4} parent=0 // loop_body
    %s20 = ssub.s32 %s15, 1
    %s21 = ssub.s32 %s15, 2
    %s22 = sadd.s32 %s15, 1
    %s24 = sadd.s32 %s23, 1
    %p27 = scmp.eq.s32.totalorder %s15, 2
    %p28 = scmp.ne.s32.totalorder %s23, %s25
    %p29 = scmp.eq.s32.totalorder %s15, 0
    %p30 = por %p28, %p29
    %p31 = scmp.ne.s32.totalorder %s23, %s25
    %p32 = scmp.eq.s32.totalorder %s20, 2
    %p33 = por %p31, %p32
    %p34 = scmp.ne.s32.totalorder %s25, %s26
    %p35 = scmp.eq.s32.totalorder %s20, 0
    %p36 = por %p34, %p35
    %p37 = scmp.ne.s32.totalorder %s25, %s26
    %p38 = scmp.eq.s32.totalorder %s21, 2
    %p39 = por %p37, %p38
    %p41 = scmp.ne.s32.totalorder %s26, %s40
    %p42 = scmp.eq.s32.totalorder %s21, 0
    %p43 = por %p41, %p42
    %s44 = ssub.s32 %s15, %s22
    %p45 = scmp.eq.s32.totalorder %s44, 0
    %s47 = sadd.s32 %s46, 1
    %s48 = scalar_select %p45, %s46, %s47
    %p51 = pneg %p45
    %p52 = scmp.eq.s32.totalorder %s15, 2
    %p53 = por %p51, %p52
    %p54 = scmp.ne.s32.totalorder %s46, %s49
    %p55 = scmp.eq.s32.totalorder %s15, 0
    %p56 = por %p54, %p55
    %p57 = scmp.ne.s32.totalorder %s46, %s49
    %p58 = scmp.eq.s32.totalorder %s20, 2
    %p59 = por %p57, %p58
    %p60 = scmp.ne.s32.totalorder %s49, %s50
    %p61 = scmp.eq.s32.totalorder %s20, 0
    %p62 = por %p60, %p61
    %p63 = scmp.ne.s32.totalorder %s49, %s50
    %p64 = scmp.eq.s32.totalorder %s21, 2
    %p65 = por %p63, %p64
    %p67 = scmp.ne.s32.totalorder %s50, %s66
    %p68 = scmp.eq.s32.totalorder %s21, 0
    %p69 = por %p67, %p68
    %s70 = sadd.s32 %s15, 1
    %s71 = smul.u32 %s70, 6
    %s72 = sadd.s32 %s22, 1
    %s73 = smul.u32 %s72, 6
    %s74 = ssub.s32 %s71, %s73
    %p75 = scmp.eq.s32.totalorder %s74, 0
    %s77 = sadd.s32 %s76, 1
    %s78 = scalar_select %p75, %s76, %s77
    %p81 = pneg %p75
    %p82 = scmp.eq.s32.totalorder %s15, 2
    %p83 = por %p81, %p82
    %p84 = scmp.ne.s32.totalorder %s76, %s79
    %p85 = scmp.eq.s32.totalorder %s15, 0
    %p86 = por %p84, %p85
    %p87 = scmp.ne.s32.totalorder %s76, %s79
    %p88 = scmp.eq.s32.totalorder %s20, 2
    %p89 = por %p87, %p88
    %p90 = scmp.ne.s32.totalorder %s79, %s80
    %p91 = scmp.eq.s32.totalorder %s20, 0
    %p92 = por %p90, %p91
    %p93 = scmp.ne.s32.totalorder %s79, %s80
    %p94 = scmp.eq.s32.totalorder %s21, 2
    %p95 = por %p93, %p94
    %p97 = scmp.ne.s32.totalorder %s80, %s96
    %p98 = scmp.eq.s32.totalorder %s21, 0
    %p99 = por %p97, %p98
    %s100 = ssub.s32 %s15, %s22
    %p101 = scmp.eq.s32.totalorder %s100, 0
    %s103 = sadd.s32 %s102, 1
    %s104 = scalar_select %p101, %s102, %s103
    %p107 = pneg %p101
    %p108 = scmp.eq.s32.totalorder %s15, 2
    %p109 = por %p107, %p108
    %p110 = scmp.ne.s32.totalorder %s102, %s105
    %p111 = scmp.eq.s32.totalorder %s15, 0
    %p112 = por %p110, %p111
    %p113 = scmp.ne.s32.totalorder %s102, %s105
    %p114 = scmp.eq.s32.totalorder %s20, 2
    %p115 = por %p113, %p114
    %p116 = scmp.ne.s32.totalorder %s105, %s106
    %p117 = scmp.eq.s32.totalorder %s20, 0
    %p118 = por %p116, %p117
    %p119 = scmp.ne.s32.totalorder %s105, %s106
    %p120 = scmp.eq.s32.totalorder %s21, 2
    %p121 = por %p119, %p120
    %p123 = scmp.ne.s32.totalorder %s106, %s122
    %p124 = scmp.eq.s32.totalorder %s21, 0
    %p125 = por %p123, %p124
    %s126 = sadd.s32 %s15, 1
    %s127 = smul.u32 %s126, 6
    %s128 = sadd.s32 %s22, 1
    %s129 = smul.u32 %s128, 6
    %s130 = ssub.s32 %s127, %s129
    %p131 = scmp.eq.s32.totalorder %s130, 0
    %s133 = sadd.s32 %s132, 1
    %s134 = scalar_select %p131, %s132, %s133
    %p137 = pneg %p131
    %p138 = scmp.eq.s32.totalorder %s15, 2
    %p139 = por %p137, %p138
    %p140 = scmp.ne.s32.totalorder %s132, %s135
    %p141 = scmp.eq.s32.totalorder %s15, 0
    %p142 = por %p140, %p141
    %p143 = scmp.ne.s32.totalorder %s132, %s135
    %p144 = scmp.eq.s32.totalorder %s20, 2
    %p145 = por %p143, %p144
    %p146 = scmp.ne.s32.totalorder %s135, %s136
    %p147 = scmp.eq.s32.totalorder %s20, 0
    %p148 = por %p146, %p147
    %p149 = scmp.ne.s32.totalorder %s135, %s136
    %p150 = scmp.eq.s32.totalorder %s21, 2
    %p151 = por %p149, %p150
    %p153 = scmp.ne.s32.totalorder %s136, %s152
    %p154 = scmp.eq.s32.totalorder %s21, 0
    %p155 = por %p153, %p154
    %s156 = ssub.s32 %s15, %s22
    %p157 = scmp.eq.s32.totalorder %s156, 0
    %s159 = sadd.s32 %s158, 1
    %s160 = scalar_select %p157, %s158, %s159
    %p163 = pneg %p157
    %p164 = scmp.eq.s32.totalorder %s15, 2
    %p165 = por %p163, %p164
    %p166 = scmp.ne.s32.totalorder %s158, %s161
    %p167 = scmp.eq.s32.totalorder %s15, 0
    %p168 = por %p166, %p167
    %p169 = scmp.ne.s32.totalorder %s158, %s161
    %p170 = scmp.eq.s32.totalorder %s20, 2
    %p171 = por %p169, %p170
    %p172 = scmp.ne.s32.totalorder %s161, %s162
    %p173 = scmp.eq.s32.totalorder %s20, 0
    %p174 = por %p172, %p173
    %p175 = scmp.ne.s32.totalorder %s161, %s162
    %p176 = scmp.eq.s32.totalorder %s21, 2
    %p177 = por %p175, %p176
    %p179 = scmp.ne.s32.totalorder %s162, %s178
    %p180 = scmp.eq.s32.totalorder %s21, 0
    %p181 = por %p179, %p180
    %s183 = sadd.s32 %s182, 1
    %p186 = scmp.eq.s32.totalorder %s15, 2
    %p187 = scmp.ne.s32.totalorder %s182, %s184
    %p188 = scmp.eq.s32.totalorder %s15, 0
    %p189 = por %p187, %p188
    %p190 = scmp.ne.s32.totalorder %s182, %s184
    %p191 = scmp.eq.s32.totalorder %s20, 2
    %p192 = por %p190, %p191
    %p193 = scmp.ne.s32.totalorder %s184, %s185
    %p194 = scmp.eq.s32.totalorder %s20, 0
    %p195 = por %p193, %p194
    %p196 = scmp.ne.s32.totalorder %s184, %s185
    %p197 = scmp.eq.s32.totalorder %s21, 2
    %p198 = por %p196, %p197
    %p200 = scmp.ne.s32.totalorder %s185, %s199
    %p201 = scmp.eq.s32.totalorder %s21, 0
    %p202 = por %p200, %p201
    %s203 = ssub.s32 %s15, %s22
    %p204 = scmp.eq.s32.totalorder %s203, 0
    %s206 = sadd.s32 %s205, 1
    %s207 = scalar_select %p204, %s205, %s206
    %p210 = pneg %p204
    %p211 = scmp.eq.s32.totalorder %s15, 2
    %p212 = por %p210, %p211
    %p213 = scmp.ne.s32.totalorder %s205, %s208
    %p214 = scmp.eq.s32.totalorder %s15, 0
    %p215 = por %p213, %p214
    %p216 = scmp.ne.s32.totalorder %s205, %s208
    %p217 = scmp.eq.s32.totalorder %s20, 2
    %p218 = por %p216, %p217
    %p219 = scmp.ne.s32.totalorder %s208, %s209
    %p220 = scmp.eq.s32.totalorder %s20, 0
    %p221 = por %p219, %p220
    %p222 = scmp.ne.s32.totalorder %s208, %s209
    %p223 = scmp.eq.s32.totalorder %s21, 2
    %p224 = por %p222, %p223
    %p226 = scmp.ne.s32.totalorder %s209, %s225
    %p227 = scmp.eq.s32.totalorder %s21, 0
    %p228 = por %p226, %p227
    %s229 = ssub.s32 %s15, %s22
    %p230 = scmp.eq.s32.totalorder %s229, 0
    %s232 = sadd.s32 %s231, 1
    %s233 = scalar_select %p230, %s231, %s232
    %p236 = pneg %p230
    %p237 = scmp.eq.s32.totalorder %s15, 2
    %p238 = por %p236, %p237
    %p239 = scmp.ne.s32.totalorder %s231, %s234
    %p240 = scmp.eq.s32.totalorder %s15, 0
    %p241 = por %p239, %p240
    %p242 = scmp.ne.s32.totalorder %s231, %s234
    %p243 = scmp.eq.s32.totalorder %s20, 2
    %p244 = por %p242, %p243
    %p245 = scmp.ne.s32.totalorder %s234, %s235
    %p246 = scmp.eq.s32.totalorder %s20, 0
    %p247 = por %p245, %p246
    %p248 = scmp.ne.s32.totalorder %s234, %s235
    %p249 = scmp.eq.s32.totalorder %s21, 2
    %p250 = por %p248, %p249
    %p252 = scmp.ne.s32.totalorder %s235, %s251
    %p253 = scmp.eq.s32.totalorder %s21, 0
    %p254 = por %p252, %p253
    %p255 = scmp.le.s32.totalorder 1, %s15
    %p256 = scmp.lt.s32.totalorder %s15, 4
    %p257 = pnand %p255, %p256
    %p258 = pneg %p257
    // Predicated region
    $region9: #{double_conv2d.4} parent=5 // pred_check
      _
    $region10: #{double_conv2d.4} parent=5 // pred_check_branch
      %260 = sbr.rel (%p257) target = $region12
    $region11: #{double_conv2d.4} parent=5 // pred_region
      %s261 = ssub.s32 %s15, 1
      // Predicated region
      $region13: #{double_conv2d.4} parent=11 // pred_check
        %p262 = pneg %p36
      $region14: #{double_conv2d.4} parent=11 // pred_check_branch
        %264 = sbr.rel (%p262) target = $region16
      $region15: #{double_conv2d.4} parent=11 // pred_region
        _
      $region16: #{double_conv2d.4} parent=11 // pred_fallthru
        _
      // Predicated region
      $region17: #{double_conv2d.4} parent=11 // pred_check
        %p265 = pneg %p195
      $region18: #{double_conv2d.4} parent=11 // pred_check_branch
        %267 = sbr.rel (%p265) target = $region20
      $region19: #{double_conv2d.4} parent=11 // pred_region
        _
      $region20: #{double_conv2d.4} parent=11 // pred_fallthru
        _
    $region12: #{double_conv2d.4} parent=5 // pred_fallthru
      _
    %p268 = scmp.lt.s32.totalorder %s15, 3
    // Predicated region
    $region21: #{double_conv2d.4} parent=5 // pred_check
      %p269 = pneg %p268
    $region22: #{double_conv2d.4} parent=5 // pred_check_branch
      %271 = sbr.rel (%p269) target = $region24
    $region23: #{double_conv2d.4} parent=5 // pred_region
      // Predicated region
      $region25: #{double_conv2d.4} parent=23 // pred_check
        %p272 = pneg %p56
      $region26: #{double_conv2d.4} parent=23 // pred_check_branch
        %274 = sbr.rel (%p272) target = $region28
      $region27: #{double_conv2d.4} parent=23 // pred_region
        %s275 = smul.u32 30, %s15
        %p276 = scmp.lt.s32.totalorder %s275, 119
        %s277 = scalar_select %p276, %s275, 119
        %s278 = smul.addr %s277, 8
        %s279 = scalar_lea.vmem %s1, %s278
        %s280 = smul.u32 30, %s15
      $region28: #{double_conv2d.4} parent=23 // pred_fallthru
        _
      // Predicated region
      $region29: #{double_conv2d.4} parent=23 // pred_check
        %p281 = pneg %p86
      $region30: #{double_conv2d.4} parent=23 // pred_check_branch
        %283 = sbr.rel (%p281) target = $region32
      $region31: #{double_conv2d.4} parent=23 // pred_region
        %s284 = sadd.s32 %s15, 1
        %s285 = smul.u32 %s284, 6
        %s286 = smul.u32 5, %s285
        %p287 = scmp.lt.s32.totalorder %s286, 119
        %s288 = scalar_select %p287, %s286, 119
        %s289 = smul.addr %s288, 8
        %s290 = scalar_lea.vmem %s2, %s289
        %s291 = sadd.s32 %s15, 1
        %s292 = smul.u32 %s291, 6
        %s293 = smul.u32 5, %s292
      $region32: #{double_conv2d.4} parent=23 // pred_fallthru
        _
      // Predicated region
      $region33: #{double_conv2d.4} parent=23 // pred_check
        %p294 = pneg %p112
      $region34: #{double_conv2d.4} parent=23 // pred_check_branch
        %296 = sbr.rel (%p294) target = $region36
      $region35: #{double_conv2d.4} parent=23 // pred_region
        %s297 = smul.u32 30, %s15
        %p298 = scmp.lt.s32.totalorder %s297, 119
        %s299 = scalar_select %p298, %s297, 119
        %s300 = smul.addr %s299, 8
        %s301 = scalar_lea.vmem %s3, %s300
        %s302 = smul.u32 30, %s15
      $region36: #{double_conv2d.4} parent=23 // pred_fallthru
        _
      // Predicated region
      $region37: #{double_conv2d.4} parent=23 // pred_check
        %p303 = pneg %p142
      $region38: #{double_conv2d.4} parent=23 // pred_check_branch
        %305 = sbr.rel (%p303) target = $region40
      $region39: #{double_conv2d.4} parent=23 // pred_region
        %s306 = sadd.s32 %s15, 1
        %s307 = smul.u32 %s306, 6
        %s308 = smul.u32 5, %s307
        %p309 = scmp.lt.s32.totalorder %s308, 119
        %s310 = scalar_select %p309, %s308, 119
        %s311 = smul.addr %s310, 8
        %s312 = scalar_lea.vmem %s4, %s311
        %s313 = sadd.s32 %s15, 1
        %s314 = smul.u32 %s313, 6
        %s315 = smul.u32 5, %s314
      $region40: #{double_conv2d.4} parent=23 // pred_fallthru
        _
      // Predicated region
      $region41: #{double_conv2d.4} parent=23 // pred_check
        %p316 = pneg %p168
      $region42: #{double_conv2d.4} parent=23 // pred_check_branch
        %318 = sbr.rel (%p316) target = $region44
      $region43: #{double_conv2d.4} parent=23 // pred_region
        %s319 = smul.u32 30, %s15
        %p320 = scmp.lt.s32.totalorder %s319, 89
        %s321 = scalar_select %p320, %s319, 89
        %s322 = smul.addr %s321, 8
        %s323 = scalar_lea.vmem %s5, %s322
        %s324 = smul.u32 30, %s15
      $region44: #{double_conv2d.4} parent=23 // pred_fallthru
        _
    $region24: #{double_conv2d.4} parent=5 // pred_fallthru
      _
    %p325 = scmp.le.s32.totalorder 1, %s15
    %p326 = scmp.lt.s32.totalorder %s15, 4
    %p327 = pnand %p325, %p326
    %p328 = pneg %p327
    // Predicated region
    $region45: #{double_conv2d.4} parent=5 // pred_check
      _
    $region46: #{double_conv2d.4} parent=5 // pred_check_branch
      %330 = sbr.rel (%p327) target = $region48
    $region47: #{double_conv2d.4} parent=5 // pred_region
      %s331 = ssub.s32 %s15, 1
      %p332 = pneg %p36
      %p333 = pneg %p33
      %s334 = smul.u32 30, %s20
      %p335 = scmp.lt.s32.totalorder %s334, 119
      %s336 = scalar_select %p335, %s334, 119
      %s337 = smul.addr %s336, 8
      %s338 = scalar_lea.vmem %s1, %s337
      %p339 = pneg %p62
      %p340 = pneg %p59
      %s341 = sadd.s32 %s20, 1
      %s342 = smul.u32 %s341, 6
      %s343 = smul.u32 5, %s342
      %p344 = scmp.lt.s32.totalorder %s343, 119
      %s345 = scalar_select %p344, %s343, 119
      %s346 = smul.addr %s345, 8
      %s347 = scalar_lea.vmem %s2, %s346
      %p348 = pneg %p92
      %p349 = pneg %p89
      %s350 = smul.u32 30, %s20
      %p351 = scmp.lt.s32.totalorder %s350, 119
      %s352 = scalar_select %p351, %s350, 119
      %s353 = smul.addr %s352, 8
      %s354 = scalar_lea.vmem %s3, %s353
      %p355 = pneg %p118
      %p356 = pneg %p115
      %s357 = sadd.s32 %s20, 1
      %s358 = smul.u32 %s357, 6
      %s359 = smul.u32 5, %s358
      %p360 = scmp.lt.s32.totalorder %s359, 119
      %s361 = scalar_select %p360, %s359, 119
      %s362 = smul.addr %s361, 8
      %s363 = scalar_lea.vmem %s4, %s362
      %p364 = pneg %p148
      %p365 = pneg %p145
      %s366 = smul.u32 30, %s20
      %p367 = scmp.lt.s32.totalorder %s366, 89
      %s368 = scalar_select %p367, %s366, 89
      %s369 = smul.addr %s368, 8
      %s370 = scalar_lea.vmem %s5, %s369
      %p371 = pneg %p174
      %p372 = pneg %p171
      %p373 = pneg %p195
      %p374 = pneg %p192
      %p375 = pneg %p221
      %p376 = pneg %p218
      %s377 = smul.u32 30, %s20
      %p378 = scmp.lt.s32.totalorder %s377, 89
      %s379 = scalar_select %p378, %s377, 89
      %s380 = smul.addr %s379, 8
      %s381 = scalar_lea.vmem %s7, %s380
      %p382 = pneg %p247
      %p383 = pneg %p244
      %p384 = scmp.lt.s32.totalorder %s20, 2
      %s385 = scalar_select %p384, %s20, 2
      %s386 = smul.addr %s385, 2
      %s387 = scalar_lea.vmem %s8, %s386
      %s388 = smul.u32 30, %s20
      %p389 = scmp.lt.s32.totalorder %s388, 119
      %s390 = scalar_select %p389, %s388, 119
      %s391 = smul.addr %s390, 8
      %s392 = scalar_lea.vmem %s1, %s391
      %s393 = smul.u32 30, %s20
      %s394 = sadd.s32 %s20, 1
      %s395 = smul.u32 %s394, 6
      %s396 = smul.u32 5, %s395
      %p397 = scmp.lt.s32.totalorder %s396, 119
      %s398 = scalar_select %p397, %s396, 119
      %s399 = smul.addr %s398, 8
      %s400 = scalar_lea.vmem %s2, %s399
      %s401 = sadd.s32 %s20, 1
      %s402 = smul.u32 %s401, 6
      %s403 = smul.u32 5, %s402
      %s404 = smul.u32 30, %s20
      %p405 = scmp.lt.s32.totalorder %s404, 119
      %s406 = scalar_select %p405, %s404, 119
      %s407 = smul.addr %s406, 8
      %s408 = scalar_lea.vmem %s3, %s407
      %s409 = smul.u32 30, %s20
      %s410 = sadd.s32 %s20, 1
      %s411 = smul.u32 %s410, 6
      %s412 = smul.u32 5, %s411
      %p413 = scmp.lt.s32.totalorder %s412, 119
      %s414 = scalar_select %p413, %s412, 119
      %s415 = smul.addr %s414, 8
      %s416 = scalar_lea.vmem %s4, %s415
      %s417 = sadd.s32 %s20, 1
      %s418 = smul.u32 %s417, 6
      %s419 = smul.u32 5, %s418
      %s420 = smul.u32 30, %s20
      %p421 = scmp.lt.s32.totalorder %s420, 89
      %s422 = scalar_select %p421, %s420, 89
      %s423 = smul.addr %s422, 8
      %s424 = scalar_lea.vmem %s5, %s423
      %s425 = smul.u32 30, %s20
      %s426 = smul.u32 30, %s20
      %p427 = scmp.lt.s32.totalorder %s426, 89
      %s428 = scalar_select %p427, %s426, 89
      %s429 = smul.addr %s428, 8
      %s430 = scalar_lea.vmem %s7, %s429
      %s431 = smul.u32 30, %s20
      %p432 = scmp.lt.s32.totalorder %s20, 2
      %s433 = scalar_select %p432, %s20, 2
      %s434 = smul.addr %s433, 2
      %s435 = scalar_lea.vmem %s8, %s434
      %v436 = vld [vmem:[%s0] sm:$0x1]
      %v437 = vld [vmem:[%s0 + $0x1] sm:$0x1]
      %v438 = vld [vmem:[%s408] sm:$0xff]
      %v439 = vld [vmem:[%s408 + $0x8] sm:$0xff]
      %v440 = vld [vmem:[%s408 + $0x10] sm:$0xff]
      %v441 = vld [vmem:[%s408 + $0x18] sm:$0xff]
      %v442 = vld [vmem:[%s408 + $0x20] sm:$0xff]
      %v443 = vld [vmem:[%s408 + $0x28] sm:$0xff]
      %v444 = vld [vmem:[%s408 + $0x30] sm:$0xff]
      %v445 = vld [vmem:[%s408 + $0x38] sm:$0xff]
      %v446 = vld [vmem:[%s408 + $0x40] sm:$0xff]
      %v447 = vld [vmem:[%s408 + $0x48] sm:$0xff]
      %v448 = vld [vmem:[%s408 + $0x50] sm:$0xff]
      %v449 = vld [vmem:[%s408 + $0x58] sm:$0xff]
      %v450 = vld [vmem:[%s408 + $0x60] sm:$0xff]
      %v451 = vld [vmem:[%s408 + $0x68] sm:$0xff]
      %v452 = vld [vmem:[%s408 + $0x70] sm:$0xff]
      %v453 = vld [vmem:[%s408 + $0x78] sm:$0xff]
      %v454 = vld [vmem:[%s408 + $0x80] sm:$0xff]
      %v455 = vld [vmem:[%s408 + $0x88] sm:$0xff]
      %v456 = vld [vmem:[%s408 + $0x90] sm:$0xff]
      %v457 = vld [vmem:[%s408 + $0x98] sm:$0xff]
      %v458 = vld [vmem:[%s408 + $0xa0] sm:$0xff]
      %v459 = vld [vmem:[%s408 + $0xa8] sm:$0xff]
      %v460 = vld [vmem:[%s408 + $0xb0] sm:$0xff]
      %v461 = vld [vmem:[%s408 + $0xb8] sm:$0xff]
      %v462 = vld [vmem:[%s408 + $0xc0] sm:$0xff]
      %v463 = vld [vmem:[%s408 + $0xc8] sm:$0xff]
      %v464 = vld [vmem:[%s408 + $0xd0] sm:$0xff]
      %v465 = vld [vmem:[%s408 + $0xd8] sm:$0xff]
      %v466 = vld [vmem:[%s408 + $0xe0] sm:$0xff]
      %v467 = vld [vmem:[%s408 + $0xe8] sm:$0xff]
      %v468 = vlaneseq
      %v469 = vshrl.u32 %v468, 7
      %v470 = vsub.s32 0, %v469
      %v471 = vrot.slane %v436, %v470
      %v472 = vmul.f32 %v438, %v471
      %v473 = vmul.f32 %v439, %v471
      %v474 = vmul.f32 %v440, %v471
      %v475 = vmul.f32 %v441, %v471
      %v476 = vmul.f32 %v442, %v471
      %v477 = vmul.f32 %v443, %v471
      %v478 = vmul.f32 %v444, %v471
      %v479 = vmul.f32 %v445, %v471
      %v480 = vmul.f32 %v446, %v471
      %v481 = vmul.f32 %v447, %v471
      %v482 = vmul.f32 %v448, %v471
      %v483 = vmul.f32 %v449, %v471
      %v484 = vmul.f32 %v450, %v471
      %v485 = vmul.f32 %v451, %v471
      %v486 = vmul.f32 %v452, %v471
      %v487 = vmul.f32 %v453, %v471
      %v488 = vmul.f32 %v454, %v471
      %v489 = vmul.f32 %v455, %v471
      %v490 = vmul.f32 %v456, %v471
      %v491 = vmul.f32 %v457, %v471
      %v492 = vmul.f32 %v458, %v471
      %v493 = vmul.f32 %v459, %v471
      %v494 = vmul.f32 %v460, %v471
      %v495 = vmul.f32 %v461, %v471
      %v496 = vmul.f32 %v462, %v471
      %v497 = vmul.f32 %v463, %v471
      %v498 = vmul.f32 %v464, %v471
      %v499 = vmul.f32 %v465, %v471
      %v500 = vmul.f32 %v466, %v471
      %v501 = vmul.f32 %v467, %v471
      %v502 = vlaneseq
      %v503 = vshrl.u32 %v502, 7
      %v504 = vsub.s32 0, %v503
      %v505 = vrot.slane %v437, %v504
      %v506 = vadd.f32 %v472, %v505
      %v507 = vadd.f32 %v473, %v505
      %v508 = vadd.f32 %v474, %v505
      %v509 = vadd.f32 %v475, %v505
      %v510 = vadd.f32 %v476, %v505
      %v511 = vadd.f32 %v477, %v505
      %v512 = vadd.f32 %v478, %v505
      %v513 = vadd.f32 %v479, %v505
      %v514 = vadd.f32 %v480, %v505
      %v515 = vadd.f32 %v481, %v505
      %v516 = vadd.f32 %v482, %v505
      %v517 = vadd.f32 %v483, %v505
      %v518 = vadd.f32 %v484, %v505
      %v519 = vadd.f32 %v485, %v505
      %v520 = vadd.f32 %v486, %v505
      %v521 = vadd.f32 %v487, %v505
      %v522 = vadd.f32 %v488, %v505
      %v523 = vadd.f32 %v489, %v505
      %v524 = vadd.f32 %v490, %v505
      %v525 = vadd.f32 %v491, %v505
      %v526 = vadd.f32 %v492, %v505
      %v527 = vadd.f32 %v493, %v505
      %v528 = vadd.f32 %v494, %v505
      %v529 = vadd.f32 %v495, %v505
      %v530 = vadd.f32 %v496, %v505
      %v531 = vadd.f32 %v497, %v505
      %v532 = vadd.f32 %v498, %v505
      %v533 = vadd.f32 %v499, %v505
      %v534 = vadd.f32 %v500, %v505
      %v535 = vadd.f32 %v501, %v505
      %v536 = vmax.f32 %v506, 0.0
      %v537 = vmax.f32 %v507, 0.0
      %v538 = vmax.f32 %v508, 0.0
      %v539 = vmax.f32 %v509, 0.0
      %v540 = vmax.f32 %v510, 0.0
      %v541 = vmax.f32 %v511, 0.0
      %v542 = vmax.f32 %v512, 0.0
      %v543 = vmax.f32 %v513, 0.0
      %v544 = vmax.f32 %v514, 0.0
      %v545 = vmax.f32 %v515, 0.0
      %v546 = vmax.f32 %v516, 0.0
      %v547 = vmax.f32 %v517, 0.0
      %v548 = vmax.f32 %v518, 0.0
      %v549 = vmax.f32 %v519, 0.0
      %v550 = vmax.f32 %v520, 0.0
      %v551 = vmax.f32 %v521, 0.0
      %v552 = vmax.f32 %v522, 0.0
      %v553 = vmax.f32 %v523, 0.0
      %v554 = vmax.f32 %v524, 0.0
      %v555 = vmax.f32 %v525, 0.0
      %v556 = vmax.f32 %v526, 0.0
      %v557 = vmax.f32 %v527, 0.0
      %v558 = vmax.f32 %v528, 0.0
      %v559 = vmax.f32 %v529, 0.0
      %v560 = vmax.f32 %v530, 0.0
      %v561 = vmax.f32 %v531, 0.0
      %v562 = vmax.f32 %v532, 0.0
      %v563 = vmax.f32 %v533, 0.0
      %v564 = vmax.f32 %v534, 0.0
      %v565 = vmax.f32 %v535, 0.0
      %v566 = vld [vmem:[%s416] sm:$0xff]
      %v567 = vld [vmem:[%s416 + $0x8] sm:$0xff]
      %v568 = vld [vmem:[%s416 + $0x10] sm:$0xff]
      %v569 = vld [vmem:[%s416 + $0x18] sm:$0xff]
      %v570 = vld [vmem:[%s416 + $0x20] sm:$0xff]
      %v571 = vmul.f32 %v566, %v471
      %v572 = vmul.f32 %v567, %v471
      %v573 = vmul.f32 %v568, %v471
      %v574 = vmul.f32 %v569, %v471
      %v575 = vmul.f32 %v570, %v471
      %v576 = vadd.f32 %v571, %v505
      %v577 = vadd.f32 %v572, %v505
      %v578 = vadd.f32 %v573, %v505
      %v579 = vadd.f32 %v574, %v505
      %v580 = vadd.f32 %v575, %v505
      %v581 = vmax.f32 %v576, 0.0
      %v582 = vmax.f32 %v577, 0.0
      %v583 = vmax.f32 %v578, 0.0
      %v584 = vmax.f32 %v579, 0.0
      %v585 = vmax.f32 %v580, 0.0
      %v586 = vld [vmem:[%s392] sm:$0xff]
      %v587 = vld [vmem:[%s392 + $0x8] sm:$0xff]
      %v588 = vld [vmem:[%s392 + $0x10] sm:$0xff]
      %v589 = vld [vmem:[%s392 + $0x18] sm:$0xff]
      %v590 = vld [vmem:[%s392 + $0x20] sm:$0xff]
      %v591 = vld [vmem:[%s392 + $0x28] sm:$0xff]
      %v592 = vld [vmem:[%s392 + $0x30] sm:$0xff]
      %v593 = vld [vmem:[%s392 + $0x38] sm:$0xff]
      %v594 = vld [vmem:[%s392 + $0x40] sm:$0xff]
      %v595 = vld [vmem:[%s392 + $0x48] sm:$0xff]
      %v596 = vld [vmem:[%s392 + $0x50] sm:$0xff]
      %v597 = vld [vmem:[%s392 + $0x58] sm:$0xff]
      %v598 = vld [vmem:[%s392 + $0x60] sm:$0xff]
      %v599 = vld [vmem:[%s392 + $0x68] sm:$0xff]
      %v600 = vld [vmem:[%s392 + $0x70] sm:$0xff]
      %v601 = vld [vmem:[%s392 + $0x78] sm:$0xff]
      %v602 = vld [vmem:[%s392 + $0x80] sm:$0xff]
      %v603 = vld [vmem:[%s392 + $0x88] sm:$0xff]
      %v604 = vld [vmem:[%s392 + $0x90] sm:$0xff]
      %v605 = vld [vmem:[%s392 + $0x98] sm:$0xff]
      %v606 = vld [vmem:[%s392 + $0xa0] sm:$0xff]
      %v607 = vld [vmem:[%s392 + $0xa8] sm:$0xff]
      %v608 = vld [vmem:[%s392 + $0xb0] sm:$0xff]
      %v609 = vld [vmem:[%s392 + $0xb8] sm:$0xff]
      %v610 = vld [vmem:[%s392 + $0xc0] sm:$0xff]
      %v611 = vld [vmem:[%s392 + $0xc8] sm:$0xff]
      %v612 = vld [vmem:[%s392 + $0xd0] sm:$0xff]
      %v613 = vld [vmem:[%s392 + $0xd8] sm:$0xff]
      %v614 = vld [vmem:[%s392 + $0xe0] sm:$0xff]
      %v615 = vld [vmem:[%s392 + $0xe8] sm:$0xff]
      %617 = vset.pattern.permute.xlu0 0
      %618 = vperm.xlu0 %617, %v586
      %v619 = vpop.permute.xlu0 %618
      %622 = vset.pattern.permute.xlu0 0
      %623 = vperm.xlu0 %622, %v587
      %v624 = vpop.permute.xlu0 %623
      %627 = vset.pattern.permute.xlu0 0
      %628 = vperm.xlu0 %627, %v588
      %v629 = vpop.permute.xlu0 %628
      %632 = vset.pattern.permute.xlu0 0
      %633 = vperm.xlu0 %632, %v589
      %v634 = vpop.permute.xlu0 %633
      %637 = vset.pattern.permute.xlu0 0
      %638 = vperm.xlu0 %637, %v590
      %v639 = vpop.permute.xlu0 %638
      %642 = vset.pattern.permute.xlu0 0
      %643 = vperm.xlu0 %642, %v591
      %v644 = vpop.permute.xlu0 %643
      %647 = vset.pattern.permute.xlu0 0
      %648 = vperm.xlu0 %647, %v592
      %v649 = vpop.permute.xlu0 %648
      %652 = vset.pattern.permute.xlu0 0
      %653 = vperm.xlu0 %652, %v593
      %v654 = vpop.permute.xlu0 %653
      %657 = vset.pattern.permute.xlu0 0
      %658 = vperm.xlu0 %657, %v594
      %v659 = vpop.permute.xlu0 %658
      %662 = vset.pattern.permute.xlu0 0
      %663 = vperm.xlu0 %662, %v595
      %v664 = vpop.permute.xlu0 %663
      %667 = vset.pattern.permute.xlu0 0
      %668 = vperm.xlu0 %667, %v596
      %v669 = vpop.permute.xlu0 %668
      %672 = vset.pattern.permute.xlu0 0
      %673 = vperm.xlu0 %672, %v597
      %v674 = vpop.permute.xlu0 %673
      %677 = vset.pattern.permute.xlu0 0
      %678 = vperm.xlu0 %677, %v598
      %v679 = vpop.permute.xlu0 %678
      %682 = vset.pattern.permute.xlu0 0
      %683 = vperm.xlu0 %682, %v599
      %v684 = vpop.permute.xlu0 %683
      %687 = vset.pattern.permute.xlu0 0
      %688 = vperm.xlu0 %687, %v600
      %v689 = vpop.permute.xlu0 %688
      %692 = vset.pattern.permute.xlu0 0
      %693 = vperm.xlu0 %692, %v601
      %v694 = vpop.permute.xlu0 %693
      %697 = vset.pattern.permute.xlu0 0
      %698 = vperm.xlu0 %697, %v602
      %v699 = vpop.permute.xlu0 %698
      %702 = vset.pattern.permute.xlu0 0
      %703 = vperm.xlu0 %702, %v603
      %v704 = vpop.permute.xlu0 %703
      %707 = vset.pattern.permute.xlu0 0
      %708 = vperm.xlu0 %707, %v604
      %v709 = vpop.permute.xlu0 %708
      %712 = vset.pattern.permute.xlu0 0
      %713 = vperm.xlu0 %712, %v605
      %v714 = vpop.permute.xlu0 %713
      %717 = vset.pattern.permute.xlu0 0
      %718 = vperm.xlu0 %717, %v606
      %v719 = vpop.permute.xlu0 %718
      %722 = vset.pattern.permute.xlu0 0
      %723 = vperm.xlu0 %722, %v607
      %v724 = vpop.permute.xlu0 %723
      %727 = vset.pattern.permute.xlu0 0
      %728 = vperm.xlu0 %727, %v608
      %v729 = vpop.permute.xlu0 %728
      %732 = vset.pattern.permute.xlu0 0
      %733 = vperm.xlu0 %732, %v609
      %v734 = vpop.permute.xlu0 %733
      %737 = vset.pattern.permute.xlu0 0
      %738 = vperm.xlu0 %737, %v610
      %v739 = vpop.permute.xlu0 %738
      %742 = vset.pattern.permute.xlu0 0
      %743 = vperm.xlu0 %742, %v611
      %v744 = vpop.permute.xlu0 %743
      %747 = vset.pattern.permute.xlu0 0
      %748 = vperm.xlu0 %747, %v612
      %v749 = vpop.permute.xlu0 %748
      %752 = vset.pattern.permute.xlu0 0
      %753 = vperm.xlu0 %752, %v613
      %v754 = vpop.permute.xlu0 %753
      %757 = vset.pattern.permute.xlu0 0
      %758 = vperm.xlu0 %757, %v614
      %v759 = vpop.permute.xlu0 %758
      %762 = vset.pattern.permute.xlu0 0
      %763 = vperm.xlu0 %762, %v615
      %v764 = vpop.permute.xlu0 %763
      %v766 = vmul.f32 %v536, %v619
      %v767 = vmul.f32 %v537, %v624
      %v768 = vmul.f32 %v538, %v629
      %v769 = vmul.f32 %v539, %v634
      %v770 = vmul.f32 %v540, %v639
      %v771 = vmul.f32 %v541, %v644
      %v772 = vmul.f32 %v542, %v649
      %v773 = vmul.f32 %v543, %v654
      %v774 = vmul.f32 %v544, %v659
      %v775 = vmul.f32 %v545, %v664
      %v776 = vmul.f32 %v546, %v669
      %v777 = vmul.f32 %v547, %v674
      %v778 = vmul.f32 %v548, %v679
      %v779 = vmul.f32 %v549, %v684
      %v780 = vmul.f32 %v550, %v689
      %v781 = vmul.f32 %v551, %v694
      %v782 = vmul.f32 %v552, %v699
      %v783 = vmul.f32 %v553, %v704
      %v784 = vmul.f32 %v554, %v709
      %v785 = vmul.f32 %v555, %v714
      %v786 = vmul.f32 %v556, %v719
      %v787 = vmul.f32 %v557, %v724
      %v788 = vmul.f32 %v558, %v729
      %v789 = vmul.f32 %v559, %v734
      %v790 = vmul.f32 %v560, %v739
      %v791 = vmul.f32 %v561, %v744
      %v792 = vmul.f32 %v562, %v749
      %v793 = vmul.f32 %v563, %v754
      %v794 = vmul.f32 %v564, %v759
      %v795 = vmul.f32 %v565, %v764
      %vm796 = vcmask 64512
      %797 = vst.msk [vmem:[#allocation2] sm:$0xff] %vm796, %v766
      %798 = vst.msk [vmem:[#allocation2 + $0x8] sm:$0xff] %vm796, %v767
      %799 = vst.msk [vmem:[#allocation2 + $0x10] sm:$0xff] %vm796, %v768
      %800 = vst.msk [vmem:[#allocation2 + $0x18] sm:$0xff] %vm796, %v769
      %801 = vst.msk [vmem:[#allocation2 + $0x20] sm:$0xff] %vm796, %v770
      %802 = vst.msk [vmem:[#allocation2 + $0x28] sm:$0xff] %vm796, %v771
      %803 = vst.msk [vmem:[#allocation2 + $0x30] sm:$0xff] %vm796, %v772
      %804 = vst.msk [vmem:[#allocation2 + $0x38] sm:$0xff] %vm796, %v773
      %805 = vst.msk [vmem:[#allocation2 + $0x40] sm:$0xff] %vm796, %v774
      %806 = vst.msk [vmem:[#allocation2 + $0x48] sm:$0xff] %vm796, %v775
      %807 = vst.msk [vmem:[#allocation2 + $0x50] sm:$0xff] %vm796, %v776
      %808 = vst.msk [vmem:[#allocation2 + $0x58] sm:$0xff] %vm796, %v777
      %809 = vst.msk [vmem:[#allocation2 + $0x60] sm:$0xff] %vm796, %v778
      %810 = vst.msk [vmem:[#allocation2 + $0x68] sm:$0xff] %vm796, %v779
      %811 = vst.msk [vmem:[#allocation2 + $0x70] sm:$0xff] %vm796, %v780
      %812 = vst.msk [vmem:[#allocation2 + $0x78] sm:$0xff] %vm796, %v781
      %813 = vst.msk [vmem:[#allocation2 + $0x80] sm:$0xff] %vm796, %v782
      %814 = vst.msk [vmem:[#allocation2 + $0x88] sm:$0xff] %vm796, %v783
      %815 = vst.msk [vmem:[#allocation2 + $0x90] sm:$0xff] %vm796, %v784
      %816 = vst.msk [vmem:[#allocation2 + $0x98] sm:$0xff] %vm796, %v785
      %817 = vst.msk [vmem:[#allocation2 + $0xa0] sm:$0xff] %vm796, %v786
      %818 = vst.msk [vmem:[#allocation2 + $0xa8] sm:$0xff] %vm796, %v787
      %819 = vst.msk [vmem:[#allocation2 + $0xb0] sm:$0xff] %vm796, %v788
      %820 = vst.msk [vmem:[#allocation2 + $0xb8] sm:$0xff] %vm796, %v789
      %821 = vst.msk [vmem:[#allocation2 + $0xc0] sm:$0xff] %vm796, %v790
      %822 = vst.msk [vmem:[#allocation2 + $0xc8] sm:$0xff] %vm796, %v791
      %823 = vst.msk [vmem:[#allocation2 + $0xd0] sm:$0xff] %vm796, %v792
      %824 = vst.msk [vmem:[#allocation2 + $0xd8] sm:$0xff] %vm796, %v793
      %825 = vst.msk [vmem:[#allocation2 + $0xe0] sm:$0xff] %vm796, %v794
      %826 = vst.msk [vmem:[#allocation2 + $0xe8] sm:$0xff] %vm796, %v795
      %v827 = vld [vmem:[%s400] sm:$0xff]
      %v828 = vld [vmem:[%s400 + $0x8] sm:$0xff]
      %v829 = vld [vmem:[%s400 + $0x10] sm:$0xff]
      %v830 = vld [vmem:[%s400 + $0x18] sm:$0xff]
      %v831 = vld [vmem:[%s400 + $0x20] sm:$0xff]
      %833 = vset.pattern.permute.xlu0 0
      %834 = vperm.xlu0 %833, %v827
      %v835 = vpop.permute.xlu0 %834
      %838 = vset.pattern.permute.xlu0 0
      %839 = vperm.xlu0 %838, %v828
      %v840 = vpop.permute.xlu0 %839
      %843 = vset.pattern.permute.xlu0 0
      %844 = vperm.xlu0 %843, %v829
      %v845 = vpop.permute.xlu0 %844
      %848 = vset.pattern.permute.xlu0 0
      %849 = vperm.xlu0 %848, %v830
      %v850 = vpop.permute.xlu0 %849
      %853 = vset.pattern.permute.xlu0 0
      %854 = vperm.xlu0 %853, %v831
      %v855 = vpop.permute.xlu0 %854
      %v857 = vmul.f32 %v581, %v835
      %v858 = vmul.f32 %v582, %v840
      %v859 = vmul.f32 %v583, %v845
      %v860 = vmul.f32 %v584, %v850
      %v861 = vmul.f32 %v585, %v855
      %862 = vst.msk [vmem:[#allocation2 + $0xf0] sm:$0xff] %vm796, %v857
      %863 = vst.msk [vmem:[#allocation2 + $0xf8] sm:$0xff] %vm796, %v858
      %864 = vst.msk [vmem:[#allocation2 + $0x100] sm:$0xff] %vm796, %v859
      %865 = vst.msk [vmem:[#allocation2 + $0x108] sm:$0xff] %vm796, %v860
      %866 = vst.msk [vmem:[#allocation2 + $0x110] sm:$0xff] %vm796, %v861
      %v867 = vld [vmem:[#allocation2] sm:$0xff]
      %v868 = vld [vmem:[#allocation2 + $0x8] sm:$0xff]
      %v869 = vld [vmem:[#allocation2 + $0x10] sm:$0xff]
      %v870 = vld [vmem:[#allocation2 + $0x18] sm:$0xff]
      %v871 = vld [vmem:[#allocation2 + $0x20] sm:$0xff]
      %v872 = vld [vmem:[#allocation2 + $0x28] sm:$0xff]
      %v873 = vld [vmem:[#allocation2 + $0x30] sm:$0xff]
      %v874 = vld [vmem:[#allocation2 + $0x38] sm:$0xff]
      %v875 = vld [vmem:[#allocation2 + $0x40] sm:$0xff]
      %v876 = vld [vmem:[#allocation2 + $0x48] sm:$0xff]
      %v877 = vld [vmem:[#allocation2 + $0x50] sm:$0xff]
      %v878 = vld [vmem:[#allocation2 + $0x58] sm:$0xff]
      %v879 = vld [vmem:[#allocation2 + $0x60] sm:$0xff]
      %v880 = vld [vmem:[#allocation2 + $0x68] sm:$0xff]
      %v881 = vld [vmem:[#allocation2 + $0x70] sm:$0xff]
      %v882 = vld [vmem:[#allocation2 + $0x78] sm:$0xff]
      %v883 = vld [vmem:[#allocation2 + $0x80] sm:$0xff]
      %v884 = vld [vmem:[#allocation2 + $0x88] sm:$0xff]
      %v885 = vld [vmem:[#allocation2 + $0x90] sm:$0xff]
      %v886 = vld [vmem:[#allocation2 + $0x98] sm:$0xff]
      %v887 = vld [vmem:[#allocation2 + $0xa0] sm:$0xff]
      %v888 = vld [vmem:[#allocation2 + $0xa8] sm:$0xff]
      %v889 = vld [vmem:[#allocation2 + $0xb0] sm:$0xff]
      %v890 = vld [vmem:[#allocation2 + $0xb8] sm:$0xff]
      %v891 = vld [vmem:[#allocation2 + $0xc0] sm:$0xff]
      %v892 = vld [vmem:[#allocation2 + $0xc8] sm:$0xff]
      %v893 = vld [vmem:[#allocation2 + $0xd0] sm:$0xff]
      %v894 = vld [vmem:[#allocation2 + $0xd8] sm:$0xff]
      %v895 = vld [vmem:[#allocation2 + $0xe0] sm:$0xff]
      %v896 = vld [vmem:[#allocation2 + $0xe8] sm:$0xff]
      %v897 = vld [vmem:[%s6] sm:$0xff]
      %v898 = vld [vmem:[#allocation2 + $0x1] sm:$0xff]
      %v899 = vld [vmem:[#allocation2 + $0x9] sm:$0xff]
      %v900 = vld [vmem:[#allocation2 + $0x11] sm:$0xff]
      %v901 = vld [vmem:[#allocation2 + $0x19] sm:$0xff]
      %v902 = vld [vmem:[#allocation2 + $0x21] sm:$0xff]
      %v903 = vld [vmem:[#allocation2 + $0x29] sm:$0xff]
      %v904 = vld [vmem:[#allocation2 + $0x31] sm:$0xff]
      %v905 = vld [vmem:[#allocation2 + $0x39] sm:$0xff]
      %v906 = vld [vmem:[#allocation2 + $0x41] sm:$0xff]
      %v907 = vld [vmem:[#allocation2 + $0x49] sm:$0xff]
      %v908 = vld [vmem:[#allocation2 + $0x51] sm:$0xff]
      %v909 = vld [vmem:[#allocation2 + $0x59] sm:$0xff]
      %v910 = vld [vmem:[#allocation2 + $0x61] sm:$0xff]
      %v911 = vld [vmem:[#allocation2 + $0x69] sm:$0xff]
      %v912 = vld [vmem:[#allocation2 + $0x71] sm:$0xff]
      %v913 = vld [vmem:[#allocation2 + $0x79] sm:$0xff]
      %v914 = vld [vmem:[#allocation2 + $0x81] sm:$0xff]
      %v915 = vld [vmem:[#allocation2 + $0x89] sm:$0xff]
      %v916 = vld [vmem:[#allocation2 + $0x91] sm:$0xff]
      %v917 = vld [vmem:[#allocation2 + $0x99] sm:$0xff]
      %v918 = vld [vmem:[#allocation2 + $0xa1] sm:$0xff]
      %v919 = vld [vmem:[#allocation2 + $0xa9] sm:$0xff]
      %v920 = vld [vmem:[#allocation2 + $0xb1] sm:$0xff]
      %v921 = vld [vmem:[#allocation2 + $0xb9] sm:$0xff]
      %v922 = vld [vmem:[#allocation2 + $0xc1] sm:$0xff]
      %v923 = vld [vmem:[#allocation2 + $0xc9] sm:$0xff]
      %v924 = vld [vmem:[#allocation2 + $0xd1] sm:$0xff]
      %v925 = vld [vmem:[#allocation2 + $0xd9] sm:$0xff]
      %v926 = vld [vmem:[#allocation2 + $0xe1] sm:$0xff]
      %v927 = vld [vmem:[#allocation2 + $0xe9] sm:$0xff]
      %s928 = scalar_lea.vmem %s6, 8
      %v929 = vld [vmem:[%s928] sm:$0xff]
      %v931 = vsel %vm796, %v898, 0
      %v934 = vsel %vm796, %v899, 0
      %v937 = vsel %vm796, %v900, 0
      %v940 = vsel %vm796, %v901, 0
      %v943 = vsel %vm796, %v902, 0
      %v946 = vsel %vm796, %v903, 0
      %v949 = vsel %vm796, %v904, 0
      %v952 = vsel %vm796, %v905, 0
      %v955 = vsel %vm796, %v906, 0
      %v958 = vsel %vm796, %v907, 0
      %v961 = vsel %vm796, %v908, 0
      %v964 = vsel %vm796, %v909, 0
      %v967 = vsel %vm796, %v910, 0
      %v970 = vsel %vm796, %v911, 0
      %v973 = vsel %vm796, %v912, 0
      %v976 = vsel %vm796, %v913, 0
      %v979 = vsel %vm796, %v914, 0
      %v982 = vsel %vm796, %v915, 0
      %v985 = vsel %vm796, %v916, 0
      %v988 = vsel %vm796, %v917, 0
      %v991 = vsel %vm796, %v918, 0
      %v994 = vsel %vm796, %v919, 0
      %v997 = vsel %vm796, %v920, 0
      %v1000 = vsel %vm796, %v921, 0
      %v1003 = vsel %vm796, %v922, 0
      %v1006 = vsel %vm796, %v923, 0
      %v1009 = vsel %vm796, %v924, 0
      %v1012 = vsel %vm796, %v925, 0
      %v1015 = vsel %vm796, %v926, 0
      %v1018 = vsel %vm796, %v927, 0
      %1020 = vmatprep.subr.mxu0 0.0
      %1021 = vmatpush1.msra.mxu0 %v929
      %1022 = vmatprep.subr.mxu0 0.0
      %1023 = vmatpush1.msra.mxu0 0.0
      %1024 = vmatprep.subr.mxu0 0.0
      %1025 = vmatpush1.msra.mxu0 0.0
      %1026 = vmatprep.subr.mxu0 0.0
      %1027 = vmatpush1.msra.mxu0 0.0
      %1028 = vmatprep.subr.mxu0 0.0
      %1029 = vmatpush1.msra.mxu0 0.0
      %1030 = vmatprep.subr.mxu0 0.0
      %1031 = vmatpush1.msra.mxu0 0.0
      %1032 = vmatprep.subr.mxu0 0.0
      %1033 = vmatpush1.msra.mxu0 0.0
      %1034 = vmatprep.subr.mxu0 0.0
      %1035 = vmatpush1.msra.mxu0 0.0
      %1036 = vmatprep.subr.mxu0 0.0
      %1037 = vmatpush1.msra.mxu0 0.0
      %1038 = vmatprep.subr.mxu0 0.0
      %1039 = vmatpush1.msra.mxu0 0.0
      %1040 = vmatprep.subr.mxu0 0.0
      %1041 = vmatpush1.msra.mxu0 0.0
      %1042 = vmatprep.subr.mxu0 0.0
      %1043 = vmatpush1.msra.mxu0 0.0
      %1044 = vmatprep.subr.mxu0 0.0
      %1045 = vmatpush1.msra.mxu0 0.0
      %1046 = vmatprep.subr.mxu0 0.0
      %1047 = vmatpush1.msra.mxu0 0.0
      %1048 = vmatprep.subr.mxu0 0.0
      %1049 = vmatpush1.msra.mxu0 0.0
      %1050 = vmatprep.subr.mxu0 0.0
      %1051 = vmatpush1.msra.mxu0 0.0
      %1052 = vmatprep.subr.mxu0 0.0
      %1053 = vmatpush1.msra.mxu0 0.0
      %1054 = vmatprep.subr.mxu0 0.0
      %1055 = vmatpush1.msra.mxu0 0.0
      %1056 = vmatprep.subr.mxu0 0.0
      %1057 = vmatpush1.msra.mxu0 0.0
      %1058 = vmatprep.subr.mxu0 0.0
      %1059 = vmatpush1.msra.mxu0 0.0
      %1060 = vmatprep.subr.mxu0 0.0
      %1061 = vmatpush1.msra.mxu0 0.0
      %1062 = vmatprep.subr.mxu0 0.0
      %1063 = vmatpush1.msra.mxu0 0.0
      %1064 = vmatprep.subr.mxu0 0.0
      %1065 = vmatpush1.msra.mxu0 0.0
      %1066 = vmatprep.subr.mxu0 0.0
      %1067 = vmatpush1.msra.mxu0 0.0
      %1068 = vmatprep.subr.mxu0 0.0
      %1069 = vmatpush1.msra.mxu0 0.0
      %1070 = vmatprep.subr.mxu0 0.0
      %1071 = vmatpush1.msra.mxu0 0.0
      %1072 = vmatprep.subr.mxu0 0.0
      %1073 = vmatpush1.msra.mxu0 0.0
      %1074 = vmatprep.subr.mxu0 0.0
      %1075 = vmatpush1.msra.mxu0 0.0
      %1076 = vmatprep.subr.mxu0 0.0
      %1077 = vmatpush1.msra.mxu0 0.0
      %1078 = vmatprep.subr.mxu0 0.0
      %1079 = vmatpush1.msra.mxu0 0.0
      %1080 = vmatprep.subr.mxu0 0.0
      %1081 = vmatpush1.msra.mxu0 0.0
      %1082 = vmatprep.subr.mxu0 0.0
      %1083 = vmatpush1.msra.mxu0 0.0
      %1084 = vmatprep.mubr.f32.mxu0 0.0
      %1085 = vmatmul.mubr.f32.gmra.mrb[0].mxu0 %v931
      %v1086 = vpop.f32.mrb[0].mxu0
      %v1087 = vadd.f32 0.0, %v1086
      %v1088 = vpop.f32.mrb[0].mxu0
      %1089 = vmatprep.mubr.f32.mxu0 0.0
      %1090 = vmatmul.mubr.f32.gmra.mrb[0].mxu0 %v934
      %v1091 = vpop.f32.mrb[0].mxu0
      %v1092 = vadd.f32 0.0, %v1091
      %v1093 = vpop.f32.mrb[0].mxu0
      %1094 = vmatprep.mubr.f32.mxu0 0.0
      %1095 = vmatmul.mubr.f32.gmra.mrb[0].mxu0 %v937
      %v1096 = vpop.f32.mrb[0].mxu0
      %v1097 = vadd.f32 0.0, %v1096
      %v1098 = vpop.f32.mrb[0].mxu0
      %1099 = vmatprep.mubr.f32.mxu0 0.0
      %1100 = vmatmul.mubr.f32.gmra.mrb[0].mxu0 %v940
      %v1101 = vpop.f32.mrb[0].mxu0
      %v1102 = vadd.f32 0.0, %v1101
      %v1103 = vpop.f32.mrb[0].mxu0
      %1104 = vmatprep.mubr.f32.mxu0 0.0
      %1105 = vmatmul.mubr.f32.gmra.mrb[0].mxu0 %v943
      %v1106 = vpop.f32.mrb[0].mxu0
      %v1107 = vadd.f32 0.0, %v1106
      %v1108 = vpop.f32.mrb[0].mxu0
      %1109 = vmatprep.mubr.f32.mxu0 0.0
      %1110 = vmatmul.mubr.f32.gmra.mrb[0].mxu0 %v946
      %v1111 = vpop.f32.mrb[0].mxu0
      %v1112 = vadd.f32 0.0, %v1111
      %v1113 = vpop.f32.mrb[0].mxu0
      %1114 = vmatprep.mubr.f32.mxu0 0.0
      %1115 = vmatmul.mubr.f32.gmra.mrb[0].mxu0 %v949
      %v1116 = vpop.f32.mrb[0].mxu0
      %v1117 = vadd.f32 0.0, %v1116
      %v1118 = vpop.f32.mrb[0].mxu0
      %1119 = vmatprep.mubr.f32.mxu0 0.0
      %1120 = vmatmul.mubr.f32.gmra.mrb[0].mxu0 %v952
      %v1121 = vpop.f32.mrb[0].mxu0
      %v1122 = vadd.f32 0.0, %v1121
      %v1123 = vpop.f32.mrb[0].mxu0
      %1124 = vmatprep.mubr.f32.mxu0 0.0
      %1125 = vmatmul.mubr.f32.gmra.mrb[0].mxu0 %v955
      %v1126 = vpop.f32.mrb[0].mxu0
      %v1127 = vadd.f32 0.0, %v1126
      %v1128 = vpop.f32.mrb[0].mxu0
      %1129 = vmatprep.mubr.f32.mxu0 0.0
      %1130 = vmatmul.mubr.f32.gmra.mrb[0].mxu0 %v958
      %v1131 = vpop.f32.mrb[0].mxu0
      %v1132 = vadd.f32 0.0, %v1131
      %v1133 = vpop.f32.mrb[0].mxu0
      %1134 = vmatprep.mubr.f32.mxu0 0.0
      %1135 = vmatmul.mubr.f32.gmra.mrb[0].mxu0 %v961
      %v1136 = vpop.f32.mrb[0].mxu0
      %v1137 = vadd.f32 0.0, %v1136
      %v1138 = vpop.f32.mrb[0].mxu0
      %1139 = vmatprep.mubr.f32.mxu0 0.0
      %1140 = vmatmul.mubr.f32.gmra.mrb[0].mxu0 %v964
      %v1141 = vpop.f32.mrb[0].mxu0
      %v1142 = vadd.f32 0.0, %v1141
      %v1143 = vpop.f32.mrb[0].mxu0
      %1144 = vmatprep.mubr.f32.mxu0 0.0
      %1145 = vmatmul.mubr.f32.gmra.mrb[0].mxu0 %v967
      %v1146 = vpop.f32.mrb[0].mxu0
      %v1147 = vadd.f32 0.0, %v1146
      %v1148 = vpop.f32.mrb[0].mxu0
      %1149 = vmatprep.mubr.f32.mxu0 0.0
      %1150 = vmatmul.mubr.f32.gmra.mrb[0].mxu0 %v970
      %v1151 = vpop.f32.mrb[0].mxu0
      %v1152 = vadd.f32 0.0, %v1151
      %v1153 = vpop.f32.mrb[0].mxu0
      %1154 = vmatprep.mubr.f32.mxu0 0.0
      %1155 = vmatmul.mubr.f32.gmra.mrb[0].mxu0 %v973
      %v1156 = vpop.f32.mrb[0].mxu0
      %v1157 = vadd.f32 0.0, %v1156
      %v1158 = vpop.f32.mrb[0].mxu0
      %1159 = vmatprep.mubr.f32.mxu0 0.0
      %1160 = vmatmul.mubr.f32.gmra.mrb[0].mxu0 %v976
      %v1161 = vpop.f32.mrb[0].mxu0
      %v1162 = vadd.f32 0.0, %v1161
      %v1163 = vpop.f32.mrb[0].mxu0
      %1164 = vmatprep.mubr.f32.mxu0 0.0
      %1165 = vmatmul.mubr.f32.gmra.mrb[0].mxu0 %v979
      %v1166 = vpop.f32.mrb[0].mxu0
      %v1167 = vadd.f32 0.0, %v1166
      %v1168 = vpop.f32.mrb[0].mxu0
      %1169 = vmatprep.mubr.f32.mxu0 0.0
      %1170 = vmatmul.mubr.f32.gmra.mrb[0].mxu0 %v982
      %v1171 = vpop.f32.mrb[0].mxu0
      %v1172 = vadd.f32 0.0, %v1171
      %v1173 = vpop.f32.mrb[0].mxu0
      %1174 = vmatprep.mubr.f32.mxu0 0.0
      %1175 = vmatmul.mubr.f32.gmra.mrb[0].mxu0 %v985
      %v1176 = vpop.f32.mrb[0].mxu0
      %v1177 = vadd.f32 0.0, %v1176
      %v1178 = vpop.f32.mrb[0].mxu0
      %1179 = vmatprep.mubr.f32.mxu0 0.0
      %1180 = vmatmul.mubr.f32.gmra.mrb[0].mxu0 %v988
      %v1181 = vpop.f32.mrb[0].mxu0
      %v1182 = vadd.f32 0.0, %v1181
      %v1183 = vpop.f32.mrb[0].mxu0
      %1184 = vmatprep.mubr.f32.mxu0 0.0
      %1185 = vmatmul.mubr.f32.gmra.mrb[0].mxu0 %v991
      %v1186 = vpop.f32.mrb[0].mxu0
      %v1187 = vadd.f32 0.0, %v1186
      %v1188 = vpop.f32.mrb[0].mxu0
      %1189 = vmatprep.mubr.f32.mxu0 0.0
      %1190 = vmatmul.mubr.f32.gmra.mrb[0].mxu0 %v994
      %v1191 = vpop.f32.mrb[0].mxu0
      %v1192 = vadd.f32 0.0, %v1191
      %v1193 = vpop.f32.mrb[0].mxu0
      %1194 = vmatprep.mubr.f32.mxu0 0.0
      %1195 = vmatmul.mubr.f32.gmra.mrb[0].mxu0 %v997
      %v1196 = vpop.f32.mrb[0].mxu0
      %v1197 = vadd.f32 0.0, %v1196
      %v1198 = vpop.f32.mrb[0].mxu0
      %1199 = vmatprep.mubr.f32.mxu0 0.0
      %1200 = vmatmul.mubr.f32.gmra.mrb[0].mxu0 %v1000
      %v1201 = vpop.f32.mrb[0].mxu0
      %v1202 = vadd.f32 0.0, %v1201
      %v1203 = vpop.f32.mrb[0].mxu0
      %1204 = vmatprep.mubr.f32.mxu0 0.0
      %1205 = vmatmul.mubr.f32.gmra.mrb[0].mxu0 %v1003
      %v1206 = vpop.f32.mrb[0].mxu0
      %v1207 = vadd.f32 0.0, %v1206
      %v1208 = vpop.f32.mrb[0].mxu0
      %1209 = vmatprep.mubr.f32.mxu0 0.0
      %1210 = vmatmul.mubr.f32.gmra.mrb[0].mxu0 %v1006
      %v1211 = vpop.f32.mrb[0].mxu0
      %v1212 = vadd.f32 0.0, %v1211
      %v1213 = vpop.f32.mrb[0].mxu0
      %1214 = vmatprep.mubr.f32.mxu0 0.0
      %1215 = vmatmul.mubr.f32.gmra.mrb[0].mxu0 %v1009
      %v1216 = vpop.f32.mrb[0].mxu0
      %v1217 = vadd.f32 0.0, %v1216
      %v1218 = vpop.f32.mrb[0].mxu0
      %1219 = vmatprep.mubr.f32.mxu0 0.0
      %1220 = vmatmul.mubr.f32.gmra.mrb[0].mxu0 %v1012
      %v1221 = vpop.f32.mrb[0].mxu0
      %v1222 = vadd.f32 0.0, %v1221
      %v1223 = vpop.f32.mrb[0].mxu0
      %1224 = vmatprep.mubr.f32.mxu0 0.0
      %1225 = vmatmul.mubr.f32.gmra.mrb[0].mxu0 %v1015
      %v1226 = vpop.f32.mrb[0].mxu0
      %v1227 = vadd.f32 0.0, %v1226
      %v1228 = vpop.f32.mrb[0].mxu0
      %1229 = vmatprep.mubr.f32.mxu0 0.0
      %1230 = vmatmul.mubr.f32.gmra.mrb[0].mxu0 %v1018
      %v1231 = vpop.f32.mrb[0].mxu0
      %v1232 = vadd.f32 0.0, %v1231
      %v1233 = vpop.f32.mrb[0].mxu0
      %1234 = vdwg.mxu0
      %v1236 = vsel %vm796, %v867, 0
      %v1239 = vsel %vm796, %v868, 0
      %v1242 = vsel %vm796, %v869, 0
      %v1245 = vsel %vm796, %v870, 0
      %v1248 = vsel %vm796, %v871, 0
      %v1251 = vsel %vm796, %v872, 0
      %v1254 = vsel %vm796, %v873, 0
      %v1257 = vsel %vm796, %v874, 0
      %v1260 = vsel %vm796, %v875, 0
      %v1263 = vsel %vm796, %v876, 0
      %v1266 = vsel %vm796, %v877, 0
      %v1269 = vsel %vm796, %v878, 0
      %v1272 = vsel %vm796, %v879, 0
      %v1275 = vsel %vm796, %v880, 0
      %v1278 = vsel %vm796, %v881, 0
      %v1281 = vsel %vm796, %v882, 0
      %v1284 = vsel %vm796, %v883, 0
      %v1287 = vsel %vm796, %v884, 0
      %v1290 = vsel %vm796, %v885, 0
      %v1293 = vsel %vm796, %v886, 0
      %v1296 = vsel %vm796, %v887, 0
      %v1299 = vsel %vm796, %v888, 0
      %v1302 = vsel %vm796, %v889, 0
      %v1305 = vsel %vm796, %v890, 0
      %v1308 = vsel %vm796, %v891, 0
      %v1311 = vsel %vm796, %v892, 0
      %v1314 = vsel %vm796, %v893, 0
      %v1317 = vsel %vm796, %v894, 0
      %v1320 = vsel %vm796, %v895, 0
      %v1323 = vsel %vm796, %v896, 0
      %1325 = vmatprep.subr.mxu0 0.0
      %1326 = vmatpush1.msra.mxu0 %v897
      %1327 = vmatprep.subr.mxu0 0.0
      %1328 = vmatpush1.msra.mxu0 0.0
      %1329 = vmatprep.subr.mxu0 0.0
      %1330 = vmatpush1.msra.mxu0 0.0
      %1331 = vmatprep.subr.mxu0 0.0
      %1332 = vmatpush1.msra.mxu0 0.0
      %1333 = vmatprep.subr.mxu0 0.0
      %1334 = vmatpush1.msra.mxu0 0.0
      %1335 = vmatprep.subr.mxu0 0.0
      %1336 = vmatpush1.msra.mxu0 0.0
      %1337 = vmatprep.subr.mxu0 0.0
      %1338 = vmatpush1.msra.mxu0 0.0
      %1339 = vmatprep.subr.mxu0 0.0
      %1340 = vmatpush1.msra.mxu0 0.0
      %1341 = vmatprep.subr.mxu0 0.0
      %1342 = vmatpush1.msra.mxu0 0.0
      %1343 = vmatprep.subr.mxu0 0.0
      %1344 = vmatpush1.msra.mxu0 0.0
      %1345 = vmatprep.subr.mxu0 0.0
      %1346 = vmatpush1.msra.mxu0 0.0
      %1347 = vmatprep.subr.mxu0 0.0
      %1348 = vmatpush1.msra.mxu0 0.0
      %1349 = vmatprep.subr.mxu0 0.0
      %1350 = vmatpush1.msra.mxu0 0.0
      %1351 = vmatprep.subr.mxu0 0.0
      %1352 = vmatpush1.msra.mxu0 0.0
      %1353 = vmatprep.subr.mxu0 0.0
      %1354 = vmatpush1.msra.mxu0 0.0
      %1355 = vmatprep.subr.mxu0 0.0
      %1356 = vmatpush1.msra.mxu0 0.0
      %1357 = vmatprep.subr.mxu0 0.0
      %1358 = vmatpush1.msra.mxu0 0.0
      %1359 = vmatprep.subr.mxu0 0.0
      %1360 = vmatpush1.msra.mxu0 0.0
      %1361 = vmatprep.subr.mxu0 0.0
      %1362 = vmatpush1.msra.mxu0 0.0
      %1363 = vmatprep.subr.mxu0 0.0
      %1364 = vmatpush1.msra.mxu0 0.0
      %1365 = vmatprep.subr.mxu0 0.0
      %1366 = vmatpush1.msra.mxu0 0.0
      %1367 = vmatprep.subr.mxu0 0.0
      %1368 = vmatpush1.msra.mxu0 0.0
      %1369 = vmatprep.subr.mxu0 0.0
      %1370 = vmatpush1.msra.mxu0 0.0
      %1371 = vmatprep.subr.mxu0 0.0
      %1372 = vmatpush1.msra.mxu0 0.0
      %1373 = vmatprep.subr.mxu0 0.0
      %1374 = vmatpush1.msra.mxu0 0.0
      %1375 = vmatprep.subr.mxu0 0.0
      %1376 = vmatpush1.msra.mxu0 0.0
      %1377 = vmatprep.subr.mxu0 0.0
      %1378 = vmatpush1.msra.mxu0 0.0
      %1379 = vmatprep.subr.mxu0 0.0
      %1380 = vmatpush1.msra.mxu0 0.0
      %1381 = vmatprep.subr.mxu0 0.0
      %1382 = vmatpush1.msra.mxu0 0.0
      %1383 = vmatprep.subr.mxu0 0.0
      %1384 = vmatpush1.msra.mxu0 0.0
      %1385 = vmatprep.subr.mxu0 0.0
      %1386 = vmatpush1.msra.mxu0 0.0
      %1387 = vmatprep.subr.mxu0 0.0
      %1388 = vmatpush1.msra.mxu0 0.0
      %1389 = vmatprep.mubr.f32.mxu0 0.0
      %1390 = vmatmul.mubr.f32.gmra.mrb[0].mxu0 %v1236
      %v1391 = vpop.f32.mrb[0].mxu0
      %v1392 = vadd.f32 %v1087, %v1391
      %v1393 = vpop.f32.mrb[0].mxu0
      %1394 = vmatprep.mubr.f32.mxu0 0.0
      %1395 = vmatmul.mubr.f32.gmra.mrb[0].mxu0 %v1239
      %v1396 = vpop.f32.mrb[0].mxu0
      %v1397 = vadd.f32 %v1092, %v1396
      %v1398 = vpop.f32.mrb[0].mxu0
      %1399 = vmatprep.mubr.f32.mxu0 0.0
      %1400 = vmatmul.mubr.f32.gmra.mrb[0].mxu0 %v1242
      %v1401 = vpop.f32.mrb[0].mxu0
      %v1402 = vadd.f32 %v1097, %v1401
      %v1403 = vpop.f32.mrb[0].mxu0
      %1404 = vmatprep.mubr.f32.mxu0 0.0
      %1405 = vmatmul.mubr.f32.gmra.mrb[0].mxu0 %v1245
      %v1406 = vpop.f32.mrb[0].mxu0
      %v1407 = vadd.f32 %v1102, %v1406
      %v1408 = vpop.f32.mrb[0].mxu0
      %1409 = vmatprep.mubr.f32.mxu0 0.0
      %1410 = vmatmul.mubr.f32.gmra.mrb[0].mxu0 %v1248
      %v1411 = vpop.f32.mrb[0].mxu0
      %v1412 = vadd.f32 %v1107, %v1411
      %v1413 = vpop.f32.mrb[0].mxu0
      %1414 = vmatprep.mubr.f32.mxu0 0.0
      %1415 = vmatmul.mubr.f32.gmra.mrb[0].mxu0 %v1251
      %v1416 = vpop.f32.mrb[0].mxu0
      %v1417 = vadd.f32 %v1112, %v1416
      %v1418 = vpop.f32.mrb[0].mxu0
      %1419 = vmatprep.mubr.f32.mxu0 0.0
      %1420 = vmatmul.mubr.f32.gmra.mrb[0].mxu0 %v1254
      %v1421 = vpop.f32.mrb[0].mxu0
      %v1422 = vadd.f32 %v1117, %v1421
      %v1423 = vpop.f32.mrb[0].mxu0
      %1424 = vmatprep.mubr.f32.mxu0 0.0
      %1425 = vmatmul.mubr.f32.gmra.mrb[0].mxu0 %v1257
      %v1426 = vpop.f32.mrb[0].mxu0
      %v1427 = vadd.f32 %v1122, %v1426
      %v1428 = vpop.f32.mrb[0].mxu0
      %1429 = vmatprep.mubr.f32.mxu0 0.0
      %1430 = vmatmul.mubr.f32.gmra.mrb[0].mxu0 %v1260
      %v1431 = vpop.f32.mrb[0].mxu0
      %v1432 = vadd.f32 %v1127, %v1431
      %v1433 = vpop.f32.mrb[0].mxu0
      %1434 = vmatprep.mubr.f32.mxu0 0.0
      %1435 = vmatmul.mubr.f32.gmra.mrb[0].mxu0 %v1263
      %v1436 = vpop.f32.mrb[0].mxu0
      %v1437 = vadd.f32 %v1132, %v1436
      %v1438 = vpop.f32.mrb[0].mxu0
      %1439 = vmatprep.mubr.f32.mxu0 0.0
      %1440 = vmatmul.mubr.f32.gmra.mrb[0].mxu0 %v1266
      %v1441 = vpop.f32.mrb[0].mxu0
      %v1442 = vadd.f32 %v1137, %v1441
      %v1443 = vpop.f32.mrb[0].mxu0
      %1444 = vmatprep.mubr.f32.mxu0 0.0
      %1445 = vmatmul.mubr.f32.gmra.mrb[0].mxu0 %v1269
      %v1446 = vpop.f32.mrb[0].mxu0
      %v1447 = vadd.f32 %v1142, %v1446
      %v1448 = vpop.f32.mrb[0].mxu0
      %1449 = vmatprep.mubr.f32.mxu0 0.0
      %1450 = vmatmul.mubr.f32.gmra.mrb[0].mxu0 %v1272
      %v1451 = vpop.f32.mrb[0].mxu0
      %v1452 = vadd.f32 %v1147, %v1451
      %v1453 = vpop.f32.mrb[0].mxu0
      %1454 = vmatprep.mubr.f32.mxu0 0.0
      %1455 = vmatmul.mubr.f32.gmra.mrb[0].mxu0 %v1275
      %v1456 = vpop.f32.mrb[0].mxu0
      %v1457 = vadd.f32 %v1152, %v1456
      %v1458 = vpop.f32.mrb[0].mxu0
      %1459 = vmatprep.mubr.f32.mxu0 0.0
      %1460 = vmatmul.mubr.f32.gmra.mrb[0].mxu0 %v1278
      %v1461 = vpop.f32.mrb[0].mxu0
      %v1462 = vadd.f32 %v1157, %v1461
      %v1463 = vpop.f32.mrb[0].mxu0
      %1464 = vmatprep.mubr.f32.mxu0 0.0
      %1465 = vmatmul.mubr.f32.gmra.mrb[0].mxu0 %v1281
      %v1466 = vpop.f32.mrb[0].mxu0
      %v1467 = vadd.f32 %v1162, %v1466
      %v1468 = vpop.f32.mrb[0].mxu0
      %1469 = vmatprep.mubr.f32.mxu0 0.0
      %1470 = vmatmul.mubr.f32.gmra.mrb[0].mxu0 %v1284
      %v1471 = vpop.f32.mrb[0].mxu0
      %v1472 = vadd.f32 %v1167, %v1471
      %v1473 = vpop.f32.mrb[0].mxu0
      %1474 = vmatprep.mubr.f32.mxu0 0.0
      %1475 = vmatmul.mubr.f32.gmra.mrb[0].mxu0 %v1287
      %v1476 = vpop.f32.mrb[0].mxu0
      %v1477 = vadd.f32 %v1172, %v1476
      %v1478 = vpop.f32.mrb[0].mxu0
      %1479 = vmatprep.mubr.f32.mxu0 0.0
      %1480 = vmatmul.mubr.f32.gmra.mrb[0].mxu0 %v1290
      %v1481 = vpop.f32.mrb[0].mxu0
      %v1482 = vadd.f32 %v1177, %v1481
      %v1483 = vpop.f32.mrb[0].mxu0
      %1484 = vmatprep.mubr.f32.mxu0 0.0
      %1485 = vmatmul.mubr.f32.gmra.mrb[0].mxu0 %v1293
      %v1486 = vpop.f32.mrb[0].mxu0
      %v1487 = vadd.f32 %v1182, %v1486
      %v1488 = vpop.f32.mrb[0].mxu0
      %1489 = vmatprep.mubr.f32.mxu0 0.0
      %1490 = vmatmul.mubr.f32.gmra.mrb[0].mxu0 %v1296
      %v1491 = vpop.f32.mrb[0].mxu0
      %v1492 = vadd.f32 %v1187, %v1491
      %v1493 = vpop.f32.mrb[0].mxu0
      %1494 = vmatprep.mubr.f32.mxu0 0.0
      %1495 = vmatmul.mubr.f32.gmra.mrb[0].mxu0 %v1299
      %v1496 = vpop.f32.mrb[0].mxu0
      %v1497 = vadd.f32 %v1192, %v1496
      %v1498 = vpop.f32.mrb[0].mxu0
      %1499 = vmatprep.mubr.f32.mxu0 0.0
      %1500 = vmatmul.mubr.f32.gmra.mrb[0].mxu0 %v1302
      %v1501 = vpop.f32.mrb[0].mxu0
      %v1502 = vadd.f32 %v1197, %v1501
      %v1503 = vpop.f32.mrb[0].mxu0
      %1504 = vmatprep.mubr.f32.mxu0 0.0
      %1505 = vmatmul.mubr.f32.gmra.mrb[0].mxu0 %v1305
      %v1506 = vpop.f32.mrb[0].mxu0
      %v1507 = vadd.f32 %v1202, %v1506
      %v1508 = vpop.f32.mrb[0].mxu0
      %1509 = vmatprep.mubr.f32.mxu0 0.0
      %1510 = vmatmul.mubr.f32.gmra.mrb[0].mxu0 %v1308
      %v1511 = vpop.f32.mrb[0].mxu0
      %v1512 = vadd.f32 %v1207, %v1511
      %v1513 = vpop.f32.mrb[0].mxu0
      %1514 = vmatprep.mubr.f32.mxu0 0.0
      %1515 = vmatmul.mubr.f32.gmra.mrb[0].mxu0 %v1311
      %v1516 = vpop.f32.mrb[0].mxu0
      %v1517 = vadd.f32 %v1212, %v1516
      %v1518 = vpop.f32.mrb[0].mxu0
      %1519 = vmatprep.mubr.f32.mxu0 0.0
      %1520 = vmatmul.mubr.f32.gmra.mrb[0].mxu0 %v1314
      %v1521 = vpop.f32.mrb[0].mxu0
      %v1522 = vadd.f32 %v1217, %v1521
      %v1523 = vpop.f32.mrb[0].mxu0
      %1524 = vmatprep.mubr.f32.mxu0 0.0
      %1525 = vmatmul.mubr.f32.gmra.mrb[0].mxu0 %v1317
      %v1526 = vpop.f32.mrb[0].mxu0
      %v1527 = vadd.f32 %v1222, %v1526
      %v1528 = vpop.f32.mrb[0].mxu0
      %1529 = vmatprep.mubr.f32.mxu0 0.0
      %1530 = vmatmul.mubr.f32.gmra.mrb[0].mxu0 %v1320
      %v1531 = vpop.f32.mrb[0].mxu0
      %v1532 = vadd.f32 %v1227, %v1531
      %v1533 = vpop.f32.mrb[0].mxu0
      %1534 = vmatprep.mubr.f32.mxu0 0.0
      %1535 = vmatmul.mubr.f32.gmra.mrb[0].mxu0 %v1323
      %v1536 = vpop.f32.mrb[0].mxu0
      %v1537 = vadd.f32 %v1232, %v1536
      %v1538 = vpop.f32.mrb[0].mxu0
      %1539 = vdwg.mxu0
      %v1540 = vld [vmem:[#allocation2 + $0x2] sm:$0xff]
      %v1541 = vld [vmem:[#allocation2 + $0xa] sm:$0xff]
      %v1542 = vld [vmem:[#allocation2 + $0x12] sm:$0xff]
      %v1543 = vld [vmem:[#allocation2 + $0x1a] sm:$0xff]
      %v1544 = vld [vmem:[#allocation2 + $0x22] sm:$0xff]
      %v1545 = vld [vmem:[#allocation2 + $0x2a] sm:$0xff]
      %v1546 = vld [vmem:[#allocation2 + $0x32] sm:$0xff]
      %v1547 = vld [vmem:[#allocation2 + $0x3a] sm:$0xff]
      %v1548 = vld [vmem:[#allocation2 + $0x42] sm:$0xff]
      %v1549 = vld [vmem:[#allocation2 + $0x4a] sm:$0xff]
      %v1550 = vld [vmem:[#allocation2 + $0x52] sm:$0xff]
      %v1551 = vld [vmem:[#allocation2 + $0x5a] sm:$0xff]
      %v1552 = vld [vmem:[#allocation2 + $0x62] sm:$0xff]
      %v1553 = vld [vmem:[#allocation2 + $0x6a] sm:$0xff]
      %v1554 = vld [vmem:[#allocation2 + $0x72] sm:$0xff]
      %v1555 = vld [vmem:[#allocation2 + $0x7a] sm:$0xff]
      %v1556 = vld [vmem:[#allocation2 + $0x82] sm:$0xff]
      %v1557 = vld [vmem:[#allocation2 + $0x8a] sm:$0xff]
      %v1558 = vld [vmem:[#allocation2 + $0x92] sm:$0xff]
      %v1559 = vld [vmem:[#allocation2 + $0x9a] sm:$0xff]
      %v1560 = vld [vmem:[#allocation2 + $0xa2] sm:$0xff]
      %v1561 = vld [vmem:[#allocation2 + $0xaa] sm:$0xff]
      %v1562 = vld [vmem:[#allocation2 + $0xb2] sm:$0xff]
      %v1563 = vld [vmem:[#allocation2 + $0xba] sm:$0xff]
      %v1564 = vld [vmem:[#allocation2 + $0xc2] sm:$0xff]
      %v1565 = vld [vmem:[#allocation2 + $0xca] sm:$0xff]
      %v1566 = vld [vmem:[#allocation2 + $0xd2] sm:$0xff]
      %v1567 = vld [vmem:[#allocation2 + $0xda] sm:$0xff]
      %v1568 = vld [vmem:[#allocation2 + $0xe2] sm:$0xff]
      %v1569 = vld [vmem:[#allocation2 + $0xea] sm:$0xff]
      %s1570 = scalar_lea.vmem %s6, 16
      %v1571 = vld [vmem:[%s1570] sm:$0xff]
      %v1573 = vsel %vm796, %v1540, 0
      %v1576 = vsel %vm796, %v1541, 0
      %v1579 = vsel %vm796, %v1542, 0
      %v1582 = vsel %vm796, %v1543, 0
      %v1585 = vsel %vm796, %v1544, 0
      %v1588 = vsel %vm796, %v1545, 0
      %v1591 = vsel %vm796, %v1546, 0
      %v1594 = vsel %vm796, %v1547, 0
      %v1597 = vsel %vm796, %v1548, 0
      %v1600 = vsel %vm796, %v1549, 0
      %v1603 = vsel %vm796, %v1550, 0
      %v1606 = vsel %vm796, %v1551, 0
      %v1609 = vsel %vm796, %v1552, 0
      %v1612 = vsel %vm796, %v1553, 0
      %v1615 = vsel %vm796, %v1554, 0
      %v1618 = vsel %vm796, %v1555, 0
      %v1621 = vsel %vm796, %v1556, 0
      %v1624 = vsel %vm796, %v1557, 0
      %v1627 = vsel %vm796, %v1558, 0
      %v1630 = vsel %vm796, %v1559, 0
      %v1633 = vsel %vm796, %v1560, 0
      %v1636 = vsel %vm796, %v1561, 0
      %v1639 = vsel %vm796, %v1562, 0
      %v1642 = vsel %vm796, %v1563, 0
      %v1645 = vsel %vm796, %v1564, 0
      %v1648 = vsel %vm796, %v1565, 0
      %v1651 = vsel %vm796, %v1566, 0
      %v1654 = vsel %vm796, %v1567, 0
      %v1657 = vsel %vm796, %v1568, 0
      %v1660 = vsel %vm796, %v1569, 0
      %1662 = vmatprep.subr.mxu0 0.0
      %1663 = vmatpush1.msra.mxu0 %v1571
      %1664 = vmatprep.subr.mxu0 0.0
      %1665 = vmatpush1.msra.mxu0 0.0
      %1666 = vmatprep.subr.mxu0 0.0
      %1667 = vmatpush1.msra.mxu0 0.0
      %1668 = vmatprep.subr.mxu0 0.0
      %1669 = vmatpush1.msra.mxu0 0.0
      %1670 = vmatprep.subr.mxu0 0.0
      %1671 = vmatpush1.msra.mxu0 0.0
      %1672 = vmatprep.subr.mxu0 0.0
      %1673 = vmatpush1.msra.mxu0 0.0
      %1674 = vmatprep.subr.mxu0 0.0
      %1675 = vmatpush1.msra.mxu0 0.0
      %1676 = vmatprep.subr.mxu0 0.0
      %1677 = vmatpush1.msra.mxu0 0.0
      %1678 = vmatprep.subr.mxu0 0.0
      %1679 = vmatpush1.msra.mxu0 0.0
      %1680 = vmatprep.subr.mxu0 0.0
      %1681 = vmatpush1.msra.mxu0 0.0
      %1682 = vmatprep.subr.mxu0 0.0
      %1683 = vmatpush1.msra.mxu0 0.0
      %1684 = vmatprep.subr.mxu0 0.0
      %1685 = vmatpush1.msra.mxu0 0.0
      %1686 = vmatprep.subr.mxu0 0.0
      %1687 = vmatpush1.msra.mxu0 0.0
      %1688 = vmatprep.subr.mxu0 0.0
      %1689 = vmatpush1.msra.mxu0 0.0
      %1690 = vmatprep.subr.mxu0 0.0
      %1691 = vmatpush1.msra.mxu0 0.0
      %1692 = vmatprep.subr.mxu0 0.0
      %1693 = vmatpush1.msra.mxu0 0.0
      %1694 = vmatprep.subr.mxu0 0.0
      %1695 = vmatpush1.msra.mxu0 0.0
      %1696 = vmatprep.subr.mxu0 0.0
      %1697 = vmatpush1.msra.mxu0 0.0
      %1698 = vmatprep.subr.mxu0 0.0
      %1699 = vmatpush1.msra.mxu0 0.0
      %1700 = vmatprep.subr.mxu0 0.0
      %1701 = vmatpush1.msra.mxu0 0.0
      %1702 = vmatprep.subr.mxu0 0.0
      %1703 = vmatpush1.msra.mxu0 0.0
      %1704 = vmatprep.subr.mxu0 0.0
      %1705 = vmatpush1.msra.mxu0 0.0
      %1706 = vmatprep.subr.mxu0 0.0
      %1707 = vmatpush1.msra.mxu0 0.0
      %1708 = vmatprep.subr.mxu0 0.0
      %1709 = vmatpush1.msra.mxu0 0.0
      %1710 = vmatprep.subr.mxu0 0.0
      %1711 = vmatpush1.msra.mxu0 0.0
      %1712 = vmatprep.subr.mxu0 0.0
      %1713 = vmatpush1.msra.mxu0 0.0
      %1714 = vmatprep.subr.mxu0 0.0
      %1715 = vmatpush1.msra.mxu0 0.0
      %1716 = vmatprep.subr.mxu0 0.0
      %1717 = vmatpush1.msra.mxu0 0.0
      %1718 = vmatprep.subr.mxu0 0.0
      %1719 = vmatpush1.msra.mxu0 0.0
      %1720 = vmatprep.subr.mxu0 0.0
      %1721 = vmatpush1.msra.mxu0 0.0
      %1722 = vmatprep.subr.mxu0 0.0
      %1723 = vmatpush1.msra.mxu0 0.0
      %1724 = vmatprep.subr.mxu0 0.0
      %1725 = vmatpush1.msra.mxu0 0.0
      %1726 = vmatprep.mubr.f32.mxu0 0.0
      %1727 = vmatmul.mubr.f32.gmra.mrb[0].mxu0 %v1573
      %v1728 = vpop.f32.mrb[0].mxu0
      %v1729 = vadd.f32 0.0, %v1728
      %v1730 = vpop.f32.mrb[0].mxu0
      %1731 = vmatprep.mubr.f32.mxu0 0.0
      %1732 = vmatmul.mubr.f32.gmra.mrb[0].mxu0 %v1576
      %v1733 = vpop.f32.mrb[0].mxu0
      %v1734 = vadd.f32 0.0, %v1733
      %v1735 = vpop.f32.mrb[0].mxu0
      %1736 = vmatprep.mubr.f32.mxu0 0.0
      %1737 = vmatmul.mubr.f32.gmra.mrb[0].mxu0 %v1579
      %v1738 = vpop.f32.mrb[0].mxu0
      %v1739 = vadd.f32 0.0, %v1738
      %v1740 = vpop.f32.mrb[0].mxu0
      %1741 = vmatprep.mubr.f32.mxu0 0.0
      %1742 = vmatmul.mubr.f32.gmra.mrb[0].mxu0 %v1582
      %v1743 = vpop.f32.mrb[0].mxu0
      %v1744 = vadd.f32 0.0, %v1743
      %v1745 = vpop.f32.mrb[0].mxu0
      %1746 = vmatprep.mubr.f32.mxu0 0.0
      %1747 = vmatmul.mubr.f32.gmra.mrb[0].mxu0 %v1585
      %v1748 = vpop.f32.mrb[0].mxu0
      %v1749 = vadd.f32 0.0, %v1748
      %v1750 = vpop.f32.mrb[0].mxu0
      %1751 = vmatprep.mubr.f32.mxu0 0.0
      %1752 = vmatmul.mubr.f32.gmra.mrb[0].mxu0 %v1588
      %v1753 = vpop.f32.mrb[0].mxu0
      %v1754 = vadd.f32 0.0, %v1753
      %v1755 = vpop.f32.mrb[0].mxu0
      %1756 = vmatprep.mubr.f32.mxu0 0.0
      %1757 = vmatmul.mubr.f32.gmra.mrb[0].mxu0 %v1591
      %v1758 = vpop.f32.mrb[0].mxu0
      %v1759 = vadd.f32 0.0, %v1758
      %v1760 = vpop.f32.mrb[0].mxu0
      %1761 = vmatprep.mubr.f32.mxu0 0.0
      %1762 = vmatmul.mubr.f32.gmra.mrb[0].mxu0 %v1594
      %v1763 = vpop.f32.mrb[0].mxu0
      %v1764 = vadd.f32 0.0, %v1763
      %v1765 = vpop.f32.mrb[0].mxu0
      %1766 = vmatprep.mubr.f32.mxu0 0.0
      %1767 = vmatmul.mubr.f32.gmra.mrb[0].mxu0 %v1597
      %v1768 = vpop.f32.mrb[0].mxu0
      %v1769 = vadd.f32 0.0, %v1768
      %v1770 = vpop.f32.mrb[0].mxu0
      %1771 = vmatprep.mubr.f32.mxu0 0.0
      %1772 = vmatmul.mubr.f32.gmra.mrb[0].mxu0 %v1600
      %v1773 = vpop.f32.mrb[0].mxu0
      %v1774 = vadd.f32 0.0, %v1773
      %v1775 = vpop.f32.mrb[0].mxu0
      %1776 = vmatprep.mubr.f32.mxu0 0.0
      %1777 = vmatmul.mubr.f32.gmra.mrb[0].mxu0 %v1603
      %v1778 = vpop.f32.mrb[0].mxu0
      %v1779 = vadd.f32 0.0, %v1778
      %v1780 = vpop.f32.mrb[0].mxu0
      %1781 = vmatprep.mubr.f32.mxu0 0.0
      %1782 = vmatmul.mubr.f32.gmra.mrb[0].mxu0 %v1606
      %v1783 = vpop.f32.mrb[0].mxu0
      %v1784 = vadd.f32 0.0, %v1783
      %v1785 = vpop.f32.mrb[0].mxu0
      %1786 = vmatprep.mubr.f32.mxu0 0.0
      %1787 = vmatmul.mubr.f32.gmra.mrb[0].mxu0 %v1609
      %v1788 = vpop.f32.mrb[0].mxu0
      %v1789 = vadd.f32 0.0, %v1788
      %v1790 = vpop.f32.mrb[0].mxu0
      %1791 = vmatprep.mubr.f32.mxu0 0.0
      %1792 = vmatmul.mubr.f32.gmra.mrb[0].mxu0 %v1612
      %v1793 = vpop.f32.mrb[0].mxu0
      %v1794 = vadd.f32 0.0, %v1793
      %v1795 = vpop.f32.mrb[0].mxu0
      %1796 = vmatprep.mubr.f32.mxu0 0.0
      %1797 = vmatmul.mubr.f32.gmra.mrb[0].mxu0 %v1615
      %v1798 = vpop.f32.mrb[0].mxu0
      %v1799 = vadd.f32 0.0, %v1798
      %v1800 = vpop.f32.mrb[0].mxu0
      %1801 = vmatprep.mubr.f32.mxu0 0.0
      %1802 = vmatmul.mubr.f32.gmra.mrb[0].mxu0 %v1618
      %v1803 = vpop.f32.mrb[0].mxu0
      %v1804 = vadd.f32 0.0, %v1803
      %v1805 = vpop.f32.mrb[0].mxu0
      %1806 = vmatprep.mubr.f32.mxu0 0.0
      %1807 = vmatmul.mubr.f32.gmra.mrb[0].mxu0 %v1621
      %v1808 = vpop.f32.mrb[0].mxu0
      %v1809 = vadd.f32 0.0, %v1808
      %v1810 = vpop.f32.mrb[0].mxu0
      %1811 = vmatprep.mubr.f32.mxu0 0.0
      %1812 = vmatmul.mubr.f32.gmra.mrb[0].mxu0 %v1624
      %v1813 = vpop.f32.mrb[0].mxu0
      %v1814 = vadd.f32 0.0, %v1813
      %v1815 = vpop.f32.mrb[0].mxu0
      %1816 = vmatprep.mubr.f32.mxu0 0.0
      %1817 = vmatmul.mubr.f32.gmra.mrb[0].mxu0 %v1627
      %v1818 = vpop.f32.mrb[0].mxu0
      %v1819 = vadd.f32 0.0, %v1818
      %v1820 = vpop.f32.mrb[0].mxu0
      %1821 = vmatprep.mubr.f32.mxu0 0.0
      %1822 = vmatmul.mubr.f32.gmra.mrb[0].mxu0 %v1630
      %v1823 = vpop.f32.mrb[0].mxu0
      %v1824 = vadd.f32 0.0, %v1823
      %v1825 = vpop.f32.mrb[0].mxu0
      %1826 = vmatprep.mubr.f32.mxu0 0.0
      %1827 = vmatmul.mubr.f32.gmra.mrb[0].mxu0 %v1633
      %v1828 = vpop.f32.mrb[0].mxu0
      %v1829 = vadd.f32 0.0, %v1828
      %v1830 = vpop.f32.mrb[0].mxu0
      %1831 = vmatprep.mubr.f32.mxu0 0.0
      %1832 = vmatmul.mubr.f32.gmra.mrb[0].mxu0 %v1636
      %v1833 = vpop.f32.mrb[0].mxu0
      %v1834 = vadd.f32 0.0, %v1833
      %v1835 = vpop.f32.mrb[0].mxu0
      %1836 = vmatprep.mubr.f32.mxu0 0.0
      %1837 = vmatmul.mubr.f32.gmra.mrb[0].mxu0 %v1639
      %v1838 = vpop.f32.mrb[0].mxu0
      %v1839 = vadd.f32 0.0, %v1838
      %v1840 = vpop.f32.mrb[0].mxu0
      %1841 = vmatprep.mubr.f32.mxu0 0.0
      %1842 = vmatmul.mubr.f32.gmra.mrb[0].mxu0 %v1642
      %v1843 = vpop.f32.mrb[0].mxu0
      %v1844 = vadd.f32 0.0, %v1843
      %v1845 = vpop.f32.mrb[0].mxu0
      %1846 = vmatprep.mubr.f32.mxu0 0.0
      %1847 = vmatmul.mubr.f32.gmra.mrb[0].mxu0 %v1645
      %v1848 = vpop.f32.mrb[0].mxu0
      %v1849 = vadd.f32 0.0, %v1848
      %v1850 = vpop.f32.mrb[0].mxu0
      %1851 = vmatprep.mubr.f32.mxu0 0.0
      %1852 = vmatmul.mubr.f32.gmra.mrb[0].mxu0 %v1648
      %v1853 = vpop.f32.mrb[0].mxu0
      %v1854 = vadd.f32 0.0, %v1853
      %v1855 = vpop.f32.mrb[0].mxu0
      %1856 = vmatprep.mubr.f32.mxu0 0.0
      %1857 = vmatmul.mubr.f32.gmra.mrb[0].mxu0 %v1651
      %v1858 = vpop.f32.mrb[0].mxu0
      %v1859 = vadd.f32 0.0, %v1858
      %v1860 = vpop.f32.mrb[0].mxu0
      %1861 = vmatprep.mubr.f32.mxu0 0.0
      %1862 = vmatmul.mubr.f32.gmra.mrb[0].mxu0 %v1654
      %v1863 = vpop.f32.mrb[0].mxu0
      %v1864 = vadd.f32 0.0, %v1863
      %v1865 = vpop.f32.mrb[0].mxu0
      %1866 = vmatprep.mubr.f32.mxu0 0.0
      %1867 = vmatmul.mubr.f32.gmra.mrb[0].mxu0 %v1657
      %v1868 = vpop.f32.mrb[0].mxu0
      %v1869 = vadd.f32 0.0, %v1868
      %v1870 = vpop.f32.mrb[0].mxu0
      %1871 = vmatprep.mubr.f32.mxu0 0.0
      %1872 = vmatmul.mubr.f32.gmra.mrb[0].mxu0 %v1660
      %v1873 = vpop.f32.mrb[0].mxu0
      %v1874 = vadd.f32 0.0, %v1873
      %v1875 = vpop.f32.mrb[0].mxu0
      %1876 = vdwg.mxu0
      %v1877 = vadd.f32 %v1392, %v1729
      %v1878 = vadd.f32 %v1397, %v1734
      %v1879 = vadd.f32 %v1402, %v1739
      %v1880 = vadd.f32 %v1407, %v1744
      %v1881 = vadd.f32 %v1412, %v1749
      %v1882 = vadd.f32 %v1417, %v1754
      %v1883 = vadd.f32 %v1422, %v1759
      %v1884 = vadd.f32 %v1427, %v1764
      %v1885 = vadd.f32 %v1432, %v1769
      %v1886 = vadd.f32 %v1437, %v1774
      %v1887 = vadd.f32 %v1442, %v1779
      %v1888 = vadd.f32 %v1447, %v1784
      %v1889 = vadd.f32 %v1452, %v1789
      %v1890 = vadd.f32 %v1457, %v1794
      %v1891 = vadd.f32 %v1462, %v1799
      %v1892 = vadd.f32 %v1467, %v1804
      %v1893 = vadd.f32 %v1472, %v1809
      %v1894 = vadd.f32 %v1477, %v1814
      %v1895 = vadd.f32 %v1482, %v1819
      %v1896 = vadd.f32 %v1487, %v1824
      %v1897 = vadd.f32 %v1492, %v1829
      %v1898 = vadd.f32 %v1497, %v1834
      %v1899 = vadd.f32 %v1502, %v1839
      %v1900 = vadd.f32 %v1507, %v1844
      %v1901 = vadd.f32 %v1512, %v1849
      %v1902 = vadd.f32 %v1517, %v1854
      %v1903 = vadd.f32 %v1522, %v1859
      %v1904 = vadd.f32 %v1527, %v1864
      %v1905 = vadd.f32 %v1532, %v1869
      %v1906 = vadd.f32 %v1537, %v1874
      %v1907 = vld [vmem:[#allocation2 + $0x12] sm:$0xff]
      %v1908 = vld [vmem:[#allocation2 + $0x1a] sm:$0xff]
      %v1909 = vld [vmem:[#allocation2 + $0x22] sm:$0xff]
      %v1910 = vld [vmem:[#allocation2 + $0x2a] sm:$0xff]
      %v1911 = vld [vmem:[#allocation2 + $0x32] sm:$0xff]
      %v1912 = vld [vmem:[#allocation2 + $0x3a] sm:$0xff]
      %v1913 = vld [vmem:[#allocation2 + $0x42] sm:$0xff]
      %v1914 = vld [vmem:[#allocation2 + $0x4a] sm:$0xff]
      %v1915 = vld [vmem:[#allocation2 + $0x52] sm:$0xff]
      %v1916 = vld [vmem:[#allocation2 + $0x5a] sm:$0xff]
      %v1917 = vld [vmem:[#allocation2 + $0x62] sm:$0xff]
      %v1918 = vld [vmem:[#allocation2 + $0x6a] sm:$0xff]
      %v1919 = vld [vmem:[#allocation2 + $0x72] sm:$0xff]
      %v1920 = vld [vmem:[#allocation2 + $0x7a] sm:$0xff]
      %v1921 = vld [vmem:[#allocation2 + $0x82] sm:$0xff]
      %v1922 = vld [vmem:[#allocation2 + $0x8a] sm:$0xff]
      %v1923 = vld [vmem:[#allocation2 + $0x92] sm:$0xff]
      %v1924 = vld [vmem:[#allocation2 + $0x9a] sm:$0xff]
      %v1925 = vld [vmem:[#allocation2 + $0xa2] sm:$0xff]
      %v1926 = vld [vmem:[#allocation2 + $0xaa] sm:$0xff]
      %v1927 = vld [vmem:[#allocation2 + $0xb2] sm:$0xff]
      %v1928 = vld [vmem:[#allocation2 + $0xba] sm:$0xff]
      %v1929 = vld [vmem:[#allocation2 + $0xc2] sm:$0xff]
      %v1930 = vld [vmem:[#allocation2 + $0xca] sm:$0xff]
      %v1931 = vld [vmem:[#allocation2 + $0xd2] sm:$0xff]
      %v1932 = vld [vmem:[#allocation2 + $0xda] sm:$0xff]
      %v1933 = vld [vmem:[#allocation2 + $0xe2] sm:$0xff]
      %v1934 = vld [vmem:[#allocation2 + $0xea] sm:$0xff]
      %v1935 = vld [vmem:[#allocation2 + $0xf2] sm:$0xff]
      %v1936 = vld [vmem:[#allocation2 + $0xfa] sm:$0xff]
      %s1937 = scalar_lea.vmem %s6, 24
      %v1938 = vld [vmem:[%s1937] sm:$0xff]
      %v1940 = vsel %vm796, %v1907, 0
      %v1943 = vsel %vm796, %v1908, 0
      %v1946 = vsel %vm796, %v1909, 0
      %v1949 = vsel %vm796, %v1910, 0
      %v1952 = vsel %vm796, %v1911, 0
      %v1955 = vsel %vm796, %v1912, 0
      %v1958 = vsel %vm796, %v1913, 0
      %v1961 = vsel %vm796, %v1914, 0
      %v1964 = vsel %vm796, %v1915, 0
      %v1967 = vsel %vm796, %v1916, 0
      %v1970 = vsel %vm796, %v1917, 0
      %v1973 = vsel %vm796, %v1918, 0
      %v1976 = vsel %vm796, %v1919, 0
      %v1979 = vsel %vm796, %v1920, 0
      %v1982 = vsel %vm796, %v1921, 0
      %v1985 = vsel %vm796, %v1922, 0
      %v1988 = vsel %vm796, %v1923, 0
      %v1991 = vsel %vm796, %v1924, 0
      %v1994 = vsel %vm796, %v1925, 0
      %v1997 = vsel %vm796, %v1926, 0
      %v2000 = vsel %vm796, %v1927, 0
      %v2003 = vsel %vm796, %v1928, 0
      %v2006 = vsel %vm796, %v1929, 0
      %v2009 = vsel %vm796, %v1930, 0
      %v2012 = vsel %vm796, %v1931, 0
      %v2015 = vsel %vm796, %v1932, 0
      %v2018 = vsel %vm796, %v1933, 0
      %v2021 = vsel %vm796, %v1934, 0
      %v2024 = vsel %vm796, %v1935, 0
      %v2027 = vsel %vm796, %v1936, 0
      %2029 = vmatprep.subr.mxu0 0.0
      %2030 = vmatpush1.msra.mxu0 %v1938
      %2031 = vmatprep.subr.mxu0 0.0
      %2032 = vmatpush1.msra.mxu0 0.0
      %2033 = vmatprep.subr.mxu0 0.0
      %2034 = vmatpush1.msra.mxu0 0.0
      %2035 = vmatprep.subr.mxu0 0.0
      %2036 = vmatpush1.msra.mxu0 0.0
      %2037 = vmatprep.subr.mxu0 0.0
      %2038 = vmatpush1.msra.mxu0 0.0
      %2039 = vmatprep.subr.mxu0 0.0
      %2040 = vmatpush1.msra.mxu0 0.0
      %2041 = vmatprep.subr.mxu0 0.0
      %2042 = vmatpush1.msra.mxu0 0.0
      %2043 = vmatprep.subr.mxu0 0.0
      %2044 = vmatpush1.msra.mxu0 0.0
      %2045 = vmatprep.subr.mxu0 0.0
      %2046 = vmatpush1.msra.mxu0 0.0
      %2047 = vmatprep.subr.mxu0 0.0
      %2048 = vmatpush1.msra.mxu0 0.0
      %2049 = vmatprep.subr.mxu0 0.0
      %2050 = vmatpush1.msra.mxu0 0.0
      %2051 = vmatprep.subr.mxu0 0.0
      %2052 = vmatpush1.msra.mxu0 0.0
      %2053 = vmatprep.subr.mxu0 0.0
      %2054 = vmatpush1.msra.mxu0 0.0
      %2055 = vmatprep.subr.mxu0 0.0
      %2056 = vmatpush1.msra.mxu0 0.0
      %2057 = vmatprep.subr.mxu0 0.0
      %2058 = vmatpush1.msra.mxu0 0.0
      %2059 = vmatprep.subr.mxu0 0.0
      %2060 = vmatpush1.msra.mxu0 0.0
      %2061 = vmatprep.subr.mxu0 0.0
      %2062 = vmatpush1.msra.mxu0 0.0
      %2063 = vmatprep.subr.mxu0 0.0
      %2064 = vmatpush1.msra.mxu0 0.0
      %2065 = vmatprep.subr.mxu0 0.0
      %2066 = vmatpush1.msra.mxu0 0.0
      %2067 = vmatprep.subr.mxu0 0.0
      %2068 = vmatpush1.msra.mxu0 0.0
      %2069 = vmatprep.subr.mxu0 0.0
      %2070 = vmatpush1.msra.mxu0 0.0
      %2071 = vmatprep.subr.mxu0 0.0
      %2072 = vmatpush1.msra.mxu0 0.0
      %2073 = vmatprep.subr.mxu0 0.0
      %2074 = vmatpush1.msra.mxu0 0.0
      %2075 = vmatprep.subr.mxu0 0.0
      %2076 = vmatpush1.msra.mxu0 0.0
      %2077 = vmatprep.subr.mxu0 0.0
      %2078 = vmatpush1.msra.mxu0 0.0
      %2079 = vmatprep.subr.mxu0 0.0
      %2080 = vmatpush1.msra.mxu0 0.0
      %2081 = vmatprep.subr.mxu0 0.0
      %2082 = vmatpush1.msra.mxu0 0.0
      %2083 = vmatprep.subr.mxu0 0.0
      %2084 = vmatpush1.msra.mxu0 0.0
      %2085 = vmatprep.subr.mxu0 0.0
      %2086 = vmatpush1.msra.mxu0 0.0
      %2087 = vmatprep.subr.mxu0 0.0
      %2088 = vmatpush1.msra.mxu0 0.0
      %2089 = vmatprep.subr.mxu0 0.0
      %2090 = vmatpush1.msra.mxu0 0.0
      %2091 = vmatprep.subr.mxu0 0.0
      %2092 = vmatpush1.msra.mxu0 0.0
      %2093 = vmatprep.mubr.f32.mxu0 0.0
      %2094 = vmatmul.mubr.f32.gmra.mrb[0].mxu0 %v1940
      %v2095 = vpop.f32.mrb[0].mxu0
      %v2096 = vadd.f32 0.0, %v2095
      %v2097 = vpop.f32.mrb[0].mxu0
      %2098 = vmatprep.mubr.f32.mxu0 0.0
      %2099 = vmatmul.mubr.f32.gmra.mrb[0].mxu0 %v1943
      %v2100 = vpop.f32.mrb[0].mxu0
      %v2101 = vadd.f32 0.0, %v2100
      %v2102 = vpop.f32.mrb[0].mxu0
      %2103 = vmatprep.mubr.f32.mxu0 0.0
      %2104 = vmatmul.mubr.f32.gmra.mrb[0].mxu0 %v1946
      %v2105 = vpop.f32.mrb[0].mxu0
      %v2106 = vadd.f32 0.0, %v2105
      %v2107 = vpop.f32.mrb[0].mxu0
      %2108 = vmatprep.mubr.f32.mxu0 0.0
      %2109 = vmatmul.mubr.f32.gmra.mrb[0].mxu0 %v1949
      %v2110 = vpop.f32.mrb[0].mxu0
      %v2111 = vadd.f32 0.0, %v2110
      %v2112 = vpop.f32.mrb[0].mxu0
      %2113 = vmatprep.mubr.f32.mxu0 0.0
      %2114 = vmatmul.mubr.f32.gmra.mrb[0].mxu0 %v1952
      %v2115 = vpop.f32.mrb[0].mxu0
      %v2116 = vadd.f32 0.0, %v2115
      %v2117 = vpop.f32.mrb[0].mxu0
      %2118 = vmatprep.mubr.f32.mxu0 0.0
      %2119 = vmatmul.mubr.f32.gmra.mrb[0].mxu0 %v1955
      %v2120 = vpop.f32.mrb[0].mxu0
      %v2121 = vadd.f32 0.0, %v2120
      %v2122 = vpop.f32.mrb[0].mxu0
      %2123 = vmatprep.mubr.f32.mxu0 0.0
      %2124 = vmatmul.mubr.f32.gmra.mrb[0].mxu0 %v1958
      %v2125 = vpop.f32.mrb[0].mxu0
      %v2126 = vadd.f32 0.0, %v2125
      %v2127 = vpop.f32.mrb[0].mxu0
      %2128 = vmatprep.mubr.f32.mxu0 0.0
      %2129 = vmatmul.mubr.f32.gmra.mrb[0].mxu0 %v1961
      %v2130 = vpop.f32.mrb[0].mxu0
      %v2131 = vadd.f32 0.0, %v2130
      %v2132 = vpop.f32.mrb[0].mxu0
      %2133 = vmatprep.mubr.f32.mxu0 0.0
      %2134 = vmatmul.mubr.f32.gmra.mrb[0].mxu0 %v1964
      %v2135 = vpop.f32.mrb[0].mxu0
      %v2136 = vadd.f32 0.0, %v2135
      %v2137 = vpop.f32.mrb[0].mxu0
      %2138 = vmatprep.mubr.f32.mxu0 0.0
      %2139 = vmatmul.mubr.f32.gmra.mrb[0].mxu0 %v1967
      %v2140 = vpop.f32.mrb[0].mxu0
      %v2141 = vadd.f32 0.0, %v2140
      %v2142 = vpop.f32.mrb[0].mxu0
      %2143 = vmatprep.mubr.f32.mxu0 0.0
      %2144 = vmatmul.mubr.f32.gmra.mrb[0].mxu0 %v1970
      %v2145 = vpop.f32.mrb[0].mxu0
      %v2146 = vadd.f32 0.0, %v2145
      %v2147 = vpop.f32.mrb[0].mxu0
      %2148 = vmatprep.mubr.f32.mxu0 0.0
      %2149 = vmatmul.mubr.f32.gmra.mrb[0].mxu0 %v1973
      %v2150 = vpop.f32.mrb[0].mxu0
      %v2151 = vadd.f32 0.0, %v2150
      %v2152 = vpop.f32.mrb[0].mxu0
      %2153 = vmatprep.mubr.f32.mxu0 0.0
      %2154 = vmatmul.mubr.f32.gmra.mrb[0].mxu0 %v1976
      %v2155 = vpop.f32.mrb[0].mxu0
      %v2156 = vadd.f32 0.0, %v2155
      %v2157 = vpop.f32.mrb[0].mxu0
      %2158 = vmatprep.mubr.f32.mxu0 0.0
      %2159 = vmatmul.mubr.f32.gmra.mrb[0].mxu0 %v1979
      %v2160 = vpop.f32.mrb[0].mxu0
      %v2161 = vadd.f32 0.0, %v2160
      %v2162 = vpop.f32.mrb[0].mxu0
      %2163 = vmatprep.mubr.f32.mxu0 0.0
      %2164 = vmatmul.mubr.f32.gmra.mrb[0].mxu0 %v1982
      %v2165 = vpop.f32.mrb[0].mxu0
      %v2166 = vadd.f32 0.0, %v2165
      %v2167 = vpop.f32.mrb[0].mxu0
      %2168 = vmatprep.mubr.f32.mxu0 0.0
      %2169 = vmatmul.mubr.f32.gmra.mrb[0].mxu0 %v1985
      %v2170 = vpop.f32.mrb[0].mxu0
      %v2171 = vadd.f32 0.0, %v2170
      %v2172 = vpop.f32.mrb[0].mxu0
      %2173 = vmatprep.mubr.f32.mxu0 0.0
      %2174 = vmatmul.mubr.f32.gmra.mrb[0].mxu0 %v1988
      %v2175 = vpop.f32.mrb[0].mxu0
      %v2176 = vadd.f32 0.0, %v2175
      %v2177 = vpop.f32.mrb[0].mxu0
      %2178 = vmatprep.mubr.f32.mxu0 0.0
      %2179 = vmatmul.mubr.f32.gmra.mrb[0].mxu0 %v1991
      %v2180 = vpop.f32.mrb[0].mxu0
      %v2181 = vadd.f32 0.0, %v2180
      %v2182 = vpop.f32.mrb[0].mxu0
      %2183 = vmatprep.mubr.f32.mxu0 0.0
      %2184 = vmatmul.mubr.f32.gmra.mrb[0].mxu0 %v1994
      %v2185 = vpop.f32.mrb[0].mxu0
      %v2186 = vadd.f32 0.0, %v2185
      %v2187 = vpop.f32.mrb[0].mxu0
      %2188 = vmatprep.mubr.f32.mxu0 0.0
      %2189 = vmatmul.mubr.f32.gmra.mrb[0].mxu0 %v1997
      %v2190 = vpop.f32.mrb[0].mxu0
      %v2191 = vadd.f32 0.0, %v2190
      %v2192 = vpop.f32.mrb[0].mxu0
      %2193 = vmatprep.mubr.f32.mxu0 0.0
      %2194 = vmatmul.mubr.f32.gmra.mrb[0].mxu0 %v2000
      %v2195 = vpop.f32.mrb[0].mxu0
      %v2196 = vadd.f32 0.0, %v2195
      %v2197 = vpop.f32.mrb[0].mxu0
      %2198 = vmatprep.mubr.f32.mxu0 0.0
      %2199 = vmatmul.mubr.f32.gmra.mrb[0].mxu0 %v2003
      %v2200 = vpop.f32.mrb[0].mxu0
      %v2201 = vadd.f32 0.0, %v2200
      %v2202 = vpop.f32.mrb[0].mxu0
      %2203 = vmatprep.mubr.f32.mxu0 0.0
      %2204 = vmatmul.mubr.f32.gmra.mrb[0].mxu0 %v2006
      %v2205 = vpop.f32.mrb[0].mxu0
      %v2206 = vadd.f32 0.0, %v2205
      %v2207 = vpop.f32.mrb[0].mxu0
      %2208 = vmatprep.mubr.f32.mxu0 0.0
      %2209 = vmatmul.mubr.f32.gmra.mrb[0].mxu0 %v2009
      %v2210 = vpop.f32.mrb[0].mxu0
      %v2211 = vadd.f32 0.0, %v2210
      %v2212 = vpop.f32.mrb[0].mxu0
      %2213 = vmatprep.mubr.f32.mxu0 0.0
      %2214 = vmatmul.mubr.f32.gmra.mrb[0].mxu0 %v2012
      %v2215 = vpop.f32.mrb[0].mxu0
      %v2216 = vadd.f32 0.0, %v2215
      %v2217 = vpop.f32.mrb[0].mxu0
      %2218 = vmatprep.mubr.f32.mxu0 0.0
      %2219 = vmatmul.mubr.f32.gmra.mrb[0].mxu0 %v2015
      %v2220 = vpop.f32.mrb[0].mxu0
      %v2221 = vadd.f32 0.0, %v2220
      %v2222 = vpop.f32.mrb[0].mxu0
      %2223 = vmatprep.mubr.f32.mxu0 0.0
      %2224 = vmatmul.mubr.f32.gmra.mrb[0].mxu0 %v2018
      %v2225 = vpop.f32.mrb[0].mxu0
      %v2226 = vadd.f32 0.0, %v2225
      %v2227 = vpop.f32.mrb[0].mxu0
      %2228 = vmatprep.mubr.f32.mxu0 0.0
      %2229 = vmatmul.mubr.f32.gmra.mrb[0].mxu0 %v2021
      %v2230 = vpop.f32.mrb[0].mxu0
      %v2231 = vadd.f32 0.0, %v2230
      %v2232 = vpop.f32.mrb[0].mxu0
      %2233 = vmatprep.mubr.f32.mxu0 0.0
      %2234 = vmatmul.mubr.f32.gmra.mrb[0].mxu0 %v2024
      %v2235 = vpop.f32.mrb[0].mxu0
      %v2236 = vadd.f32 0.0, %v2235
      %v2237 = vpop.f32.mrb[0].mxu0
      %2238 = vmatprep.mubr.f32.mxu0 0.0
      %2239 = vmatmul.mubr.f32.gmra.mrb[0].mxu0 %v2027
      %v2240 = vpop.f32.mrb[0].mxu0
      %v2241 = vadd.f32 0.0, %v2240
      %v2242 = vpop.f32.mrb[0].mxu0
      %2243 = vdwg.mxu0
      %v2244 = vadd.f32 %v1877, %v2096
      %v2245 = vadd.f32 %v1878, %v2101
      %v2246 = vadd.f32 %v1879, %v2106
      %v2247 = vadd.f32 %v1880, %v2111
      %v2248 = vadd.f32 %v1881, %v2116
      %v2249 = vadd.f32 %v1882, %v2121
      %v2250 = vadd.f32 %v1883, %v2126
      %v2251 = vadd.f32 %v1884, %v2131
      %v2252 = vadd.f32 %v1885, %v2136
      %v2253 = vadd.f32 %v1886, %v2141
      %v2254 = vadd.f32 %v1887, %v2146
      %v2255 = vadd.f32 %v1888, %v2151
      %v2256 = vadd.f32 %v1889, %v2156
      %v2257 = vadd.f32 %v1890, %v2161
      %v2258 = vadd.f32 %v1891, %v2166
      %v2259 = vadd.f32 %v1892, %v2171
      %v2260 = vadd.f32 %v1893, %v2176
      %v2261 = vadd.f32 %v1894, %v2181
      %v2262 = vadd.f32 %v1895, %v2186
      %v2263 = vadd.f32 %v1896, %v2191
      %v2264 = vadd.f32 %v1897, %v2196
      %v2265 = vadd.f32 %v1898, %v2201
      %v2266 = vadd.f32 %v1899, %v2206
      %v2267 = vadd.f32 %v1900, %v2211
      %v2268 = vadd.f32 %v1901, %v2216
      %v2269 = vadd.f32 %v1902, %v2221
      %v2270 = vadd.f32 %v1903, %v2226
      %v2271 = vadd.f32 %v1904, %v2231
      %v2272 = vadd.f32 %v1905, %v2236
      %v2273 = vadd.f32 %v1906, %v2241
      %v2274 = vld [vmem:[#allocation2 + $0x13] sm:$0xff]
      %v2275 = vld [vmem:[#allocation2 + $0x1b] sm:$0xff]
      %v2276 = vld [vmem:[#allocation2 + $0x23] sm:$0xff]
      %v2277 = vld [vmem:[#allocation2 + $0x2b] sm:$0xff]
      %v2278 = vld [vmem:[#allocation2 + $0x33] sm:$0xff]
      %v2279 = vld [vmem:[#allocation2 + $0x3b] sm:$0xff]
      %v2280 = vld [vmem:[#allocation2 + $0x43] sm:$0xff]
      %v2281 = vld [vmem:[#allocation2 + $0x4b] sm:$0xff]
      %v2282 = vld [vmem:[#allocation2 + $0x53] sm:$0xff]
      %v2283 = vld [vmem:[#allocation2 + $0x5b] sm:$0xff]
      %v2284 = vld [vmem:[#allocation2 + $0x63] sm:$0xff]
      %v2285 = vld [vmem:[#allocation2 + $0x6b] sm:$0xff]
      %v2286 = vld [vmem:[#allocation2 + $0x73] sm:$0xff]
      %v2287 = vld [vmem:[#allocation2 + $0x7b] sm:$0xff]
      %v2288 = vld [vmem:[#allocation2 + $0x83] sm:$0xff]
      %v2289 = vld [vmem:[#allocation2 + $0x8b] sm:$0xff]
      %v2290 = vld [vmem:[#allocation2 + $0x93] sm:$0xff]
      %v2291 = vld [vmem:[#allocation2 + $0x9b] sm:$0xff]
      %v2292 = vld [vmem:[#allocation2 + $0xa3] sm:$0xff]
      %v2293 = vld [vmem:[#allocation2 + $0xab] sm:$0xff]
      %v2294 = vld [vmem:[#allocation2 + $0xb3] sm:$0xff]
      %v2295 = vld [vmem:[#allocation2 + $0xbb] sm:$0xff]
      %v2296 = vld [vmem:[#allocation2 + $0xc3] sm:$0xff]
      %v2297 = vld [vmem:[#allocation2 + $0xcb] sm:$0xff]
      %v2298 = vld [vmem:[#allocation2 + $0xd3] sm:$0xff]
      %v2299 = vld [vmem:[#allocation2 + $0xdb] sm:$0xff]
      %v2300 = vld [vmem:[#allocation2 + $0xe3] sm:$0xff]
      %v2301 = vld [vmem:[#allocation2 + $0xeb] sm:$0xff]
      %v2302 = vld [vmem:[#allocation2 + $0xf3] sm:$0xff]
      %v2303 = vld [vmem:[#allocation2 + $0xfb] sm:$0xff]
      %s2304 = scalar_lea.vmem %s6, 32
      %v2305 = vld [vmem:[%s2304] sm:$0xff]
      %v2307 = vsel %vm796, %v2274, 0
      %v2310 = vsel %vm796, %v2275, 0
      %v2313 = vsel %vm796, %v2276, 0
      %v2316 = vsel %vm796, %v2277, 0
      %v2319 = vsel %vm796, %v2278, 0
      %v2322 = vsel %vm796, %v2279, 0
      %v2325 = vsel %vm796, %v2280, 0
      %v2328 = vsel %vm796, %v2281, 0
      %v2331 = vsel %vm796, %v2282, 0
      %v2334 = vsel %vm796, %v2283, 0
      %v2337 = vsel %vm796, %v2284, 0
      %v2340 = vsel %vm796, %v2285, 0
      %v2343 = vsel %vm796, %v2286, 0
      %v2346 = vsel %vm796, %v2287, 0
      %v2349 = vsel %vm796, %v2288, 0
      %v2352 = vsel %vm796, %v2289, 0
      %v2355 = vsel %vm796, %v2290, 0
      %v2358 = vsel %vm796, %v2291, 0
      %v2361 = vsel %vm796, %v2292, 0
      %v2364 = vsel %vm796, %v2293, 0
      %v2367 = vsel %vm796, %v2294, 0
      %v2370 = vsel %vm796, %v2295, 0
      %v2373 = vsel %vm796, %v2296, 0
      %v2376 = vsel %vm796, %v2297, 0
      %v2379 = vsel %vm796, %v2298, 0
      %v2382 = vsel %vm796, %v2299, 0
      %v2385 = vsel %vm796, %v2300, 0
      %v2388 = vsel %vm796, %v2301, 0
      %v2391 = vsel %vm796, %v2302, 0
      %v2394 = vsel %vm796, %v2303, 0
      %2396 = vmatprep.subr.mxu0 0.0
      %2397 = vmatpush1.msra.mxu0 %v2305
      %2398 = vmatprep.subr.mxu0 0.0
      %2399 = vmatpush1.msra.mxu0 0.0
      %2400 = vmatprep.subr.mxu0 0.0
      %2401 = vmatpush1.msra.mxu0 0.0
      %2402 = vmatprep.subr.mxu0 0.0
      %2403 = vmatpush1.msra.mxu0 0.0
      %2404 = vmatprep.subr.mxu0 0.0
      %2405 = vmatpush1.msra.mxu0 0.0
      %2406 = vmatprep.subr.mxu0 0.0
      %2407 = vmatpush1.msra.mxu0 0.0
      %2408 = vmatprep.subr.mxu0 0.0
      %2409 = vmatpush1.msra.mxu0 0.0
      %2410 = vmatprep.subr.mxu0 0.0
      %2411 = vmatpush1.msra.mxu0 0.0
      %2412 = vmatprep.subr.mxu0 0.0
      %2413 = vmatpush1.msra.mxu0 0.0
      %2414 = vmatprep.subr.mxu0 0.0
      %2415 = vmatpush1.msra.mxu0 0.0
      %2416 = vmatprep.subr.mxu0 0.0
      %2417 = vmatpush1.msra.mxu0 0.0
      %2418 = vmatprep.subr.mxu0 0.0
      %2419 = vmatpush1.msra.mxu0 0.0
      %2420 = vmatprep.subr.mxu0 0.0
      %2421 = vmatpush1.msra.mxu0 0.0
      %2422 = vmatprep.subr.mxu0 0.0
      %2423 = vmatpush1.msra.mxu0 0.0
      %2424 = vmatprep.subr.mxu0 0.0
      %2425 = vmatpush1.msra.mxu0 0.0
      %2426 = vmatprep.subr.mxu0 0.0
      %2427 = vmatpush1.msra.mxu0 0.0
      %2428 = vmatprep.subr.mxu0 0.0
      %2429 = vmatpush1.msra.mxu0 0.0
      %2430 = vmatprep.subr.mxu0 0.0
      %2431 = vmatpush1.msra.mxu0 0.0
      %2432 = vmatprep.subr.mxu0 0.0
      %2433 = vmatpush1.msra.mxu0 0.0
      %2434 = vmatprep.subr.mxu0 0.0
      %2435 = vmatpush1.msra.mxu0 0.0
      %2436 = vmatprep.subr.mxu0 0.0
      %2437 = vmatpush1.msra.mxu0 0.0
      %2438 = vmatprep.subr.mxu0 0.0
      %2439 = vmatpush1.msra.mxu0 0.0
      %2440 = vmatprep.subr.mxu0 0.0
      %2441 = vmatpush1.msra.mxu0 0.0
      %2442 = vmatprep.subr.mxu0 0.0
      %2443 = vmatpush1.msra.mxu0 0.0
      %2444 = vmatprep.subr.mxu0 0.0
      %2445 = vmatpush1.msra.mxu0 0.0
      %2446 = vmatprep.subr.mxu0 0.0
      %2447 = vmatpush1.msra.mxu0 0.0
      %2448 = vmatprep.subr.mxu0 0.0
      %2449 = vmatpush1.msra.mxu0 0.0
      %2450 = vmatprep.subr.mxu0 0.0
      %2451 = vmatpush1.msra.mxu0 0.0
      %2452 = vmatprep.subr.mxu0 0.0
      %2453 = vmatpush1.msra.mxu0 0.0
      %2454 = vmatprep.subr.mxu0 0.0
      %2455 = vmatpush1.msra.mxu0 0.0
      %2456 = vmatprep.subr.mxu0 0.0
      %2457 = vmatpush1.msra.mxu0 0.0
      %2458 = vmatprep.subr.mxu0 0.0
      %2459 = vmatpush1.msra.mxu0 0.0
      %2460 = vmatprep.mubr.f32.mxu0 0.0
      %2461 = vmatmul.mubr.f32.gmra.mrb[0].mxu0 %v2307
      %v2462 = vpop.f32.mrb[0].mxu0
      %v2463 = vadd.f32 0.0, %v2462
      %v2464 = vpop.f32.mrb[0].mxu0
      %2465 = vmatprep.mubr.f32.mxu0 0.0
      %2466 = vmatmul.mubr.f32.gmra.mrb[0].mxu0 %v2310
      %v2467 = vpop.f32.mrb[0].mxu0
      %v2468 = vadd.f32 0.0, %v2467
      %v2469 = vpop.f32.mrb[0].mxu0
      %2470 = vmatprep.mubr.f32.mxu0 0.0
      %2471 = vmatmul.mubr.f32.gmra.mrb[0].mxu0 %v2313
      %v2472 = vpop.f32.mrb[0].mxu0
      %v2473 = vadd.f32 0.0, %v2472
      %v2474 = vpop.f32.mrb[0].mxu0
      %2475 = vmatprep.mubr.f32.mxu0 0.0
      %2476 = vmatmul.mubr.f32.gmra.mrb[0].mxu0 %v2316
      %v2477 = vpop.f32.mrb[0].mxu0
      %v2478 = vadd.f32 0.0, %v2477
      %v2479 = vpop.f32.mrb[0].mxu0
      %2480 = vmatprep.mubr.f32.mxu0 0.0
      %2481 = vmatmul.mubr.f32.gmra.mrb[0].mxu0 %v2319
      %v2482 = vpop.f32.mrb[0].mxu0
      %v2483 = vadd.f32 0.0, %v2482
      %v2484 = vpop.f32.mrb[0].mxu0
      %2485 = vmatprep.mubr.f32.mxu0 0.0
      %2486 = vmatmul.mubr.f32.gmra.mrb[0].mxu0 %v2322
      %v2487 = vpop.f32.mrb[0].mxu0
      %v2488 = vadd.f32 0.0, %v2487
      %v2489 = vpop.f32.mrb[0].mxu0
      %2490 = vmatprep.mubr.f32.mxu0 0.0
      %2491 = vmatmul.mubr.f32.gmra.mrb[0].mxu0 %v2325
      %v2492 = vpop.f32.mrb[0].mxu0
      %v2493 = vadd.f32 0.0, %v2492
      %v2494 = vpop.f32.mrb[0].mxu0
      %2495 = vmatprep.mubr.f32.mxu0 0.0
      %2496 = vmatmul.mubr.f32.gmra.mrb[0].mxu0 %v2328
      %v2497 = vpop.f32.mrb[0].mxu0
      %v2498 = vadd.f32 0.0, %v2497
      %v2499 = vpop.f32.mrb[0].mxu0
      %2500 = vmatprep.mubr.f32.mxu0 0.0
      %2501 = vmatmul.mubr.f32.gmra.mrb[0].mxu0 %v2331
      %v2502 = vpop.f32.mrb[0].mxu0
      %v2503 = vadd.f32 0.0, %v2502
      %v2504 = vpop.f32.mrb[0].mxu0
      %2505 = vmatprep.mubr.f32.mxu0 0.0
      %2506 = vmatmul.mubr.f32.gmra.mrb[0].mxu0 %v2334
      %v2507 = vpop.f32.mrb[0].mxu0
      %v2508 = vadd.f32 0.0, %v2507
      %v2509 = vpop.f32.mrb[0].mxu0
      %2510 = vmatprep.mubr.f32.mxu0 0.0
      %2511 = vmatmul.mubr.f32.gmra.mrb[0].mxu0 %v2337
      %v2512 = vpop.f32.mrb[0].mxu0
      %v2513 = vadd.f32 0.0, %v2512
      %v2514 = vpop.f32.mrb[0].mxu0
      %2515 = vmatprep.mubr.f32.mxu0 0.0
      %2516 = vmatmul.mubr.f32.gmra.mrb[0].mxu0 %v2340
      %v2517 = vpop.f32.mrb[0].mxu0
      %v2518 = vadd.f32 0.0, %v2517
      %v2519 = vpop.f32.mrb[0].mxu0
      %2520 = vmatprep.mubr.f32.mxu0 0.0
      %2521 = vmatmul.mubr.f32.gmra.mrb[0].mxu0 %v2343
      %v2522 = vpop.f32.mrb[0].mxu0
      %v2523 = vadd.f32 0.0, %v2522
      %v2524 = vpop.f32.mrb[0].mxu0
      %2525 = vmatprep.mubr.f32.mxu0 0.0
      %2526 = vmatmul.mubr.f32.gmra.mrb[0].mxu0 %v2346
      %v2527 = vpop.f32.mrb[0].mxu0
      %v2528 = vadd.f32 0.0, %v2527
      %v2529 = vpop.f32.mrb[0].mxu0
      %2530 = vmatprep.mubr.f32.mxu0 0.0
      %2531 = vmatmul.mubr.f32.gmra.mrb[0].mxu0 %v2349
      %v2532 = vpop.f32.mrb[0].mxu0
      %v2533 = vadd.f32 0.0, %v2532
      %v2534 = vpop.f32.mrb[0].mxu0
      %2535 = vmatprep.mubr.f32.mxu0 0.0
      %2536 = vmatmul.mubr.f32.gmra.mrb[0].mxu0 %v2352
      %v2537 = vpop.f32.mrb[0].mxu0
      %v2538 = vadd.f32 0.0, %v2537
      %v2539 = vpop.f32.mrb[0].mxu0
      %2540 = vmatprep.mubr.f32.mxu0 0.0
      %2541 = vmatmul.mubr.f32.gmra.mrb[0].mxu0 %v2355
      %v2542 = vpop.f32.mrb[0].mxu0
      %v2543 = vadd.f32 0.0, %v2542
      %v2544 = vpop.f32.mrb[0].mxu0
      %2545 = vmatprep.mubr.f32.mxu0 0.0
      %2546 = vmatmul.mubr.f32.gmra.mrb[0].mxu0 %v2358
      %v2547 = vpop.f32.mrb[0].mxu0
      %v2548 = vadd.f32 0.0, %v2547
      %v2549 = vpop.f32.mrb[0].mxu0
      %2550 = vmatprep.mubr.f32.mxu0 0.0
      %2551 = vmatmul.mubr.f32.gmra.mrb[0].mxu0 %v2361
      %v2552 = vpop.f32.mrb[0].mxu0
      %v2553 = vadd.f32 0.0, %v2552
      %v2554 = vpop.f32.mrb[0].mxu0
      %2555 = vmatprep.mubr.f32.mxu0 0.0
      %2556 = vmatmul.mubr.f32.gmra.mrb[0].mxu0 %v2364
      %v2557 = vpop.f32.mrb[0].mxu0
      %v2558 = vadd.f32 0.0, %v2557
      %v2559 = vpop.f32.mrb[0].mxu0
      %2560 = vmatprep.mubr.f32.mxu0 0.0
      %2561 = vmatmul.mubr.f32.gmra.mrb[0].mxu0 %v2367
      %v2562 = vpop.f32.mrb[0].mxu0
      %v2563 = vadd.f32 0.0, %v2562
      %v2564 = vpop.f32.mrb[0].mxu0
      %2565 = vmatprep.mubr.f32.mxu0 0.0
      %2566 = vmatmul.mubr.f32.gmra.mrb[0].mxu0 %v2370
      %v2567 = vpop.f32.mrb[0].mxu0
      %v2568 = vadd.f32 0.0, %v2567
      %v2569 = vpop.f32.mrb[0].mxu0
      %2570 = vmatprep.mubr.f32.mxu0 0.0
      %2571 = vmatmul.mubr.f32.gmra.mrb[0].mxu0 %v2373
      %v2572 = vpop.f32.mrb[0].mxu0
      %v2573 = vadd.f32 0.0, %v2572
      %v2574 = vpop.f32.mrb[0].mxu0
      %2575 = vmatprep.mubr.f32.mxu0 0.0
      %2576 = vmatmul.mubr.f32.gmra.mrb[0].mxu0 %v2376
      %v2577 = vpop.f32.mrb[0].mxu0
      %v2578 = vadd.f32 0.0, %v2577
      %v2579 = vpop.f32.mrb[0].mxu0
      %2580 = vmatprep.mubr.f32.mxu0 0.0
      %2581 = vmatmul.mubr.f32.gmra.mrb[0].mxu0 %v2379
      %v2582 = vpop.f32.mrb[0].mxu0
      %v2583 = vadd.f32 0.0, %v2582
      %v2584 = vpop.f32.mrb[0].mxu0
      %2585 = vmatprep.mubr.f32.mxu0 0.0
      %2586 = vmatmul.mubr.f32.gmra.mrb[0].mxu0 %v2382
      %v2587 = vpop.f32.mrb[0].mxu0
      %v2588 = vadd.f32 0.0, %v2587
      %v2589 = vpop.f32.mrb[0].mxu0
      %2590 = vmatprep.mubr.f32.mxu0 0.0
      %2591 = vmatmul.mubr.f32.gmra.mrb[0].mxu0 %v2385
      %v2592 = vpop.f32.mrb[0].mxu0
      %v2593 = vadd.f32 0.0, %v2592
      %v2594 = vpop.f32.mrb[0].mxu0
      %2595 = vmatprep.mubr.f32.mxu0 0.0
      %2596 = vmatmul.mubr.f32.gmra.mrb[0].mxu0 %v2388
      %v2597 = vpop.f32.mrb[0].mxu0
      %v2598 = vadd.f32 0.0, %v2597
      %v2599 = vpop.f32.mrb[0].mxu0
      %2600 = vmatprep.mubr.f32.mxu0 0.0
      %2601 = vmatmul.mubr.f32.gmra.mrb[0].mxu0 %v2391
      %v2602 = vpop.f32.mrb[0].mxu0
      %v2603 = vadd.f32 0.0, %v2602
      %v2604 = vpop.f32.mrb[0].mxu0
      %2605 = vmatprep.mubr.f32.mxu0 0.0
      %2606 = vmatmul.mubr.f32.gmra.mrb[0].mxu0 %v2394
      %v2607 = vpop.f32.mrb[0].mxu0
      %v2608 = vadd.f32 0.0, %v2607
      %v2609 = vpop.f32.mrb[0].mxu0
      %2610 = vdwg.mxu0
      %v2611 = vadd.f32 %v2244, %v2463
      %v2612 = vadd.f32 %v2245, %v2468
      %v2613 = vadd.f32 %v2246, %v2473
      %v2614 = vadd.f32 %v2247, %v2478
      %v2615 = vadd.f32 %v2248, %v2483
      %v2616 = vadd.f32 %v2249, %v2488
      %v2617 = vadd.f32 %v2250, %v2493
      %v2618 = vadd.f32 %v2251, %v2498
      %v2619 = vadd.f32 %v2252, %v2503
      %v2620 = vadd.f32 %v2253, %v2508
      %v2621 = vadd.f32 %v2254, %v2513
      %v2622 = vadd.f32 %v2255, %v2518
      %v2623 = vadd.f32 %v2256, %v2523
      %v2624 = vadd.f32 %v2257, %v2528
      %v2625 = vadd.f32 %v2258, %v2533
      %v2626 = vadd.f32 %v2259, %v2538
      %v2627 = vadd.f32 %v2260, %v2543
      %v2628 = vadd.f32 %v2261, %v2548
      %v2629 = vadd.f32 %v2262, %v2553
      %v2630 = vadd.f32 %v2263, %v2558
      %v2631 = vadd.f32 %v2264, %v2563
      %v2632 = vadd.f32 %v2265, %v2568
      %v2633 = vadd.f32 %v2266, %v2573
      %v2634 = vadd.f32 %v2267, %v2578
      %v2635 = vadd.f32 %v2268, %v2583
      %v2636 = vadd.f32 %v2269, %v2588
      %v2637 = vadd.f32 %v2270, %v2593
      %v2638 = vadd.f32 %v2271, %v2598
      %v2639 = vadd.f32 %v2272, %v2603
      %v2640 = vadd.f32 %v2273, %v2608
      %v2641 = vld [vmem:[#allocation2 + $0x14] sm:$0xff]
      %v2642 = vld [vmem:[#allocation2 + $0x1c] sm:$0xff]
      %v2643 = vld [vmem:[#allocation2 + $0x24] sm:$0xff]
      %v2644 = vld [vmem:[#allocation2 + $0x2c] sm:$0xff]
      %v2645 = vld [vmem:[#allocation2 + $0x34] sm:$0xff]
      %v2646 = vld [vmem:[#allocation2 + $0x3c] sm:$0xff]
      %v2647 = vld [vmem:[#allocation2 + $0x44] sm:$0xff]
      %v2648 = vld [vmem:[#allocation2 + $0x4c] sm:$0xff]
      %v2649 = vld [vmem:[#allocation2 + $0x54] sm:$0xff]
      %v2650 = vld [vmem:[#allocation2 + $0x5c] sm:$0xff]
      %v2651 = vld [vmem:[#allocation2 + $0x64] sm:$0xff]
      %v2652 = vld [vmem:[#allocation2 + $0x6c] sm:$0xff]
      %v2653 = vld [vmem:[#allocation2 + $0x74] sm:$0xff]
      %v2654 = vld [vmem:[#allocation2 + $0x7c] sm:$0xff]
      %v2655 = vld [vmem:[#allocation2 + $0x84] sm:$0xff]
      %v2656 = vld [vmem:[#allocation2 + $0x8c] sm:$0xff]
      %v2657 = vld [vmem:[#allocation2 + $0x94] sm:$0xff]
      %v2658 = vld [vmem:[#allocation2 + $0x9c] sm:$0xff]
      %v2659 = vld [vmem:[#allocation2 + $0xa4] sm:$0xff]
      %v2660 = vld [vmem:[#allocation2 + $0xac] sm:$0xff]
      %v2661 = vld [vmem:[#allocation2 + $0xb4] sm:$0xff]
      %v2662 = vld [vmem:[#allocation2 + $0xbc] sm:$0xff]
      %v2663 = vld [vmem:[#allocation2 + $0xc4] sm:$0xff]
      %v2664 = vld [vmem:[#allocation2 + $0xcc] sm:$0xff]
      %v2665 = vld [vmem:[#allocation2 + $0xd4] sm:$0xff]
      %v2666 = vld [vmem:[#allocation2 + $0xdc] sm:$0xff]
      %v2667 = vld [vmem:[#allocation2 + $0xe4] sm:$0xff]
      %v2668 = vld [vmem:[#allocation2 + $0xec] sm:$0xff]
      %v2669 = vld [vmem:[#allocation2 + $0xf4] sm:$0xff]
      %v2670 = vld [vmem:[#allocation2 + $0xfc] sm:$0xff]
      %s2671 = scalar_lea.vmem %s6, 40
      %v2672 = vld [vmem:[%s2671] sm:$0xff]
      %v2674 = vsel %vm796, %v2641, 0
      %v2677 = vsel %vm796, %v2642, 0
      %v2680 = vsel %vm796, %v2643, 0
      %v2683 = vsel %vm796, %v2644, 0
      %v2686 = vsel %vm796, %v2645, 0
      %v2689 = vsel %vm796, %v2646, 0
      %v2692 = vsel %vm796, %v2647, 0
      %v2695 = vsel %vm796, %v2648, 0
      %v2698 = vsel %vm796, %v2649, 0
      %v2701 = vsel %vm796, %v2650, 0
      %v2704 = vsel %vm796, %v2651, 0
      %v2707 = vsel %vm796, %v2652, 0
      %v2710 = vsel %vm796, %v2653, 0
      %v2713 = vsel %vm796, %v2654, 0
      %v2716 = vsel %vm796, %v2655, 0
      %v2719 = vsel %vm796, %v2656, 0
      %v2722 = vsel %vm796, %v2657, 0
      %v2725 = vsel %vm796, %v2658, 0
      %v2728 = vsel %vm796, %v2659, 0
      %v2731 = vsel %vm796, %v2660, 0
      %v2734 = vsel %vm796, %v2661, 0
      %v2737 = vsel %vm796, %v2662, 0
      %v2740 = vsel %vm796, %v2663, 0
      %v2743 = vsel %vm796, %v2664, 0
      %v2746 = vsel %vm796, %v2665, 0
      %v2749 = vsel %vm796, %v2666, 0
      %v2752 = vsel %vm796, %v2667, 0
      %v2755 = vsel %vm796, %v2668, 0
      %v2758 = vsel %vm796, %v2669, 0
      %v2761 = vsel %vm796, %v2670, 0
      %2763 = vmatprep.subr.mxu0 0.0
      %2764 = vmatpush1.msra.mxu0 %v2672
      %2765 = vmatprep.subr.mxu0 0.0
      %2766 = vmatpush1.msra.mxu0 0.0
      %2767 = vmatprep.subr.mxu0 0.0
      %2768 = vmatpush1.msra.mxu0 0.0
      %2769 = vmatprep.subr.mxu0 0.0
      %2770 = vmatpush1.msra.mxu0 0.0
      %2771 = vmatprep.subr.mxu0 0.0
      %2772 = vmatpush1.msra.mxu0 0.0
      %2773 = vmatprep.subr.mxu0 0.0
      %2774 = vmatpush1.msra.mxu0 0.0
      %2775 = vmatprep.subr.mxu0 0.0
      %2776 = vmatpush1.msra.mxu0 0.0
      %2777 = vmatprep.subr.mxu0 0.0
      %2778 = vmatpush1.msra.mxu0 0.0
      %2779 = vmatprep.subr.mxu0 0.0
      %2780 = vmatpush1.msra.mxu0 0.0
      %2781 = vmatprep.subr.mxu0 0.0
      %2782 = vmatpush1.msra.mxu0 0.0
      %2783 = vmatprep.subr.mxu0 0.0
      %2784 = vmatpush1.msra.mxu0 0.0
      %2785 = vmatprep.subr.mxu0 0.0
      %2786 = vmatpush1.msra.mxu0 0.0
      %2787 = vmatprep.subr.mxu0 0.0
      %2788 = vmatpush1.msra.mxu0 0.0
      %2789 = vmatprep.subr.mxu0 0.0
      %2790 = vmatpush1.msra.mxu0 0.0
      %2791 = vmatprep.subr.mxu0 0.0
      %2792 = vmatpush1.msra.mxu0 0.0
      %2793 = vmatprep.subr.mxu0 0.0
      %2794 = vmatpush1.msra.mxu0 0.0
      %2795 = vmatprep.subr.mxu0 0.0
      %2796 = vmatpush1.msra.mxu0 0.0
      %2797 = vmatprep.subr.mxu0 0.0
      %2798 = vmatpush1.msra.mxu0 0.0
      %2799 = vmatprep.subr.mxu0 0.0
      %2800 = vmatpush1.msra.mxu0 0.0
      %2801 = vmatprep.subr.mxu0 0.0
      %2802 = vmatpush1.msra.mxu0 0.0
      %2803 = vmatprep.subr.mxu0 0.0
      %2804 = vmatpush1.msra.mxu0 0.0
      %2805 = vmatprep.subr.mxu0 0.0
      %2806 = vmatpush1.msra.mxu0 0.0
      %2807 = vmatprep.subr.mxu0 0.0
      %2808 = vmatpush1.msra.mxu0 0.0
      %2809 = vmatprep.subr.mxu0 0.0
      %2810 = vmatpush1.msra.mxu0 0.0
      %2811 = vmatprep.subr.mxu0 0.0
      %2812 = vmatpush1.msra.mxu0 0.0
      %2813 = vmatprep.subr.mxu0 0.0
      %2814 = vmatpush1.msra.mxu0 0.0
      %2815 = vmatprep.subr.mxu0 0.0
      %2816 = vmatpush1.msra.mxu0 0.0
      %2817 = vmatprep.subr.mxu0 0.0
      %2818 = vmatpush1.msra.mxu0 0.0
      %2819 = vmatprep.subr.mxu0 0.0
      %2820 = vmatpush1.msra.mxu0 0.0
      %2821 = vmatprep.subr.mxu0 0.0
      %2822 = vmatpush1.msra.mxu0 0.0
      %2823 = vmatprep.subr.mxu0 0.0
      %2824 = vmatpush1.msra.mxu0 0.0
      %2825 = vmatprep.subr.mxu0 0.0
      %2826 = vmatpush1.msra.mxu0 0.0
      %2827 = vmatprep.mubr.f32.mxu0 0.0
      %2828 = vmatmul.mubr.f32.gmra.mrb[0].mxu0 %v2674
      %v2829 = vpop.f32.mrb[0].mxu0
      %v2830 = vadd.f32 0.0, %v2829
      %v2831 = vpop.f32.mrb[0].mxu0
      %2832 = vmatprep.mubr.f32.mxu0 0.0
      %2833 = vmatmul.mubr.f32.gmra.mrb[0].mxu0 %v2677
      %v2834 = vpop.f32.mrb[0].mxu0
      %v2835 = vadd.f32 0.0, %v2834
      %v2836 = vpop.f32.mrb[0].mxu0
      %2837 = vmatprep.mubr.f32.mxu0 0.0
      %2838 = vmatmul.mubr.f32.gmra.mrb[0].mxu0 %v2680
      %v2839 = vpop.f32.mrb[0].mxu0
      %v2840 = vadd.f32 0.0, %v2839
      %v2841 = vpop.f32.mrb[0].mxu0
      %2842 = vmatprep.mubr.f32.mxu0 0.0
      %2843 = vmatmul.mubr.f32.gmra.mrb[0].mxu0 %v2683
      %v2844 = vpop.f32.mrb[0].mxu0
      %v2845 = vadd.f32 0.0, %v2844
      %v2846 = vpop.f32.mrb[0].mxu0
      %2847 = vmatprep.mubr.f32.mxu0 0.0
      %2848 = vmatmul.mubr.f32.gmra.mrb[0].mxu0 %v2686
      %v2849 = vpop.f32.mrb[0].mxu0
      %v2850 = vadd.f32 0.0, %v2849
      %v2851 = vpop.f32.mrb[0].mxu0
      %2852 = vmatprep.mubr.f32.mxu0 0.0
      %2853 = vmatmul.mubr.f32.gmra.mrb[0].mxu0 %v2689
      %v2854 = vpop.f32.mrb[0].mxu0
      %v2855 = vadd.f32 0.0, %v2854
      %v2856 = vpop.f32.mrb[0].mxu0
      %2857 = vmatprep.mubr.f32.mxu0 0.0
      %2858 = vmatmul.mubr.f32.gmra.mrb[0].mxu0 %v2692
      %v2859 = vpop.f32.mrb[0].mxu0
      %v2860 = vadd.f32 0.0, %v2859
      %v2861 = vpop.f32.mrb[0].mxu0
      %2862 = vmatprep.mubr.f32.mxu0 0.0
      %2863 = vmatmul.mubr.f32.gmra.mrb[0].mxu0 %v2695
      %v2864 = vpop.f32.mrb[0].mxu0
      %v2865 = vadd.f32 0.0, %v2864
      %v2866 = vpop.f32.mrb[0].mxu0
      %2867 = vmatprep.mubr.f32.mxu0 0.0
      %2868 = vmatmul.mubr.f32.gmra.mrb[0].mxu0 %v2698
      %v2869 = vpop.f32.mrb[0].mxu0
      %v2870 = vadd.f32 0.0, %v2869
      %v2871 = vpop.f32.mrb[0].mxu0
      %2872 = vmatprep.mubr.f32.mxu0 0.0
      %2873 = vmatmul.mubr.f32.gmra.mrb[0].mxu0 %v2701
      %v2874 = vpop.f32.mrb[0].mxu0
      %v2875 = vadd.f32 0.0, %v2874
      %v2876 = vpop.f32.mrb[0].mxu0
      %2877 = vmatprep.mubr.f32.mxu0 0.0
      %2878 = vmatmul.mubr.f32.gmra.mrb[0].mxu0 %v2704
      %v2879 = vpop.f32.mrb[0].mxu0
      %v2880 = vadd.f32 0.0, %v2879
      %v2881 = vpop.f32.mrb[0].mxu0
      %2882 = vmatprep.mubr.f32.mxu0 0.0
      %2883 = vmatmul.mubr.f32.gmra.mrb[0].mxu0 %v2707
      %v2884 = vpop.f32.mrb[0].mxu0
      %v2885 = vadd.f32 0.0, %v2884
      %v2886 = vpop.f32.mrb[0].mxu0
      %2887 = vmatprep.mubr.f32.mxu0 0.0
      %2888 = vmatmul.mubr.f32.gmra.mrb[0].mxu0 %v2710
      %v2889 = vpop.f32.mrb[0].mxu0
      %v2890 = vadd.f32 0.0, %v2889
      %v2891 = vpop.f32.mrb[0].mxu0
      %2892 = vmatprep.mubr.f32.mxu0 0.0
      %2893 = vmatmul.mubr.f32.gmra.mrb[0].mxu0 %v2713
      %v2894 = vpop.f32.mrb[0].mxu0
      %v2895 = vadd.f32 0.0, %v2894
      %v2896 = vpop.f32.mrb[0].mxu0
      %2897 = vmatprep.mubr.f32.mxu0 0.0
      %2898 = vmatmul.mubr.f32.gmra.mrb[0].mxu0 %v2716
      %v2899 = vpop.f32.mrb[0].mxu0
      %v2900 = vadd.f32 0.0, %v2899
      %v2901 = vpop.f32.mrb[0].mxu0
      %2902 = vmatprep.mubr.f32.mxu0 0.0
      %2903 = vmatmul.mubr.f32.gmra.mrb[0].mxu0 %v2719
      %v2904 = vpop.f32.mrb[0].mxu0
      %v2905 = vadd.f32 0.0, %v2904
      %v2906 = vpop.f32.mrb[0].mxu0
      %2907 = vmatprep.mubr.f32.mxu0 0.0
      %2908 = vmatmul.mubr.f32.gmra.mrb[0].mxu0 %v2722
      %v2909 = vpop.f32.mrb[0].mxu0
      %v2910 = vadd.f32 0.0, %v2909
      %v2911 = vpop.f32.mrb[0].mxu0
      %2912 = vmatprep.mubr.f32.mxu0 0.0
      %2913 = vmatmul.mubr.f32.gmra.mrb[0].mxu0 %v2725
      %v2914 = vpop.f32.mrb[0].mxu0
      %v2915 = vadd.f32 0.0, %v2914
      %v2916 = vpop.f32.mrb[0].mxu0
      %2917 = vmatprep.mubr.f32.mxu0 0.0
      %2918 = vmatmul.mubr.f32.gmra.mrb[0].mxu0 %v2728
      %v2919 = vpop.f32.mrb[0].mxu0
      %v2920 = vadd.f32 0.0, %v2919
      %v2921 = vpop.f32.mrb[0].mxu0
      %2922 = vmatprep.mubr.f32.mxu0 0.0
      %2923 = vmatmul.mubr.f32.gmra.mrb[0].mxu0 %v2731
      %v2924 = vpop.f32.mrb[0].mxu0
      %v2925 = vadd.f32 0.0, %v2924
      %v2926 = vpop.f32.mrb[0].mxu0
      %2927 = vmatprep.mubr.f32.mxu0 0.0
      %2928 = vmatmul.mubr.f32.gmra.mrb[0].mxu0 %v2734
      %v2929 = vpop.f32.mrb[0].mxu0
      %v2930 = vadd.f32 0.0, %v2929
      %v2931 = vpop.f32.mrb[0].mxu0
      %2932 = vmatprep.mubr.f32.mxu0 0.0
      %2933 = vmatmul.mubr.f32.gmra.mrb[0].mxu0 %v2737
      %v2934 = vpop.f32.mrb[0].mxu0
      %v2935 = vadd.f32 0.0, %v2934
      %v2936 = vpop.f32.mrb[0].mxu0
      %2937 = vmatprep.mubr.f32.mxu0 0.0
      %2938 = vmatmul.mubr.f32.gmra.mrb[0].mxu0 %v2740
      %v2939 = vpop.f32.mrb[0].mxu0
      %v2940 = vadd.f32 0.0, %v2939
      %v2941 = vpop.f32.mrb[0].mxu0
      %2942 = vmatprep.mubr.f32.mxu0 0.0
      %2943 = vmatmul.mubr.f32.gmra.mrb[0].mxu0 %v2743
      %v2944 = vpop.f32.mrb[0].mxu0
      %v2945 = vadd.f32 0.0, %v2944
      %v2946 = vpop.f32.mrb[0].mxu0
      %2947 = vmatprep.mubr.f32.mxu0 0.0
      %2948 = vmatmul.mubr.f32.gmra.mrb[0].mxu0 %v2746
      %v2949 = vpop.f32.mrb[0].mxu0
      %v2950 = vadd.f32 0.0, %v2949
      %v2951 = vpop.f32.mrb[0].mxu0
      %2952 = vmatprep.mubr.f32.mxu0 0.0
      %2953 = vmatmul.mubr.f32.gmra.mrb[0].mxu0 %v2749
      %v2954 = vpop.f32.mrb[0].mxu0
      %v2955 = vadd.f32 0.0, %v2954
      %v2956 = vpop.f32.mrb[0].mxu0
      %2957 = vmatprep.mubr.f32.mxu0 0.0
      %2958 = vmatmul.mubr.f32.gmra.mrb[0].mxu0 %v2752
      %v2959 = vpop.f32.mrb[0].mxu0
      %v2960 = vadd.f32 0.0, %v2959
      %v2961 = vpop.f32.mrb[0].mxu0
      %2962 = vmatprep.mubr.f32.mxu0 0.0
      %2963 = vmatmul.mubr.f32.gmra.mrb[0].mxu0 %v2755
      %v2964 = vpop.f32.mrb[0].mxu0
      %v2965 = vadd.f32 0.0, %v2964
      %v2966 = vpop.f32.mrb[0].mxu0
      %2967 = vmatprep.mubr.f32.mxu0 0.0
      %2968 = vmatmul.mubr.f32.gmra.mrb[0].mxu0 %v2758
      %v2969 = vpop.f32.mrb[0].mxu0
      %v2970 = vadd.f32 0.0, %v2969
      %v2971 = vpop.f32.mrb[0].mxu0
      %2972 = vmatprep.mubr.f32.mxu0 0.0
      %2973 = vmatmul.mubr.f32.gmra.mrb[0].mxu0 %v2761
      %v2974 = vpop.f32.mrb[0].mxu0
      %v2975 = vadd.f32 0.0, %v2974
      %v2976 = vpop.f32.mrb[0].mxu0
      %2977 = vdwg.mxu0
      %v2978 = vadd.f32 %v2611, %v2830
      %v2979 = vadd.f32 %v2612, %v2835
      %v2980 = vadd.f32 %v2613, %v2840
      %v2981 = vadd.f32 %v2614, %v2845
      %v2982 = vadd.f32 %v2615, %v2850
      %v2983 = vadd.f32 %v2616, %v2855
      %v2984 = vadd.f32 %v2617, %v2860
      %v2985 = vadd.f32 %v2618, %v2865
      %v2986 = vadd.f32 %v2619, %v2870
      %v2987 = vadd.f32 %v2620, %v2875
      %v2988 = vadd.f32 %v2621, %v2880
      %v2989 = vadd.f32 %v2622, %v2885
      %v2990 = vadd.f32 %v2623, %v2890
      %v2991 = vadd.f32 %v2624, %v2895
      %v2992 = vadd.f32 %v2625, %v2900
      %v2993 = vadd.f32 %v2626, %v2905
      %v2994 = vadd.f32 %v2627, %v2910
      %v2995 = vadd.f32 %v2628, %v2915
      %v2996 = vadd.f32 %v2629, %v2920
      %v2997 = vadd.f32 %v2630, %v2925
      %v2998 = vadd.f32 %v2631, %v2930
      %v2999 = vadd.f32 %v2632, %v2935
      %v3000 = vadd.f32 %v2633, %v2940
      %v3001 = vadd.f32 %v2634, %v2945
      %v3002 = vadd.f32 %v2635, %v2950
      %v3003 = vadd.f32 %v2636, %v2955
      %v3004 = vadd.f32 %v2637, %v2960
      %v3005 = vadd.f32 %v2638, %v2965
      %v3006 = vadd.f32 %v2639, %v2970
      %v3007 = vadd.f32 %v2640, %v2975
      %v3008 = vld [vmem:[#allocation2 + $0x24] sm:$0xff]
      %v3009 = vld [vmem:[#allocation2 + $0x2c] sm:$0xff]
      %v3010 = vld [vmem:[#allocation2 + $0x34] sm:$0xff]
      %v3011 = vld [vmem:[#allocation2 + $0x3c] sm:$0xff]
      %v3012 = vld [vmem:[#allocation2 + $0x44] sm:$0xff]
      %v3013 = vld [vmem:[#allocation2 + $0x4c] sm:$0xff]
      %v3014 = vld [vmem:[#allocation2 + $0x54] sm:$0xff]
      %v3015 = vld [vmem:[#allocation2 + $0x5c] sm:$0xff]
      %v3016 = vld [vmem:[#allocation2 + $0x64] sm:$0xff]
      %v3017 = vld [vmem:[#allocation2 + $0x6c] sm:$0xff]
      %v3018 = vld [vmem:[#allocation2 + $0x74] sm:$0xff]
      %v3019 = vld [vmem:[#allocation2 + $0x7c] sm:$0xff]
      %v3020 = vld [vmem:[#allocation2 + $0x84] sm:$0xff]
      %v3021 = vld [vmem:[#allocation2 + $0x8c] sm:$0xff]
      %v3022 = vld [vmem:[#allocation2 + $0x94] sm:$0xff]
      %v3023 = vld [vmem:[#allocation2 + $0x9c] sm:$0xff]
      %v3024 = vld [vmem:[#allocation2 + $0xa4] sm:$0xff]
      %v3025 = vld [vmem:[#allocation2 + $0xac] sm:$0xff]
      %v3026 = vld [vmem:[#allocation2 + $0xb4] sm:$0xff]
      %v3027 = vld [vmem:[#allocation2 + $0xbc] sm:$0xff]
      %v3028 = vld [vmem:[#allocation2 + $0xc4] sm:$0xff]
      %v3029 = vld [vmem:[#allocation2 + $0xcc] sm:$0xff]
      %v3030 = vld [vmem:[#allocation2 + $0xd4] sm:$0xff]
      %v3031 = vld [vmem:[#allocation2 + $0xdc] sm:$0xff]
      %v3032 = vld [vmem:[#allocation2 + $0xe4] sm:$0xff]
      %v3033 = vld [vmem:[#allocation2 + $0xec] sm:$0xff]
      %v3034 = vld [vmem:[#allocation2 + $0xf4] sm:$0xff]
      %v3035 = vld [vmem:[#allocation2 + $0xfc] sm:$0xff]
      %v3036 = vld [vmem:[#allocation2 + $0x104] sm:$0xff]
      %v3037 = vld [vmem:[#allocation2 + $0x10c] sm:$0xff]
      %s3038 = scalar_lea.vmem %s6, 48
      %v3039 = vld [vmem:[%s3038] sm:$0xff]
      %v3041 = vsel %vm796, %v3008, 0
      %v3044 = vsel %vm796, %v3009, 0
      %v3047 = vsel %vm796, %v3010, 0
      %v3050 = vsel %vm796, %v3011, 0
      %v3053 = vsel %vm796, %v3012, 0
      %v3056 = vsel %vm796, %v3013, 0
      %v3059 = vsel %vm796, %v3014, 0
      %v3062 = vsel %vm796, %v3015, 0
      %v3065 = vsel %vm796, %v3016, 0
      %v3068 = vsel %vm796, %v3017, 0
      %v3071 = vsel %vm796, %v3018, 0
      %v3074 = vsel %vm796, %v3019, 0
      %v3077 = vsel %vm796, %v3020, 0
      %v3080 = vsel %vm796, %v3021, 0
      %v3083 = vsel %vm796, %v3022, 0
      %v3086 = vsel %vm796, %v3023, 0
      %v3089 = vsel %vm796, %v3024, 0
      %v3092 = vsel %vm796, %v3025, 0
      %v3095 = vsel %vm796, %v3026, 0
      %v3098 = vsel %vm796, %v3027, 0
      %v3101 = vsel %vm796, %v3028, 0
      %v3104 = vsel %vm796, %v3029, 0
      %v3107 = vsel %vm796, %v3030, 0
      %v3110 = vsel %vm796, %v3031, 0
      %v3113 = vsel %vm796, %v3032, 0
      %v3116 = vsel %vm796, %v3033, 0
      %v3119 = vsel %vm796, %v3034, 0
      %v3122 = vsel %vm796, %v3035, 0
      %v3125 = vsel %vm796, %v3036, 0
      %v3128 = vsel %vm796, %v3037, 0
      %3130 = vmatprep.subr.mxu0 0.0
      %3131 = vmatpush1.msra.mxu0 %v3039
      %3132 = vmatprep.subr.mxu0 0.0
      %3133 = vmatpush1.msra.mxu0 0.0
      %3134 = vmatprep.subr.mxu0 0.0
      %3135 = vmatpush1.msra.mxu0 0.0
      %3136 = vmatprep.subr.mxu0 0.0
      %3137 = vmatpush1.msra.mxu0 0.0
      %3138 = vmatprep.subr.mxu0 0.0
      %3139 = vmatpush1.msra.mxu0 0.0
      %3140 = vmatprep.subr.mxu0 0.0
      %3141 = vmatpush1.msra.mxu0 0.0
      %3142 = vmatprep.subr.mxu0 0.0
      %3143 = vmatpush1.msra.mxu0 0.0
      %3144 = vmatprep.subr.mxu0 0.0
      %3145 = vmatpush1.msra.mxu0 0.0
      %3146 = vmatprep.subr.mxu0 0.0
      %3147 = vmatpush1.msra.mxu0 0.0
      %3148 = vmatprep.subr.mxu0 0.0
      %3149 = vmatpush1.msra.mxu0 0.0
      %3150 = vmatprep.subr.mxu0 0.0
      %3151 = vmatpush1.msra.mxu0 0.0
      %3152 = vmatprep.subr.mxu0 0.0
      %3153 = vmatpush1.msra.mxu0 0.0
      %3154 = vmatprep.subr.mxu0 0.0
      %3155 = vmatpush1.msra.mxu0 0.0
      %3156 = vmatprep.subr.mxu0 0.0
      %3157 = vmatpush1.msra.mxu0 0.0
      %3158 = vmatprep.subr.mxu0 0.0
      %3159 = vmatpush1.msra.mxu0 0.0
      %3160 = vmatprep.subr.mxu0 0.0
      %3161 = vmatpush1.msra.mxu0 0.0
      %3162 = vmatprep.subr.mxu0 0.0
      %3163 = vmatpush1.msra.mxu0 0.0
      %3164 = vmatprep.subr.mxu0 0.0
      %3165 = vmatpush1.msra.mxu0 0.0
      %3166 = vmatprep.subr.mxu0 0.0
      %3167 = vmatpush1.msra.mxu0 0.0
      %3168 = vmatprep.subr.mxu0 0.0
      %3169 = vmatpush1.msra.mxu0 0.0
      %3170 = vmatprep.subr.mxu0 0.0
      %3171 = vmatpush1.msra.mxu0 0.0
      %3172 = vmatprep.subr.mxu0 0.0
      %3173 = vmatpush1.msra.mxu0 0.0
      %3174 = vmatprep.subr.mxu0 0.0
      %3175 = vmatpush1.msra.mxu0 0.0
      %3176 = vmatprep.subr.mxu0 0.0
      %3177 = vmatpush1.msra.mxu0 0.0
      %3178 = vmatprep.subr.mxu0 0.0
      %3179 = vmatpush1.msra.mxu0 0.0
      %3180 = vmatprep.subr.mxu0 0.0
      %3181 = vmatpush1.msra.mxu0 0.0
      %3182 = vmatprep.subr.mxu0 0.0
      %3183 = vmatpush1.msra.mxu0 0.0
      %3184 = vmatprep.subr.mxu0 0.0
      %3185 = vmatpush1.msra.mxu0 0.0
      %3186 = vmatprep.subr.mxu0 0.0
      %3187 = vmatpush1.msra.mxu0 0.0
      %3188 = vmatprep.subr.mxu0 0.0
      %3189 = vmatpush1.msra.mxu0 0.0
      %3190 = vmatprep.subr.mxu0 0.0
      %3191 = vmatpush1.msra.mxu0 0.0
      %3192 = vmatprep.subr.mxu0 0.0
      %3193 = vmatpush1.msra.mxu0 0.0
      %3194 = vmatprep.mubr.f32.mxu0 0.0
      %3195 = vmatmul.mubr.f32.gmra.mrb[0].mxu0 %v3041
      %v3196 = vpop.f32.mrb[0].mxu0
      %v3197 = vadd.f32 0.0, %v3196
      %v3198 = vpop.f32.mrb[0].mxu0
      %3199 = vmatprep.mubr.f32.mxu0 0.0
      %3200 = vmatmul.mubr.f32.gmra.mrb[0].mxu0 %v3044
      %v3201 = vpop.f32.mrb[0].mxu0
      %v3202 = vadd.f32 0.0, %v3201
      %v3203 = vpop.f32.mrb[0].mxu0
      %3204 = vmatprep.mubr.f32.mxu0 0.0
      %3205 = vmatmul.mubr.f32.gmra.mrb[0].mxu0 %v3047
      %v3206 = vpop.f32.mrb[0].mxu0
      %v3207 = vadd.f32 0.0, %v3206
      %v3208 = vpop.f32.mrb[0].mxu0
      %3209 = vmatprep.mubr.f32.mxu0 0.0
      %3210 = vmatmul.mubr.f32.gmra.mrb[0].mxu0 %v3050
      %v3211 = vpop.f32.mrb[0].mxu0
      %v3212 = vadd.f32 0.0, %v3211
      %v3213 = vpop.f32.mrb[0].mxu0
      %3214 = vmatprep.mubr.f32.mxu0 0.0
      %3215 = vmatmul.mubr.f32.gmra.mrb[0].mxu0 %v3053
      %v3216 = vpop.f32.mrb[0].mxu0
      %v3217 = vadd.f32 0.0, %v3216
      %v3218 = vpop.f32.mrb[0].mxu0
      %3219 = vmatprep.mubr.f32.mxu0 0.0
      %3220 = vmatmul.mubr.f32.gmra.mrb[0].mxu0 %v3056
      %v3221 = vpop.f32.mrb[0].mxu0
      %v3222 = vadd.f32 0.0, %v3221
      %v3223 = vpop.f32.mrb[0].mxu0
      %3224 = vmatprep.mubr.f32.mxu0 0.0
      %3225 = vmatmul.mubr.f32.gmra.mrb[0].mxu0 %v3059
      %v3226 = vpop.f32.mrb[0].mxu0
      %v3227 = vadd.f32 0.0, %v3226
      %v3228 = vpop.f32.mrb[0].mxu0
      %3229 = vmatprep.mubr.f32.mxu0 0.0
      %3230 = vmatmul.mubr.f32.gmra.mrb[0].mxu0 %v3062
      %v3231 = vpop.f32.mrb[0].mxu0
      %v3232 = vadd.f32 0.0, %v3231
      %v3233 = vpop.f32.mrb[0].mxu0
      %3234 = vmatprep.mubr.f32.mxu0 0.0
      %3235 = vmatmul.mubr.f32.gmra.mrb[0].mxu0 %v3065
      %v3236 = vpop.f32.mrb[0].mxu0
      %v3237 = vadd.f32 0.0, %v3236
      %v3238 = vpop.f32.mrb[0].mxu0
      %3239 = vmatprep.mubr.f32.mxu0 0.0
      %3240 = vmatmul.mubr.f32.gmra.mrb[0].mxu0 %v3068
      %v3241 = vpop.f32.mrb[0].mxu0
      %v3242 = vadd.f32 0.0, %v3241
      %v3243 = vpop.f32.mrb[0].mxu0
      %3244 = vmatprep.mubr.f32.mxu0 0.0
      %3245 = vmatmul.mubr.f32.gmra.mrb[0].mxu0 %v3071
      %v3246 = vpop.f32.mrb[0].mxu0
      %v3247 = vadd.f32 0.0, %v3246
      %v3248 = vpop.f32.mrb[0].mxu0
      %3249 = vmatprep.mubr.f32.mxu0 0.0
      %3250 = vmatmul.mubr.f32.gmra.mrb[0].mxu0 %v3074
      %v3251 = vpop.f32.mrb[0].mxu0
      %v3252 = vadd.f32 0.0, %v3251
      %v3253 = vpop.f32.mrb[0].mxu0
      %3254 = vmatprep.mubr.f32.mxu0 0.0
      %3255 = vmatmul.mubr.f32.gmra.mrb[0].mxu0 %v3077
      %v3256 = vpop.f32.mrb[0].mxu0
      %v3257 = vadd.f32 0.0, %v3256
      %v3258 = vpop.f32.mrb[0].mxu0
      %3259 = vmatprep.mubr.f32.mxu0 0.0
      %3260 = vmatmul.mubr.f32.gmra.mrb[0].mxu0 %v3080
      %v3261 = vpop.f32.mrb[0].mxu0
      %v3262 = vadd.f32 0.0, %v3261
      %v3263 = vpop.f32.mrb[0].mxu0
      %3264 = vmatprep.mubr.f32.mxu0 0.0
      %3265 = vmatmul.mubr.f32.gmra.mrb[0].mxu0 %v3083
      %v3266 = vpop.f32.mrb[0].mxu0
      %v3267 = vadd.f32 0.0, %v3266
      %v3268 = vpop.f32.mrb[0].mxu0
      %3269 = vmatprep.mubr.f32.mxu0 0.0
      %3270 = vmatmul.mubr.f32.gmra.mrb[0].mxu0 %v3086
      %v3271 = vpop.f32.mrb[0].mxu0
      %v3272 = vadd.f32 0.0, %v3271
      %v3273 = vpop.f32.mrb[0].mxu0
      %3274 = vmatprep.mubr.f32.mxu0 0.0
      %3275 = vmatmul.mubr.f32.gmra.mrb[0].mxu0 %v3089
      %v3276 = vpop.f32.mrb[0].mxu0
      %v3277 = vadd.f32 0.0, %v3276
      %v3278 = vpop.f32.mrb[0].mxu0
      %3279 = vmatprep.mubr.f32.mxu0 0.0
      %3280 = vmatmul.mubr.f32.gmra.mrb[0].mxu0 %v3092
      %v3281 = vpop.f32.mrb[0].mxu0
      %v3282 = vadd.f32 0.0, %v3281
      %v3283 = vpop.f32.mrb[0].mxu0
      %3284 = vmatprep.mubr.f32.mxu0 0.0
      %3285 = vmatmul.mubr.f32.gmra.mrb[0].mxu0 %v3095
      %v3286 = vpop.f32.mrb[0].mxu0
      %v3287 = vadd.f32 0.0, %v3286
      %v3288 = vpop.f32.mrb[0].mxu0
      %3289 = vmatprep.mubr.f32.mxu0 0.0
      %3290 = vmatmul.mubr.f32.gmra.mrb[0].mxu0 %v3098
      %v3291 = vpop.f32.mrb[0].mxu0
      %v3292 = vadd.f32 0.0, %v3291
      %v3293 = vpop.f32.mrb[0].mxu0
      %3294 = vmatprep.mubr.f32.mxu0 0.0
      %3295 = vmatmul.mubr.f32.gmra.mrb[0].mxu0 %v3101
      %v3296 = vpop.f32.mrb[0].mxu0
      %v3297 = vadd.f32 0.0, %v3296
      %v3298 = vpop.f32.mrb[0].mxu0
      %3299 = vmatprep.mubr.f32.mxu0 0.0
      %3300 = vmatmul.mubr.f32.gmra.mrb[0].mxu0 %v3104
      %v3301 = vpop.f32.mrb[0].mxu0
      %v3302 = vadd.f32 0.0, %v3301
      %v3303 = vpop.f32.mrb[0].mxu0
      %3304 = vmatprep.mubr.f32.mxu0 0.0
      %3305 = vmatmul.mubr.f32.gmra.mrb[0].mxu0 %v3107
      %v3306 = vpop.f32.mrb[0].mxu0
      %v3307 = vadd.f32 0.0, %v3306
      %v3308 = vpop.f32.mrb[0].mxu0
      %3309 = vmatprep.mubr.f32.mxu0 0.0
      %3310 = vmatmul.mubr.f32.gmra.mrb[0].mxu0 %v3110
      %v3311 = vpop.f32.mrb[0].mxu0
      %v3312 = vadd.f32 0.0, %v3311
      %v3313 = vpop.f32.mrb[0].mxu0
      %3314 = vmatprep.mubr.f32.mxu0 0.0
      %3315 = vmatmul.mubr.f32.gmra.mrb[0].mxu0 %v3113
      %v3316 = vpop.f32.mrb[0].mxu0
      %v3317 = vadd.f32 0.0, %v3316
      %v3318 = vpop.f32.mrb[0].mxu0
      %3319 = vmatprep.mubr.f32.mxu0 0.0
      %3320 = vmatmul.mubr.f32.gmra.mrb[0].mxu0 %v3116
      %v3321 = vpop.f32.mrb[0].mxu0
      %v3322 = vadd.f32 0.0, %v3321
      %v3323 = vpop.f32.mrb[0].mxu0
      %3324 = vmatprep.mubr.f32.mxu0 0.0
      %3325 = vmatmul.mubr.f32.gmra.mrb[0].mxu0 %v3119
      %v3326 = vpop.f32.mrb[0].mxu0
      %v3327 = vadd.f32 0.0, %v3326
      %v3328 = vpop.f32.mrb[0].mxu0
      %3329 = vmatprep.mubr.f32.mxu0 0.0
      %3330 = vmatmul.mubr.f32.gmra.mrb[0].mxu0 %v3122
      %v3331 = vpop.f32.mrb[0].mxu0
      %v3332 = vadd.f32 0.0, %v3331
      %v3333 = vpop.f32.mrb[0].mxu0
      %3334 = vmatprep.mubr.f32.mxu0 0.0
      %3335 = vmatmul.mubr.f32.gmra.mrb[0].mxu0 %v3125
      %v3336 = vpop.f32.mrb[0].mxu0
      %v3337 = vadd.f32 0.0, %v3336
      %v3338 = vpop.f32.mrb[0].mxu0
      %3339 = vmatprep.mubr.f32.mxu0 0.0
      %3340 = vmatmul.mubr.f32.gmra.mrb[0].mxu0 %v3128
      %v3341 = vpop.f32.mrb[0].mxu0
      %v3342 = vadd.f32 0.0, %v3341
      %v3343 = vpop.f32.mrb[0].mxu0
      %3344 = vdwg.mxu0
      %v3345 = vadd.f32 %v2978, %v3197
      %v3346 = vadd.f32 %v2979, %v3202
      %v3347 = vadd.f32 %v2980, %v3207
      %v3348 = vadd.f32 %v2981, %v3212
      %v3349 = vadd.f32 %v2982, %v3217
      %v3350 = vadd.f32 %v2983, %v3222
      %v3351 = vadd.f32 %v2984, %v3227
      %v3352 = vadd.f32 %v2985, %v3232
      %v3353 = vadd.f32 %v2986, %v3237
      %v3354 = vadd.f32 %v2987, %v3242
      %v3355 = vadd.f32 %v2988, %v3247
      %v3356 = vadd.f32 %v2989, %v3252
      %v3357 = vadd.f32 %v2990, %v3257
      %v3358 = vadd.f32 %v2991, %v3262
      %v3359 = vadd.f32 %v2992, %v3267
      %v3360 = vadd.f32 %v2993, %v3272
      %v3361 = vadd.f32 %v2994, %v3277
      %v3362 = vadd.f32 %v2995, %v3282
      %v3363 = vadd.f32 %v2996, %v3287
      %v3364 = vadd.f32 %v2997, %v3292
      %v3365 = vadd.f32 %v2998, %v3297
      %v3366 = vadd.f32 %v2999, %v3302
      %v3367 = vadd.f32 %v3000, %v3307
      %v3368 = vadd.f32 %v3001, %v3312
      %v3369 = vadd.f32 %v3002, %v3317
      %v3370 = vadd.f32 %v3003, %v3322
      %v3371 = vadd.f32 %v3004, %v3327
      %v3372 = vadd.f32 %v3005, %v3332
      %v3373 = vadd.f32 %v3006, %v3337
      %v3374 = vadd.f32 %v3007, %v3342
      %v3375 = vld [vmem:[#allocation2 + $0x25] sm:$0xff]
      %v3376 = vld [vmem:[#allocation2 + $0x2d] sm:$0xff]
      %v3377 = vld [vmem:[#allocation2 + $0x35] sm:$0xff]
      %v3378 = vld [vmem:[#allocation2 + $0x3d] sm:$0xff]
      %v3379 = vld [vmem:[#allocation2 + $0x45] sm:$0xff]
      %v3380 = vld [vmem:[#allocation2 + $0x4d] sm:$0xff]
      %v3381 = vld [vmem:[#allocation2 + $0x55] sm:$0xff]
      %v3382 = vld [vmem:[#allocation2 + $0x5d] sm:$0xff]
      %v3383 = vld [vmem:[#allocation2 + $0x65] sm:$0xff]
      %v3384 = vld [vmem:[#allocation2 + $0x6d] sm:$0xff]
      %v3385 = vld [vmem:[#allocation2 + $0x75] sm:$0xff]
      %v3386 = vld [vmem:[#allocation2 + $0x7d] sm:$0xff]
      %v3387 = vld [vmem:[#allocation2 + $0x85] sm:$0xff]
      %v3388 = vld [vmem:[#allocation2 + $0x8d] sm:$0xff]
      %v3389 = vld [vmem:[#allocation2 + $0x95] sm:$0xff]
      %v3390 = vld [vmem:[#allocation2 + $0x9d] sm:$0xff]
      %v3391 = vld [vmem:[#allocation2 + $0xa5] sm:$0xff]
      %v3392 = vld [vmem:[#allocation2 + $0xad] sm:$0xff]
      %v3393 = vld [vmem:[#allocation2 + $0xb5] sm:$0xff]
      %v3394 = vld [vmem:[#allocation2 + $0xbd] sm:$0xff]
      %v3395 = vld [vmem:[#allocation2 + $0xc5] sm:$0xff]
      %v3396 = vld [vmem:[#allocation2 + $0xcd] sm:$0xff]
      %v3397 = vld [vmem:[#allocation2 + $0xd5] sm:$0xff]
      %v3398 = vld [vmem:[#allocation2 + $0xdd] sm:$0xff]
      %v3399 = vld [vmem:[#allocation2 + $0xe5] sm:$0xff]
      %v3400 = vld [vmem:[#allocation2 + $0xed] sm:$0xff]
      %v3401 = vld [vmem:[#allocation2 + $0xf5] sm:$0xff]
      %v3402 = vld [vmem:[#allocation2 + $0xfd] sm:$0xff]
      %v3403 = vld [vmem:[#allocation2 + $0x105] sm:$0xff]
      %v3404 = vld [vmem:[#allocation2 + $0x10d] sm:$0xff]
      %s3405 = scalar_lea.vmem %s6, 56
      %v3406 = vld [vmem:[%s3405] sm:$0xff]
      %v3408 = vsel %vm796, %v3375, 0
      %v3411 = vsel %vm796, %v3376, 0
      %v3414 = vsel %vm796, %v3377, 0
      %v3417 = vsel %vm796, %v3378, 0
      %v3420 = vsel %vm796, %v3379, 0
      %v3423 = vsel %vm796, %v3380, 0
      %v3426 = vsel %vm796, %v3381, 0
      %v3429 = vsel %vm796, %v3382, 0
      %v3432 = vsel %vm796, %v3383, 0
      %v3435 = vsel %vm796, %v3384, 0
      %v3438 = vsel %vm796, %v3385, 0
      %v3441 = vsel %vm796, %v3386, 0
      %v3444 = vsel %vm796, %v3387, 0
      %v3447 = vsel %vm796, %v3388, 0
      %v3450 = vsel %vm796, %v3389, 0
      %v3453 = vsel %vm796, %v3390, 0
      %v3456 = vsel %vm796, %v3391, 0
      %v3459 = vsel %vm796, %v3392, 0
      %v3462 = vsel %vm796, %v3393, 0
      %v3465 = vsel %vm796, %v3394, 0
      %v3468 = vsel %vm796, %v3395, 0
      %v3471 = vsel %vm796, %v3396, 0
      %v3474 = vsel %vm796, %v3397, 0
      %v3477 = vsel %vm796, %v3398, 0
      %v3480 = vsel %vm796, %v3399, 0
      %v3483 = vsel %vm796, %v3400, 0
      %v3486 = vsel %vm796, %v3401, 0
      %v3489 = vsel %vm796, %v3402, 0
      %v3492 = vsel %vm796, %v3403, 0
      %v3495 = vsel %vm796, %v3404, 0
      %3497 = vmatprep.subr.mxu0 0.0
      %3498 = vmatpush1.msra.mxu0 %v3406
      %3499 = vmatprep.subr.mxu0 0.0
      %3500 = vmatpush1.msra.mxu0 0.0
      %3501 = vmatprep.subr.mxu0 0.0
      %3502 = vmatpush1.msra.mxu0 0.0
      %3503 = vmatprep.subr.mxu0 0.0
      %3504 = vmatpush1.msra.mxu0 0.0
      %3505 = vmatprep.subr.mxu0 0.0
      %3506 = vmatpush1.msra.mxu0 0.0
      %3507 = vmatprep.subr.mxu0 0.0
      %3508 = vmatpush1.msra.mxu0 0.0
      %3509 = vmatprep.subr.mxu0 0.0
      %3510 = vmatpush1.msra.mxu0 0.0
      %3511 = vmatprep.subr.mxu0 0.0
      %3512 = vmatpush1.msra.mxu0 0.0
      %3513 = vmatprep.subr.mxu0 0.0
      %3514 = vmatpush1.msra.mxu0 0.0
      %3515 = vmatprep.subr.mxu0 0.0
      %3516 = vmatpush1.msra.mxu0 0.0
      %3517 = vmatprep.subr.mxu0 0.0
      %3518 = vmatpush1.msra.mxu0 0.0
      %3519 = vmatprep.subr.mxu0 0.0
      %3520 = vmatpush1.msra.mxu0 0.0
      %3521 = vmatprep.subr.mxu0 0.0
      %3522 = vmatpush1.msra.mxu0 0.0
      %3523 = vmatprep.subr.mxu0 0.0
      %3524 = vmatpush1.msra.mxu0 0.0
      %3525 = vmatprep.subr.mxu0 0.0
      %3526 = vmatpush1.msra.mxu0 0.0
      %3527 = vmatprep.subr.mxu0 0.0
      %3528 = vmatpush1.msra.mxu0 0.0
      %3529 = vmatprep.subr.mxu0 0.0
      %3530 = vmatpush1.msra.mxu0 0.0
      %3531 = vmatprep.subr.mxu0 0.0
      %3532 = vmatpush1.msra.mxu0 0.0
      %3533 = vmatprep.subr.mxu0 0.0
      %3534 = vmatpush1.msra.mxu0 0.0
      %3535 = vmatprep.subr.mxu0 0.0
      %3536 = vmatpush1.msra.mxu0 0.0
      %3537 = vmatprep.subr.mxu0 0.0
      %3538 = vmatpush1.msra.mxu0 0.0
      %3539 = vmatprep.subr.mxu0 0.0
      %3540 = vmatpush1.msra.mxu0 0.0
      %3541 = vmatprep.subr.mxu0 0.0
      %3542 = vmatpush1.msra.mxu0 0.0
      %3543 = vmatprep.subr.mxu0 0.0
      %3544 = vmatpush1.msra.mxu0 0.0
      %3545 = vmatprep.subr.mxu0 0.0
      %3546 = vmatpush1.msra.mxu0 0.0
      %3547 = vmatprep.subr.mxu0 0.0
      %3548 = vmatpush1.msra.mxu0 0.0
      %3549 = vmatprep.subr.mxu0 0.0
      %3550 = vmatpush1.msra.mxu0 0.0
      %3551 = vmatprep.subr.mxu0 0.0
      %3552 = vmatpush1.msra.mxu0 0.0
      %3553 = vmatprep.subr.mxu0 0.0
      %3554 = vmatpush1.msra.mxu0 0.0
      %3555 = vmatprep.subr.mxu0 0.0
      %3556 = vmatpush1.msra.mxu0 0.0
      %3557 = vmatprep.subr.mxu0 0.0
      %3558 = vmatpush1.msra.mxu0 0.0
      %3559 = vmatprep.subr.mxu0 0.0
      %3560 = vmatpush1.msra.mxu0 0.0
      %3561 = vmatprep.mubr.f32.mxu0 0.0
      %3562 = vmatmul.mubr.f32.gmra.mrb[0].mxu0 %v3408
      %v3563 = vpop.f32.mrb[0].mxu0
      %v3564 = vadd.f32 0.0, %v3563
      %v3565 = vpop.f32.mrb[0].mxu0
      %3566 = vmatprep.mubr.f32.mxu0 0.0
      %3567 = vmatmul.mubr.f32.gmra.mrb[0].mxu0 %v3411
      %v3568 = vpop.f32.mrb[0].mxu0
      %v3569 = vadd.f32 0.0, %v3568
      %v3570 = vpop.f32.mrb[0].mxu0
      %3571 = vmatprep.mubr.f32.mxu0 0.0
      %3572 = vmatmul.mubr.f32.gmra.mrb[0].mxu0 %v3414
      %v3573 = vpop.f32.mrb[0].mxu0
      %v3574 = vadd.f32 0.0, %v3573
      %v3575 = vpop.f32.mrb[0].mxu0
      %3576 = vmatprep.mubr.f32.mxu0 0.0
      %3577 = vmatmul.mubr.f32.gmra.mrb[0].mxu0 %v3417
      %v3578 = vpop.f32.mrb[0].mxu0
      %v3579 = vadd.f32 0.0, %v3578
      %v3580 = vpop.f32.mrb[0].mxu0
      %3581 = vmatprep.mubr.f32.mxu0 0.0
      %3582 = vmatmul.mubr.f32.gmra.mrb[0].mxu0 %v3420
      %v3583 = vpop.f32.mrb[0].mxu0
      %v3584 = vadd.f32 0.0, %v3583
      %v3585 = vpop.f32.mrb[0].mxu0
      %3586 = vmatprep.mubr.f32.mxu0 0.0
      %3587 = vmatmul.mubr.f32.gmra.mrb[0].mxu0 %v3423
      %v3588 = vpop.f32.mrb[0].mxu0
      %v3589 = vadd.f32 0.0, %v3588
      %v3590 = vpop.f32.mrb[0].mxu0
      %3591 = vmatprep.mubr.f32.mxu0 0.0
      %3592 = vmatmul.mubr.f32.gmra.mrb[0].mxu0 %v3426
      %v3593 = vpop.f32.mrb[0].mxu0
      %v3594 = vadd.f32 0.0, %v3593
      %v3595 = vpop.f32.mrb[0].mxu0
      %3596 = vmatprep.mubr.f32.mxu0 0.0
      %3597 = vmatmul.mubr.f32.gmra.mrb[0].mxu0 %v3429
      %v3598 = vpop.f32.mrb[0].mxu0
      %v3599 = vadd.f32 0.0, %v3598
      %v3600 = vpop.f32.mrb[0].mxu0
      %3601 = vmatprep.mubr.f32.mxu0 0.0
      %3602 = vmatmul.mubr.f32.gmra.mrb[0].mxu0 %v3432
      %v3603 = vpop.f32.mrb[0].mxu0
      %v3604 = vadd.f32 0.0, %v3603
      %v3605 = vpop.f32.mrb[0].mxu0
      %3606 = vmatprep.mubr.f32.mxu0 0.0
      %3607 = vmatmul.mubr.f32.gmra.mrb[0].mxu0 %v3435
      %v3608 = vpop.f32.mrb[0].mxu0
      %v3609 = vadd.f32 0.0, %v3608
      %v3610 = vpop.f32.mrb[0].mxu0
      %3611 = vmatprep.mubr.f32.mxu0 0.0
      %3612 = vmatmul.mubr.f32.gmra.mrb[0].mxu0 %v3438
      %v3613 = vpop.f32.mrb[0].mxu0
      %v3614 = vadd.f32 0.0, %v3613
      %v3615 = vpop.f32.mrb[0].mxu0
      %3616 = vmatprep.mubr.f32.mxu0 0.0
      %3617 = vmatmul.mubr.f32.gmra.mrb[0].mxu0 %v3441
      %v3618 = vpop.f32.mrb[0].mxu0
      %v3619 = vadd.f32 0.0, %v3618
      %v3620 = vpop.f32.mrb[0].mxu0
      %3621 = vmatprep.mubr.f32.mxu0 0.0
      %3622 = vmatmul.mubr.f32.gmra.mrb[0].mxu0 %v3444
      %v3623 = vpop.f32.mrb[0].mxu0
      %v3624 = vadd.f32 0.0, %v3623
      %v3625 = vpop.f32.mrb[0].mxu0
      %3626 = vmatprep.mubr.f32.mxu0 0.0
      %3627 = vmatmul.mubr.f32.gmra.mrb[0].mxu0 %v3447
      %v3628 = vpop.f32.mrb[0].mxu0
      %v3629 = vadd.f32 0.0, %v3628
      %v3630 = vpop.f32.mrb[0].mxu0
      %3631 = vmatprep.mubr.f32.mxu0 0.0
      %3632 = vmatmul.mubr.f32.gmra.mrb[0].mxu0 %v3450
      %v3633 = vpop.f32.mrb[0].mxu0
      %v3634 = vadd.f32 0.0, %v3633
      %v3635 = vpop.f32.mrb[0].mxu0
      %3636 = vmatprep.mubr.f32.mxu0 0.0
      %3637 = vmatmul.mubr.f32.gmra.mrb[0].mxu0 %v3453
      %v3638 = vpop.f32.mrb[0].mxu0
      %v3639 = vadd.f32 0.0, %v3638
      %v3640 = vpop.f32.mrb[0].mxu0
      %3641 = vmatprep.mubr.f32.mxu0 0.0
      %3642 = vmatmul.mubr.f32.gmra.mrb[0].mxu0 %v3456
      %v3643 = vpop.f32.mrb[0].mxu0
      %v3644 = vadd.f32 0.0, %v3643
      %v3645 = vpop.f32.mrb[0].mxu0
      %3646 = vmatprep.mubr.f32.mxu0 0.0
      %3647 = vmatmul.mubr.f32.gmra.mrb[0].mxu0 %v3459
      %v3648 = vpop.f32.mrb[0].mxu0
      %v3649 = vadd.f32 0.0, %v3648
      %v3650 = vpop.f32.mrb[0].mxu0
      %3651 = vmatprep.mubr.f32.mxu0 0.0
      %3652 = vmatmul.mubr.f32.gmra.mrb[0].mxu0 %v3462
      %v3653 = vpop.f32.mrb[0].mxu0
      %v3654 = vadd.f32 0.0, %v3653
      %v3655 = vpop.f32.mrb[0].mxu0
      %3656 = vmatprep.mubr.f32.mxu0 0.0
      %3657 = vmatmul.mubr.f32.gmra.mrb[0].mxu0 %v3465
      %v3658 = vpop.f32.mrb[0].mxu0
      %v3659 = vadd.f32 0.0, %v3658
      %v3660 = vpop.f32.mrb[0].mxu0
      %3661 = vmatprep.mubr.f32.mxu0 0.0
      %3662 = vmatmul.mubr.f32.gmra.mrb[0].mxu0 %v3468
      %v3663 = vpop.f32.mrb[0].mxu0
      %v3664 = vadd.f32 0.0, %v3663
      %v3665 = vpop.f32.mrb[0].mxu0
      %3666 = vmatprep.mubr.f32.mxu0 0.0
      %3667 = vmatmul.mubr.f32.gmra.mrb[0].mxu0 %v3471
      %v3668 = vpop.f32.mrb[0].mxu0
      %v3669 = vadd.f32 0.0, %v3668
      %v3670 = vpop.f32.mrb[0].mxu0
      %3671 = vmatprep.mubr.f32.mxu0 0.0
      %3672 = vmatmul.mubr.f32.gmra.mrb[0].mxu0 %v3474
      %v3673 = vpop.f32.mrb[0].mxu0
      %v3674 = vadd.f32 0.0, %v3673
      %v3675 = vpop.f32.mrb[0].mxu0
      %3676 = vmatprep.mubr.f32.mxu0 0.0
      %3677 = vmatmul.mubr.f32.gmra.mrb[0].mxu0 %v3477
      %v3678 = vpop.f32.mrb[0].mxu0
      %v3679 = vadd.f32 0.0, %v3678
      %v3680 = vpop.f32.mrb[0].mxu0
      %3681 = vmatprep.mubr.f32.mxu0 0.0
      %3682 = vmatmul.mubr.f32.gmra.mrb[0].mxu0 %v3480
      %v3683 = vpop.f32.mrb[0].mxu0
      %v3684 = vadd.f32 0.0, %v3683
      %v3685 = vpop.f32.mrb[0].mxu0
      %3686 = vmatprep.mubr.f32.mxu0 0.0
      %3687 = vmatmul.mubr.f32.gmra.mrb[0].mxu0 %v3483
      %v3688 = vpop.f32.mrb[0].mxu0
      %v3689 = vadd.f32 0.0, %v3688
      %v3690 = vpop.f32.mrb[0].mxu0
      %3691 = vmatprep.mubr.f32.mxu0 0.0
      %3692 = vmatmul.mubr.f32.gmra.mrb[0].mxu0 %v3486
      %v3693 = vpop.f32.mrb[0].mxu0
      %v3694 = vadd.f32 0.0, %v3693
      %v3695 = vpop.f32.mrb[0].mxu0
      %3696 = vmatprep.mubr.f32.mxu0 0.0
      %3697 = vmatmul.mubr.f32.gmra.mrb[0].mxu0 %v3489
      %v3698 = vpop.f32.mrb[0].mxu0
      %v3699 = vadd.f32 0.0, %v3698
      %v3700 = vpop.f32.mrb[0].mxu0
      %3701 = vmatprep.mubr.f32.mxu0 0.0
      %3702 = vmatmul.mubr.f32.gmra.mrb[0].mxu0 %v3492
      %v3703 = vpop.f32.mrb[0].mxu0
      %v3704 = vadd.f32 0.0, %v3703
      %v3705 = vpop.f32.mrb[0].mxu0
      %3706 = vmatprep.mubr.f32.mxu0 0.0
      %3707 = vmatmul.mubr.f32.gmra.mrb[0].mxu0 %v3495
      %v3708 = vpop.f32.mrb[0].mxu0
      %v3709 = vadd.f32 0.0, %v3708
      %v3710 = vpop.f32.mrb[0].mxu0
      %3711 = vdwg.mxu0
      %v3712 = vadd.f32 %v3345, %v3564
      %v3713 = vadd.f32 %v3346, %v3569
      %v3714 = vadd.f32 %v3347, %v3574
      %v3715 = vadd.f32 %v3348, %v3579
      %v3716 = vadd.f32 %v3349, %v3584
      %v3717 = vadd.f32 %v3350, %v3589
      %v3718 = vadd.f32 %v3351, %v3594
      %v3719 = vadd.f32 %v3352, %v3599
      %v3720 = vadd.f32 %v3353, %v3604
      %v3721 = vadd.f32 %v3354, %v3609
      %v3722 = vadd.f32 %v3355, %v3614
      %v3723 = vadd.f32 %v3356, %v3619
      %v3724 = vadd.f32 %v3357, %v3624
      %v3725 = vadd.f32 %v3358, %v3629
      %v3726 = vadd.f32 %v3359, %v3634
      %v3727 = vadd.f32 %v3360, %v3639
      %v3728 = vadd.f32 %v3361, %v3644
      %v3729 = vadd.f32 %v3362, %v3649
      %v3730 = vadd.f32 %v3363, %v3654
      %v3731 = vadd.f32 %v3364, %v3659
      %v3732 = vadd.f32 %v3365, %v3664
      %v3733 = vadd.f32 %v3366, %v3669
      %v3734 = vadd.f32 %v3367, %v3674
      %v3735 = vadd.f32 %v3368, %v3679
      %v3736 = vadd.f32 %v3369, %v3684
      %v3737 = vadd.f32 %v3370, %v3689
      %v3738 = vadd.f32 %v3371, %v3694
      %v3739 = vadd.f32 %v3372, %v3699
      %v3740 = vadd.f32 %v3373, %v3704
      %v3741 = vadd.f32 %v3374, %v3709
      %v3742 = vld [vmem:[#allocation2 + $0x26] sm:$0xff]
      %v3743 = vld [vmem:[#allocation2 + $0x2e] sm:$0xff]
      %v3744 = vld [vmem:[#allocation2 + $0x36] sm:$0xff]
      %v3745 = vld [vmem:[#allocation2 + $0x3e] sm:$0xff]
      %v3746 = vld [vmem:[#allocation2 + $0x46] sm:$0xff]
      %v3747 = vld [vmem:[#allocation2 + $0x4e] sm:$0xff]
      %v3748 = vld [vmem:[#allocation2 + $0x56] sm:$0xff]
      %v3749 = vld [vmem:[#allocation2 + $0x5e] sm:$0xff]
      %v3750 = vld [vmem:[#allocation2 + $0x66] sm:$0xff]
      %v3751 = vld [vmem:[#allocation2 + $0x6e] sm:$0xff]
      %v3752 = vld [vmem:[#allocation2 + $0x76] sm:$0xff]
      %v3753 = vld [vmem:[#allocation2 + $0x7e] sm:$0xff]
      %v3754 = vld [vmem:[#allocation2 + $0x86] sm:$0xff]
      %v3755 = vld [vmem:[#allocation2 + $0x8e] sm:$0xff]
      %v3756 = vld [vmem:[#allocation2 + $0x96] sm:$0xff]
      %v3757 = vld [vmem:[#allocation2 + $0x9e] sm:$0xff]
      %v3758 = vld [vmem:[#allocation2 + $0xa6] sm:$0xff]
      %v3759 = vld [vmem:[#allocation2 + $0xae] sm:$0xff]
      %v3760 = vld [vmem:[#allocation2 + $0xb6] sm:$0xff]
      %v3761 = vld [vmem:[#allocation2 + $0xbe] sm:$0xff]
      %v3762 = vld [vmem:[#allocation2 + $0xc6] sm:$0xff]
      %v3763 = vld [vmem:[#allocation2 + $0xce] sm:$0xff]
      %v3764 = vld [vmem:[#allocation2 + $0xd6] sm:$0xff]
      %v3765 = vld [vmem:[#allocation2 + $0xde] sm:$0xff]
      %v3766 = vld [vmem:[#allocation2 + $0xe6] sm:$0xff]
      %v3767 = vld [vmem:[#allocation2 + $0xee] sm:$0xff]
      %v3768 = vld [vmem:[#allocation2 + $0xf6] sm:$0xff]
      %v3769 = vld [vmem:[#allocation2 + $0xfe] sm:$0xff]
      %v3770 = vld [vmem:[#allocation2 + $0x106] sm:$0xff]
      %v3771 = vld [vmem:[#allocation2 + $0x10e] sm:$0xff]
      %s3772 = scalar_lea.vmem %s6, 64
      %v3773 = vld [vmem:[%s3772] sm:$0xff]
      %v3775 = vsel %vm796, %v3742, 0
      %v3778 = vsel %vm796, %v3743, 0
      %v3781 = vsel %vm796, %v3744, 0
      %v3784 = vsel %vm796, %v3745, 0
      %v3787 = vsel %vm796, %v3746, 0
      %v3790 = vsel %vm796, %v3747, 0
      %v3793 = vsel %vm796, %v3748, 0
      %v3796 = vsel %vm796, %v3749, 0
      %v3799 = vsel %vm796, %v3750, 0
      %v3802 = vsel %vm796, %v3751, 0
      %v3805 = vsel %vm796, %v3752, 0
      %v3808 = vsel %vm796, %v3753, 0
      %v3811 = vsel %vm796, %v3754, 0
      %v3814 = vsel %vm796, %v3755, 0
      %v3817 = vsel %vm796, %v3756, 0
      %v3820 = vsel %vm796, %v3757, 0
      %v3823 = vsel %vm796, %v3758, 0
      %v3826 = vsel %vm796, %v3759, 0
      %v3829 = vsel %vm796, %v3760, 0
      %v3832 = vsel %vm796, %v3761, 0
      %v3835 = vsel %vm796, %v3762, 0
      %v3838 = vsel %vm796, %v3763, 0
      %v3841 = vsel %vm796, %v3764, 0
      %v3844 = vsel %vm796, %v3765, 0
      %v3847 = vsel %vm796, %v3766, 0
      %v3850 = vsel %vm796, %v3767, 0
      %v3853 = vsel %vm796, %v3768, 0
      %v3856 = vsel %vm796, %v3769, 0
      %v3859 = vsel %vm796, %v3770, 0
      %v3862 = vsel %vm796, %v3771, 0
      %3864 = vmatprep.subr.mxu0 0.0
      %3865 = vmatpush1.msra.mxu0 %v3773
      %3866 = vmatprep.subr.mxu0 0.0
      %3867 = vmatpush1.msra.mxu0 0.0
      %3868 = vmatprep.subr.mxu0 0.0
      %3869 = vmatpush1.msra.mxu0 0.0
      %3870 = vmatprep.subr.mxu0 0.0
      %3871 = vmatpush1.msra.mxu0 0.0
      %3872 = vmatprep.subr.mxu0 0.0
      %3873 = vmatpush1.msra.mxu0 0.0
      %3874 = vmatprep.subr.mxu0 0.0
      %3875 = vmatpush1.msra.mxu0 0.0
      %3876 = vmatprep.subr.mxu0 0.0
      %3877 = vmatpush1.msra.mxu0 0.0
      %3878 = vmatprep.subr.mxu0 0.0
      %3879 = vmatpush1.msra.mxu0 0.0
      %3880 = vmatprep.subr.mxu0 0.0
      %3881 = vmatpush1.msra.mxu0 0.0
      %3882 = vmatprep.subr.mxu0 0.0
      %3883 = vmatpush1.msra.mxu0 0.0
      %3884 = vmatprep.subr.mxu0 0.0
      %3885 = vmatpush1.msra.mxu0 0.0
      %3886 = vmatprep.subr.mxu0 0.0
      %3887 = vmatpush1.msra.mxu0 0.0
      %3888 = vmatprep.subr.mxu0 0.0
      %3889 = vmatpush1.msra.mxu0 0.0
      %3890 = vmatprep.subr.mxu0 0.0
      %3891 = vmatpush1.msra.mxu0 0.0
      %3892 = vmatprep.subr.mxu0 0.0
      %3893 = vmatpush1.msra.mxu0 0.0
      %3894 = vmatprep.subr.mxu0 0.0
      %3895 = vmatpush1.msra.mxu0 0.0
      %3896 = vmatprep.subr.mxu0 0.0
      %3897 = vmatpush1.msra.mxu0 0.0
      %3898 = vmatprep.subr.mxu0 0.0
      %3899 = vmatpush1.msra.mxu0 0.0
      %3900 = vmatprep.subr.mxu0 0.0
      %3901 = vmatpush1.msra.mxu0 0.0
      %3902 = vmatprep.subr.mxu0 0.0
      %3903 = vmatpush1.msra.mxu0 0.0
      %3904 = vmatprep.subr.mxu0 0.0
      %3905 = vmatpush1.msra.mxu0 0.0
      %3906 = vmatprep.subr.mxu0 0.0
      %3907 = vmatpush1.msra.mxu0 0.0
      %3908 = vmatprep.subr.mxu0 0.0
      %3909 = vmatpush1.msra.mxu0 0.0
      %3910 = vmatprep.subr.mxu0 0.0
      %3911 = vmatpush1.msra.mxu0 0.0
      %3912 = vmatprep.subr.mxu0 0.0
      %3913 = vmatpush1.msra.mxu0 0.0
      %3914 = vmatprep.subr.mxu0 0.0
      %3915 = vmatpush1.msra.mxu0 0.0
      %3916 = vmatprep.subr.mxu0 0.0
      %3917 = vmatpush1.msra.mxu0 0.0
      %3918 = vmatprep.subr.mxu0 0.0
      %3919 = vmatpush1.msra.mxu0 0.0
      %3920 = vmatprep.subr.mxu0 0.0
      %3921 = vmatpush1.msra.mxu0 0.0
      %3922 = vmatprep.subr.mxu0 0.0
      %3923 = vmatpush1.msra.mxu0 0.0
      %3924 = vmatprep.subr.mxu0 0.0
      %3925 = vmatpush1.msra.mxu0 0.0
      %3926 = vmatprep.subr.mxu0 0.0
      %3927 = vmatpush1.msra.mxu0 0.0
      %3928 = vmatprep.mubr.f32.mxu0 0.0
      %3929 = vmatmul.mubr.f32.gmra.mrb[0].mxu0 %v3775
      %v3930 = vpop.f32.mrb[0].mxu0
      %v3931 = vadd.f32 0.0, %v3930
      %v3932 = vpop.f32.mrb[0].mxu0
      %3933 = vmatprep.mubr.f32.mxu0 0.0
      %3934 = vmatmul.mubr.f32.gmra.mrb[0].mxu0 %v3778
      %v3935 = vpop.f32.mrb[0].mxu0
      %v3936 = vadd.f32 0.0, %v3935
      %v3937 = vpop.f32.mrb[0].mxu0
      %3938 = vmatprep.mubr.f32.mxu0 0.0
      %3939 = vmatmul.mubr.f32.gmra.mrb[0].mxu0 %v3781
      %v3940 = vpop.f32.mrb[0].mxu0
      %v3941 = vadd.f32 0.0, %v3940
      %v3942 = vpop.f32.mrb[0].mxu0
      %3943 = vmatprep.mubr.f32.mxu0 0.0
      %3944 = vmatmul.mubr.f32.gmra.mrb[0].mxu0 %v3784
      %v3945 = vpop.f32.mrb[0].mxu0
      %v3946 = vadd.f32 0.0, %v3945
      %v3947 = vpop.f32.mrb[0].mxu0
      %3948 = vmatprep.mubr.f32.mxu0 0.0
      %3949 = vmatmul.mubr.f32.gmra.mrb[0].mxu0 %v3787
      %v3950 = vpop.f32.mrb[0].mxu0
      %v3951 = vadd.f32 0.0, %v3950
      %v3952 = vpop.f32.mrb[0].mxu0
      %3953 = vmatprep.mubr.f32.mxu0 0.0
      %3954 = vmatmul.mubr.f32.gmra.mrb[0].mxu0 %v3790
      %v3955 = vpop.f32.mrb[0].mxu0
      %v3956 = vadd.f32 0.0, %v3955
      %v3957 = vpop.f32.mrb[0].mxu0
      %3958 = vmatprep.mubr.f32.mxu0 0.0
      %3959 = vmatmul.mubr.f32.gmra.mrb[0].mxu0 %v3793
      %v3960 = vpop.f32.mrb[0].mxu0
      %v3961 = vadd.f32 0.0, %v3960
      %v3962 = vpop.f32.mrb[0].mxu0
      %3963 = vmatprep.mubr.f32.mxu0 0.0
      %3964 = vmatmul.mubr.f32.gmra.mrb[0].mxu0 %v3796
      %v3965 = vpop.f32.mrb[0].mxu0
      %v3966 = vadd.f32 0.0, %v3965
      %v3967 = vpop.f32.mrb[0].mxu0
      %3968 = vmatprep.mubr.f32.mxu0 0.0
      %3969 = vmatmul.mubr.f32.gmra.mrb[0].mxu0 %v3799
      %v3970 = vpop.f32.mrb[0].mxu0
      %v3971 = vadd.f32 0.0, %v3970
      %v3972 = vpop.f32.mrb[0].mxu0
      %3973 = vmatprep.mubr.f32.mxu0 0.0
      %3974 = vmatmul.mubr.f32.gmra.mrb[0].mxu0 %v3802
      %v3975 = vpop.f32.mrb[0].mxu0
      %v3976 = vadd.f32 0.0, %v3975
      %v3977 = vpop.f32.mrb[0].mxu0
      %3978 = vmatprep.mubr.f32.mxu0 0.0
      %3979 = vmatmul.mubr.f32.gmra.mrb[0].mxu0 %v3805
      %v3980 = vpop.f32.mrb[0].mxu0
      %v3981 = vadd.f32 0.0, %v3980
      %v3982 = vpop.f32.mrb[0].mxu0
      %3983 = vmatprep.mubr.f32.mxu0 0.0
      %3984 = vmatmul.mubr.f32.gmra.mrb[0].mxu0 %v3808
      %v3985 = vpop.f32.mrb[0].mxu0
      %v3986 = vadd.f32 0.0, %v3985
      %v3987 = vpop.f32.mrb[0].mxu0
      %3988 = vmatprep.mubr.f32.mxu0 0.0
      %3989 = vmatmul.mubr.f32.gmra.mrb[0].mxu0 %v3811
      %v3990 = vpop.f32.mrb[0].mxu0
      %v3991 = vadd.f32 0.0, %v3990
      %v3992 = vpop.f32.mrb[0].mxu0
      %3993 = vmatprep.mubr.f32.mxu0 0.0
      %3994 = vmatmul.mubr.f32.gmra.mrb[0].mxu0 %v3814
      %v3995 = vpop.f32.mrb[0].mxu0
      %v3996 = vadd.f32 0.0, %v3995
      %v3997 = vpop.f32.mrb[0].mxu0
      %3998 = vmatprep.mubr.f32.mxu0 0.0
      %3999 = vmatmul.mubr.f32.gmra.mrb[0].mxu0 %v3817
      %v4000 = vpop.f32.mrb[0].mxu0
      %v4001 = vadd.f32 0.0, %v4000
      %v4002 = vpop.f32.mrb[0].mxu0
      %4003 = vmatprep.mubr.f32.mxu0 0.0
      %4004 = vmatmul.mubr.f32.gmra.mrb[0].mxu0 %v3820
      %v4005 = vpop.f32.mrb[0].mxu0
      %v4006 = vadd.f32 0.0, %v4005
      %v4007 = vpop.f32.mrb[0].mxu0
      %4008 = vmatprep.mubr.f32.mxu0 0.0
      %4009 = vmatmul.mubr.f32.gmra.mrb[0].mxu0 %v3823
      %v4010 = vpop.f32.mrb[0].mxu0
      %v4011 = vadd.f32 0.0, %v4010
      %v4012 = vpop.f32.mrb[0].mxu0
      %4013 = vmatprep.mubr.f32.mxu0 0.0
      %4014 = vmatmul.mubr.f32.gmra.mrb[0].mxu0 %v3826
      %v4015 = vpop.f32.mrb[0].mxu0
      %v4016 = vadd.f32 0.0, %v4015
      %v4017 = vpop.f32.mrb[0].mxu0
      %4018 = vmatprep.mubr.f32.mxu0 0.0
      %4019 = vmatmul.mubr.f32.gmra.mrb[0].mxu0 %v3829
      %v4020 = vpop.f32.mrb[0].mxu0
      %v4021 = vadd.f32 0.0, %v4020
      %v4022 = vpop.f32.mrb[0].mxu0
      %4023 = vmatprep.mubr.f32.mxu0 0.0
      %4024 = vmatmul.mubr.f32.gmra.mrb[0].mxu0 %v3832
      %v4025 = vpop.f32.mrb[0].mxu0
      %v4026 = vadd.f32 0.0, %v4025
      %v4027 = vpop.f32.mrb[0].mxu0
      %4028 = vmatprep.mubr.f32.mxu0 0.0
      %4029 = vmatmul.mubr.f32.gmra.mrb[0].mxu0 %v3835
      %v4030 = vpop.f32.mrb[0].mxu0
      %v4031 = vadd.f32 0.0, %v4030
      %v4032 = vpop.f32.mrb[0].mxu0
      %4033 = vmatprep.mubr.f32.mxu0 0.0
      %4034 = vmatmul.mubr.f32.gmra.mrb[0].mxu0 %v3838
      %v4035 = vpop.f32.mrb[0].mxu0
      %v4036 = vadd.f32 0.0, %v4035
      %v4037 = vpop.f32.mrb[0].mxu0
      %4038 = vmatprep.mubr.f32.mxu0 0.0
      %4039 = vmatmul.mubr.f32.gmra.mrb[0].mxu0 %v3841
      %v4040 = vpop.f32.mrb[0].mxu0
      %v4041 = vadd.f32 0.0, %v4040
      %v4042 = vpop.f32.mrb[0].mxu0
      %4043 = vmatprep.mubr.f32.mxu0 0.0
      %4044 = vmatmul.mubr.f32.gmra.mrb[0].mxu0 %v3844
      %v4045 = vpop.f32.mrb[0].mxu0
      %v4046 = vadd.f32 0.0, %v4045
      %v4047 = vpop.f32.mrb[0].mxu0
      %4048 = vmatprep.mubr.f32.mxu0 0.0
      %4049 = vmatmul.mubr.f32.gmra.mrb[0].mxu0 %v3847
      %v4050 = vpop.f32.mrb[0].mxu0
      %v4051 = vadd.f32 0.0, %v4050
      %v4052 = vpop.f32.mrb[0].mxu0
      %4053 = vmatprep.mubr.f32.mxu0 0.0
      %4054 = vmatmul.mubr.f32.gmra.mrb[0].mxu0 %v3850
      %v4055 = vpop.f32.mrb[0].mxu0
      %v4056 = vadd.f32 0.0, %v4055
      %v4057 = vpop.f32.mrb[0].mxu0
      %4058 = vmatprep.mubr.f32.mxu0 0.0
      %4059 = vmatmul.mubr.f32.gmra.mrb[0].mxu0 %v3853
      %v4060 = vpop.f32.mrb[0].mxu0
      %v4061 = vadd.f32 0.0, %v4060
      %v4062 = vpop.f32.mrb[0].mxu0
      %4063 = vmatprep.mubr.f32.mxu0 0.0
      %4064 = vmatmul.mubr.f32.gmra.mrb[0].mxu0 %v3856
      %v4065 = vpop.f32.mrb[0].mxu0
      %v4066 = vadd.f32 0.0, %v4065
      %v4067 = vpop.f32.mrb[0].mxu0
      %4068 = vmatprep.mubr.f32.mxu0 0.0
      %4069 = vmatmul.mubr.f32.gmra.mrb[0].mxu0 %v3859
      %v4070 = vpop.f32.mrb[0].mxu0
      %v4071 = vadd.f32 0.0, %v4070
      %v4072 = vpop.f32.mrb[0].mxu0
      %4073 = vmatprep.mubr.f32.mxu0 0.0
      %4074 = vmatmul.mubr.f32.gmra.mrb[0].mxu0 %v3862
      %v4075 = vpop.f32.mrb[0].mxu0
      %v4076 = vadd.f32 0.0, %v4075
      %v4077 = vpop.f32.mrb[0].mxu0
      %4078 = vdwg.mxu0
      %v4079 = vadd.f32 %v3712, %v3931
      %v4080 = vadd.f32 %v3713, %v3936
      %v4081 = vadd.f32 %v3714, %v3941
      %v4082 = vadd.f32 %v3715, %v3946
      %v4083 = vadd.f32 %v3716, %v3951
      %v4084 = vadd.f32 %v3717, %v3956
      %v4085 = vadd.f32 %v3718, %v3961
      %v4086 = vadd.f32 %v3719, %v3966
      %v4087 = vadd.f32 %v3720, %v3971
      %v4088 = vadd.f32 %v3721, %v3976
      %v4089 = vadd.f32 %v3722, %v3981
      %v4090 = vadd.f32 %v3723, %v3986
      %v4091 = vadd.f32 %v3724, %v3991
      %v4092 = vadd.f32 %v3725, %v3996
      %v4093 = vadd.f32 %v3726, %v4001
      %v4094 = vadd.f32 %v3727, %v4006
      %v4095 = vadd.f32 %v3728, %v4011
      %v4096 = vadd.f32 %v3729, %v4016
      %v4097 = vadd.f32 %v3730, %v4021
      %v4098 = vadd.f32 %v3731, %v4026
      %v4099 = vadd.f32 %v3732, %v4031
      %v4100 = vadd.f32 %v3733, %v4036
      %v4101 = vadd.f32 %v3734, %v4041
      %v4102 = vadd.f32 %v3735, %v4046
      %v4103 = vadd.f32 %v3736, %v4051
      %v4104 = vadd.f32 %v3737, %v4056
      %v4105 = vadd.f32 %v3738, %v4061
      %v4106 = vadd.f32 %v3739, %v4066
      %v4107 = vadd.f32 %v3740, %v4071
      %v4108 = vadd.f32 %v3741, %v4076
      %4109 = vst.msk [vmem:[%s430] sm:$0xff] %vm796, %v4079
      %4110 = vst.msk [vmem:[%s430 + $0x8] sm:$0xff] %vm796, %v4080
      %4111 = vst.msk [vmem:[%s430 + $0x10] sm:$0xff] %vm796, %v4081
      %4112 = vst.msk [vmem:[%s430 + $0x18] sm:$0xff] %vm796, %v4082
      %4113 = vst.msk [vmem:[%s430 + $0x20] sm:$0xff] %vm796, %v4083
      %4114 = vst.msk [vmem:[%s430 + $0x28] sm:$0xff] %vm796, %v4084
      %4115 = vst.msk [vmem:[%s430 + $0x30] sm:$0xff] %vm796, %v4085
      %4116 = vst.msk [vmem:[%s430 + $0x38] sm:$0xff] %vm796, %v4086
      %4117 = vst.msk [vmem:[%s430 + $0x40] sm:$0xff] %vm796, %v4087
      %4118 = vst.msk [vmem:[%s430 + $0x48] sm:$0xff] %vm796, %v4088
      %4119 = vst.msk [vmem:[%s430 + $0x50] sm:$0xff] %vm796, %v4089
      %4120 = vst.msk [vmem:[%s430 + $0x58] sm:$0xff] %vm796, %v4090
      %4121 = vst.msk [vmem:[%s430 + $0x60] sm:$0xff] %vm796, %v4091
      %4122 = vst.msk [vmem:[%s430 + $0x68] sm:$0xff] %vm796, %v4092
      %4123 = vst.msk [vmem:[%s430 + $0x70] sm:$0xff] %vm796, %v4093
      %4124 = vst.msk [vmem:[%s430 + $0x78] sm:$0xff] %vm796, %v4094
      %4125 = vst.msk [vmem:[%s430 + $0x80] sm:$0xff] %vm796, %v4095
      %4126 = vst.msk [vmem:[%s430 + $0x88] sm:$0xff] %vm796, %v4096
      %4127 = vst.msk [vmem:[%s430 + $0x90] sm:$0xff] %vm796, %v4097
      %4128 = vst.msk [vmem:[%s430 + $0x98] sm:$0xff] %vm796, %v4098
      %4129 = vst.msk [vmem:[%s430 + $0xa0] sm:$0xff] %vm796, %v4099
      %4130 = vst.msk [vmem:[%s430 + $0xa8] sm:$0xff] %vm796, %v4100
      %4131 = vst.msk [vmem:[%s430 + $0xb0] sm:$0xff] %vm796, %v4101
      %4132 = vst.msk [vmem:[%s430 + $0xb8] sm:$0xff] %vm796, %v4102
      %4133 = vst.msk [vmem:[%s430 + $0xc0] sm:$0xff] %vm796, %v4103
      %4134 = vst.msk [vmem:[%s430 + $0xc8] sm:$0xff] %vm796, %v4104
      %4135 = vst.msk [vmem:[%s430 + $0xd0] sm:$0xff] %vm796, %v4105
      %4136 = vst.msk [vmem:[%s430 + $0xd8] sm:$0xff] %vm796, %v4106
      %4137 = vst.msk [vmem:[%s430 + $0xe0] sm:$0xff] %vm796, %v4107
      %4138 = vst.msk [vmem:[%s430 + $0xe8] sm:$0xff] %vm796, %v4108
      %v4139 = vld [vmem:[%s424] sm:$0xff]
      %v4140 = vld [vmem:[%s424 + $0x8] sm:$0xff]
      %v4141 = vld [vmem:[%s424 + $0x10] sm:$0xff]
      %v4142 = vld [vmem:[%s424 + $0x18] sm:$0xff]
      %v4143 = vld [vmem:[%s424 + $0x20] sm:$0xff]
      %v4144 = vld [vmem:[%s424 + $0x28] sm:$0xff]
      %v4145 = vld [vmem:[%s424 + $0x30] sm:$0xff]
      %v4146 = vld [vmem:[%s424 + $0x38] sm:$0xff]
      %v4147 = vld [vmem:[%s424 + $0x40] sm:$0xff]
      %v4148 = vld [vmem:[%s424 + $0x48] sm:$0xff]
      %v4149 = vld [vmem:[%s424 + $0x50] sm:$0xff]
      %v4150 = vld [vmem:[%s424 + $0x58] sm:$0xff]
      %v4151 = vld [vmem:[%s424 + $0x60] sm:$0xff]
      %v4152 = vld [vmem:[%s424 + $0x68] sm:$0xff]
      %v4153 = vld [vmem:[%s424 + $0x70] sm:$0xff]
      %v4154 = vld [vmem:[%s424 + $0x78] sm:$0xff]
      %v4155 = vld [vmem:[%s424 + $0x80] sm:$0xff]
      %v4156 = vld [vmem:[%s424 + $0x88] sm:$0xff]
      %v4157 = vld [vmem:[%s424 + $0x90] sm:$0xff]
      %v4158 = vld [vmem:[%s424 + $0x98] sm:$0xff]
      %v4159 = vld [vmem:[%s424 + $0xa0] sm:$0xff]
      %v4160 = vld [vmem:[%s424 + $0xa8] sm:$0xff]
      %v4161 = vld [vmem:[%s424 + $0xb0] sm:$0xff]
      %v4162 = vld [vmem:[%s424 + $0xb8] sm:$0xff]
      %v4163 = vld [vmem:[%s424 + $0xc0] sm:$0xff]
      %v4164 = vld [vmem:[%s424 + $0xc8] sm:$0xff]
      %v4165 = vld [vmem:[%s424 + $0xd0] sm:$0xff]
      %v4166 = vld [vmem:[%s424 + $0xd8] sm:$0xff]
      %v4167 = vld [vmem:[%s424 + $0xe0] sm:$0xff]
      %v4168 = vld [vmem:[%s424 + $0xe8] sm:$0xff]
      %4170 = vset.pattern.permute.xlu0 0
      %4171 = vperm.xlu0 %4170, %v4139
      %v4172 = vpop.permute.xlu0 %4171
      %4175 = vset.pattern.permute.xlu0 0
      %4176 = vperm.xlu0 %4175, %v4140
      %v4177 = vpop.permute.xlu0 %4176
      %4180 = vset.pattern.permute.xlu0 0
      %4181 = vperm.xlu0 %4180, %v4141
      %v4182 = vpop.permute.xlu0 %4181
      %4185 = vset.pattern.permute.xlu0 0
      %4186 = vperm.xlu0 %4185, %v4142
      %v4187 = vpop.permute.xlu0 %4186
      %4190 = vset.pattern.permute.xlu0 0
      %4191 = vperm.xlu0 %4190, %v4143
      %v4192 = vpop.permute.xlu0 %4191
      %4195 = vset.pattern.permute.xlu0 0
      %4196 = vperm.xlu0 %4195, %v4144
      %v4197 = vpop.permute.xlu0 %4196
      %4200 = vset.pattern.permute.xlu0 0
      %4201 = vperm.xlu0 %4200, %v4145
      %v4202 = vpop.permute.xlu0 %4201
      %4205 = vset.pattern.permute.xlu0 0
      %4206 = vperm.xlu0 %4205, %v4146
      %v4207 = vpop.permute.xlu0 %4206
      %4210 = vset.pattern.permute.xlu0 0
      %4211 = vperm.xlu0 %4210, %v4147
      %v4212 = vpop.permute.xlu0 %4211
      %4215 = vset.pattern.permute.xlu0 0
      %4216 = vperm.xlu0 %4215, %v4148
      %v4217 = vpop.permute.xlu0 %4216
      %4220 = vset.pattern.permute.xlu0 0
      %4221 = vperm.xlu0 %4220, %v4149
      %v4222 = vpop.permute.xlu0 %4221
      %4225 = vset.pattern.permute.xlu0 0
      %4226 = vperm.xlu0 %4225, %v4150
      %v4227 = vpop.permute.xlu0 %4226
      %4230 = vset.pattern.permute.xlu0 0
      %4231 = vperm.xlu0 %4230, %v4151
      %v4232 = vpop.permute.xlu0 %4231
      %4235 = vset.pattern.permute.xlu0 0
      %4236 = vperm.xlu0 %4235, %v4152
      %v4237 = vpop.permute.xlu0 %4236
      %4240 = vset.pattern.permute.xlu0 0
      %4241 = vperm.xlu0 %4240, %v4153
      %v4242 = vpop.permute.xlu0 %4241
      %4245 = vset.pattern.permute.xlu0 0
      %4246 = vperm.xlu0 %4245, %v4154
      %v4247 = vpop.permute.xlu0 %4246
      %4250 = vset.pattern.permute.xlu0 0
      %4251 = vperm.xlu0 %4250, %v4155
      %v4252 = vpop.permute.xlu0 %4251
      %4255 = vset.pattern.permute.xlu0 0
      %4256 = vperm.xlu0 %4255, %v4156
      %v4257 = vpop.permute.xlu0 %4256
      %4260 = vset.pattern.permute.xlu0 0
      %4261 = vperm.xlu0 %4260, %v4157
      %v4262 = vpop.permute.xlu0 %4261
      %4265 = vset.pattern.permute.xlu0 0
      %4266 = vperm.xlu0 %4265, %v4158
      %v4267 = vpop.permute.xlu0 %4266
      %4270 = vset.pattern.permute.xlu0 0
      %4271 = vperm.xlu0 %4270, %v4159
      %v4272 = vpop.permute.xlu0 %4271
      %4275 = vset.pattern.permute.xlu0 0
      %4276 = vperm.xlu0 %4275, %v4160
      %v4277 = vpop.permute.xlu0 %4276
      %4280 = vset.pattern.permute.xlu0 0
      %4281 = vperm.xlu0 %4280, %v4161
      %v4282 = vpop.permute.xlu0 %4281
      %4285 = vset.pattern.permute.xlu0 0
      %4286 = vperm.xlu0 %4285, %v4162
      %v4287 = vpop.permute.xlu0 %4286
      %4290 = vset.pattern.permute.xlu0 0
      %4291 = vperm.xlu0 %4290, %v4163
      %v4292 = vpop.permute.xlu0 %4291
      %4295 = vset.pattern.permute.xlu0 0
      %4296 = vperm.xlu0 %4295, %v4164
      %v4297 = vpop.permute.xlu0 %4296
      %4300 = vset.pattern.permute.xlu0 0
      %4301 = vperm.xlu0 %4300, %v4165
      %v4302 = vpop.permute.xlu0 %4301
      %4305 = vset.pattern.permute.xlu0 0
      %4306 = vperm.xlu0 %4305, %v4166
      %v4307 = vpop.permute.xlu0 %4306
      %4310 = vset.pattern.permute.xlu0 0
      %4311 = vperm.xlu0 %4310, %v4167
      %v4312 = vpop.permute.xlu0 %4311
      %4315 = vset.pattern.permute.xlu0 0
      %4316 = vperm.xlu0 %4315, %v4168
      %v4317 = vpop.permute.xlu0 %4316
      %v4319 = vmul.f32 %v4079, %v4172
      %v4320 = vmul.f32 %v4080, %v4177
      %v4321 = vmul.f32 %v4081, %v4182
      %v4322 = vmul.f32 %v4082, %v4187
      %v4323 = vmul.f32 %v4083, %v4192
      %v4324 = vmul.f32 %v4084, %v4197
      %v4325 = vmul.f32 %v4085, %v4202
      %v4326 = vmul.f32 %v4086, %v4207
      %v4327 = vmul.f32 %v4087, %v4212
      %v4328 = vmul.f32 %v4088, %v4217
      %v4329 = vmul.f32 %v4089, %v4222
      %v4330 = vmul.f32 %v4090, %v4227
      %v4331 = vmul.f32 %v4091, %v4232
      %v4332 = vmul.f32 %v4092, %v4237
      %v4333 = vmul.f32 %v4093, %v4242
      %v4334 = vmul.f32 %v4094, %v4247
      %v4335 = vmul.f32 %v4095, %v4252
      %v4336 = vmul.f32 %v4096, %v4257
      %v4337 = vmul.f32 %v4097, %v4262
      %v4338 = vmul.f32 %v4098, %v4267
      %v4339 = vmul.f32 %v4099, %v4272
      %v4340 = vmul.f32 %v4100, %v4277
      %v4341 = vmul.f32 %v4101, %v4282
      %v4342 = vmul.f32 %v4102, %v4287
      %v4343 = vmul.f32 %v4103, %v4292
      %v4344 = vmul.f32 %v4104, %v4297
      %v4345 = vmul.f32 %v4105, %v4302
      %v4346 = vmul.f32 %v4106, %v4307
      %v4347 = vmul.f32 %v4107, %v4312
      %v4348 = vmul.f32 %v4108, %v4317
      %v4349 = vsel %vm796, %v4319, 0.0
      %v4350 = vsel %vm796, %v4320, 0.0
      %v4351 = vadd.f32 %v4349, %v4350
      %v4352 = vsel %vm796, %v4321, 0.0
      %v4353 = vadd.f32 %v4351, %v4352
      %v4354 = vsel %vm796, %v4322, 0.0
      %v4355 = vadd.f32 %v4353, %v4354
      %v4356 = vsel %vm796, %v4323, 0.0
      %v4357 = vadd.f32 %v4355, %v4356
      %v4358 = vsel %vm796, %v4324, 0.0
      %v4359 = vadd.f32 %v4357, %v4358
      %v4360 = vsel %vm796, %v4325, 0.0
      %v4361 = vadd.f32 %v4359, %v4360
      %v4362 = vsel %vm796, %v4326, 0.0
      %v4363 = vadd.f32 %v4361, %v4362
      %v4364 = vsel %vm796, %v4327, 0.0
      %v4365 = vadd.f32 %v4363, %v4364
      %v4366 = vsel %vm796, %v4328, 0.0
      %v4367 = vadd.f32 %v4365, %v4366
      %v4368 = vsel %vm796, %v4329, 0.0
      %v4369 = vadd.f32 %v4367, %v4368
      %v4370 = vsel %vm796, %v4330, 0.0
      %v4371 = vadd.f32 %v4369, %v4370
      %v4372 = vsel %vm796, %v4331, 0.0
      %v4373 = vadd.f32 %v4371, %v4372
      %v4374 = vsel %vm796, %v4332, 0.0
      %v4375 = vadd.f32 %v4373, %v4374
      %v4376 = vsel %vm796, %v4333, 0.0
      %v4377 = vadd.f32 %v4375, %v4376
      %v4378 = vsel %vm796, %v4334, 0.0
      %v4379 = vadd.f32 %v4377, %v4378
      %v4380 = vsel %vm796, %v4335, 0.0
      %v4381 = vadd.f32 %v4379, %v4380
      %v4382 = vsel %vm796, %v4336, 0.0
      %v4383 = vadd.f32 %v4381, %v4382
      %v4384 = vsel %vm796, %v4337, 0.0
      %v4385 = vadd.f32 %v4383, %v4384
      %v4386 = vsel %vm796, %v4338, 0.0
      %v4387 = vadd.f32 %v4385, %v4386
      %v4388 = vsel %vm796, %v4339, 0.0
      %v4389 = vadd.f32 %v4387, %v4388
      %v4390 = vsel %vm796, %v4340, 0.0
      %v4391 = vadd.f32 %v4389, %v4390
      %v4392 = vsel %vm796, %v4341, 0.0
      %v4393 = vadd.f32 %v4391, %v4392
      %v4394 = vsel %vm796, %v4342, 0.0
      %v4395 = vadd.f32 %v4393, %v4394
      %v4396 = vsel %vm796, %v4343, 0.0
      %v4397 = vadd.f32 %v4395, %v4396
      %v4398 = vsel %vm796, %v4344, 0.0
      %v4399 = vadd.f32 %v4397, %v4398
      %v4400 = vsel %vm796, %v4345, 0.0
      %v4401 = vadd.f32 %v4399, %v4400
      %v4402 = vsel %vm796, %v4346, 0.0
      %v4403 = vadd.f32 %v4401, %v4402
      %v4404 = vsel %vm796, %v4347, 0.0
      %v4405 = vadd.f32 %v4403, %v4404
      %v4406 = vsel %vm796, %v4348, 0.0
      %v4407 = vadd.f32 %v4405, %v4406
      %v4408 = vrot.slane %v4407, 4
      %v4409 = vadd.f32 %v4407, %v4408
      %v4410 = vrot.slane %v4409, 2
      %v4411 = vadd.f32 %v4409, %v4410
      %v4412 = vrot.slane %v4411, 1
      %v4413 = vadd.f32 %v4411, %v4412
      %v4414 = vmul.f32 %v4319, %v4079
      %v4415 = vmul.f32 %v4320, %v4080
      %v4416 = vmul.f32 %v4321, %v4081
      %v4417 = vmul.f32 %v4322, %v4082
      %v4418 = vmul.f32 %v4323, %v4083
      %v4419 = vmul.f32 %v4324, %v4084
      %v4420 = vmul.f32 %v4325, %v4085
      %v4421 = vmul.f32 %v4326, %v4086
      %v4422 = vmul.f32 %v4327, %v4087
      %v4423 = vmul.f32 %v4328, %v4088
      %v4424 = vmul.f32 %v4329, %v4089
      %v4425 = vmul.f32 %v4330, %v4090
      %v4426 = vmul.f32 %v4331, %v4091
      %v4427 = vmul.f32 %v4332, %v4092
      %v4428 = vmul.f32 %v4333, %v4093
      %v4429 = vmul.f32 %v4334, %v4094
      %v4430 = vmul.f32 %v4335, %v4095
      %v4431 = vmul.f32 %v4336, %v4096
      %v4432 = vmul.f32 %v4337, %v4097
      %v4433 = vmul.f32 %v4338, %v4098
      %v4434 = vmul.f32 %v4339, %v4099
      %v4435 = vmul.f32 %v4340, %v4100
      %v4436 = vmul.f32 %v4341, %v4101
      %v4437 = vmul.f32 %v4342, %v4102
      %v4438 = vmul.f32 %v4343, %v4103
      %v4439 = vmul.f32 %v4344, %v4104
      %v4440 = vmul.f32 %v4345, %v4105
      %v4441 = vmul.f32 %v4346, %v4106
      %v4442 = vmul.f32 %v4347, %v4107
      %v4443 = vmul.f32 %v4348, %v4108
      %v4444 = vsel %vm796, %v4414, 0.0
      %v4445 = vsel %vm796, %v4415, 0.0
      %v4446 = vadd.f32 %v4444, %v4445
      %v4447 = vsel %vm796, %v4416, 0.0
      %v4448 = vadd.f32 %v4446, %v4447
      %v4449 = vsel %vm796, %v4417, 0.0
      %v4450 = vadd.f32 %v4448, %v4449
      %v4451 = vsel %vm796, %v4418, 0.0
      %v4452 = vadd.f32 %v4450, %v4451
      %v4453 = vsel %vm796, %v4419, 0.0
      %v4454 = vadd.f32 %v4452, %v4453
      %v4455 = vsel %vm796, %v4420, 0.0
      %v4456 = vadd.f32 %v4454, %v4455
      %v4457 = vsel %vm796, %v4421, 0.0
      %v4458 = vadd.f32 %v4456, %v4457
      %v4459 = vsel %vm796, %v4422, 0.0
      %v4460 = vadd.f32 %v4458, %v4459
      %v4461 = vsel %vm796, %v4423, 0.0
      %v4462 = vadd.f32 %v4460, %v4461
      %v4463 = vsel %vm796, %v4424, 0.0
      %v4464 = vadd.f32 %v4462, %v4463
      %v4465 = vsel %vm796, %v4425, 0.0
      %v4466 = vadd.f32 %v4464, %v4465
      %v4467 = vsel %vm796, %v4426, 0.0
      %v4468 = vadd.f32 %v4466, %v4467
      %v4469 = vsel %vm796, %v4427, 0.0
      %v4470 = vadd.f32 %v4468, %v4469
      %v4471 = vsel %vm796, %v4428, 0.0
      %v4472 = vadd.f32 %v4470, %v4471
      %v4473 = vsel %vm796, %v4429, 0.0
      %v4474 = vadd.f32 %v4472, %v4473
      %v4475 = vsel %vm796, %v4430, 0.0
      %v4476 = vadd.f32 %v4474, %v4475
      %v4477 = vsel %vm796, %v4431, 0.0
      %v4478 = vadd.f32 %v4476, %v4477
      %v4479 = vsel %vm796, %v4432, 0.0
      %v4480 = vadd.f32 %v4478, %v4479
      %v4481 = vsel %vm796, %v4433, 0.0
      %v4482 = vadd.f32 %v4480, %v4481
      %v4483 = vsel %vm796, %v4434, 0.0
      %v4484 = vadd.f32 %v4482, %v4483
      %v4485 = vsel %vm796, %v4435, 0.0
      %v4486 = vadd.f32 %v4484, %v4485
      %v4487 = vsel %vm796, %v4436, 0.0
      %v4488 = vadd.f32 %v4486, %v4487
      %v4489 = vsel %vm796, %v4437, 0.0
      %v4490 = vadd.f32 %v4488, %v4489
      %v4491 = vsel %vm796, %v4438, 0.0
      %v4492 = vadd.f32 %v4490, %v4491
      %v4493 = vsel %vm796, %v4439, 0.0
      %v4494 = vadd.f32 %v4492, %v4493
      %v4495 = vsel %vm796, %v4440, 0.0
      %v4496 = vadd.f32 %v4494, %v4495
      %v4497 = vsel %vm796, %v4441, 0.0
      %v4498 = vadd.f32 %v4496, %v4497
      %v4499 = vsel %vm796, %v4442, 0.0
      %v4500 = vadd.f32 %v4498, %v4499
      %v4501 = vsel %vm796, %v4443, 0.0
      %v4502 = vadd.f32 %v4500, %v4501
      %v4503 = vrot.slane %v4502, 4
      %v4504 = vadd.f32 %v4502, %v4503
      %v4505 = vrot.slane %v4504, 2
      %v4506 = vadd.f32 %v4504, %v4505
      %v4507 = vrot.slane %v4506, 1
      %v4508 = vadd.f32 %v4506, %v4507
      %vm4509 = vcmask 1040384
      %v4510 = vsel %vm4509, %v4413, %v4508
      %vm4511 = vcmask 58368
      %4512 = vst.msk [vmem:[%s435] sm:$0x3] %vm4511, %v4510
      %s4513 = smul.u32 30, %s20
      %p4514 = scmp.lt.s32.totalorder %s4513, 89
      %s4515 = scalar_select %p4514, %s4513, 89
      %s4516 = smul.addr %s4515, 8
      %s4517 = scalar_lea.vmem %s7, %s4516
      %p4518 = scmp.lt.s32.totalorder %s20, 2
      %s4519 = scalar_select %p4518, %s20, 2
      %s4520 = smul.addr %s4519, 2
      %s4521 = scalar_lea.vmem %s8, %s4520
      // Predicated region
      $region49: #{double_conv2d.4} parent=47 // pred_check
        %p4522 = pneg %p218
      $region50: #{double_conv2d.4} parent=47 // pred_check_branch
        %4524 = sbr.rel (%p4522) target = $region52
      $region51: #{double_conv2d.4} parent=47 // pred_region
        %s4525 = smul.u32 30, %s20
      $region52: #{double_conv2d.4} parent=47 // pred_fallthru
        _
      // Predicated region
      $region53: #{double_conv2d.4} parent=47 // pred_check
        %p4526 = pneg %p244
      $region54: #{double_conv2d.4} parent=47 // pred_check_branch
        %4528 = sbr.rel (%p4526) target = $region56
      $region55: #{double_conv2d.4} parent=47 // pred_region
        _
      $region56: #{double_conv2d.4} parent=47 // pred_fallthru
        _
    $region48: #{double_conv2d.4} parent=5 // pred_fallthru
      _
    %p4529 = scmp.le.s32.totalorder 2, %s15
    // Predicated region
    $region57: #{double_conv2d.4} parent=5 // pred_check
      %p4530 = pneg %p4529
    $region58: #{double_conv2d.4} parent=5 // pred_check_branch
      %4532 = sbr.rel (%p4530) target = $region60
    $region59: #{double_conv2d.4} parent=5 // pred_region
      %s4533 = ssub.s32 %s15, 2
      // Predicated region
      $region61: #{double_conv2d.4} parent=59 // pred_check
        %p4534 = pneg %p224
      $region62: #{double_conv2d.4} parent=59 // pred_check_branch
        %4536 = sbr.rel (%p4534) target = $region64
      $region63: #{double_conv2d.4} parent=59 // pred_region
        %s4537 = smul.u32 30, %s21
        %p4538 = scmp.lt.s32.totalorder %s4537, 89
        %s4539 = scalar_select %p4538, %s4537, 89
        %s4540 = smul.addr %s4539, 8
        %s4541 = scalar_lea.vmem %s7, %s4540
      $region64: #{double_conv2d.4} parent=59 // pred_fallthru
        _
      // Predicated region
      $region65: #{double_conv2d.4} parent=59 // pred_check
        %p4542 = pneg %p250
      $region66: #{double_conv2d.4} parent=59 // pred_check_branch
        %4544 = sbr.rel (%p4542) target = $region68
      $region67: #{double_conv2d.4} parent=59 // pred_region
        %p4545 = scmp.lt.s32.totalorder %s21, 2
        %s4546 = scalar_select %p4545, %s21, 2
        %s4547 = smul.addr %s4546, 2
        %s4548 = scalar_lea.vmem %s8, %s4547
      $region68: #{double_conv2d.4} parent=59 // pred_fallthru
        _
    $region60: #{double_conv2d.4} parent=5 // pred_fallthru
      _
  $region6: #{double_conv2d.4} parent=0 // loop_footer
    %s19 = sadd.s32 1, %s15
  $region7: #{double_conv2d.4} parent=0 // loop_footer_branch
    %14 = sbr.rel target = $region3
  $region8: #{double_conv2d.4} parent=0 // loop_exit
    _

</llo_original>
